<compile_context>
chip_gen: v7x
topology: tpu7x:2x2x1
jax: 0.10.0
libtpu: 0.0.40
codegen_flags: <defaults>
</compile_context>

<pallas_src>
import math

import numpy as np
import jax
import jax.numpy as jnp
from jax.experimental import pallas as pl
from jax.experimental.pallas import tpu as pltpu

# ---------------- static hyper-parameters -------------------------------
HIDDEN = 32            # hp.network.layers[0]
NUM_LAYERS = 4         # hp.network.layers[1]
FA_DIM = 8             # hp.xFA[1][0]
GATE = 128             # per-gate lane block (vreg aligned)
T10_LOW, S0_LOW = 0.1, 0.5     # hp.simulations.T10bounds[0, :]
T10_HIGH, S0_HIGH = 4.0, 2.0   # hp.simulations.T10bounds[1, :]
TR_DCE = 0.005                 # hp.acquisition.TR_dce
FA_DCE = math.radians(15.0)    # hp.acquisition.FA_dce
R1_RELAX = 4.5                 # hp.acquisition.r1
COS_FA_DCE = math.cos(FA_DCE)

PACKED_ORDER = ("w0gi", "b0gi", "w0hh", "b0hh", "wr", "br",
                "wst", "bst", "wss", "bss",
                "wt1h", "wt1f", "bt1", "wt2", "bt2",
                "ws1h", "ws1f", "bs1", "ws2", "bs2")


# ---------------- Pallas kernel ------------------------------------------
def _t10_kernel(xfa_ref, fa_ref, sinfa_ref, cosfa_ref, tr_ref, xdce_ref, s0dce_ref,
                w0gi_ref, b0gi_ref, w0hh_ref, b0hh_ref, wr_ref, br_ref,
                wst_ref, bst_ref, wss_ref, bss_ref,
                wt1h_ref, wt1f_ref, bt1_ref, wt2_ref, bt2_ref,
                ws1h_ref, ws1f_ref, bs1_ref, ws2_ref, bs2_ref,
                xfa_out_ref, cdce_out_ref, t10_out_ref, s0_out_ref):
    B, S = xfa_ref.shape
    H, G, L = HIDDEN, GATE, NUM_LAYERS

    def sigmoid(v):
        # tanh form: overflow-free, one EUP op, identical math to 1/(1+exp(-x)).
        return 0.5 * (jnp.tanh(0.5 * v) + 1.0)

    # ---- hoisted loads: small operands reused by every unrolled cell ----
    x_all = xfa_ref[...]                     # (B, S)
    w0gi = w0gi_ref[...]                     # (1, 3G)  layer-0 input weights
    b0gi = b0gi_ref[...]                     # (1, 3G)
    w0hh = w0hh_ref[...]                     # (H, 3G)  layer-0 hidden weights
    b0hh = b0hh_ref[...]                     # (1, 3G)
    br = [br_ref[l] for l in range(L - 1)]   # each (1, 4G)
    # NOTE: the big fused (2H, 4G) weights are read at point of use (they feed
    # the MXU push directly; holding all 3 layers live would just force spills).

    h = [jnp.zeros((B, H), jnp.float32) for _ in range(L)]
    outs = []

    # ---- fully unrolled S x L GRU (S, L are small compile-time constants) ----
    for t in range(S):
        x_t = x_all[:, t:t + 1]                                   # (B, 1)
        # layer 0: input projection is a broadcast (no rank-1 MXU op)
        gi = x_t * w0gi + b0gi                                    # (B, 3G)
        gh = jnp.dot(h[0], w0hh, preferred_element_type=jnp.float32) + b0hh
        r = sigmoid(gi[:, 0:H] + gh[:, 0:H])
        z = sigmoid(gi[:, G:G + H] + gh[:, G:G + H])
        n = jnp.tanh(gi[:, 2 * G:2 * G + H] + r * gh[:, 2 * G:2 * G + H])
        h[0] = (1.0 - z) * n + z * h[0]
        inp = h[0]
        # layers 1..3: one fused matmul per cell, gate blocks vreg-aligned
        for l in range(1, L):
            lhs = jnp.concatenate([inp, h[l]], axis=1)            # (B, 2H)
            g = jnp.dot(lhs, wr_ref[l - 1],
                        preferred_element_type=jnp.float32) + br[l - 1]   # (B, 4G)
            r = sigmoid(g[:, 0:H])
            z = sigmoid(g[:, G:G + H])
            n = jnp.tanh(g[:, 2 * G:2 * G + H] + r * g[:, 3 * G:3 * G + H])
            h[l] = (1.0 - z) * n + z * h[l]
            inp = h[l]
        outs.append(inp)                                          # top-layer output

    # ---- attention pooling: Linear(H,1) + softmax over the S steps ----
    # All per-step outputs are live register values; no VMEM round-trip.
    def attn_pool(w_ref, b_ref):
        w = w_ref[...]                                            # (1, H)
        b = b_ref[...]                                            # (1, 1)
        logits = [jnp.sum(o * w, axis=1, keepdims=True) + b for o in outs]
        m = logits[0]
        for lg in logits[1:]:
            m = jnp.maximum(m, lg)
        es = [jnp.exp(lg - m) for lg in logits]
        denom = es[0]
        for e in es[1:]:
            denom = denom + e
        inv = pl.reciprocal(denom, approx=True)
        hidden = jnp.zeros_like(outs[0])
        for o, e in zip(outs, es):
            hidden = hidden + o * (e * inv)
        return hidden                                             # (B, H)

    hidden_t = attn_pool(wst_ref, bst_ref)
    hidden_s = attn_pool(wss_ref, bss_ref)
    fa = fa_ref[...]                                              # (B, FA_DIM)

    def elu(v):
        return jnp.where(v > 0.0, v, jnp.exp(jnp.minimum(v, 0.0)) - 1.0)

    def encoder(hidden, w1h_ref, w1f_ref, b1_ref, w2_ref, b2_ref):
        # split first matmul instead of lane-concatenating [hidden | fa]
        h1 = elu(jnp.dot(hidden, w1h_ref[...], preferred_element_type=jnp.float32)
                 + jnp.dot(fa, w1f_ref[...], preferred_element_type=jnp.float32)
                 + b1_ref[...])
        return jnp.dot(h1, w2_ref[...], preferred_element_type=jnp.float32) + b2_ref[...]

    t10_raw = encoder(hidden_t, wt1h_ref, wt1f_ref, bt1_ref, wt2_ref, bt2_ref)
    s0_raw = encoder(hidden_s, ws1h_ref, ws1f_ref, bs1_ref, ws2_ref, bs2_ref)

    T10 = T10_LOW + sigmoid(t10_raw) * (T10_HIGH - T10_LOW)      # (B, 1)
    S0f = S0_LOW + sigmoid(s0_raw) * (S0_HIGH - S0_LOW)
    t10_out_ref[...] = T10
    s0_out_ref[...] = S0f

    # exact divide: R1 feeds a nearly cancelling term in C_dce
    R1 = 1.0 / T10                                               # (B, 1)

    # ---- variable-flip-angle (SPGR) signal model ----
    TR = tr_ref[...]                                             # (B, 1)
    E_fa = jnp.exp(-TR * R1)
    xfa_sig = (1.0 - E_fa) * sinfa_ref[...] * pl.reciprocal(
        1.0 - cosfa_ref[...] * E_fa, approx=True)
    xfa_out_ref[...] = xfa_sig * S0f

    # ---- DCE concentration ----
    xdce = xdce_ref[...]                                         # (B, T)
    A = xdce / s0dce_ref[...]                                    # exact divide
    E0 = jnp.exp(-R1 * TR_DCE)                                   # (B, 1)
    cF = COS_FA_DCE
    E = (1.0 - A + A * E0 - E0 * cF) / (1.0 - A * cF + A * E0 * cF - E0 * cF)
    R1eff = (-1.0 / TR_DCE) * jnp.log(E)
    C = (R1eff - R1) / R1_RELAX
    cdce_out_ref[...] = jnp.where(C != C, 0.0, C)                # C[isnan(C)] = 0


# ---------------- parameter init (deterministic, PyTorch gate order r|z|n) ----
def init_params(key):
    H, L = HIDDEN, NUM_LAYERS
    d_in = H + FA_DIM
    d_hid = d_in // 2
    keys = iter(jax.random.split(key, 32))

    def u(shape, bound):
        return jax.random.uniform(next(keys), shape, jnp.float32, -bound, bound)

    kg = 1.0 / math.sqrt(H)
    kl = 1.0 / math.sqrt(H)
    k1 = 1.0 / math.sqrt(d_in)
    k2 = 1.0 / math.sqrt(d_hid)
    return {
        "wih0": u((1, 3 * H), kg), "whh0": u((H, 3 * H), kg),
        "bih0": u((1, 3 * H), kg), "bhh0": u((1, 3 * H), kg),
        "wihr": u((L - 1, H, 3 * H), kg), "whhr": u((L - 1, H, 3 * H), kg),
        "bihr": u((L - 1, 1, 3 * H), kg), "bhhr": u((L - 1, 1, 3 * H), kg),
        "w_score_t": u((1, H), kl), "b_score_t": u((1, 1), kl),
        "w_score_s": u((1, H), kl), "b_score_s": u((1, 1), kl),
        "w_enc_t1": u((d_in, d_hid), k1), "b_enc_t1": u((1, d_hid), k1),
        "w_enc_t2": u((d_hid, 1), k2), "b_enc_t2": u((1, 1), k2),
        "w_enc_s1": u((d_in, d_hid), k1), "b_enc_s1": u((1, d_hid), k1),
        "w_enc_s2": u((d_hid, 1), k2), "b_enc_s2": u((1, 1), k2),
    }


# ---------------- pack raw params into the kernel's aligned layout --------
def pack_params(params):
    H, G, L = HIDDEN, GATE, NUM_LAYERS

    def to_blocks(x):
        # (..., 3H) -> (..., 3G): each gate [r|z|n] in its own 128-lane block.
        out = jnp.zeros(x.shape[:-1] + (3 * G,), jnp.float32)
        for g in range(3):
            out = out.at[..., g * G:g * G + H].set(x[..., g * H:(g + 1) * H])
        return out

    w0gi = to_blocks(params["wih0"])
    b0gi = to_blocks(params["bih0"])
    w0hh = to_blocks(params["whh0"])
    b0hh = to_blocks(params["bhh0"])

    # layers 1..3: fused [Wih; Whh] with 4 gate blocks [r | z | gi_n | gh_n]
    Ws, bs = [], []
    for l in range(L - 1):
        wih, whh = params["wihr"][l], params["whhr"][l]      # (H, 3H)
        bih, bhh = params["bihr"][l], params["bhhr"][l]      # (1, 3H)
        W = jnp.zeros((2 * H, 4 * G), jnp.float32)
        b = jnp.zeros((1, 4 * G), jnp.float32)
        # r gate (block 0) and z gate (block 1): ih + hh fused, biases summed
        for g in range(2):
            W = W.at[0:H, g * G:g * G + H].set(wih[:, g * H:(g + 1) * H])
            W = W.at[H:2 * H, g * G:g * G + H].set(whh[:, g * H:(g + 1) * H])
            b = b.at[:, g * G:g * G + H].set(bih[:, g * H:(g + 1) * H]
                                             + bhh[:, g * H:(g + 1) * H])
        # n gate kept split (block 2 = gi_n, block 3 = gh_n) for r*gh_n asymmetry
        W = W.at[0:H, 2 * G:2 * G + H].set(wih[:, 2 * H:3 * H])
        b = b.at[:, 2 * G:2 * G + H].set(bih[:, 2 * H:3 * H])
        W = W.at[H:2 * H, 3 * G:3 * G + H].set(whh[:, 2 * H:3 * H])
        b = b.at[:, 3 * G:3 * G + H].set(bhh[:, 2 * H:3 * H])
        Ws.append(W)
        bs.append(b)

    return {
        "w0gi": w0gi, "b0gi": b0gi, "w0hh": w0hh, "b0hh": b0hh,
        "wr": jnp.stack(Ws, axis=0), "br": jnp.stack(bs, axis=0),
        "wst": params["w_score_t"], "bst": params["b_score_t"],
        "wss": params["w_score_s"], "bss": params["b_score_s"],
        "wt1h": params["w_enc_t1"][:H], "wt1f": params["w_enc_t1"][H:],
        "bt1": params["b_enc_t1"], "wt2": params["w_enc_t2"], "bt2": params["b_enc_t2"],
        "ws1h": params["w_enc_s1"][:H], "ws1f": params["w_enc_s1"][H:],
        "bs1": params["b_enc_s1"], "ws2": params["w_enc_s2"], "bs2": params["b_enc_s2"],
    }


# ---------------- wrapper --------------------------------------------------
@jax.jit
def t10_forward(packed, X_fa, fa_vals, fa_len, TR_vals, T10_true, S0_dce, X_dce):
    del fa_len, T10_true            # unused in the len_dim == 0 configuration
    B, S = X_fa.shape
    T = X_dce.shape[1]
    # TODO(synk): sin/cos of runtime flip angles computed in plain JAX (trig has
    # no Mosaic transcendental lowering); the constant FA_dce is folded at trace time.
    sin_fa = jnp.sin(fa_vals).astype(jnp.float32)
    cos_fa = jnp.cos(fa_vals).astype(jnp.float32)
    s0_dce = S0_dce[:, None].astype(jnp.float32)

    # batch grid: at B=2 this is grid=(1,); for production B it tiles the MXU
    # M-dim and shards across TensorCores via the "parallel" semantic.
    bt = B if B <= 256 else 256
    nb = pl.cdiv(B, bt)

    def row_spec(ncols):
        return pl.BlockSpec((bt, ncols), lambda i: (i, 0))

    def const_spec(arr):
        nd = arr.ndim
        return pl.BlockSpec(arr.shape, lambda i, _nd=nd: (0,) * _nd)

    inputs = (X_fa.astype(jnp.float32), fa_vals.astype(jnp.float32), sin_fa, cos_fa,
              TR_vals.astype(jnp.float32), X_dce.astype(jnp.float32), s0_dce)
    in_specs = [row_spec(S), row_spec(FA_DIM), row_spec(FA_DIM), row_spec(FA_DIM),
                row_spec(1), row_spec(T), row_spec(1)]
    param_list = []
    for k in PACKED_ORDER:
        p = packed[k]
        param_list.append(p)
        in_specs.append(const_spec(p))

    out_shape = (
        jax.ShapeDtypeStruct((B, FA_DIM), jnp.float32),   # simulated X_fa signal
        jax.ShapeDtypeStruct((B, T), jnp.float32),        # C_dce
        jax.ShapeDtypeStruct((B, 1), jnp.float32),        # T10
        jax.ShapeDtypeStruct((B, 1), jnp.float32),        # S0_fa
    )
    out_specs = (row_spec(FA_DIM), row_spec(T), row_spec(1), row_spec(1))

    return pl.pallas_call(
        _t10_kernel,
        out_shape=out_shape,
        grid=(nb,),
        in_specs=in_specs,
        out_specs=out_specs,
        compiler_params=pltpu.CompilerParams(
            dimension_semantics=("parallel",)),
    )(*inputs, *param_list)


# ---------------- pure-JAX reference (for verification) --------------------
def t10_forward_ref(params, X_fa, fa_vals, fa_len, TR_vals, T10_true, S0_dce, X_dce):
    H, L = HIDDEN, NUM_LAYERS
    B, S = X_fa.shape
    sigmoid = jax.nn.sigmoid
    h = [jnp.zeros((B, H), jnp.float32) for _ in range(L)]
    outs = []
    for t in range(S):
        inp = X_fa[:, t][:, None]
        for l in range(L):
            if l == 0:
                wih, whh, bih, bhh = params["wih0"], params["whh0"], params["bih0"], params["bhh0"]
            else:
                wih, whh, bih, bhh = (params["wihr"][l - 1], params["whhr"][l - 1],
                                      params["bihr"][l - 1], params["bhhr"][l - 1])
            gi = inp @ wih + bih
            gh = h[l] @ whh + bhh
            r = sigmoid(gi[:, :H] + gh[:, :H])
            z = sigmoid(gi[:, H:2 * H] + gh[:, H:2 * H])
            n = jnp.tanh(gi[:, 2 * H:] + r * gh[:, 2 * H:])
            h[l] = (1 - z) * n + z * h[l]
            inp = h[l]
        outs.append(inp)
    out = jnp.stack(outs, axis=1)                       # (B, S, H)

    def pool(w, b):
        logits = out @ w.T + b
        score = jax.nn.softmax(logits, axis=1)
        return jnp.sum(out * score, axis=1)

    hid_t = jnp.concatenate([pool(params["w_score_t"], params["b_score_t"]), fa_vals], axis=1)
    hid_s = jnp.concatenate([pool(params["w_score_s"], params["b_score_s"]), fa_vals], axis=1)

    def enc(hid, w1, b1, w2, b2):
        return jax.nn.elu(hid @ w1 + b1) @ w2 + b2

    T10 = T10_LOW + sigmoid(enc(hid_t, params["w_enc_t1"], params["b_enc_t1"],
                                params["w_enc_t2"], params["b_enc_t2"])) * (T10_HIGH - T10_LOW)
    S0f = S0_LOW + sigmoid(enc(hid_s, params["w_enc_s1"], params["b_enc_s1"],
                               params["w_enc_s2"], params["b_enc_s2"])) * (S0_HIGH - S0_LOW)
    R1 = 1.0 / T10
    E_fa = jnp.exp(-TR_vals * R1)
    xfa = (1 - E_fa) * jnp.sin(fa_vals) / (1 - jnp.cos(fa_vals) * E_fa) * S0f
    A = X_dce / S0_dce[:, None]
    E0 = jnp.exp(-R1 * TR_DCE)
    cF = COS_FA_DCE
    E = (1 - A + A * E0 - E0 * cF) / (1 - A * cF + A * E0 * cF - E0 * cF)
    R1eff = (-1.0 / TR_DCE) * jnp.log(E)
    C = (R1eff - R1) / R1_RELAX
    C = jnp.where(jnp.isnan(C), 0.0, C)
    return xfa, C, T10, S0f


# ---------------- main ------------------------------------------------------
if __name__ == "__main__":
    key = jax.random.PRNGKey(0)
    kp, k1, k2, k3, k4 = jax.random.split(key, 5)
    params = init_params(kp)
    packed = pack_params(params)

    B, S, T = 2, FA_DIM, 16
    fa_vals = jax.random.uniform(k1, (B, S), jnp.float32, 0.05, 0.45)   # flip angles [rad]
    TR_vals = jnp.full((B, 1), 0.0075, jnp.float32)
    X_fa = jax.random.uniform(k2, (B, S), jnp.float32, 0.1, 1.0)        # measured VFA signal
    X_dce = jax.random.uniform(k3, (B, T), jnp.float32, 0.5, 1.5)
    S0_dce = jax.random.uniform(k4, (B,), jnp.float32, 0.8, 1.2)
    T10_true = jnp.ones((B,), jnp.float32)                              # unused by forward
    fa_len = jnp.full((B, 1), float(S), jnp.float32)                    # unused (len_dim == 0)

    outs = t10_forward(packed, X_fa, fa_vals, fa_len, TR_vals, T10_true, S0_dce, X_dce)
    outs = jax.block_until_ready(outs)

    refs = t10_forward_ref(params, X_fa, fa_vals, fa_len, TR_vals, T10_true, S0_dce, X_dce)
    for o, r in zip(outs, refs):
        np.testing.assert_allclose(np.asarray(o), np.asarray(r), rtol=1e-2, atol=1e-2)

    print("KERNEL_OK")
</pallas_src>

<mosaic_0001>
module attributes {stable_mosaic.version = 11 : i64} {
  func.func @_t10_kernel(%arg0: i32, %arg1: memref<2x8xf32, #tpu.memory_space<vmem>>, %arg2: memref<2x8xf32, #tpu.memory_space<vmem>>, %arg3: memref<2x8xf32, #tpu.memory_space<vmem>>, %arg4: memref<2x8xf32, #tpu.memory_space<vmem>>, %arg5: memref<2x1xf32, #tpu.memory_space<vmem>>, %arg6: memref<2x16xf32, #tpu.memory_space<vmem>>, %arg7: memref<2x1xf32, #tpu.memory_space<vmem>>, %arg8: memref<1x384xf32, #tpu.memory_space<vmem>>, %arg9: memref<1x384xf32, #tpu.memory_space<vmem>>, %arg10: memref<32x384xf32, #tpu.memory_space<vmem>>, %arg11: memref<1x384xf32, #tpu.memory_space<vmem>>, %arg12: memref<3x64x512xf32, #tpu.memory_space<vmem>>, %arg13: memref<3x1x512xf32, #tpu.memory_space<vmem>>, %arg14: memref<1x32xf32, #tpu.memory_space<vmem>>, %arg15: memref<1x1xf32, #tpu.memory_space<vmem>>, %arg16: memref<1x32xf32, #tpu.memory_space<vmem>>, %arg17: memref<1x1xf32, #tpu.memory_space<vmem>>, %arg18: memref<32x20xf32, #tpu.memory_space<vmem>>, %arg19: memref<8x20xf32, #tpu.memory_space<vmem>>, %arg20: memref<1x20xf32, #tpu.memory_space<vmem>>, %arg21: memref<20x1xf32, #tpu.memory_space<vmem>>, %arg22: memref<1x1xf32, #tpu.memory_space<vmem>>, %arg23: memref<32x20xf32, #tpu.memory_space<vmem>>, %arg24: memref<8x20xf32, #tpu.memory_space<vmem>>, %arg25: memref<1x20xf32, #tpu.memory_space<vmem>>, %arg26: memref<20x1xf32, #tpu.memory_space<vmem>>, %arg27: memref<1x1xf32, #tpu.memory_space<vmem>>, %arg28: memref<2x8xf32, #tpu.memory_space<vmem>>, %arg29: memref<2x16xf32, #tpu.memory_space<vmem>>, %arg30: memref<2x1xf32, #tpu.memory_space<vmem>>, %arg31: memref<2x1xf32, #tpu.memory_space<vmem>>) attributes {dimension_semantics = [#tpu.dimension_semantics<parallel>], iteration_bounds = array<i64: 1>, scalar_prefetch = 0 : i64, scratch_operands = 0 : i64, tpu.core_type = #tpu.core_type<tc>, window_params = [{transform_indices = @transform_0, window_bounds = array<i64: 2, 8>}, {transform_indices = @transform_1, window_bounds = array<i64: 2, 8>}, {transform_indices = @transform_2, window_bounds = array<i64: 2, 8>}, {transform_indices = @transform_3, window_bounds = array<i64: 2, 8>}, {transform_indices = @transform_4, window_bounds = array<i64: 2, 1>}, {transform_indices = @transform_5, window_bounds = array<i64: 2, 16>}, {transform_indices = @transform_6, window_bounds = array<i64: 2, 1>}, {pipeline_mode = #tpu.pipeline_mode<synchronous>, transform_indices = @transform_7, window_bounds = array<i64: 1, 384>}, {pipeline_mode = #tpu.pipeline_mode<synchronous>, transform_indices = @transform_8, window_bounds = array<i64: 1, 384>}, {pipeline_mode = #tpu.pipeline_mode<synchronous>, transform_indices = @transform_9, window_bounds = array<i64: 32, 384>}, {pipeline_mode = #tpu.pipeline_mode<synchronous>, transform_indices = @transform_10, window_bounds = array<i64: 1, 384>}, {pipeline_mode = #tpu.pipeline_mode<synchronous>, transform_indices = @transform_11, window_bounds = array<i64: 3, 64, 512>}, {pipeline_mode = #tpu.pipeline_mode<synchronous>, transform_indices = @transform_12, window_bounds = array<i64: 3, 1, 512>}, {pipeline_mode = #tpu.pipeline_mode<synchronous>, transform_indices = @transform_13, window_bounds = array<i64: 1, 32>}, {pipeline_mode = #tpu.pipeline_mode<synchronous>, transform_indices = @transform_14, window_bounds = array<i64: 1, 1>}, {pipeline_mode = #tpu.pipeline_mode<synchronous>, transform_indices = @transform_15, window_bounds = array<i64: 1, 32>}, {pipeline_mode = #tpu.pipeline_mode<synchronous>, transform_indices = @transform_16, window_bounds = array<i64: 1, 1>}, {pipeline_mode = #tpu.pipeline_mode<synchronous>, transform_indices = @transform_17, window_bounds = array<i64: 32, 20>}, {pipeline_mode = #tpu.pipeline_mode<synchronous>, transform_indices = @transform_18, window_bounds = array<i64: 8, 20>}, {pipeline_mode = #tpu.pipeline_mode<synchronous>, transform_indices = @transform_19, window_bounds = array<i64: 1, 20>}, {pipeline_mode = #tpu.pipeline_mode<synchronous>, transform_indices = @transform_20, window_bounds = array<i64: 20, 1>}, {pipeline_mode = #tpu.pipeline_mode<synchronous>, transform_indices = @transform_21, window_bounds = array<i64: 1, 1>}, {pipeline_mode = #tpu.pipeline_mode<synchronous>, transform_indices = @transform_22, window_bounds = array<i64: 32, 20>}, {pipeline_mode = #tpu.pipeline_mode<synchronous>, transform_indices = @transform_23, window_bounds = array<i64: 8, 20>}, {pipeline_mode = #tpu.pipeline_mode<synchronous>, transform_indices = @transform_24, window_bounds = array<i64: 1, 20>}, {pipeline_mode = #tpu.pipeline_mode<synchronous>, transform_indices = @transform_25, window_bounds = array<i64: 20, 1>}, {pipeline_mode = #tpu.pipeline_mode<synchronous>, transform_indices = @transform_26, window_bounds = array<i64: 1, 1>}, {transform_indices = @transform_27, window_bounds = array<i64: 2, 8>}, {transform_indices = @transform_28, window_bounds = array<i64: 2, 16>}, {transform_indices = @transform_29, window_bounds = array<i64: 2, 1>}, {transform_indices = @transform_30, window_bounds = array<i64: 2, 1>}]} {
    %c0 = arith.constant 0 : index
    %c0_0 = arith.constant 0 : index
    %0 = vector.load %arg1[%c0, %c0_0] : memref<2x8xf32, #tpu.memory_space<vmem>>, vector<2x8xf32>
    %c0_1 = arith.constant 0 : index
    %c0_2 = arith.constant 0 : index
    %1 = vector.load %arg8[%c0_1, %c0_2] : memref<1x384xf32, #tpu.memory_space<vmem>>, vector<1x384xf32>
    %c0_3 = arith.constant 0 : index
    %c0_4 = arith.constant 0 : index
    %2 = vector.load %arg9[%c0_3, %c0_4] : memref<1x384xf32, #tpu.memory_space<vmem>>, vector<1x384xf32>
    %c0_5 = arith.constant 0 : index
    %c0_6 = arith.constant 0 : index
    %3 = vector.load %arg10[%c0_5, %c0_6] : memref<32x384xf32, #tpu.memory_space<vmem>>, vector<32x384xf32>
    %c0_7 = arith.constant 0 : index
    %c0_8 = arith.constant 0 : index
    %4 = vector.load %arg11[%c0_7, %c0_8] : memref<1x384xf32, #tpu.memory_space<vmem>>, vector<1x384xf32>
    %c0_9 = arith.constant 0 : index
    %c0_10 = arith.constant 0 : index
    %c0_11 = arith.constant 0 : index
    %5 = vector.load %arg13[%c0_9, %c0_10, %c0_11] : memref<3x1x512xf32, #tpu.memory_space<vmem>>, vector<1x1x512xf32>
    %6 = vector.shape_cast %5 : vector<1x1x512xf32> to vector<1x512xf32>
    %c1 = arith.constant 1 : index
    %c0_12 = arith.constant 0 : index
    %c0_13 = arith.constant 0 : index
    %7 = vector.load %arg13[%c1, %c0_12, %c0_13] : memref<3x1x512xf32, #tpu.memory_space<vmem>>, vector<1x1x512xf32>
    %8 = vector.shape_cast %7 : vector<1x1x512xf32> to vector<1x512xf32>
    %c2 = arith.constant 2 : index
    %c0_14 = arith.constant 0 : index
    %c0_15 = arith.constant 0 : index
    %9 = vector.load %arg13[%c2, %c0_14, %c0_15] : memref<3x1x512xf32, #tpu.memory_space<vmem>>, vector<1x1x512xf32>
    %10 = vector.shape_cast %9 : vector<1x1x512xf32> to vector<1x512xf32>
    %cst = arith.constant 0.000000e+00 : f32
    %11 = vector.broadcast %cst : f32 to vector<2x32xf32>
    %cst_16 = arith.constant 0.000000e+00 : f32
    %12 = vector.broadcast %cst_16 : f32 to vector<2x32xf32>
    %cst_17 = arith.constant 0.000000e+00 : f32
    %13 = vector.broadcast %cst_17 : f32 to vector<2x32xf32>
    %cst_18 = arith.constant 0.000000e+00 : f32
    %14 = vector.broadcast %cst_18 : f32 to vector<2x32xf32>
    %15 = vector.extract_strided_slice %0 {offsets = [0, 0], sizes = [2, 1], strides = [1, 1]} : vector<2x8xf32> to vector<2x1xf32>
    %16 = vector.broadcast %15 : vector<2x1xf32> to vector<2x384xf32>
    %17 = vector.broadcast %1 : vector<1x384xf32> to vector<2x384xf32>
    %18 = arith.mulf %16, %17 : vector<2x384xf32>
    %19 = vector.broadcast %2 : vector<1x384xf32> to vector<2x384xf32>
    %20 = arith.addf %18, %19 : vector<2x384xf32>
    %cst_19 = arith.constant dense<0.000000e+00> : vector<2x384xf32>
    %21 = tpu.matmul %11, %3, %cst_19 {dimension_numbers = #tpu.dot_dimension_numbers<[1], [0], [0], [1], [0, 0, 1, 1], [], []>} : vector<2x32xf32>, vector<32x384xf32>, vector<2x384xf32> -> vector<2x384xf32>
    %22 = vector.broadcast %4 : vector<1x384xf32> to vector<2x384xf32>
    %23 = arith.addf %21, %22 : vector<2x384xf32>
    %24 = vector.extract_strided_slice %20 {offsets = [0, 0], sizes = [2, 32], strides = [1, 1]} : vector<2x384xf32> to vector<2x32xf32>
    %25 = vector.extract_strided_slice %23 {offsets = [0, 0], sizes = [2, 32], strides = [1, 1]} : vector<2x384xf32> to vector<2x32xf32>
    %26 = arith.addf %24, %25 : vector<2x32xf32>
    %cst_20 = arith.constant 5.000000e-01 : f32
    %27 = vector.broadcast %cst_20 : f32 to vector<2x32xf32>
    %28 = arith.mulf %27, %26 : vector<2x32xf32>
    %29 = math.tanh %28 : vector<2x32xf32>
    %cst_21 = arith.constant 1.000000e+00 : f32
    %30 = vector.broadcast %cst_21 : f32 to vector<2x32xf32>
    %31 = arith.addf %29, %30 : vector<2x32xf32>
    %cst_22 = arith.constant 5.000000e-01 : f32
    %32 = vector.broadcast %cst_22 : f32 to vector<2x32xf32>
    %33 = arith.mulf %32, %31 : vector<2x32xf32>
    %34 = vector.extract_strided_slice %20 {offsets = [0, 128], sizes = [2, 32], strides = [1, 1]} : vector<2x384xf32> to vector<2x32xf32>
    %35 = vector.extract_strided_slice %23 {offsets = [0, 128], sizes = [2, 32], strides = [1, 1]} : vector<2x384xf32> to vector<2x32xf32>
    %36 = arith.addf %34, %35 : vector<2x32xf32>
    %cst_23 = arith.constant 5.000000e-01 : f32
    %37 = vector.broadcast %cst_23 : f32 to vector<2x32xf32>
    %38 = arith.mulf %37, %36 : vector<2x32xf32>
    %39 = math.tanh %38 : vector<2x32xf32>
    %cst_24 = arith.constant 1.000000e+00 : f32
    %40 = vector.broadcast %cst_24 : f32 to vector<2x32xf32>
    %41 = arith.addf %39, %40 : vector<2x32xf32>
    %cst_25 = arith.constant 5.000000e-01 : f32
    %42 = vector.broadcast %cst_25 : f32 to vector<2x32xf32>
    %43 = arith.mulf %42, %41 : vector<2x32xf32>
    %44 = vector.extract_strided_slice %20 {offsets = [0, 256], sizes = [2, 32], strides = [1, 1]} : vector<2x384xf32> to vector<2x32xf32>
    %45 = vector.extract_strided_slice %23 {offsets = [0, 256], sizes = [2, 32], strides = [1, 1]} : vector<2x384xf32> to vector<2x32xf32>
    %46 = arith.mulf %33, %45 : vector<2x32xf32>
    %47 = arith.addf %44, %46 : vector<2x32xf32>
    %48 = math.tanh %47 : vector<2x32xf32>
    %cst_26 = arith.constant 1.000000e+00 : f32
    %49 = vector.broadcast %cst_26 : f32 to vector<2x32xf32>
    %50 = arith.subf %49, %43 : vector<2x32xf32>
    %51 = arith.mulf %50, %48 : vector<2x32xf32>
    %52 = arith.mulf %43, %11 : vector<2x32xf32>
    %53 = arith.addf %51, %52 : vector<2x32xf32>
    %54 = tpu.concatenate %53, %12 in 1 : vector<2x32xf32>, vector<2x32xf32> -> vector<2x64xf32>
    %c0_27 = arith.constant 0 : index
    %c0_28 = arith.constant 0 : index
    %c0_29 = arith.constant 0 : index
    %55 = vector.load %arg12[%c0_27, %c0_28, %c0_29] : memref<3x64x512xf32, #tpu.memory_space<vmem>>, vector<1x64x512xf32>
    %56 = vector.shape_cast %55 : vector<1x64x512xf32> to vector<64x512xf32>
    %cst_30 = arith.constant dense<0.000000e+00> : vector<2x512xf32>
    %57 = tpu.matmul %54, %56, %cst_30 {dimension_numbers = #tpu.dot_dimension_numbers<[1], [0], [0], [1], [0, 0, 1, 1], [], []>} : vector<2x64xf32>, vector<64x512xf32>, vector<2x512xf32> -> vector<2x512xf32>
    %58 = vector.broadcast %6 : vector<1x512xf32> to vector<2x512xf32>
    %59 = arith.addf %57, %58 : vector<2x512xf32>
    %60 = vector.extract_strided_slice %59 {offsets = [0, 0], sizes = [2, 32], strides = [1, 1]} : vector<2x512xf32> to vector<2x32xf32>
    %cst_31 = arith.constant 5.000000e-01 : f32
    %61 = vector.broadcast %cst_31 : f32 to vector<2x32xf32>
    %62 = arith.mulf %61, %60 : vector<2x32xf32>
    %63 = math.tanh %62 : vector<2x32xf32>
    %cst_32 = arith.constant 1.000000e+00 : f32
    %64 = vector.broadcast %cst_32 : f32 to vector<2x32xf32>
    %65 = arith.addf %63, %64 : vector<2x32xf32>
    %cst_33 = arith.constant 5.000000e-01 : f32
    %66 = vector.broadcast %cst_33 : f32 to vector<2x32xf32>
    %67 = arith.mulf %66, %65 : vector<2x32xf32>
    %68 = vector.extract_strided_slice %59 {offsets = [0, 128], sizes = [2, 32], strides = [1, 1]} : vector<2x512xf32> to vector<2x32xf32>
    %cst_34 = arith.constant 5.000000e-01 : f32
    %69 = vector.broadcast %cst_34 : f32 to vector<2x32xf32>
    %70 = arith.mulf %69, %68 : vector<2x32xf32>
    %71 = math.tanh %70 : vector<2x32xf32>
    %cst_35 = arith.constant 1.000000e+00 : f32
    %72 = vector.broadcast %cst_35 : f32 to vector<2x32xf32>
    %73 = arith.addf %71, %72 : vector<2x32xf32>
    %cst_36 = arith.constant 5.000000e-01 : f32
    %74 = vector.broadcast %cst_36 : f32 to vector<2x32xf32>
    %75 = arith.mulf %74, %73 : vector<2x32xf32>
    %76 = vector.extract_strided_slice %59 {offsets = [0, 256], sizes = [2, 32], strides = [1, 1]} : vector<2x512xf32> to vector<2x32xf32>
    %77 = vector.extract_strided_slice %59 {offsets = [0, 384], sizes = [2, 32], strides = [1, 1]} : vector<2x512xf32> to vector<2x32xf32>
    %78 = arith.mulf %67, %77 : vector<2x32xf32>
    %79 = arith.addf %76, %78 : vector<2x32xf32>
    %80 = math.tanh %79 : vector<2x32xf32>
    %cst_37 = arith.constant 1.000000e+00 : f32
    %81 = vector.broadcast %cst_37 : f32 to vector<2x32xf32>
    %82 = arith.subf %81, %75 : vector<2x32xf32>
    %83 = arith.mulf %82, %80 : vector<2x32xf32>
    %84 = arith.mulf %75, %12 : vector<2x32xf32>
    %85 = arith.addf %83, %84 : vector<2x32xf32>
    %86 = tpu.concatenate %85, %13 in 1 : vector<2x32xf32>, vector<2x32xf32> -> vector<2x64xf32>
    %c1_38 = arith.constant 1 : index
    %c0_39 = arith.constant 0 : index
    %c0_40 = arith.constant 0 : index
    %87 = vector.load %arg12[%c1_38, %c0_39, %c0_40] : memref<3x64x512xf32, #tpu.memory_space<vmem>>, vector<1x64x512xf32>
    %88 = vector.shape_cast %87 : vector<1x64x512xf32> to vector<64x512xf32>
    %cst_41 = arith.constant dense<0.000000e+00> : vector<2x512xf32>
    %89 = tpu.matmul %86, %88, %cst_41 {dimension_numbers = #tpu.dot_dimension_numbers<[1], [0], [0], [1], [0, 0, 1, 1], [], []>} : vector<2x64xf32>, vector<64x512xf32>, vector<2x512xf32> -> vector<2x512xf32>
    %90 = vector.broadcast %8 : vector<1x512xf32> to vector<2x512xf32>
    %91 = arith.addf %89, %90 : vector<2x512xf32>
    %92 = vector.extract_strided_slice %91 {offsets = [0, 0], sizes = [2, 32], strides = [1, 1]} : vector<2x512xf32> to vector<2x32xf32>
    %cst_42 = arith.constant 5.000000e-01 : f32
    %93 = vector.broadcast %cst_42 : f32 to vector<2x32xf32>
    %94 = arith.mulf %93, %92 : vector<2x32xf32>
    %95 = math.tanh %94 : vector<2x32xf32>
    %cst_43 = arith.constant 1.000000e+00 : f32
    %96 = vector.broadcast %cst_43 : f32 to vector<2x32xf32>
    %97 = arith.addf %95, %96 : vector<2x32xf32>
    %cst_44 = arith.constant 5.000000e-01 : f32
    %98 = vector.broadcast %cst_44 : f32 to vector<2x32xf32>
    %99 = arith.mulf %98, %97 : vector<2x32xf32>
    %100 = vector.extract_strided_slice %91 {offsets = [0, 128], sizes = [2, 32], strides = [1, 1]} : vector<2x512xf32> to vector<2x32xf32>
    %cst_45 = arith.constant 5.000000e-01 : f32
    %101 = vector.broadcast %cst_45 : f32 to vector<2x32xf32>
    %102 = arith.mulf %101, %100 : vector<2x32xf32>
    %103 = math.tanh %102 : vector<2x32xf32>
    %cst_46 = arith.constant 1.000000e+00 : f32
    %104 = vector.broadcast %cst_46 : f32 to vector<2x32xf32>
    %105 = arith.addf %103, %104 : vector<2x32xf32>
    %cst_47 = arith.constant 5.000000e-01 : f32
    %106 = vector.broadcast %cst_47 : f32 to vector<2x32xf32>
    %107 = arith.mulf %106, %105 : vector<2x32xf32>
    %108 = vector.extract_strided_slice %91 {offsets = [0, 256], sizes = [2, 32], strides = [1, 1]} : vector<2x512xf32> to vector<2x32xf32>
    %109 = vector.extract_strided_slice %91 {offsets = [0, 384], sizes = [2, 32], strides = [1, 1]} : vector<2x512xf32> to vector<2x32xf32>
    %110 = arith.mulf %99, %109 : vector<2x32xf32>
    %111 = arith.addf %108, %110 : vector<2x32xf32>
    %112 = math.tanh %111 : vector<2x32xf32>
    %cst_48 = arith.constant 1.000000e+00 : f32
    %113 = vector.broadcast %cst_48 : f32 to vector<2x32xf32>
    %114 = arith.subf %113, %107 : vector<2x32xf32>
    %115 = arith.mulf %114, %112 : vector<2x32xf32>
    %116 = arith.mulf %107, %13 : vector<2x32xf32>
    %117 = arith.addf %115, %116 : vector<2x32xf32>
    %118 = tpu.concatenate %117, %14 in 1 : vector<2x32xf32>, vector<2x32xf32> -> vector<2x64xf32>
    %c2_49 = arith.constant 2 : index
    %c0_50 = arith.constant 0 : index
    %c0_51 = arith.constant 0 : index
    %119 = vector.load %arg12[%c2_49, %c0_50, %c0_51] : memref<3x64x512xf32, #tpu.memory_space<vmem>>, vector<1x64x512xf32>
    %120 = vector.shape_cast %119 : vector<1x64x512xf32> to vector<64x512xf32>
    %cst_52 = arith.constant dense<0.000000e+00> : vector<2x512xf32>
    %121 = tpu.matmul %118, %120, %cst_52 {dimension_numbers = #tpu.dot_dimension_numbers<[1], [0], [0], [1], [0, 0, 1, 1], [], []>} : vector<2x64xf32>, vector<64x512xf32>, vector<2x512xf32> -> vector<2x512xf32>
    %122 = vector.broadcast %10 : vector<1x512xf32> to vector<2x512xf32>
    %123 = arith.addf %121, %122 : vector<2x512xf32>
    %124 = vector.extract_strided_slice %123 {offsets = [0, 0], sizes = [2, 32], strides = [1, 1]} : vector<2x512xf32> to vector<2x32xf32>
    %cst_53 = arith.constant 5.000000e-01 : f32
    %125 = vector.broadcast %cst_53 : f32 to vector<2x32xf32>
    %126 = arith.mulf %125, %124 : vector<2x32xf32>
    %127 = math.tanh %126 : vector<2x32xf32>
    %cst_54 = arith.constant 1.000000e+00 : f32
    %128 = vector.broadcast %cst_54 : f32 to vector<2x32xf32>
    %129 = arith.addf %127, %128 : vector<2x32xf32>
    %cst_55 = arith.constant 5.000000e-01 : f32
    %130 = vector.broadcast %cst_55 : f32 to vector<2x32xf32>
    %131 = arith.mulf %130, %129 : vector<2x32xf32>
    %132 = vector.extract_strided_slice %123 {offsets = [0, 128], sizes = [2, 32], strides = [1, 1]} : vector<2x512xf32> to vector<2x32xf32>
    %cst_56 = arith.constant 5.000000e-01 : f32
    %133 = vector.broadcast %cst_56 : f32 to vector<2x32xf32>
    %134 = arith.mulf %133, %132 : vector<2x32xf32>
    %135 = math.tanh %134 : vector<2x32xf32>
    %cst_57 = arith.constant 1.000000e+00 : f32
    %136 = vector.broadcast %cst_57 : f32 to vector<2x32xf32>
    %137 = arith.addf %135, %136 : vector<2x32xf32>
    %cst_58 = arith.constant 5.000000e-01 : f32
    %138 = vector.broadcast %cst_58 : f32 to vector<2x32xf32>
    %139 = arith.mulf %138, %137 : vector<2x32xf32>
    %140 = vector.extract_strided_slice %123 {offsets = [0, 256], sizes = [2, 32], strides = [1, 1]} : vector<2x512xf32> to vector<2x32xf32>
    %141 = vector.extract_strided_slice %123 {offsets = [0, 384], sizes = [2, 32], strides = [1, 1]} : vector<2x512xf32> to vector<2x32xf32>
    %142 = arith.mulf %131, %141 : vector<2x32xf32>
    %143 = arith.addf %140, %142 : vector<2x32xf32>
    %144 = math.tanh %143 : vector<2x32xf32>
    %cst_59 = arith.constant 1.000000e+00 : f32
    %145 = vector.broadcast %cst_59 : f32 to vector<2x32xf32>
    %146 = arith.subf %145, %139 : vector<2x32xf32>
    %147 = arith.mulf %146, %144 : vector<2x32xf32>
    %148 = arith.mulf %139, %14 : vector<2x32xf32>
    %149 = arith.addf %147, %148 : vector<2x32xf32>
    %150 = vector.extract_strided_slice %0 {offsets = [0, 1], sizes = [2, 1], strides = [1, 1]} : vector<2x8xf32> to vector<2x1xf32>
    %151 = vector.broadcast %150 : vector<2x1xf32> to vector<2x384xf32>
    %152 = vector.broadcast %1 : vector<1x384xf32> to vector<2x384xf32>
    %153 = arith.mulf %151, %152 : vector<2x384xf32>
    %154 = vector.broadcast %2 : vector<1x384xf32> to vector<2x384xf32>
    %155 = arith.addf %153, %154 : vector<2x384xf32>
    %cst_60 = arith.constant dense<0.000000e+00> : vector<2x384xf32>
    %156 = tpu.matmul %53, %3, %cst_60 {dimension_numbers = #tpu.dot_dimension_numbers<[1], [0], [0], [1], [0, 0, 1, 1], [], []>} : vector<2x32xf32>, vector<32x384xf32>, vector<2x384xf32> -> vector<2x384xf32>
    %157 = vector.broadcast %4 : vector<1x384xf32> to vector<2x384xf32>
    %158 = arith.addf %156, %157 : vector<2x384xf32>
    %159 = vector.extract_strided_slice %155 {offsets = [0, 0], sizes = [2, 32], strides = [1, 1]} : vector<2x384xf32> to vector<2x32xf32>
    %160 = vector.extract_strided_slice %158 {offsets = [0, 0], sizes = [2, 32], strides = [1, 1]} : vector<2x384xf32> to vector<2x32xf32>
    %161 = arith.addf %159, %160 : vector<2x32xf32>
    %cst_61 = arith.constant 5.000000e-01 : f32
    %162 = vector.broadcast %cst_61 : f32 to vector<2x32xf32>
    %163 = arith.mulf %162, %161 : vector<2x32xf32>
    %164 = math.tanh %163 : vector<2x32xf32>
    %cst_62 = arith.constant 1.000000e+00 : f32
    %165 = vector.broadcast %cst_62 : f32 to vector<2x32xf32>
    %166 = arith.addf %164, %165 : vector<2x32xf32>
    %cst_63 = arith.constant 5.000000e-01 : f32
    %167 = vector.broadcast %cst_63 : f32 to vector<2x32xf32>
    %168 = arith.mulf %167, %166 : vector<2x32xf32>
    %169 = vector.extract_strided_slice %155 {offsets = [0, 128], sizes = [2, 32], strides = [1, 1]} : vector<2x384xf32> to vector<2x32xf32>
    %170 = vector.extract_strided_slice %158 {offsets = [0, 128], sizes = [2, 32], strides = [1, 1]} : vector<2x384xf32> to vector<2x32xf32>
    %171 = arith.addf %169, %170 : vector<2x32xf32>
    %cst_64 = arith.constant 5.000000e-01 : f32
    %172 = vector.broadcast %cst_64 : f32 to vector<2x32xf32>
    %173 = arith.mulf %172, %171 : vector<2x32xf32>
    %174 = math.tanh %173 : vector<2x32xf32>
    %cst_65 = arith.constant 1.000000e+00 : f32
    %175 = vector.broadcast %cst_65 : f32 to vector<2x32xf32>
    %176 = arith.addf %174, %175 : vector<2x32xf32>
    %cst_66 = arith.constant 5.000000e-01 : f32
    %177 = vector.broadcast %cst_66 : f32 to vector<2x32xf32>
    %178 = arith.mulf %177, %176 : vector<2x32xf32>
    %179 = vector.extract_strided_slice %155 {offsets = [0, 256], sizes = [2, 32], strides = [1, 1]} : vector<2x384xf32> to vector<2x32xf32>
    %180 = vector.extract_strided_slice %158 {offsets = [0, 256], sizes = [2, 32], strides = [1, 1]} : vector<2x384xf32> to vector<2x32xf32>
    %181 = arith.mulf %168, %180 : vector<2x32xf32>
    %182 = arith.addf %179, %181 : vector<2x32xf32>
    %183 = math.tanh %182 : vector<2x32xf32>
    %cst_67 = arith.constant 1.000000e+00 : f32
    %184 = vector.broadcast %cst_67 : f32 to vector<2x32xf32>
    %185 = arith.subf %184, %178 : vector<2x32xf32>
    %186 = arith.mulf %185, %183 : vector<2x32xf32>
    %187 = arith.mulf %178, %53 : vector<2x32xf32>
    %188 = arith.addf %186, %187 : vector<2x32xf32>
    %189 = tpu.concatenate %188, %85 in 1 : vector<2x32xf32>, vector<2x32xf32> -> vector<2x64xf32>
    %c0_68 = arith.constant 0 : index
    %c0_69 = arith.constant 0 : index
    %c0_70 = arith.constant 0 : index
    %190 = vector.load %arg12[%c0_68, %c0_69, %c0_70] : memref<3x64x512xf32, #tpu.memory_space<vmem>>, vector<1x64x512xf32>
    %191 = vector.shape_cast %190 : vector<1x64x512xf32> to vector<64x512xf32>
    %cst_71 = arith.constant dense<0.000000e+00> : vector<2x512xf32>
    %192 = tpu.matmul %189, %191, %cst_71 {dimension_numbers = #tpu.dot_dimension_numbers<[1], [0], [0], [1], [0, 0, 1, 1], [], []>} : vector<2x64xf32>, vector<64x512xf32>, vector<2x512xf32> -> vector<2x512xf32>
    %193 = vector.broadcast %6 : vector<1x512xf32> to vector<2x512xf32>
    %194 = arith.addf %192, %193 : vector<2x512xf32>
    %195 = vector.extract_strided_slice %194 {offsets = [0, 0], sizes = [2, 32], strides = [1, 1]} : vector<2x512xf32> to vector<2x32xf32>
    %cst_72 = arith.constant 5.000000e-01 : f32
    %196 = vector.broadcast %cst_72 : f32 to vector<2x32xf32>
    %197 = arith.mulf %196, %195 : vector<2x32xf32>
    %198 = math.tanh %197 : vector<2x32xf32>
    %cst_73 = arith.constant 1.000000e+00 : f32
    %199 = vector.broadcast %cst_73 : f32 to vector<2x32xf32>
    %200 = arith.addf %198, %199 : vector<2x32xf32>
    %cst_74 = arith.constant 5.000000e-01 : f32
    %201 = vector.broadcast %cst_74 : f32 to vector<2x32xf32>
    %202 = arith.mulf %201, %200 : vector<2x32xf32>
    %203 = vector.extract_strided_slice %194 {offsets = [0, 128], sizes = [2, 32], strides = [1, 1]} : vector<2x512xf32> to vector<2x32xf32>
    %cst_75 = arith.constant 5.000000e-01 : f32
    %204 = vector.broadcast %cst_75 : f32 to vector<2x32xf32>
    %205 = arith.mulf %204, %203 : vector<2x32xf32>
    %206 = math.tanh %205 : vector<2x32xf32>
    %cst_76 = arith.constant 1.000000e+00 : f32
    %207 = vector.broadcast %cst_76 : f32 to vector<2x32xf32>
    %208 = arith.addf %206, %207 : vector<2x32xf32>
    %cst_77 = arith.constant 5.000000e-01 : f32
    %209 = vector.broadcast %cst_77 : f32 to vector<2x32xf32>
    %210 = arith.mulf %209, %208 : vector<2x32xf32>
    %211 = vector.extract_strided_slice %194 {offsets = [0, 256], sizes = [2, 32], strides = [1, 1]} : vector<2x512xf32> to vector<2x32xf32>
    %212 = vector.extract_strided_slice %194 {offsets = [0, 384], sizes = [2, 32], strides = [1, 1]} : vector<2x512xf32> to vector<2x32xf32>
    %213 = arith.mulf %202, %212 : vector<2x32xf32>
    %214 = arith.addf %211, %213 : vector<2x32xf32>
    %215 = math.tanh %214 : vector<2x32xf32>
    %cst_78 = arith.constant 1.000000e+00 : f32
    %216 = vector.broadcast %cst_78 : f32 to vector<2x32xf32>
    %217 = arith.subf %216, %210 : vector<2x32xf32>
    %218 = arith.mulf %217, %215 : vector<2x32xf32>
    %219 = arith.mulf %210, %85 : vector<2x32xf32>
    %220 = arith.addf %218, %219 : vector<2x32xf32>
    %221 = tpu.concatenate %220, %117 in 1 : vector<2x32xf32>, vector<2x32xf32> -> vector<2x64xf32>
    %c1_79 = arith.constant 1 : index
    %c0_80 = arith.constant 0 : index
    %c0_81 = arith.constant 0 : index
    %222 = vector.load %arg12[%c1_79, %c0_80, %c0_81] : memref<3x64x512xf32, #tpu.memory_space<vmem>>, vector<1x64x512xf32>
    %223 = vector.shape_cast %222 : vector<1x64x512xf32> to vector<64x512xf32>
    %cst_82 = arith.constant dense<0.000000e+00> : vector<2x512xf32>
    %224 = tpu.matmul %221, %223, %cst_82 {dimension_numbers = #tpu.dot_dimension_numbers<[1], [0], [0], [1], [0, 0, 1, 1], [], []>} : vector<2x64xf32>, vector<64x512xf32>, vector<2x512xf32> -> vector<2x512xf32>
    %225 = vector.broadcast %8 : vector<1x512xf32> to vector<2x512xf32>
    %226 = arith.addf %224, %225 : vector<2x512xf32>
    %227 = vector.extract_strided_slice %226 {offsets = [0, 0], sizes = [2, 32], strides = [1, 1]} : vector<2x512xf32> to vector<2x32xf32>
    %cst_83 = arith.constant 5.000000e-01 : f32
    %228 = vector.broadcast %cst_83 : f32 to vector<2x32xf32>
    %229 = arith.mulf %228, %227 : vector<2x32xf32>
    %230 = math.tanh %229 : vector<2x32xf32>
    %cst_84 = arith.constant 1.000000e+00 : f32
    %231 = vector.broadcast %cst_84 : f32 to vector<2x32xf32>
    %232 = arith.addf %230, %231 : vector<2x32xf32>
    %cst_85 = arith.constant 5.000000e-01 : f32
    %233 = vector.broadcast %cst_85 : f32 to vector<2x32xf32>
    %234 = arith.mulf %233, %232 : vector<2x32xf32>
    %235 = vector.extract_strided_slice %226 {offsets = [0, 128], sizes = [2, 32], strides = [1, 1]} : vector<2x512xf32> to vector<2x32xf32>
    %cst_86 = arith.constant 5.000000e-01 : f32
    %236 = vector.broadcast %cst_86 : f32 to vector<2x32xf32>
    %237 = arith.mulf %236, %235 : vector<2x32xf32>
    %238 = math.tanh %237 : vector<2x32xf32>
    %cst_87 = arith.constant 1.000000e+00 : f32
    %239 = vector.broadcast %cst_87 : f32 to vector<2x32xf32>
    %240 = arith.addf %238, %239 : vector<2x32xf32>
    %cst_88 = arith.constant 5.000000e-01 : f32
    %241 = vector.broadcast %cst_88 : f32 to vector<2x32xf32>
    %242 = arith.mulf %241, %240 : vector<2x32xf32>
    %243 = vector.extract_strided_slice %226 {offsets = [0, 256], sizes = [2, 32], strides = [1, 1]} : vector<2x512xf32> to vector<2x32xf32>
    %244 = vector.extract_strided_slice %226 {offsets = [0, 384], sizes = [2, 32], strides = [1, 1]} : vector<2x512xf32> to vector<2x32xf32>
    %245 = arith.mulf %234, %244 : vector<2x32xf32>
    %246 = arith.addf %243, %245 : vector<2x32xf32>
    %247 = math.tanh %246 : vector<2x32xf32>
    %cst_89 = arith.constant 1.000000e+00 : f32
    %248 = vector.broadcast %cst_89 : f32 to vector<2x32xf32>
    %249 = arith.subf %248, %242 : vector<2x32xf32>
    %250 = arith.mulf %249, %247 : vector<2x32xf32>
    %251 = arith.mulf %242, %117 : vector<2x32xf32>
    %252 = arith.addf %250, %251 : vector<2x32xf32>
    %253 = tpu.concatenate %252, %149 in 1 : vector<2x32xf32>, vector<2x32xf32> -> vector<2x64xf32>
    %c2_90 = arith.constant 2 : index
    %c0_91 = arith.constant 0 : index
    %c0_92 = arith.constant 0 : index
    %254 = vector.load %arg12[%c2_90, %c0_91, %c0_92] : memref<3x64x512xf32, #tpu.memory_space<vmem>>, vector<1x64x512xf32>
    %255 = vector.shape_cast %254 : vector<1x64x512xf32> to vector<64x512xf32>
    %cst_93 = arith.constant dense<0.000000e+00> : vector<2x512xf32>
    %256 = tpu.matmul %253, %255, %cst_93 {dimension_numbers = #tpu.dot_dimension_numbers<[1], [0], [0], [1], [0, 0, 1, 1], [], []>} : vector<2x64xf32>, vector<64x512xf32>, vector<2x512xf32> -> vector<2x512xf32>
    %257 = vector.broadcast %10 : vector<1x512xf32> to vector<2x512xf32>
    %258 = arith.addf %256, %257 : vector<2x512xf32>
    %259 = vector.extract_strided_slice %258 {offsets = [0, 0], sizes = [2, 32], strides = [1, 1]} : vector<2x512xf32> to vector<2x32xf32>
    %cst_94 = arith.constant 5.000000e-01 : f32
    %260 = vector.broadcast %cst_94 : f32 to vector<2x32xf32>
    %261 = arith.mulf %260, %259 : vector<2x32xf32>
    %262 = math.tanh %261 : vector<2x32xf32>
    %cst_95 = arith.constant 1.000000e+00 : f32
    %263 = vector.broadcast %cst_95 : f32 to vector<2x32xf32>
    %264 = arith.addf %262, %263 : vector<2x32xf32>
    %cst_96 = arith.constant 5.000000e-01 : f32
    %265 = vector.broadcast %cst_96 : f32 to vector<2x32xf32>
    %266 = arith.mulf %265, %264 : vector<2x32xf32>
    %267 = vector.extract_strided_slice %258 {offsets = [0, 128], sizes = [2, 32], strides = [1, 1]} : vector<2x512xf32> to vector<2x32xf32>
    %cst_97 = arith.constant 5.000000e-01 : f32
    %268 = vector.broadcast %cst_97 : f32 to vector<2x32xf32>
    %269 = arith.mulf %268, %267 : vector<2x32xf32>
    %270 = math.tanh %269 : vector<2x32xf32>
    %cst_98 = arith.constant 1.000000e+00 : f32
    %271 = vector.broadcast %cst_98 : f32 to vector<2x32xf32>
    %272 = arith.addf %270, %271 : vector<2x32xf32>
    %cst_99 = arith.constant 5.000000e-01 : f32
    %273 = vector.broadcast %cst_99 : f32 to vector<2x32xf32>
    %274 = arith.mulf %273, %272 : vector<2x32xf32>
    %275 = vector.extract_strided_slice %258 {offsets = [0, 256], sizes = [2, 32], strides = [1, 1]} : vector<2x512xf32> to vector<2x32xf32>
    %276 = vector.extract_strided_slice %258 {offsets = [0, 384], sizes = [2, 32], strides = [1, 1]} : vector<2x512xf32> to vector<2x32xf32>
    %277 = arith.mulf %266, %276 : vector<2x32xf32>
    %278 = arith.addf %275, %277 : vector<2x32xf32>
    %279 = math.tanh %278 : vector<2x32xf32>
    %cst_100 = arith.constant 1.000000e+00 : f32
    %280 = vector.broadcast %cst_100 : f32 to vector<2x32xf32>
    %281 = arith.subf %280, %274 : vector<2x32xf32>
    %282 = arith.mulf %281, %279 : vector<2x32xf32>
    %283 = arith.mulf %274, %149 : vector<2x32xf32>
    %284 = arith.addf %282, %283 : vector<2x32xf32>
    %285 = vector.extract_strided_slice %0 {offsets = [0, 2], sizes = [2, 1], strides = [1, 1]} : vector<2x8xf32> to vector<2x1xf32>
    %286 = vector.broadcast %285 : vector<2x1xf32> to vector<2x384xf32>
    %287 = vector.broadcast %1 : vector<1x384xf32> to vector<2x384xf32>
    %288 = arith.mulf %286, %287 : vector<2x384xf32>
    %289 = vector.broadcast %2 : vector<1x384xf32> to vector<2x384xf32>
    %290 = arith.addf %288, %289 : vector<2x384xf32>
    %cst_101 = arith.constant dense<0.000000e+00> : vector<2x384xf32>
    %291 = tpu.matmul %188, %3, %cst_101 {dimension_numbers = #tpu.dot_dimension_numbers<[1], [0], [0], [1], [0, 0, 1, 1], [], []>} : vector<2x32xf32>, vector<32x384xf32>, vector<2x384xf32> -> vector<2x384xf32>
    %292 = vector.broadcast %4 : vector<1x384xf32> to vector<2x384xf32>
    %293 = arith.addf %291, %292 : vector<2x384xf32>
    %294 = vector.extract_strided_slice %290 {offsets = [0, 0], sizes = [2, 32], strides = [1, 1]} : vector<2x384xf32> to vector<2x32xf32>
    %295 = vector.extract_strided_slice %293 {offsets = [0, 0], sizes = [2, 32], strides = [1, 1]} : vector<2x384xf32> to vector<2x32xf32>
    %296 = arith.addf %294, %295 : vector<2x32xf32>
    %cst_102 = arith.constant 5.000000e-01 : f32
    %297 = vector.broadcast %cst_102 : f32 to vector<2x32xf32>
    %298 = arith.mulf %297, %296 : vector<2x32xf32>
    %299 = math.tanh %298 : vector<2x32xf32>
    %cst_103 = arith.constant 1.000000e+00 : f32
    %300 = vector.broadcast %cst_103 : f32 to vector<2x32xf32>
    %301 = arith.addf %299, %300 : vector<2x32xf32>
    %cst_104 = arith.constant 5.000000e-01 : f32
    %302 = vector.broadcast %cst_104 : f32 to vector<2x32xf32>
    %303 = arith.mulf %302, %301 : vector<2x32xf32>
    %304 = vector.extract_strided_slice %290 {offsets = [0, 128], sizes = [2, 32], strides = [1, 1]} : vector<2x384xf32> to vector<2x32xf32>
    %305 = vector.extract_strided_slice %293 {offsets = [0, 128], sizes = [2, 32], strides = [1, 1]} : vector<2x384xf32> to vector<2x32xf32>
    %306 = arith.addf %304, %305 : vector<2x32xf32>
    %cst_105 = arith.constant 5.000000e-01 : f32
    %307 = vector.broadcast %cst_105 : f32 to vector<2x32xf32>
    %308 = arith.mulf %307, %306 : vector<2x32xf32>
    %309 = math.tanh %308 : vector<2x32xf32>
    %cst_106 = arith.constant 1.000000e+00 : f32
    %310 = vector.broadcast %cst_106 : f32 to vector<2x32xf32>
    %311 = arith.addf %309, %310 : vector<2x32xf32>
    %cst_107 = arith.constant 5.000000e-01 : f32
    %312 = vector.broadcast %cst_107 : f32 to vector<2x32xf32>
    %313 = arith.mulf %312, %311 : vector<2x32xf32>
    %314 = vector.extract_strided_slice %290 {offsets = [0, 256], sizes = [2, 32], strides = [1, 1]} : vector<2x384xf32> to vector<2x32xf32>
    %315 = vector.extract_strided_slice %293 {offsets = [0, 256], sizes = [2, 32], strides = [1, 1]} : vector<2x384xf32> to vector<2x32xf32>
    %316 = arith.mulf %303, %315 : vector<2x32xf32>
    %317 = arith.addf %314, %316 : vector<2x32xf32>
    %318 = math.tanh %317 : vector<2x32xf32>
    %cst_108 = arith.constant 1.000000e+00 : f32
    %319 = vector.broadcast %cst_108 : f32 to vector<2x32xf32>
    %320 = arith.subf %319, %313 : vector<2x32xf32>
    %321 = arith.mulf %320, %318 : vector<2x32xf32>
    %322 = arith.mulf %313, %188 : vector<2x32xf32>
    %323 = arith.addf %321, %322 : vector<2x32xf32>
    %324 = tpu.concatenate %323, %220 in 1 : vector<2x32xf32>, vector<2x32xf32> -> vector<2x64xf32>
    %c0_109 = arith.constant 0 : index
    %c0_110 = arith.constant 0 : index
    %c0_111 = arith.constant 0 : index
    %325 = vector.load %arg12[%c0_109, %c0_110, %c0_111] : memref<3x64x512xf32, #tpu.memory_space<vmem>>, vector<1x64x512xf32>
    %326 = vector.shape_cast %325 : vector<1x64x512xf32> to vector<64x512xf32>
    %cst_112 = arith.constant dense<0.000000e+00> : vector<2x512xf32>
    %327 = tpu.matmul %324, %326, %cst_112 {dimension_numbers = #tpu.dot_dimension_numbers<[1], [0], [0], [1], [0, 0, 1, 1], [], []>} : vector<2x64xf32>, vector<64x512xf32>, vector<2x512xf32> -> vector<2x512xf32>
    %328 = vector.broadcast %6 : vector<1x512xf32> to vector<2x512xf32>
    %329 = arith.addf %327, %328 : vector<2x512xf32>
    %330 = vector.extract_strided_slice %329 {offsets = [0, 0], sizes = [2, 32], strides = [1, 1]} : vector<2x512xf32> to vector<2x32xf32>
    %cst_113 = arith.constant 5.000000e-01 : f32
    %331 = vector.broadcast %cst_113 : f32 to vector<2x32xf32>
    %332 = arith.mulf %331, %330 : vector<2x32xf32>
    %333 = math.tanh %332 : vector<2x32xf32>
    %cst_114 = arith.constant 1.000000e+00 : f32
    %334 = vector.broadcast %cst_114 : f32 to vector<2x32xf32>
    %335 = arith.addf %333, %334 : vector<2x32xf32>
    %cst_115 = arith.constant 5.000000e-01 : f32
    %336 = vector.broadcast %cst_115 : f32 to vector<2x32xf32>
    %337 = arith.mulf %336, %335 : vector<2x32xf32>
    %338 = vector.extract_strided_slice %329 {offsets = [0, 128], sizes = [2, 32], strides = [1, 1]} : vector<2x512xf32> to vector<2x32xf32>
    %cst_116 = arith.constant 5.000000e-01 : f32
    %339 = vector.broadcast %cst_116 : f32 to vector<2x32xf32>
    %340 = arith.mulf %339, %338 : vector<2x32xf32>
    %341 = math.tanh %340 : vector<2x32xf32>
    %cst_117 = arith.constant 1.000000e+00 : f32
    %342 = vector.broadcast %cst_117 : f32 to vector<2x32xf32>
    %343 = arith.addf %341, %342 : vector<2x32xf32>
    %cst_118 = arith.constant 5.000000e-01 : f32
    %344 = vector.broadcast %cst_118 : f32 to vector<2x32xf32>
    %345 = arith.mulf %344, %343 : vector<2x32xf32>
    %346 = vector.extract_strided_slice %329 {offsets = [0, 256], sizes = [2, 32], strides = [1, 1]} : vector<2x512xf32> to vector<2x32xf32>
    %347 = vector.extract_strided_slice %329 {offsets = [0, 384], sizes = [2, 32], strides = [1, 1]} : vector<2x512xf32> to vector<2x32xf32>
    %348 = arith.mulf %337, %347 : vector<2x32xf32>
    %349 = arith.addf %346, %348 : vector<2x32xf32>
    %350 = math.tanh %349 : vector<2x32xf32>
    %cst_119 = arith.constant 1.000000e+00 : f32
    %351 = vector.broadcast %cst_119 : f32 to vector<2x32xf32>
    %352 = arith.subf %351, %345 : vector<2x32xf32>
    %353 = arith.mulf %352, %350 : vector<2x32xf32>
    %354 = arith.mulf %345, %220 : vector<2x32xf32>
    %355 = arith.addf %353, %354 : vector<2x32xf32>
    %356 = tpu.concatenate %355, %252 in 1 : vector<2x32xf32>, vector<2x32xf32> -> vector<2x64xf32>
    %c1_120 = arith.constant 1 : index
    %c0_121 = arith.constant 0 : index
    %c0_122 = arith.constant 0 : index
    %357 = vector.load %arg12[%c1_120, %c0_121, %c0_122] : memref<3x64x512xf32, #tpu.memory_space<vmem>>, vector<1x64x512xf32>
    %358 = vector.shape_cast %357 : vector<1x64x512xf32> to vector<64x512xf32>
    %cst_123 = arith.constant dense<0.000000e+00> : vector<2x512xf32>
    %359 = tpu.matmul %356, %358, %cst_123 {dimension_numbers = #tpu.dot_dimension_numbers<[1], [0], [0], [1], [0, 0, 1, 1], [], []>} : vector<2x64xf32>, vector<64x512xf32>, vector<2x512xf32> -> vector<2x512xf32>
    %360 = vector.broadcast %8 : vector<1x512xf32> to vector<2x512xf32>
    %361 = arith.addf %359, %360 : vector<2x512xf32>
    %362 = vector.extract_strided_slice %361 {offsets = [0, 0], sizes = [2, 32], strides = [1, 1]} : vector<2x512xf32> to vector<2x32xf32>
    %cst_124 = arith.constant 5.000000e-01 : f32
    %363 = vector.broadcast %cst_124 : f32 to vector<2x32xf32>
    %364 = arith.mulf %363, %362 : vector<2x32xf32>
    %365 = math.tanh %364 : vector<2x32xf32>
    %cst_125 = arith.constant 1.000000e+00 : f32
    %366 = vector.broadcast %cst_125 : f32 to vector<2x32xf32>
    %367 = arith.addf %365, %366 : vector<2x32xf32>
    %cst_126 = arith.constant 5.000000e-01 : f32
    %368 = vector.broadcast %cst_126 : f32 to vector<2x32xf32>
    %369 = arith.mulf %368, %367 : vector<2x32xf32>
    %370 = vector.extract_strided_slice %361 {offsets = [0, 128], sizes = [2, 32], strides = [1, 1]} : vector<2x512xf32> to vector<2x32xf32>
    %cst_127 = arith.constant 5.000000e-01 : f32
    %371 = vector.broadcast %cst_127 : f32 to vector<2x32xf32>
    %372 = arith.mulf %371, %370 : vector<2x32xf32>
    %373 = math.tanh %372 : vector<2x32xf32>
    %cst_128 = arith.constant 1.000000e+00 : f32
    %374 = vector.broadcast %cst_128 : f32 to vector<2x32xf32>
    %375 = arith.addf %373, %374 : vector<2x32xf32>
    %cst_129 = arith.constant 5.000000e-01 : f32
    %376 = vector.broadcast %cst_129 : f32 to vector<2x32xf32>
    %377 = arith.mulf %376, %375 : vector<2x32xf32>
    %378 = vector.extract_strided_slice %361 {offsets = [0, 256], sizes = [2, 32], strides = [1, 1]} : vector<2x512xf32> to vector<2x32xf32>
    %379 = vector.extract_strided_slice %361 {offsets = [0, 384], sizes = [2, 32], strides = [1, 1]} : vector<2x512xf32> to vector<2x32xf32>
    %380 = arith.mulf %369, %379 : vector<2x32xf32>
    %381 = arith.addf %378, %380 : vector<2x32xf32>
    %382 = math.tanh %381 : vector<2x32xf32>
    %cst_130 = arith.constant 1.000000e+00 : f32
    %383 = vector.broadcast %cst_130 : f32 to vector<2x32xf32>
    %384 = arith.subf %383, %377 : vector<2x32xf32>
    %385 = arith.mulf %384, %382 : vector<2x32xf32>
    %386 = arith.mulf %377, %252 : vector<2x32xf32>
    %387 = arith.addf %385, %386 : vector<2x32xf32>
    %388 = tpu.concatenate %387, %284 in 1 : vector<2x32xf32>, vector<2x32xf32> -> vector<2x64xf32>
    %c2_131 = arith.constant 2 : index
    %c0_132 = arith.constant 0 : index
    %c0_133 = arith.constant 0 : index
    %389 = vector.load %arg12[%c2_131, %c0_132, %c0_133] : memref<3x64x512xf32, #tpu.memory_space<vmem>>, vector<1x64x512xf32>
    %390 = vector.shape_cast %389 : vector<1x64x512xf32> to vector<64x512xf32>
    %cst_134 = arith.constant dense<0.000000e+00> : vector<2x512xf32>
    %391 = tpu.matmul %388, %390, %cst_134 {dimension_numbers = #tpu.dot_dimension_numbers<[1], [0], [0], [1], [0, 0, 1, 1], [], []>} : vector<2x64xf32>, vector<64x512xf32>, vector<2x512xf32> -> vector<2x512xf32>
    %392 = vector.broadcast %10 : vector<1x512xf32> to vector<2x512xf32>
    %393 = arith.addf %391, %392 : vector<2x512xf32>
    %394 = vector.extract_strided_slice %393 {offsets = [0, 0], sizes = [2, 32], strides = [1, 1]} : vector<2x512xf32> to vector<2x32xf32>
    %cst_135 = arith.constant 5.000000e-01 : f32
    %395 = vector.broadcast %cst_135 : f32 to vector<2x32xf32>
    %396 = arith.mulf %395, %394 : vector<2x32xf32>
    %397 = math.tanh %396 : vector<2x32xf32>
    %cst_136 = arith.constant 1.000000e+00 : f32
    %398 = vector.broadcast %cst_136 : f32 to vector<2x32xf32>
    %399 = arith.addf %397, %398 : vector<2x32xf32>
    %cst_137 = arith.constant 5.000000e-01 : f32
    %400 = vector.broadcast %cst_137 : f32 to vector<2x32xf32>
    %401 = arith.mulf %400, %399 : vector<2x32xf32>
    %402 = vector.extract_strided_slice %393 {offsets = [0, 128], sizes = [2, 32], strides = [1, 1]} : vector<2x512xf32> to vector<2x32xf32>
    %cst_138 = arith.constant 5.000000e-01 : f32
    %403 = vector.broadcast %cst_138 : f32 to vector<2x32xf32>
    %404 = arith.mulf %403, %402 : vector<2x32xf32>
    %405 = math.tanh %404 : vector<2x32xf32>
    %cst_139 = arith.constant 1.000000e+00 : f32
    %406 = vector.broadcast %cst_139 : f32 to vector<2x32xf32>
    %407 = arith.addf %405, %406 : vector<2x32xf32>
    %cst_140 = arith.constant 5.000000e-01 : f32
    %408 = vector.broadcast %cst_140 : f32 to vector<2x32xf32>
    %409 = arith.mulf %408, %407 : vector<2x32xf32>
    %410 = vector.extract_strided_slice %393 {offsets = [0, 256], sizes = [2, 32], strides = [1, 1]} : vector<2x512xf32> to vector<2x32xf32>
    %411 = vector.extract_strided_slice %393 {offsets = [0, 384], sizes = [2, 32], strides = [1, 1]} : vector<2x512xf32> to vector<2x32xf32>
    %412 = arith.mulf %401, %411 : vector<2x32xf32>
    %413 = arith.addf %410, %412 : vector<2x32xf32>
    %414 = math.tanh %413 : vector<2x32xf32>
    %cst_141 = arith.constant 1.000000e+00 : f32
    %415 = vector.broadcast %cst_141 : f32 to vector<2x32xf32>
    %416 = arith.subf %415, %409 : vector<2x32xf32>
    %417 = arith.mulf %416, %414 : vector<2x32xf32>
    %418 = arith.mulf %409, %284 : vector<2x32xf32>
    %419 = arith.addf %417, %418 : vector<2x32xf32>
    %420 = vector.extract_strided_slice %0 {offsets = [0, 3], sizes = [2, 1], strides = [1, 1]} : vector<2x8xf32> to vector<2x1xf32>
    %421 = vector.broadcast %420 : vector<2x1xf32> to vector<2x384xf32>
    %422 = vector.broadcast %1 : vector<1x384xf32> to vector<2x384xf32>
    %423 = arith.mulf %421, %422 : vector<2x384xf32>
    %424 = vector.broadcast %2 : vector<1x384xf32> to vector<2x384xf32>
    %425 = arith.addf %423, %424 : vector<2x384xf32>
    %cst_142 = arith.constant dense<0.000000e+00> : vector<2x384xf32>
    %426 = tpu.matmul %323, %3, %cst_142 {dimension_numbers = #tpu.dot_dimension_numbers<[1], [0], [0], [1], [0, 0, 1, 1], [], []>} : vector<2x32xf32>, vector<32x384xf32>, vector<2x384xf32> -> vector<2x384xf32>
    %427 = vector.broadcast %4 : vector<1x384xf32> to vector<2x384xf32>
    %428 = arith.addf %426, %427 : vector<2x384xf32>
    %429 = vector.extract_strided_slice %425 {offsets = [0, 0], sizes = [2, 32], strides = [1, 1]} : vector<2x384xf32> to vector<2x32xf32>
    %430 = vector.extract_strided_slice %428 {offsets = [0, 0], sizes = [2, 32], strides = [1, 1]} : vector<2x384xf32> to vector<2x32xf32>
    %431 = arith.addf %429, %430 : vector<2x32xf32>
    %cst_143 = arith.constant 5.000000e-01 : f32
    %432 = vector.broadcast %cst_143 : f32 to vector<2x32xf32>
    %433 = arith.mulf %432, %431 : vector<2x32xf32>
    %434 = math.tanh %433 : vector<2x32xf32>
    %cst_144 = arith.constant 1.000000e+00 : f32
    %435 = vector.broadcast %cst_144 : f32 to vector<2x32xf32>
    %436 = arith.addf %434, %435 : vector<2x32xf32>
    %cst_145 = arith.constant 5.000000e-01 : f32
    %437 = vector.broadcast %cst_145 : f32 to vector<2x32xf32>
    %438 = arith.mulf %437, %436 : vector<2x32xf32>
    %439 = vector.extract_strided_slice %425 {offsets = [0, 128], sizes = [2, 32], strides = [1, 1]} : vector<2x384xf32> to vector<2x32xf32>
    %440 = vector.extract_strided_slice %428 {offsets = [0, 128], sizes = [2, 32], strides = [1, 1]} : vector<2x384xf32> to vector<2x32xf32>
    %441 = arith.addf %439, %440 : vector<2x32xf32>
    %cst_146 = arith.constant 5.000000e-01 : f32
    %442 = vector.broadcast %cst_146 : f32 to vector<2x32xf32>
    %443 = arith.mulf %442, %441 : vector<2x32xf32>
    %444 = math.tanh %443 : vector<2x32xf32>
    %cst_147 = arith.constant 1.000000e+00 : f32
    %445 = vector.broadcast %cst_147 : f32 to vector<2x32xf32>
    %446 = arith.addf %444, %445 : vector<2x32xf32>
    %cst_148 = arith.constant 5.000000e-01 : f32
    %447 = vector.broadcast %cst_148 : f32 to vector<2x32xf32>
    %448 = arith.mulf %447, %446 : vector<2x32xf32>
    %449 = vector.extract_strided_slice %425 {offsets = [0, 256], sizes = [2, 32], strides = [1, 1]} : vector<2x384xf32> to vector<2x32xf32>
    %450 = vector.extract_strided_slice %428 {offsets = [0, 256], sizes = [2, 32], strides = [1, 1]} : vector<2x384xf32> to vector<2x32xf32>
    %451 = arith.mulf %438, %450 : vector<2x32xf32>
    %452 = arith.addf %449, %451 : vector<2x32xf32>
    %453 = math.tanh %452 : vector<2x32xf32>
    %cst_149 = arith.constant 1.000000e+00 : f32
    %454 = vector.broadcast %cst_149 : f32 to vector<2x32xf32>
    %455 = arith.subf %454, %448 : vector<2x32xf32>
    %456 = arith.mulf %455, %453 : vector<2x32xf32>
    %457 = arith.mulf %448, %323 : vector<2x32xf32>
    %458 = arith.addf %456, %457 : vector<2x32xf32>
    %459 = tpu.concatenate %458, %355 in 1 : vector<2x32xf32>, vector<2x32xf32> -> vector<2x64xf32>
    %c0_150 = arith.constant 0 : index
    %c0_151 = arith.constant 0 : index
    %c0_152 = arith.constant 0 : index
    %460 = vector.load %arg12[%c0_150, %c0_151, %c0_152] : memref<3x64x512xf32, #tpu.memory_space<vmem>>, vector<1x64x512xf32>
    %461 = vector.shape_cast %460 : vector<1x64x512xf32> to vector<64x512xf32>
    %cst_153 = arith.constant dense<0.000000e+00> : vector<2x512xf32>
    %462 = tpu.matmul %459, %461, %cst_153 {dimension_numbers = #tpu.dot_dimension_numbers<[1], [0], [0], [1], [0, 0, 1, 1], [], []>} : vector<2x64xf32>, vector<64x512xf32>, vector<2x512xf32> -> vector<2x512xf32>
    %463 = vector.broadcast %6 : vector<1x512xf32> to vector<2x512xf32>
    %464 = arith.addf %462, %463 : vector<2x512xf32>
    %465 = vector.extract_strided_slice %464 {offsets = [0, 0], sizes = [2, 32], strides = [1, 1]} : vector<2x512xf32> to vector<2x32xf32>
    %cst_154 = arith.constant 5.000000e-01 : f32
    %466 = vector.broadcast %cst_154 : f32 to vector<2x32xf32>
    %467 = arith.mulf %466, %465 : vector<2x32xf32>
    %468 = math.tanh %467 : vector<2x32xf32>
    %cst_155 = arith.constant 1.000000e+00 : f32
    %469 = vector.broadcast %cst_155 : f32 to vector<2x32xf32>
    %470 = arith.addf %468, %469 : vector<2x32xf32>
    %cst_156 = arith.constant 5.000000e-01 : f32
    %471 = vector.broadcast %cst_156 : f32 to vector<2x32xf32>
    %472 = arith.mulf %471, %470 : vector<2x32xf32>
    %473 = vector.extract_strided_slice %464 {offsets = [0, 128], sizes = [2, 32], strides = [1, 1]} : vector<2x512xf32> to vector<2x32xf32>
    %cst_157 = arith.constant 5.000000e-01 : f32
    %474 = vector.broadcast %cst_157 : f32 to vector<2x32xf32>
    %475 = arith.mulf %474, %473 : vector<2x32xf32>
    %476 = math.tanh %475 : vector<2x32xf32>
    %cst_158 = arith.constant 1.000000e+00 : f32
    %477 = vector.broadcast %cst_158 : f32 to vector<2x32xf32>
    %478 = arith.addf %476, %477 : vector<2x32xf32>
    %cst_159 = arith.constant 5.000000e-01 : f32
    %479 = vector.broadcast %cst_159 : f32 to vector<2x32xf32>
    %480 = arith.mulf %479, %478 : vector<2x32xf32>
    %481 = vector.extract_strided_slice %464 {offsets = [0, 256], sizes = [2, 32], strides = [1, 1]} : vector<2x512xf32> to vector<2x32xf32>
    %482 = vector.extract_strided_slice %464 {offsets = [0, 384], sizes = [2, 32], strides = [1, 1]} : vector<2x512xf32> to vector<2x32xf32>
    %483 = arith.mulf %472, %482 : vector<2x32xf32>
    %484 = arith.addf %481, %483 : vector<2x32xf32>
    %485 = math.tanh %484 : vector<2x32xf32>
    %cst_160 = arith.constant 1.000000e+00 : f32
    %486 = vector.broadcast %cst_160 : f32 to vector<2x32xf32>
    %487 = arith.subf %486, %480 : vector<2x32xf32>
    %488 = arith.mulf %487, %485 : vector<2x32xf32>
    %489 = arith.mulf %480, %355 : vector<2x32xf32>
    %490 = arith.addf %488, %489 : vector<2x32xf32>
    %491 = tpu.concatenate %490, %387 in 1 : vector<2x32xf32>, vector<2x32xf32> -> vector<2x64xf32>
    %c1_161 = arith.constant 1 : index
    %c0_162 = arith.constant 0 : index
    %c0_163 = arith.constant 0 : index
    %492 = vector.load %arg12[%c1_161, %c0_162, %c0_163] : memref<3x64x512xf32, #tpu.memory_space<vmem>>, vector<1x64x512xf32>
    %493 = vector.shape_cast %492 : vector<1x64x512xf32> to vector<64x512xf32>
    %cst_164 = arith.constant dense<0.000000e+00> : vector<2x512xf32>
    %494 = tpu.matmul %491, %493, %cst_164 {dimension_numbers = #tpu.dot_dimension_numbers<[1], [0], [0], [1], [0, 0, 1, 1], [], []>} : vector<2x64xf32>, vector<64x512xf32>, vector<2x512xf32> -> vector<2x512xf32>
    %495 = vector.broadcast %8 : vector<1x512xf32> to vector<2x512xf32>
    %496 = arith.addf %494, %495 : vector<2x512xf32>
    %497 = vector.extract_strided_slice %496 {offsets = [0, 0], sizes = [2, 32], strides = [1, 1]} : vector<2x512xf32> to vector<2x32xf32>
    %cst_165 = arith.constant 5.000000e-01 : f32
    %498 = vector.broadcast %cst_165 : f32 to vector<2x32xf32>
    %499 = arith.mulf %498, %497 : vector<2x32xf32>
    %500 = math.tanh %499 : vector<2x32xf32>
    %cst_166 = arith.constant 1.000000e+00 : f32
    %501 = vector.broadcast %cst_166 : f32 to vector<2x32xf32>
    %502 = arith.addf %500, %501 : vector<2x32xf32>
    %cst_167 = arith.constant 5.000000e-01 : f32
    %503 = vector.broadcast %cst_167 : f32 to vector<2x32xf32>
    %504 = arith.mulf %503, %502 : vector<2x32xf32>
    %505 = vector.extract_strided_slice %496 {offsets = [0, 128], sizes = [2, 32], strides = [1, 1]} : vector<2x512xf32> to vector<2x32xf32>
    %cst_168 = arith.constant 5.000000e-01 : f32
    %506 = vector.broadcast %cst_168 : f32 to vector<2x32xf32>
    %507 = arith.mulf %506, %505 : vector<2x32xf32>
    %508 = math.tanh %507 : vector<2x32xf32>
    %cst_169 = arith.constant 1.000000e+00 : f32
    %509 = vector.broadcast %cst_169 : f32 to vector<2x32xf32>
    %510 = arith.addf %508, %509 : vector<2x32xf32>
    %cst_170 = arith.constant 5.000000e-01 : f32
    %511 = vector.broadcast %cst_170 : f32 to vector<2x32xf32>
    %512 = arith.mulf %511, %510 : vector<2x32xf32>
    %513 = vector.extract_strided_slice %496 {offsets = [0, 256], sizes = [2, 32], strides = [1, 1]} : vector<2x512xf32> to vector<2x32xf32>
    %514 = vector.extract_strided_slice %496 {offsets = [0, 384], sizes = [2, 32], strides = [1, 1]} : vector<2x512xf32> to vector<2x32xf32>
    %515 = arith.mulf %504, %514 : vector<2x32xf32>
    %516 = arith.addf %513, %515 : vector<2x32xf32>
    %517 = math.tanh %516 : vector<2x32xf32>
    %cst_171 = arith.constant 1.000000e+00 : f32
    %518 = vector.broadcast %cst_171 : f32 to vector<2x32xf32>
    %519 = arith.subf %518, %512 : vector<2x32xf32>
    %520 = arith.mulf %519, %517 : vector<2x32xf32>
    %521 = arith.mulf %512, %387 : vector<2x32xf32>
    %522 = arith.addf %520, %521 : vector<2x32xf32>
    %523 = tpu.concatenate %522, %419 in 1 : vector<2x32xf32>, vector<2x32xf32> -> vector<2x64xf32>
    %c2_172 = arith.constant 2 : index
    %c0_173 = arith.constant 0 : index
    %c0_174 = arith.constant 0 : index
    %524 = vector.load %arg12[%c2_172, %c0_173, %c0_174] : memref<3x64x512xf32, #tpu.memory_space<vmem>>, vector<1x64x512xf32>
    %525 = vector.shape_cast %524 : vector<1x64x512xf32> to vector<64x512xf32>
    %cst_175 = arith.constant dense<0.000000e+00> : vector<2x512xf32>
    %526 = tpu.matmul %523, %525, %cst_175 {dimension_numbers = #tpu.dot_dimension_numbers<[1], [0], [0], [1], [0, 0, 1, 1], [], []>} : vector<2x64xf32>, vector<64x512xf32>, vector<2x512xf32> -> vector<2x512xf32>
    %527 = vector.broadcast %10 : vector<1x512xf32> to vector<2x512xf32>
    %528 = arith.addf %526, %527 : vector<2x512xf32>
    %529 = vector.extract_strided_slice %528 {offsets = [0, 0], sizes = [2, 32], strides = [1, 1]} : vector<2x512xf32> to vector<2x32xf32>
    %cst_176 = arith.constant 5.000000e-01 : f32
    %530 = vector.broadcast %cst_176 : f32 to vector<2x32xf32>
    %531 = arith.mulf %530, %529 : vector<2x32xf32>
    %532 = math.tanh %531 : vector<2x32xf32>
    %cst_177 = arith.constant 1.000000e+00 : f32
    %533 = vector.broadcast %cst_177 : f32 to vector<2x32xf32>
    %534 = arith.addf %532, %533 : vector<2x32xf32>
    %cst_178 = arith.constant 5.000000e-01 : f32
    %535 = vector.broadcast %cst_178 : f32 to vector<2x32xf32>
    %536 = arith.mulf %535, %534 : vector<2x32xf32>
    %537 = vector.extract_strided_slice %528 {offsets = [0, 128], sizes = [2, 32], strides = [1, 1]} : vector<2x512xf32> to vector<2x32xf32>
    %cst_179 = arith.constant 5.000000e-01 : f32
    %538 = vector.broadcast %cst_179 : f32 to vector<2x32xf32>
    %539 = arith.mulf %538, %537 : vector<2x32xf32>
    %540 = math.tanh %539 : vector<2x32xf32>
    %cst_180 = arith.constant 1.000000e+00 : f32
    %541 = vector.broadcast %cst_180 : f32 to vector<2x32xf32>
    %542 = arith.addf %540, %541 : vector<2x32xf32>
    %cst_181 = arith.constant 5.000000e-01 : f32
    %543 = vector.broadcast %cst_181 : f32 to vector<2x32xf32>
    %544 = arith.mulf %543, %542 : vector<2x32xf32>
    %545 = vector.extract_strided_slice %528 {offsets = [0, 256], sizes = [2, 32], strides = [1, 1]} : vector<2x512xf32> to vector<2x32xf32>
    %546 = vector.extract_strided_slice %528 {offsets = [0, 384], sizes = [2, 32], strides = [1, 1]} : vector<2x512xf32> to vector<2x32xf32>
    %547 = arith.mulf %536, %546 : vector<2x32xf32>
    %548 = arith.addf %545, %547 : vector<2x32xf32>
    %549 = math.tanh %548 : vector<2x32xf32>
    %cst_182 = arith.constant 1.000000e+00 : f32
    %550 = vector.broadcast %cst_182 : f32 to vector<2x32xf32>
    %551 = arith.subf %550, %544 : vector<2x32xf32>
    %552 = arith.mulf %551, %549 : vector<2x32xf32>
    %553 = arith.mulf %544, %419 : vector<2x32xf32>
    %554 = arith.addf %552, %553 : vector<2x32xf32>
    %555 = vector.extract_strided_slice %0 {offsets = [0, 4], sizes = [2, 1], strides = [1, 1]} : vector<2x8xf32> to vector<2x1xf32>
    %556 = vector.broadcast %555 : vector<2x1xf32> to vector<2x384xf32>
    %557 = vector.broadcast %1 : vector<1x384xf32> to vector<2x384xf32>
    %558 = arith.mulf %556, %557 : vector<2x384xf32>
    %559 = vector.broadcast %2 : vector<1x384xf32> to vector<2x384xf32>
    %560 = arith.addf %558, %559 : vector<2x384xf32>
    %cst_183 = arith.constant dense<0.000000e+00> : vector<2x384xf32>
    %561 = tpu.matmul %458, %3, %cst_183 {dimension_numbers = #tpu.dot_dimension_numbers<[1], [0], [0], [1], [0, 0, 1, 1], [], []>} : vector<2x32xf32>, vector<32x384xf32>, vector<2x384xf32> -> vector<2x384xf32>
    %562 = vector.broadcast %4 : vector<1x384xf32> to vector<2x384xf32>
    %563 = arith.addf %561, %562 : vector<2x384xf32>
    %564 = vector.extract_strided_slice %560 {offsets = [0, 0], sizes = [2, 32], strides = [1, 1]} : vector<2x384xf32> to vector<2x32xf32>
    %565 = vector.extract_strided_slice %563 {offsets = [0, 0], sizes = [2, 32], strides = [1, 1]} : vector<2x384xf32> to vector<2x32xf32>
    %566 = arith.addf %564, %565 : vector<2x32xf32>
    %cst_184 = arith.constant 5.000000e-01 : f32
    %567 = vector.broadcast %cst_184 : f32 to vector<2x32xf32>
    %568 = arith.mulf %567, %566 : vector<2x32xf32>
    %569 = math.tanh %568 : vector<2x32xf32>
    %cst_185 = arith.constant 1.000000e+00 : f32
    %570 = vector.broadcast %cst_185 : f32 to vector<2x32xf32>
    %571 = arith.addf %569, %570 : vector<2x32xf32>
    %cst_186 = arith.constant 5.000000e-01 : f32
    %572 = vector.broadcast %cst_186 : f32 to vector<2x32xf32>
    %573 = arith.mulf %572, %571 : vector<2x32xf32>
    %574 = vector.extract_strided_slice %560 {offsets = [0, 128], sizes = [2, 32], strides = [1, 1]} : vector<2x384xf32> to vector<2x32xf32>
    %575 = vector.extract_strided_slice %563 {offsets = [0, 128], sizes = [2, 32], strides = [1, 1]} : vector<2x384xf32> to vector<2x32xf32>
    %576 = arith.addf %574, %575 : vector<2x32xf32>
    %cst_187 = arith.constant 5.000000e-01 : f32
    %577 = vector.broadcast %cst_187 : f32 to vector<2x32xf32>
    %578 = arith.mulf %577, %576 : vector<2x32xf32>
    %579 = math.tanh %578 : vector<2x32xf32>
    %cst_188 = arith.constant 1.000000e+00 : f32
    %580 = vector.broadcast %cst_188 : f32 to vector<2x32xf32>
    %581 = arith.addf %579, %580 : vector<2x32xf32>
    %cst_189 = arith.constant 5.000000e-01 : f32
    %582 = vector.broadcast %cst_189 : f32 to vector<2x32xf32>
    %583 = arith.mulf %582, %581 : vector<2x32xf32>
    %584 = vector.extract_strided_slice %560 {offsets = [0, 256], sizes = [2, 32], strides = [1, 1]} : vector<2x384xf32> to vector<2x32xf32>
    %585 = vector.extract_strided_slice %563 {offsets = [0, 256], sizes = [2, 32], strides = [1, 1]} : vector<2x384xf32> to vector<2x32xf32>
    %586 = arith.mulf %573, %585 : vector<2x32xf32>
    %587 = arith.addf %584, %586 : vector<2x32xf32>
    %588 = math.tanh %587 : vector<2x32xf32>
    %cst_190 = arith.constant 1.000000e+00 : f32
    %589 = vector.broadcast %cst_190 : f32 to vector<2x32xf32>
    %590 = arith.subf %589, %583 : vector<2x32xf32>
    %591 = arith.mulf %590, %588 : vector<2x32xf32>
    %592 = arith.mulf %583, %458 : vector<2x32xf32>
    %593 = arith.addf %591, %592 : vector<2x32xf32>
    %594 = tpu.concatenate %593, %490 in 1 : vector<2x32xf32>, vector<2x32xf32> -> vector<2x64xf32>
    %c0_191 = arith.constant 0 : index
    %c0_192 = arith.constant 0 : index
    %c0_193 = arith.constant 0 : index
    %595 = vector.load %arg12[%c0_191, %c0_192, %c0_193] : memref<3x64x512xf32, #tpu.memory_space<vmem>>, vector<1x64x512xf32>
    %596 = vector.shape_cast %595 : vector<1x64x512xf32> to vector<64x512xf32>
    %cst_194 = arith.constant dense<0.000000e+00> : vector<2x512xf32>
    %597 = tpu.matmul %594, %596, %cst_194 {dimension_numbers = #tpu.dot_dimension_numbers<[1], [0], [0], [1], [0, 0, 1, 1], [], []>} : vector<2x64xf32>, vector<64x512xf32>, vector<2x512xf32> -> vector<2x512xf32>
    %598 = vector.broadcast %6 : vector<1x512xf32> to vector<2x512xf32>
    %599 = arith.addf %597, %598 : vector<2x512xf32>
    %600 = vector.extract_strided_slice %599 {offsets = [0, 0], sizes = [2, 32], strides = [1, 1]} : vector<2x512xf32> to vector<2x32xf32>
    %cst_195 = arith.constant 5.000000e-01 : f32
    %601 = vector.broadcast %cst_195 : f32 to vector<2x32xf32>
    %602 = arith.mulf %601, %600 : vector<2x32xf32>
    %603 = math.tanh %602 : vector<2x32xf32>
    %cst_196 = arith.constant 1.000000e+00 : f32
    %604 = vector.broadcast %cst_196 : f32 to vector<2x32xf32>
    %605 = arith.addf %603, %604 : vector<2x32xf32>
    %cst_197 = arith.constant 5.000000e-01 : f32
    %606 = vector.broadcast %cst_197 : f32 to vector<2x32xf32>
    %607 = arith.mulf %606, %605 : vector<2x32xf32>
    %608 = vector.extract_strided_slice %599 {offsets = [0, 128], sizes = [2, 32], strides = [1, 1]} : vector<2x512xf32> to vector<2x32xf32>
    %cst_198 = arith.constant 5.000000e-01 : f32
    %609 = vector.broadcast %cst_198 : f32 to vector<2x32xf32>
    %610 = arith.mulf %609, %608 : vector<2x32xf32>
    %611 = math.tanh %610 : vector<2x32xf32>
    %cst_199 = arith.constant 1.000000e+00 : f32
    %612 = vector.broadcast %cst_199 : f32 to vector<2x32xf32>
    %613 = arith.addf %611, %612 : vector<2x32xf32>
    %cst_200 = arith.constant 5.000000e-01 : f32
    %614 = vector.broadcast %cst_200 : f32 to vector<2x32xf32>
    %615 = arith.mulf %614, %613 : vector<2x32xf32>
    %616 = vector.extract_strided_slice %599 {offsets = [0, 256], sizes = [2, 32], strides = [1, 1]} : vector<2x512xf32> to vector<2x32xf32>
    %617 = vector.extract_strided_slice %599 {offsets = [0, 384], sizes = [2, 32], strides = [1, 1]} : vector<2x512xf32> to vector<2x32xf32>
    %618 = arith.mulf %607, %617 : vector<2x32xf32>
    %619 = arith.addf %616, %618 : vector<2x32xf32>
    %620 = math.tanh %619 : vector<2x32xf32>
    %cst_201 = arith.constant 1.000000e+00 : f32
    %621 = vector.broadcast %cst_201 : f32 to vector<2x32xf32>
    %622 = arith.subf %621, %615 : vector<2x32xf32>
    %623 = arith.mulf %622, %620 : vector<2x32xf32>
    %624 = arith.mulf %615, %490 : vector<2x32xf32>
    %625 = arith.addf %623, %624 : vector<2x32xf32>
    %626 = tpu.concatenate %625, %522 in 1 : vector<2x32xf32>, vector<2x32xf32> -> vector<2x64xf32>
    %c1_202 = arith.constant 1 : index
    %c0_203 = arith.constant 0 : index
    %c0_204 = arith.constant 0 : index
    %627 = vector.load %arg12[%c1_202, %c0_203, %c0_204] : memref<3x64x512xf32, #tpu.memory_space<vmem>>, vector<1x64x512xf32>
    %628 = vector.shape_cast %627 : vector<1x64x512xf32> to vector<64x512xf32>
    %cst_205 = arith.constant dense<0.000000e+00> : vector<2x512xf32>
    %629 = tpu.matmul %626, %628, %cst_205 {dimension_numbers = #tpu.dot_dimension_numbers<[1], [0], [0], [1], [0, 0, 1, 1], [], []>} : vector<2x64xf32>, vector<64x512xf32>, vector<2x512xf32> -> vector<2x512xf32>
    %630 = vector.broadcast %8 : vector<1x512xf32> to vector<2x512xf32>
    %631 = arith.addf %629, %630 : vector<2x512xf32>
    %632 = vector.extract_strided_slice %631 {offsets = [0, 0], sizes = [2, 32], strides = [1, 1]} : vector<2x512xf32> to vector<2x32xf32>
    %cst_206 = arith.constant 5.000000e-01 : f32
    %633 = vector.broadcast %cst_206 : f32 to vector<2x32xf32>
    %634 = arith.mulf %633, %632 : vector<2x32xf32>
    %635 = math.tanh %634 : vector<2x32xf32>
    %cst_207 = arith.constant 1.000000e+00 : f32
    %636 = vector.broadcast %cst_207 : f32 to vector<2x32xf32>
    %637 = arith.addf %635, %636 : vector<2x32xf32>
    %cst_208 = arith.constant 5.000000e-01 : f32
    %638 = vector.broadcast %cst_208 : f32 to vector<2x32xf32>
    %639 = arith.mulf %638, %637 : vector<2x32xf32>
    %640 = vector.extract_strided_slice %631 {offsets = [0, 128], sizes = [2, 32], strides = [1, 1]} : vector<2x512xf32> to vector<2x32xf32>
    %cst_209 = arith.constant 5.000000e-01 : f32
    %641 = vector.broadcast %cst_209 : f32 to vector<2x32xf32>
    %642 = arith.mulf %641, %640 : vector<2x32xf32>
    %643 = math.tanh %642 : vector<2x32xf32>
    %cst_210 = arith.constant 1.000000e+00 : f32
    %644 = vector.broadcast %cst_210 : f32 to vector<2x32xf32>
    %645 = arith.addf %643, %644 : vector<2x32xf32>
    %cst_211 = arith.constant 5.000000e-01 : f32
    %646 = vector.broadcast %cst_211 : f32 to vector<2x32xf32>
    %647 = arith.mulf %646, %645 : vector<2x32xf32>
    %648 = vector.extract_strided_slice %631 {offsets = [0, 256], sizes = [2, 32], strides = [1, 1]} : vector<2x512xf32> to vector<2x32xf32>
    %649 = vector.extract_strided_slice %631 {offsets = [0, 384], sizes = [2, 32], strides = [1, 1]} : vector<2x512xf32> to vector<2x32xf32>
    %650 = arith.mulf %639, %649 : vector<2x32xf32>
    %651 = arith.addf %648, %650 : vector<2x32xf32>
    %652 = math.tanh %651 : vector<2x32xf32>
    %cst_212 = arith.constant 1.000000e+00 : f32
    %653 = vector.broadcast %cst_212 : f32 to vector<2x32xf32>
    %654 = arith.subf %653, %647 : vector<2x32xf32>
    %655 = arith.mulf %654, %652 : vector<2x32xf32>
    %656 = arith.mulf %647, %522 : vector<2x32xf32>
    %657 = arith.addf %655, %656 : vector<2x32xf32>
    %658 = tpu.concatenate %657, %554 in 1 : vector<2x32xf32>, vector<2x32xf32> -> vector<2x64xf32>
    %c2_213 = arith.constant 2 : index
    %c0_214 = arith.constant 0 : index
    %c0_215 = arith.constant 0 : index
    %659 = vector.load %arg12[%c2_213, %c0_214, %c0_215] : memref<3x64x512xf32, #tpu.memory_space<vmem>>, vector<1x64x512xf32>
    %660 = vector.shape_cast %659 : vector<1x64x512xf32> to vector<64x512xf32>
    %cst_216 = arith.constant dense<0.000000e+00> : vector<2x512xf32>
    %661 = tpu.matmul %658, %660, %cst_216 {dimension_numbers = #tpu.dot_dimension_numbers<[1], [0], [0], [1], [0, 0, 1, 1], [], []>} : vector<2x64xf32>, vector<64x512xf32>, vector<2x512xf32> -> vector<2x512xf32>
    %662 = vector.broadcast %10 : vector<1x512xf32> to vector<2x512xf32>
    %663 = arith.addf %661, %662 : vector<2x512xf32>
    %664 = vector.extract_strided_slice %663 {offsets = [0, 0], sizes = [2, 32], strides = [1, 1]} : vector<2x512xf32> to vector<2x32xf32>
    %cst_217 = arith.constant 5.000000e-01 : f32
    %665 = vector.broadcast %cst_217 : f32 to vector<2x32xf32>
    %666 = arith.mulf %665, %664 : vector<2x32xf32>
    %667 = math.tanh %666 : vector<2x32xf32>
    %cst_218 = arith.constant 1.000000e+00 : f32
    %668 = vector.broadcast %cst_218 : f32 to vector<2x32xf32>
    %669 = arith.addf %667, %668 : vector<2x32xf32>
    %cst_219 = arith.constant 5.000000e-01 : f32
    %670 = vector.broadcast %cst_219 : f32 to vector<2x32xf32>
    %671 = arith.mulf %670, %669 : vector<2x32xf32>
    %672 = vector.extract_strided_slice %663 {offsets = [0, 128], sizes = [2, 32], strides = [1, 1]} : vector<2x512xf32> to vector<2x32xf32>
    %cst_220 = arith.constant 5.000000e-01 : f32
    %673 = vector.broadcast %cst_220 : f32 to vector<2x32xf32>
    %674 = arith.mulf %673, %672 : vector<2x32xf32>
    %675 = math.tanh %674 : vector<2x32xf32>
    %cst_221 = arith.constant 1.000000e+00 : f32
    %676 = vector.broadcast %cst_221 : f32 to vector<2x32xf32>
    %677 = arith.addf %675, %676 : vector<2x32xf32>
    %cst_222 = arith.constant 5.000000e-01 : f32
    %678 = vector.broadcast %cst_222 : f32 to vector<2x32xf32>
    %679 = arith.mulf %678, %677 : vector<2x32xf32>
    %680 = vector.extract_strided_slice %663 {offsets = [0, 256], sizes = [2, 32], strides = [1, 1]} : vector<2x512xf32> to vector<2x32xf32>
    %681 = vector.extract_strided_slice %663 {offsets = [0, 384], sizes = [2, 32], strides = [1, 1]} : vector<2x512xf32> to vector<2x32xf32>
    %682 = arith.mulf %671, %681 : vector<2x32xf32>
    %683 = arith.addf %680, %682 : vector<2x32xf32>
    %684 = math.tanh %683 : vector<2x32xf32>
    %cst_223 = arith.constant 1.000000e+00 : f32
    %685 = vector.broadcast %cst_223 : f32 to vector<2x32xf32>
    %686 = arith.subf %685, %679 : vector<2x32xf32>
    %687 = arith.mulf %686, %684 : vector<2x32xf32>
    %688 = arith.mulf %679, %554 : vector<2x32xf32>
    %689 = arith.addf %687, %688 : vector<2x32xf32>
    %690 = vector.extract_strided_slice %0 {offsets = [0, 5], sizes = [2, 1], strides = [1, 1]} : vector<2x8xf32> to vector<2x1xf32>
    %691 = vector.broadcast %690 : vector<2x1xf32> to vector<2x384xf32>
    %692 = vector.broadcast %1 : vector<1x384xf32> to vector<2x384xf32>
    %693 = arith.mulf %691, %692 : vector<2x384xf32>
    %694 = vector.broadcast %2 : vector<1x384xf32> to vector<2x384xf32>
    %695 = arith.addf %693, %694 : vector<2x384xf32>
    %cst_224 = arith.constant dense<0.000000e+00> : vector<2x384xf32>
    %696 = tpu.matmul %593, %3, %cst_224 {dimension_numbers = #tpu.dot_dimension_numbers<[1], [0], [0], [1], [0, 0, 1, 1], [], []>} : vector<2x32xf32>, vector<32x384xf32>, vector<2x384xf32> -> vector<2x384xf32>
    %697 = vector.broadcast %4 : vector<1x384xf32> to vector<2x384xf32>
    %698 = arith.addf %696, %697 : vector<2x384xf32>
    %699 = vector.extract_strided_slice %695 {offsets = [0, 0], sizes = [2, 32], strides = [1, 1]} : vector<2x384xf32> to vector<2x32xf32>
    %700 = vector.extract_strided_slice %698 {offsets = [0, 0], sizes = [2, 32], strides = [1, 1]} : vector<2x384xf32> to vector<2x32xf32>
    %701 = arith.addf %699, %700 : vector<2x32xf32>
    %cst_225 = arith.constant 5.000000e-01 : f32
    %702 = vector.broadcast %cst_225 : f32 to vector<2x32xf32>
    %703 = arith.mulf %702, %701 : vector<2x32xf32>
    %704 = math.tanh %703 : vector<2x32xf32>
    %cst_226 = arith.constant 1.000000e+00 : f32
    %705 = vector.broadcast %cst_226 : f32 to vector<2x32xf32>
    %706 = arith.addf %704, %705 : vector<2x32xf32>
    %cst_227 = arith.constant 5.000000e-01 : f32
    %707 = vector.broadcast %cst_227 : f32 to vector<2x32xf32>
    %708 = arith.mulf %707, %706 : vector<2x32xf32>
    %709 = vector.extract_strided_slice %695 {offsets = [0, 128], sizes = [2, 32], strides = [1, 1]} : vector<2x384xf32> to vector<2x32xf32>
    %710 = vector.extract_strided_slice %698 {offsets = [0, 128], sizes = [2, 32], strides = [1, 1]} : vector<2x384xf32> to vector<2x32xf32>
    %711 = arith.addf %709, %710 : vector<2x32xf32>
    %cst_228 = arith.constant 5.000000e-01 : f32
    %712 = vector.broadcast %cst_228 : f32 to vector<2x32xf32>
    %713 = arith.mulf %712, %711 : vector<2x32xf32>
    %714 = math.tanh %713 : vector<2x32xf32>
    %cst_229 = arith.constant 1.000000e+00 : f32
    %715 = vector.broadcast %cst_229 : f32 to vector<2x32xf32>
    %716 = arith.addf %714, %715 : vector<2x32xf32>
    %cst_230 = arith.constant 5.000000e-01 : f32
    %717 = vector.broadcast %cst_230 : f32 to vector<2x32xf32>
    %718 = arith.mulf %717, %716 : vector<2x32xf32>
    %719 = vector.extract_strided_slice %695 {offsets = [0, 256], sizes = [2, 32], strides = [1, 1]} : vector<2x384xf32> to vector<2x32xf32>
    %720 = vector.extract_strided_slice %698 {offsets = [0, 256], sizes = [2, 32], strides = [1, 1]} : vector<2x384xf32> to vector<2x32xf32>
    %721 = arith.mulf %708, %720 : vector<2x32xf32>
    %722 = arith.addf %719, %721 : vector<2x32xf32>
    %723 = math.tanh %722 : vector<2x32xf32>
    %cst_231 = arith.constant 1.000000e+00 : f32
    %724 = vector.broadcast %cst_231 : f32 to vector<2x32xf32>
    %725 = arith.subf %724, %718 : vector<2x32xf32>
    %726 = arith.mulf %725, %723 : vector<2x32xf32>
    %727 = arith.mulf %718, %593 : vector<2x32xf32>
    %728 = arith.addf %726, %727 : vector<2x32xf32>
    %729 = tpu.concatenate %728, %625 in 1 : vector<2x32xf32>, vector<2x32xf32> -> vector<2x64xf32>
    %c0_232 = arith.constant 0 : index
    %c0_233 = arith.constant 0 : index
    %c0_234 = arith.constant 0 : index
    %730 = vector.load %arg12[%c0_232, %c0_233, %c0_234] : memref<3x64x512xf32, #tpu.memory_space<vmem>>, vector<1x64x512xf32>
    %731 = vector.shape_cast %730 : vector<1x64x512xf32> to vector<64x512xf32>
    %cst_235 = arith.constant dense<0.000000e+00> : vector<2x512xf32>
    %732 = tpu.matmul %729, %731, %cst_235 {dimension_numbers = #tpu.dot_dimension_numbers<[1], [0], [0], [1], [0, 0, 1, 1], [], []>} : vector<2x64xf32>, vector<64x512xf32>, vector<2x512xf32> -> vector<2x512xf32>
    %733 = vector.broadcast %6 : vector<1x512xf32> to vector<2x512xf32>
    %734 = arith.addf %732, %733 : vector<2x512xf32>
    %735 = vector.extract_strided_slice %734 {offsets = [0, 0], sizes = [2, 32], strides = [1, 1]} : vector<2x512xf32> to vector<2x32xf32>
    %cst_236 = arith.constant 5.000000e-01 : f32
    %736 = vector.broadcast %cst_236 : f32 to vector<2x32xf32>
    %737 = arith.mulf %736, %735 : vector<2x32xf32>
    %738 = math.tanh %737 : vector<2x32xf32>
    %cst_237 = arith.constant 1.000000e+00 : f32
    %739 = vector.broadcast %cst_237 : f32 to vector<2x32xf32>
    %740 = arith.addf %738, %739 : vector<2x32xf32>
    %cst_238 = arith.constant 5.000000e-01 : f32
    %741 = vector.broadcast %cst_238 : f32 to vector<2x32xf32>
    %742 = arith.mulf %741, %740 : vector<2x32xf32>
    %743 = vector.extract_strided_slice %734 {offsets = [0, 128], sizes = [2, 32], strides = [1, 1]} : vector<2x512xf32> to vector<2x32xf32>
    %cst_239 = arith.constant 5.000000e-01 : f32
    %744 = vector.broadcast %cst_239 : f32 to vector<2x32xf32>
    %745 = arith.mulf %744, %743 : vector<2x32xf32>
    %746 = math.tanh %745 : vector<2x32xf32>
    %cst_240 = arith.constant 1.000000e+00 : f32
    %747 = vector.broadcast %cst_240 : f32 to vector<2x32xf32>
    %748 = arith.addf %746, %747 : vector<2x32xf32>
    %cst_241 = arith.constant 5.000000e-01 : f32
    %749 = vector.broadcast %cst_241 : f32 to vector<2x32xf32>
    %750 = arith.mulf %749, %748 : vector<2x32xf32>
    %751 = vector.extract_strided_slice %734 {offsets = [0, 256], sizes = [2, 32], strides = [1, 1]} : vector<2x512xf32> to vector<2x32xf32>
    %752 = vector.extract_strided_slice %734 {offsets = [0, 384], sizes = [2, 32], strides = [1, 1]} : vector<2x512xf32> to vector<2x32xf32>
    %753 = arith.mulf %742, %752 : vector<2x32xf32>
    %754 = arith.addf %751, %753 : vector<2x32xf32>
    %755 = math.tanh %754 : vector<2x32xf32>
    %cst_242 = arith.constant 1.000000e+00 : f32
    %756 = vector.broadcast %cst_242 : f32 to vector<2x32xf32>
    %757 = arith.subf %756, %750 : vector<2x32xf32>
    %758 = arith.mulf %757, %755 : vector<2x32xf32>
    %759 = arith.mulf %750, %625 : vector<2x32xf32>
    %760 = arith.addf %758, %759 : vector<2x32xf32>
    %761 = tpu.concatenate %760, %657 in 1 : vector<2x32xf32>, vector<2x32xf32> -> vector<2x64xf32>
    %c1_243 = arith.constant 1 : index
    %c0_244 = arith.constant 0 : index
    %c0_245 = arith.constant 0 : index
    %762 = vector.load %arg12[%c1_243, %c0_244, %c0_245] : memref<3x64x512xf32, #tpu.memory_space<vmem>>, vector<1x64x512xf32>
    %763 = vector.shape_cast %762 : vector<1x64x512xf32> to vector<64x512xf32>
    %cst_246 = arith.constant dense<0.000000e+00> : vector<2x512xf32>
    %764 = tpu.matmul %761, %763, %cst_246 {dimension_numbers = #tpu.dot_dimension_numbers<[1], [0], [0], [1], [0, 0, 1, 1], [], []>} : vector<2x64xf32>, vector<64x512xf32>, vector<2x512xf32> -> vector<2x512xf32>
    %765 = vector.broadcast %8 : vector<1x512xf32> to vector<2x512xf32>
    %766 = arith.addf %764, %765 : vector<2x512xf32>
    %767 = vector.extract_strided_slice %766 {offsets = [0, 0], sizes = [2, 32], strides = [1, 1]} : vector<2x512xf32> to vector<2x32xf32>
    %cst_247 = arith.constant 5.000000e-01 : f32
    %768 = vector.broadcast %cst_247 : f32 to vector<2x32xf32>
    %769 = arith.mulf %768, %767 : vector<2x32xf32>
    %770 = math.tanh %769 : vector<2x32xf32>
    %cst_248 = arith.constant 1.000000e+00 : f32
    %771 = vector.broadcast %cst_248 : f32 to vector<2x32xf32>
    %772 = arith.addf %770, %771 : vector<2x32xf32>
    %cst_249 = arith.constant 5.000000e-01 : f32
    %773 = vector.broadcast %cst_249 : f32 to vector<2x32xf32>
    %774 = arith.mulf %773, %772 : vector<2x32xf32>
    %775 = vector.extract_strided_slice %766 {offsets = [0, 128], sizes = [2, 32], strides = [1, 1]} : vector<2x512xf32> to vector<2x32xf32>
    %cst_250 = arith.constant 5.000000e-01 : f32
    %776 = vector.broadcast %cst_250 : f32 to vector<2x32xf32>
    %777 = arith.mulf %776, %775 : vector<2x32xf32>
    %778 = math.tanh %777 : vector<2x32xf32>
    %cst_251 = arith.constant 1.000000e+00 : f32
    %779 = vector.broadcast %cst_251 : f32 to vector<2x32xf32>
    %780 = arith.addf %778, %779 : vector<2x32xf32>
    %cst_252 = arith.constant 5.000000e-01 : f32
    %781 = vector.broadcast %cst_252 : f32 to vector<2x32xf32>
    %782 = arith.mulf %781, %780 : vector<2x32xf32>
    %783 = vector.extract_strided_slice %766 {offsets = [0, 256], sizes = [2, 32], strides = [1, 1]} : vector<2x512xf32> to vector<2x32xf32>
    %784 = vector.extract_strided_slice %766 {offsets = [0, 384], sizes = [2, 32], strides = [1, 1]} : vector<2x512xf32> to vector<2x32xf32>
    %785 = arith.mulf %774, %784 : vector<2x32xf32>
    %786 = arith.addf %783, %785 : vector<2x32xf32>
    %787 = math.tanh %786 : vector<2x32xf32>
    %cst_253 = arith.constant 1.000000e+00 : f32
    %788 = vector.broadcast %cst_253 : f32 to vector<2x32xf32>
    %789 = arith.subf %788, %782 : vector<2x32xf32>
    %790 = arith.mulf %789, %787 : vector<2x32xf32>
    %791 = arith.mulf %782, %657 : vector<2x32xf32>
    %792 = arith.addf %790, %791 : vector<2x32xf32>
    %793 = tpu.concatenate %792, %689 in 1 : vector<2x32xf32>, vector<2x32xf32> -> vector<2x64xf32>
    %c2_254 = arith.constant 2 : index
    %c0_255 = arith.constant 0 : index
    %c0_256 = arith.constant 0 : index
    %794 = vector.load %arg12[%c2_254, %c0_255, %c0_256] : memref<3x64x512xf32, #tpu.memory_space<vmem>>, vector<1x64x512xf32>
    %795 = vector.shape_cast %794 : vector<1x64x512xf32> to vector<64x512xf32>
    %cst_257 = arith.constant dense<0.000000e+00> : vector<2x512xf32>
    %796 = tpu.matmul %793, %795, %cst_257 {dimension_numbers = #tpu.dot_dimension_numbers<[1], [0], [0], [1], [0, 0, 1, 1], [], []>} : vector<2x64xf32>, vector<64x512xf32>, vector<2x512xf32> -> vector<2x512xf32>
    %797 = vector.broadcast %10 : vector<1x512xf32> to vector<2x512xf32>
    %798 = arith.addf %796, %797 : vector<2x512xf32>
    %799 = vector.extract_strided_slice %798 {offsets = [0, 0], sizes = [2, 32], strides = [1, 1]} : vector<2x512xf32> to vector<2x32xf32>
    %cst_258 = arith.constant 5.000000e-01 : f32
    %800 = vector.broadcast %cst_258 : f32 to vector<2x32xf32>
    %801 = arith.mulf %800, %799 : vector<2x32xf32>
    %802 = math.tanh %801 : vector<2x32xf32>
    %cst_259 = arith.constant 1.000000e+00 : f32
    %803 = vector.broadcast %cst_259 : f32 to vector<2x32xf32>
    %804 = arith.addf %802, %803 : vector<2x32xf32>
    %cst_260 = arith.constant 5.000000e-01 : f32
    %805 = vector.broadcast %cst_260 : f32 to vector<2x32xf32>
    %806 = arith.mulf %805, %804 : vector<2x32xf32>
    %807 = vector.extract_strided_slice %798 {offsets = [0, 128], sizes = [2, 32], strides = [1, 1]} : vector<2x512xf32> to vector<2x32xf32>
    %cst_261 = arith.constant 5.000000e-01 : f32
    %808 = vector.broadcast %cst_261 : f32 to vector<2x32xf32>
    %809 = arith.mulf %808, %807 : vector<2x32xf32>
    %810 = math.tanh %809 : vector<2x32xf32>
    %cst_262 = arith.constant 1.000000e+00 : f32
    %811 = vector.broadcast %cst_262 : f32 to vector<2x32xf32>
    %812 = arith.addf %810, %811 : vector<2x32xf32>
    %cst_263 = arith.constant 5.000000e-01 : f32
    %813 = vector.broadcast %cst_263 : f32 to vector<2x32xf32>
    %814 = arith.mulf %813, %812 : vector<2x32xf32>
    %815 = vector.extract_strided_slice %798 {offsets = [0, 256], sizes = [2, 32], strides = [1, 1]} : vector<2x512xf32> to vector<2x32xf32>
    %816 = vector.extract_strided_slice %798 {offsets = [0, 384], sizes = [2, 32], strides = [1, 1]} : vector<2x512xf32> to vector<2x32xf32>
    %817 = arith.mulf %806, %816 : vector<2x32xf32>
    %818 = arith.addf %815, %817 : vector<2x32xf32>
    %819 = math.tanh %818 : vector<2x32xf32>
    %cst_264 = arith.constant 1.000000e+00 : f32
    %820 = vector.broadcast %cst_264 : f32 to vector<2x32xf32>
    %821 = arith.subf %820, %814 : vector<2x32xf32>
    %822 = arith.mulf %821, %819 : vector<2x32xf32>
    %823 = arith.mulf %814, %689 : vector<2x32xf32>
    %824 = arith.addf %822, %823 : vector<2x32xf32>
    %825 = vector.extract_strided_slice %0 {offsets = [0, 6], sizes = [2, 1], strides = [1, 1]} : vector<2x8xf32> to vector<2x1xf32>
    %826 = vector.broadcast %825 : vector<2x1xf32> to vector<2x384xf32>
    %827 = vector.broadcast %1 : vector<1x384xf32> to vector<2x384xf32>
    %828 = arith.mulf %826, %827 : vector<2x384xf32>
    %829 = vector.broadcast %2 : vector<1x384xf32> to vector<2x384xf32>
    %830 = arith.addf %828, %829 : vector<2x384xf32>
    %cst_265 = arith.constant dense<0.000000e+00> : vector<2x384xf32>
    %831 = tpu.matmul %728, %3, %cst_265 {dimension_numbers = #tpu.dot_dimension_numbers<[1], [0], [0], [1], [0, 0, 1, 1], [], []>} : vector<2x32xf32>, vector<32x384xf32>, vector<2x384xf32> -> vector<2x384xf32>
    %832 = vector.broadcast %4 : vector<1x384xf32> to vector<2x384xf32>
    %833 = arith.addf %831, %832 : vector<2x384xf32>
    %834 = vector.extract_strided_slice %830 {offsets = [0, 0], sizes = [2, 32], strides = [1, 1]} : vector<2x384xf32> to vector<2x32xf32>
    %835 = vector.extract_strided_slice %833 {offsets = [0, 0], sizes = [2, 32], strides = [1, 1]} : vector<2x384xf32> to vector<2x32xf32>
    %836 = arith.addf %834, %835 : vector<2x32xf32>
    %cst_266 = arith.constant 5.000000e-01 : f32
    %837 = vector.broadcast %cst_266 : f32 to vector<2x32xf32>
    %838 = arith.mulf %837, %836 : vector<2x32xf32>
    %839 = math.tanh %838 : vector<2x32xf32>
    %cst_267 = arith.constant 1.000000e+00 : f32
    %840 = vector.broadcast %cst_267 : f32 to vector<2x32xf32>
    %841 = arith.addf %839, %840 : vector<2x32xf32>
    %cst_268 = arith.constant 5.000000e-01 : f32
    %842 = vector.broadcast %cst_268 : f32 to vector<2x32xf32>
    %843 = arith.mulf %842, %841 : vector<2x32xf32>
    %844 = vector.extract_strided_slice %830 {offsets = [0, 128], sizes = [2, 32], strides = [1, 1]} : vector<2x384xf32> to vector<2x32xf32>
    %845 = vector.extract_strided_slice %833 {offsets = [0, 128], sizes = [2, 32], strides = [1, 1]} : vector<2x384xf32> to vector<2x32xf32>
    %846 = arith.addf %844, %845 : vector<2x32xf32>
    %cst_269 = arith.constant 5.000000e-01 : f32
    %847 = vector.broadcast %cst_269 : f32 to vector<2x32xf32>
    %848 = arith.mulf %847, %846 : vector<2x32xf32>
    %849 = math.tanh %848 : vector<2x32xf32>
    %cst_270 = arith.constant 1.000000e+00 : f32
    %850 = vector.broadcast %cst_270 : f32 to vector<2x32xf32>
    %851 = arith.addf %849, %850 : vector<2x32xf32>
    %cst_271 = arith.constant 5.000000e-01 : f32
    %852 = vector.broadcast %cst_271 : f32 to vector<2x32xf32>
    %853 = arith.mulf %852, %851 : vector<2x32xf32>
    %854 = vector.extract_strided_slice %830 {offsets = [0, 256], sizes = [2, 32], strides = [1, 1]} : vector<2x384xf32> to vector<2x32xf32>
    %855 = vector.extract_strided_slice %833 {offsets = [0, 256], sizes = [2, 32], strides = [1, 1]} : vector<2x384xf32> to vector<2x32xf32>
    %856 = arith.mulf %843, %855 : vector<2x32xf32>
    %857 = arith.addf %854, %856 : vector<2x32xf32>
    %858 = math.tanh %857 : vector<2x32xf32>
    %cst_272 = arith.constant 1.000000e+00 : f32
    %859 = vector.broadcast %cst_272 : f32 to vector<2x32xf32>
    %860 = arith.subf %859, %853 : vector<2x32xf32>
    %861 = arith.mulf %860, %858 : vector<2x32xf32>
    %862 = arith.mulf %853, %728 : vector<2x32xf32>
    %863 = arith.addf %861, %862 : vector<2x32xf32>
    %864 = tpu.concatenate %863, %760 in 1 : vector<2x32xf32>, vector<2x32xf32> -> vector<2x64xf32>
    %c0_273 = arith.constant 0 : index
    %c0_274 = arith.constant 0 : index
    %c0_275 = arith.constant 0 : index
    %865 = vector.load %arg12[%c0_273, %c0_274, %c0_275] : memref<3x64x512xf32, #tpu.memory_space<vmem>>, vector<1x64x512xf32>
    %866 = vector.shape_cast %865 : vector<1x64x512xf32> to vector<64x512xf32>
    %cst_276 = arith.constant dense<0.000000e+00> : vector<2x512xf32>
    %867 = tpu.matmul %864, %866, %cst_276 {dimension_numbers = #tpu.dot_dimension_numbers<[1], [0], [0], [1], [0, 0, 1, 1], [], []>} : vector<2x64xf32>, vector<64x512xf32>, vector<2x512xf32> -> vector<2x512xf32>
    %868 = vector.broadcast %6 : vector<1x512xf32> to vector<2x512xf32>
    %869 = arith.addf %867, %868 : vector<2x512xf32>
    %870 = vector.extract_strided_slice %869 {offsets = [0, 0], sizes = [2, 32], strides = [1, 1]} : vector<2x512xf32> to vector<2x32xf32>
    %cst_277 = arith.constant 5.000000e-01 : f32
    %871 = vector.broadcast %cst_277 : f32 to vector<2x32xf32>
    %872 = arith.mulf %871, %870 : vector<2x32xf32>
    %873 = math.tanh %872 : vector<2x32xf32>
    %cst_278 = arith.constant 1.000000e+00 : f32
    %874 = vector.broadcast %cst_278 : f32 to vector<2x32xf32>
    %875 = arith.addf %873, %874 : vector<2x32xf32>
    %cst_279 = arith.constant 5.000000e-01 : f32
    %876 = vector.broadcast %cst_279 : f32 to vector<2x32xf32>
    %877 = arith.mulf %876, %875 : vector<2x32xf32>
    %878 = vector.extract_strided_slice %869 {offsets = [0, 128], sizes = [2, 32], strides = [1, 1]} : vector<2x512xf32> to vector<2x32xf32>
    %cst_280 = arith.constant 5.000000e-01 : f32
    %879 = vector.broadcast %cst_280 : f32 to vector<2x32xf32>
    %880 = arith.mulf %879, %878 : vector<2x32xf32>
    %881 = math.tanh %880 : vector<2x32xf32>
    %cst_281 = arith.constant 1.000000e+00 : f32
    %882 = vector.broadcast %cst_281 : f32 to vector<2x32xf32>
    %883 = arith.addf %881, %882 : vector<2x32xf32>
    %cst_282 = arith.constant 5.000000e-01 : f32
    %884 = vector.broadcast %cst_282 : f32 to vector<2x32xf32>
    %885 = arith.mulf %884, %883 : vector<2x32xf32>
    %886 = vector.extract_strided_slice %869 {offsets = [0, 256], sizes = [2, 32], strides = [1, 1]} : vector<2x512xf32> to vector<2x32xf32>
    %887 = vector.extract_strided_slice %869 {offsets = [0, 384], sizes = [2, 32], strides = [1, 1]} : vector<2x512xf32> to vector<2x32xf32>
    %888 = arith.mulf %877, %887 : vector<2x32xf32>
    %889 = arith.addf %886, %888 : vector<2x32xf32>
    %890 = math.tanh %889 : vector<2x32xf32>
    %cst_283 = arith.constant 1.000000e+00 : f32
    %891 = vector.broadcast %cst_283 : f32 to vector<2x32xf32>
    %892 = arith.subf %891, %885 : vector<2x32xf32>
    %893 = arith.mulf %892, %890 : vector<2x32xf32>
    %894 = arith.mulf %885, %760 : vector<2x32xf32>
    %895 = arith.addf %893, %894 : vector<2x32xf32>
    %896 = tpu.concatenate %895, %792 in 1 : vector<2x32xf32>, vector<2x32xf32> -> vector<2x64xf32>
    %c1_284 = arith.constant 1 : index
    %c0_285 = arith.constant 0 : index
    %c0_286 = arith.constant 0 : index
    %897 = vector.load %arg12[%c1_284, %c0_285, %c0_286] : memref<3x64x512xf32, #tpu.memory_space<vmem>>, vector<1x64x512xf32>
    %898 = vector.shape_cast %897 : vector<1x64x512xf32> to vector<64x512xf32>
    %cst_287 = arith.constant dense<0.000000e+00> : vector<2x512xf32>
    %899 = tpu.matmul %896, %898, %cst_287 {dimension_numbers = #tpu.dot_dimension_numbers<[1], [0], [0], [1], [0, 0, 1, 1], [], []>} : vector<2x64xf32>, vector<64x512xf32>, vector<2x512xf32> -> vector<2x512xf32>
    %900 = vector.broadcast %8 : vector<1x512xf32> to vector<2x512xf32>
    %901 = arith.addf %899, %900 : vector<2x512xf32>
    %902 = vector.extract_strided_slice %901 {offsets = [0, 0], sizes = [2, 32], strides = [1, 1]} : vector<2x512xf32> to vector<2x32xf32>
    %cst_288 = arith.constant 5.000000e-01 : f32
    %903 = vector.broadcast %cst_288 : f32 to vector<2x32xf32>
    %904 = arith.mulf %903, %902 : vector<2x32xf32>
    %905 = math.tanh %904 : vector<2x32xf32>
    %cst_289 = arith.constant 1.000000e+00 : f32
    %906 = vector.broadcast %cst_289 : f32 to vector<2x32xf32>
    %907 = arith.addf %905, %906 : vector<2x32xf32>
    %cst_290 = arith.constant 5.000000e-01 : f32
    %908 = vector.broadcast %cst_290 : f32 to vector<2x32xf32>
    %909 = arith.mulf %908, %907 : vector<2x32xf32>
    %910 = vector.extract_strided_slice %901 {offsets = [0, 128], sizes = [2, 32], strides = [1, 1]} : vector<2x512xf32> to vector<2x32xf32>
    %cst_291 = arith.constant 5.000000e-01 : f32
    %911 = vector.broadcast %cst_291 : f32 to vector<2x32xf32>
    %912 = arith.mulf %911, %910 : vector<2x32xf32>
    %913 = math.tanh %912 : vector<2x32xf32>
    %cst_292 = arith.constant 1.000000e+00 : f32
    %914 = vector.broadcast %cst_292 : f32 to vector<2x32xf32>
    %915 = arith.addf %913, %914 : vector<2x32xf32>
    %cst_293 = arith.constant 5.000000e-01 : f32
    %916 = vector.broadcast %cst_293 : f32 to vector<2x32xf32>
    %917 = arith.mulf %916, %915 : vector<2x32xf32>
    %918 = vector.extract_strided_slice %901 {offsets = [0, 256], sizes = [2, 32], strides = [1, 1]} : vector<2x512xf32> to vector<2x32xf32>
    %919 = vector.extract_strided_slice %901 {offsets = [0, 384], sizes = [2, 32], strides = [1, 1]} : vector<2x512xf32> to vector<2x32xf32>
    %920 = arith.mulf %909, %919 : vector<2x32xf32>
    %921 = arith.addf %918, %920 : vector<2x32xf32>
    %922 = math.tanh %921 : vector<2x32xf32>
    %cst_294 = arith.constant 1.000000e+00 : f32
    %923 = vector.broadcast %cst_294 : f32 to vector<2x32xf32>
    %924 = arith.subf %923, %917 : vector<2x32xf32>
    %925 = arith.mulf %924, %922 : vector<2x32xf32>
    %926 = arith.mulf %917, %792 : vector<2x32xf32>
    %927 = arith.addf %925, %926 : vector<2x32xf32>
    %928 = tpu.concatenate %927, %824 in 1 : vector<2x32xf32>, vector<2x32xf32> -> vector<2x64xf32>
    %c2_295 = arith.constant 2 : index
    %c0_296 = arith.constant 0 : index
    %c0_297 = arith.constant 0 : index
    %929 = vector.load %arg12[%c2_295, %c0_296, %c0_297] : memref<3x64x512xf32, #tpu.memory_space<vmem>>, vector<1x64x512xf32>
    %930 = vector.shape_cast %929 : vector<1x64x512xf32> to vector<64x512xf32>
    %cst_298 = arith.constant dense<0.000000e+00> : vector<2x512xf32>
    %931 = tpu.matmul %928, %930, %cst_298 {dimension_numbers = #tpu.dot_dimension_numbers<[1], [0], [0], [1], [0, 0, 1, 1], [], []>} : vector<2x64xf32>, vector<64x512xf32>, vector<2x512xf32> -> vector<2x512xf32>
    %932 = vector.broadcast %10 : vector<1x512xf32> to vector<2x512xf32>
    %933 = arith.addf %931, %932 : vector<2x512xf32>
    %934 = vector.extract_strided_slice %933 {offsets = [0, 0], sizes = [2, 32], strides = [1, 1]} : vector<2x512xf32> to vector<2x32xf32>
    %cst_299 = arith.constant 5.000000e-01 : f32
    %935 = vector.broadcast %cst_299 : f32 to vector<2x32xf32>
    %936 = arith.mulf %935, %934 : vector<2x32xf32>
    %937 = math.tanh %936 : vector<2x32xf32>
    %cst_300 = arith.constant 1.000000e+00 : f32
    %938 = vector.broadcast %cst_300 : f32 to vector<2x32xf32>
    %939 = arith.addf %937, %938 : vector<2x32xf32>
    %cst_301 = arith.constant 5.000000e-01 : f32
    %940 = vector.broadcast %cst_301 : f32 to vector<2x32xf32>
    %941 = arith.mulf %940, %939 : vector<2x32xf32>
    %942 = vector.extract_strided_slice %933 {offsets = [0, 128], sizes = [2, 32], strides = [1, 1]} : vector<2x512xf32> to vector<2x32xf32>
    %cst_302 = arith.constant 5.000000e-01 : f32
    %943 = vector.broadcast %cst_302 : f32 to vector<2x32xf32>
    %944 = arith.mulf %943, %942 : vector<2x32xf32>
    %945 = math.tanh %944 : vector<2x32xf32>
    %cst_303 = arith.constant 1.000000e+00 : f32
    %946 = vector.broadcast %cst_303 : f32 to vector<2x32xf32>
    %947 = arith.addf %945, %946 : vector<2x32xf32>
    %cst_304 = arith.constant 5.000000e-01 : f32
    %948 = vector.broadcast %cst_304 : f32 to vector<2x32xf32>
    %949 = arith.mulf %948, %947 : vector<2x32xf32>
    %950 = vector.extract_strided_slice %933 {offsets = [0, 256], sizes = [2, 32], strides = [1, 1]} : vector<2x512xf32> to vector<2x32xf32>
    %951 = vector.extract_strided_slice %933 {offsets = [0, 384], sizes = [2, 32], strides = [1, 1]} : vector<2x512xf32> to vector<2x32xf32>
    %952 = arith.mulf %941, %951 : vector<2x32xf32>
    %953 = arith.addf %950, %952 : vector<2x32xf32>
    %954 = math.tanh %953 : vector<2x32xf32>
    %cst_305 = arith.constant 1.000000e+00 : f32
    %955 = vector.broadcast %cst_305 : f32 to vector<2x32xf32>
    %956 = arith.subf %955, %949 : vector<2x32xf32>
    %957 = arith.mulf %956, %954 : vector<2x32xf32>
    %958 = arith.mulf %949, %824 : vector<2x32xf32>
    %959 = arith.addf %957, %958 : vector<2x32xf32>
    %960 = vector.extract_strided_slice %0 {offsets = [0, 7], sizes = [2, 1], strides = [1, 1]} : vector<2x8xf32> to vector<2x1xf32>
    %961 = vector.broadcast %960 : vector<2x1xf32> to vector<2x384xf32>
    %962 = vector.broadcast %1 : vector<1x384xf32> to vector<2x384xf32>
    %963 = arith.mulf %961, %962 : vector<2x384xf32>
    %964 = vector.broadcast %2 : vector<1x384xf32> to vector<2x384xf32>
    %965 = arith.addf %963, %964 : vector<2x384xf32>
    %cst_306 = arith.constant dense<0.000000e+00> : vector<2x384xf32>
    %966 = tpu.matmul %863, %3, %cst_306 {dimension_numbers = #tpu.dot_dimension_numbers<[1], [0], [0], [1], [0, 0, 1, 1], [], []>} : vector<2x32xf32>, vector<32x384xf32>, vector<2x384xf32> -> vector<2x384xf32>
    %967 = vector.broadcast %4 : vector<1x384xf32> to vector<2x384xf32>
    %968 = arith.addf %966, %967 : vector<2x384xf32>
    %969 = vector.extract_strided_slice %965 {offsets = [0, 0], sizes = [2, 32], strides = [1, 1]} : vector<2x384xf32> to vector<2x32xf32>
    %970 = vector.extract_strided_slice %968 {offsets = [0, 0], sizes = [2, 32], strides = [1, 1]} : vector<2x384xf32> to vector<2x32xf32>
    %971 = arith.addf %969, %970 : vector<2x32xf32>
    %cst_307 = arith.constant 5.000000e-01 : f32
    %972 = vector.broadcast %cst_307 : f32 to vector<2x32xf32>
    %973 = arith.mulf %972, %971 : vector<2x32xf32>
    %974 = math.tanh %973 : vector<2x32xf32>
    %cst_308 = arith.constant 1.000000e+00 : f32
    %975 = vector.broadcast %cst_308 : f32 to vector<2x32xf32>
    %976 = arith.addf %974, %975 : vector<2x32xf32>
    %cst_309 = arith.constant 5.000000e-01 : f32
    %977 = vector.broadcast %cst_309 : f32 to vector<2x32xf32>
    %978 = arith.mulf %977, %976 : vector<2x32xf32>
    %979 = vector.extract_strided_slice %965 {offsets = [0, 128], sizes = [2, 32], strides = [1, 1]} : vector<2x384xf32> to vector<2x32xf32>
    %980 = vector.extract_strided_slice %968 {offsets = [0, 128], sizes = [2, 32], strides = [1, 1]} : vector<2x384xf32> to vector<2x32xf32>
    %981 = arith.addf %979, %980 : vector<2x32xf32>
    %cst_310 = arith.constant 5.000000e-01 : f32
    %982 = vector.broadcast %cst_310 : f32 to vector<2x32xf32>
    %983 = arith.mulf %982, %981 : vector<2x32xf32>
    %984 = math.tanh %983 : vector<2x32xf32>
    %cst_311 = arith.constant 1.000000e+00 : f32
    %985 = vector.broadcast %cst_311 : f32 to vector<2x32xf32>
    %986 = arith.addf %984, %985 : vector<2x32xf32>
    %cst_312 = arith.constant 5.000000e-01 : f32
    %987 = vector.broadcast %cst_312 : f32 to vector<2x32xf32>
    %988 = arith.mulf %987, %986 : vector<2x32xf32>
    %989 = vector.extract_strided_slice %965 {offsets = [0, 256], sizes = [2, 32], strides = [1, 1]} : vector<2x384xf32> to vector<2x32xf32>
    %990 = vector.extract_strided_slice %968 {offsets = [0, 256], sizes = [2, 32], strides = [1, 1]} : vector<2x384xf32> to vector<2x32xf32>
    %991 = arith.mulf %978, %990 : vector<2x32xf32>
    %992 = arith.addf %989, %991 : vector<2x32xf32>
    %993 = math.tanh %992 : vector<2x32xf32>
    %cst_313 = arith.constant 1.000000e+00 : f32
    %994 = vector.broadcast %cst_313 : f32 to vector<2x32xf32>
    %995 = arith.subf %994, %988 : vector<2x32xf32>
    %996 = arith.mulf %995, %993 : vector<2x32xf32>
    %997 = arith.mulf %988, %863 : vector<2x32xf32>
    %998 = arith.addf %996, %997 : vector<2x32xf32>
    %999 = tpu.concatenate %998, %895 in 1 : vector<2x32xf32>, vector<2x32xf32> -> vector<2x64xf32>
    %c0_314 = arith.constant 0 : index
    %c0_315 = arith.constant 0 : index
    %c0_316 = arith.constant 0 : index
    %1000 = vector.load %arg12[%c0_314, %c0_315, %c0_316] : memref<3x64x512xf32, #tpu.memory_space<vmem>>, vector<1x64x512xf32>
    %1001 = vector.shape_cast %1000 : vector<1x64x512xf32> to vector<64x512xf32>
    %cst_317 = arith.constant dense<0.000000e+00> : vector<2x512xf32>
    %1002 = tpu.matmul %999, %1001, %cst_317 {dimension_numbers = #tpu.dot_dimension_numbers<[1], [0], [0], [1], [0, 0, 1, 1], [], []>} : vector<2x64xf32>, vector<64x512xf32>, vector<2x512xf32> -> vector<2x512xf32>
    %1003 = vector.broadcast %6 : vector<1x512xf32> to vector<2x512xf32>
    %1004 = arith.addf %1002, %1003 : vector<2x512xf32>
    %1005 = vector.extract_strided_slice %1004 {offsets = [0, 0], sizes = [2, 32], strides = [1, 1]} : vector<2x512xf32> to vector<2x32xf32>
    %cst_318 = arith.constant 5.000000e-01 : f32
    %1006 = vector.broadcast %cst_318 : f32 to vector<2x32xf32>
    %1007 = arith.mulf %1006, %1005 : vector<2x32xf32>
    %1008 = math.tanh %1007 : vector<2x32xf32>
    %cst_319 = arith.constant 1.000000e+00 : f32
    %1009 = vector.broadcast %cst_319 : f32 to vector<2x32xf32>
    %1010 = arith.addf %1008, %1009 : vector<2x32xf32>
    %cst_320 = arith.constant 5.000000e-01 : f32
    %1011 = vector.broadcast %cst_320 : f32 to vector<2x32xf32>
    %1012 = arith.mulf %1011, %1010 : vector<2x32xf32>
    %1013 = vector.extract_strided_slice %1004 {offsets = [0, 128], sizes = [2, 32], strides = [1, 1]} : vector<2x512xf32> to vector<2x32xf32>
    %cst_321 = arith.constant 5.000000e-01 : f32
    %1014 = vector.broadcast %cst_321 : f32 to vector<2x32xf32>
    %1015 = arith.mulf %1014, %1013 : vector<2x32xf32>
    %1016 = math.tanh %1015 : vector<2x32xf32>
    %cst_322 = arith.constant 1.000000e+00 : f32
    %1017 = vector.broadcast %cst_322 : f32 to vector<2x32xf32>
    %1018 = arith.addf %1016, %1017 : vector<2x32xf32>
    %cst_323 = arith.constant 5.000000e-01 : f32
    %1019 = vector.broadcast %cst_323 : f32 to vector<2x32xf32>
    %1020 = arith.mulf %1019, %1018 : vector<2x32xf32>
    %1021 = vector.extract_strided_slice %1004 {offsets = [0, 256], sizes = [2, 32], strides = [1, 1]} : vector<2x512xf32> to vector<2x32xf32>
    %1022 = vector.extract_strided_slice %1004 {offsets = [0, 384], sizes = [2, 32], strides = [1, 1]} : vector<2x512xf32> to vector<2x32xf32>
    %1023 = arith.mulf %1012, %1022 : vector<2x32xf32>
    %1024 = arith.addf %1021, %1023 : vector<2x32xf32>
    %1025 = math.tanh %1024 : vector<2x32xf32>
    %cst_324 = arith.constant 1.000000e+00 : f32
    %1026 = vector.broadcast %cst_324 : f32 to vector<2x32xf32>
    %1027 = arith.subf %1026, %1020 : vector<2x32xf32>
    %1028 = arith.mulf %1027, %1025 : vector<2x32xf32>
    %1029 = arith.mulf %1020, %895 : vector<2x32xf32>
    %1030 = arith.addf %1028, %1029 : vector<2x32xf32>
    %1031 = tpu.concatenate %1030, %927 in 1 : vector<2x32xf32>, vector<2x32xf32> -> vector<2x64xf32>
    %c1_325 = arith.constant 1 : index
    %c0_326 = arith.constant 0 : index
    %c0_327 = arith.constant 0 : index
    %1032 = vector.load %arg12[%c1_325, %c0_326, %c0_327] : memref<3x64x512xf32, #tpu.memory_space<vmem>>, vector<1x64x512xf32>
    %1033 = vector.shape_cast %1032 : vector<1x64x512xf32> to vector<64x512xf32>
    %cst_328 = arith.constant dense<0.000000e+00> : vector<2x512xf32>
    %1034 = tpu.matmul %1031, %1033, %cst_328 {dimension_numbers = #tpu.dot_dimension_numbers<[1], [0], [0], [1], [0, 0, 1, 1], [], []>} : vector<2x64xf32>, vector<64x512xf32>, vector<2x512xf32> -> vector<2x512xf32>
    %1035 = vector.broadcast %8 : vector<1x512xf32> to vector<2x512xf32>
    %1036 = arith.addf %1034, %1035 : vector<2x512xf32>
    %1037 = vector.extract_strided_slice %1036 {offsets = [0, 0], sizes = [2, 32], strides = [1, 1]} : vector<2x512xf32> to vector<2x32xf32>
    %cst_329 = arith.constant 5.000000e-01 : f32
    %1038 = vector.broadcast %cst_329 : f32 to vector<2x32xf32>
    %1039 = arith.mulf %1038, %1037 : vector<2x32xf32>
    %1040 = math.tanh %1039 : vector<2x32xf32>
    %cst_330 = arith.constant 1.000000e+00 : f32
    %1041 = vector.broadcast %cst_330 : f32 to vector<2x32xf32>
    %1042 = arith.addf %1040, %1041 : vector<2x32xf32>
    %cst_331 = arith.constant 5.000000e-01 : f32
    %1043 = vector.broadcast %cst_331 : f32 to vector<2x32xf32>
    %1044 = arith.mulf %1043, %1042 : vector<2x32xf32>
    %1045 = vector.extract_strided_slice %1036 {offsets = [0, 128], sizes = [2, 32], strides = [1, 1]} : vector<2x512xf32> to vector<2x32xf32>
    %cst_332 = arith.constant 5.000000e-01 : f32
    %1046 = vector.broadcast %cst_332 : f32 to vector<2x32xf32>
    %1047 = arith.mulf %1046, %1045 : vector<2x32xf32>
    %1048 = math.tanh %1047 : vector<2x32xf32>
    %cst_333 = arith.constant 1.000000e+00 : f32
    %1049 = vector.broadcast %cst_333 : f32 to vector<2x32xf32>
    %1050 = arith.addf %1048, %1049 : vector<2x32xf32>
    %cst_334 = arith.constant 5.000000e-01 : f32
    %1051 = vector.broadcast %cst_334 : f32 to vector<2x32xf32>
    %1052 = arith.mulf %1051, %1050 : vector<2x32xf32>
    %1053 = vector.extract_strided_slice %1036 {offsets = [0, 256], sizes = [2, 32], strides = [1, 1]} : vector<2x512xf32> to vector<2x32xf32>
    %1054 = vector.extract_strided_slice %1036 {offsets = [0, 384], sizes = [2, 32], strides = [1, 1]} : vector<2x512xf32> to vector<2x32xf32>
    %1055 = arith.mulf %1044, %1054 : vector<2x32xf32>
    %1056 = arith.addf %1053, %1055 : vector<2x32xf32>
    %1057 = math.tanh %1056 : vector<2x32xf32>
    %cst_335 = arith.constant 1.000000e+00 : f32
    %1058 = vector.broadcast %cst_335 : f32 to vector<2x32xf32>
    %1059 = arith.subf %1058, %1052 : vector<2x32xf32>
    %1060 = arith.mulf %1059, %1057 : vector<2x32xf32>
    %1061 = arith.mulf %1052, %927 : vector<2x32xf32>
    %1062 = arith.addf %1060, %1061 : vector<2x32xf32>
    %1063 = tpu.concatenate %1062, %959 in 1 : vector<2x32xf32>, vector<2x32xf32> -> vector<2x64xf32>
    %c2_336 = arith.constant 2 : index
    %c0_337 = arith.constant 0 : index
    %c0_338 = arith.constant 0 : index
    %1064 = vector.load %arg12[%c2_336, %c0_337, %c0_338] : memref<3x64x512xf32, #tpu.memory_space<vmem>>, vector<1x64x512xf32>
    %1065 = vector.shape_cast %1064 : vector<1x64x512xf32> to vector<64x512xf32>
    %cst_339 = arith.constant dense<0.000000e+00> : vector<2x512xf32>
    %1066 = tpu.matmul %1063, %1065, %cst_339 {dimension_numbers = #tpu.dot_dimension_numbers<[1], [0], [0], [1], [0, 0, 1, 1], [], []>} : vector<2x64xf32>, vector<64x512xf32>, vector<2x512xf32> -> vector<2x512xf32>
    %1067 = vector.broadcast %10 : vector<1x512xf32> to vector<2x512xf32>
    %1068 = arith.addf %1066, %1067 : vector<2x512xf32>
    %1069 = vector.extract_strided_slice %1068 {offsets = [0, 0], sizes = [2, 32], strides = [1, 1]} : vector<2x512xf32> to vector<2x32xf32>
    %cst_340 = arith.constant 5.000000e-01 : f32
    %1070 = vector.broadcast %cst_340 : f32 to vector<2x32xf32>
    %1071 = arith.mulf %1070, %1069 : vector<2x32xf32>
    %1072 = math.tanh %1071 : vector<2x32xf32>
    %cst_341 = arith.constant 1.000000e+00 : f32
    %1073 = vector.broadcast %cst_341 : f32 to vector<2x32xf32>
    %1074 = arith.addf %1072, %1073 : vector<2x32xf32>
    %cst_342 = arith.constant 5.000000e-01 : f32
    %1075 = vector.broadcast %cst_342 : f32 to vector<2x32xf32>
    %1076 = arith.mulf %1075, %1074 : vector<2x32xf32>
    %1077 = vector.extract_strided_slice %1068 {offsets = [0, 128], sizes = [2, 32], strides = [1, 1]} : vector<2x512xf32> to vector<2x32xf32>
    %cst_343 = arith.constant 5.000000e-01 : f32
    %1078 = vector.broadcast %cst_343 : f32 to vector<2x32xf32>
    %1079 = arith.mulf %1078, %1077 : vector<2x32xf32>
    %1080 = math.tanh %1079 : vector<2x32xf32>
    %cst_344 = arith.constant 1.000000e+00 : f32
    %1081 = vector.broadcast %cst_344 : f32 to vector<2x32xf32>
    %1082 = arith.addf %1080, %1081 : vector<2x32xf32>
    %cst_345 = arith.constant 5.000000e-01 : f32
    %1083 = vector.broadcast %cst_345 : f32 to vector<2x32xf32>
    %1084 = arith.mulf %1083, %1082 : vector<2x32xf32>
    %1085 = vector.extract_strided_slice %1068 {offsets = [0, 256], sizes = [2, 32], strides = [1, 1]} : vector<2x512xf32> to vector<2x32xf32>
    %1086 = vector.extract_strided_slice %1068 {offsets = [0, 384], sizes = [2, 32], strides = [1, 1]} : vector<2x512xf32> to vector<2x32xf32>
    %1087 = arith.mulf %1076, %1086 : vector<2x32xf32>
    %1088 = arith.addf %1085, %1087 : vector<2x32xf32>
    %1089 = math.tanh %1088 : vector<2x32xf32>
    %cst_346 = arith.constant 1.000000e+00 : f32
    %1090 = vector.broadcast %cst_346 : f32 to vector<2x32xf32>
    %1091 = arith.subf %1090, %1084 : vector<2x32xf32>
    %1092 = arith.mulf %1091, %1089 : vector<2x32xf32>
    %1093 = arith.mulf %1084, %959 : vector<2x32xf32>
    %1094 = arith.addf %1092, %1093 : vector<2x32xf32>
    %c0_347 = arith.constant 0 : index
    %c0_348 = arith.constant 0 : index
    %1095 = vector.load %arg14[%c0_347, %c0_348] : memref<1x32xf32, #tpu.memory_space<vmem>>, vector<1x32xf32>
    %c0_349 = arith.constant 0 : index
    %c0_350 = arith.constant 0 : index
    %1096 = vector.load %arg15[%c0_349, %c0_350] : memref<1x1xf32, #tpu.memory_space<vmem>>, vector<1x1xf32>
    %1097 = vector.broadcast %1095 : vector<1x32xf32> to vector<2x32xf32>
    %1098 = arith.mulf %149, %1097 : vector<2x32xf32>
    %cst_351 = arith.constant dense<0.000000e+00> : vector<2xf32>
    %1099 = vector.multi_reduction <add>, %1098, %cst_351 [1] : vector<2x32xf32> to vector<2xf32>
    %1100 = vector.shape_cast %1099 : vector<2xf32> to vector<2x1xf32>
    %1101 = vector.broadcast %1096 : vector<1x1xf32> to vector<2x1xf32>
    %1102 = arith.addf %1100, %1101 : vector<2x1xf32>
    %1103 = vector.broadcast %1095 : vector<1x32xf32> to vector<2x32xf32>
    %1104 = arith.mulf %284, %1103 : vector<2x32xf32>
    %cst_352 = arith.constant dense<0.000000e+00> : vector<2xf32>
    %1105 = vector.multi_reduction <add>, %1104, %cst_352 [1] : vector<2x32xf32> to vector<2xf32>
    %1106 = vector.shape_cast %1105 : vector<2xf32> to vector<2x1xf32>
    %1107 = vector.broadcast %1096 : vector<1x1xf32> to vector<2x1xf32>
    %1108 = arith.addf %1106, %1107 : vector<2x1xf32>
    %1109 = vector.broadcast %1095 : vector<1x32xf32> to vector<2x32xf32>
    %1110 = arith.mulf %419, %1109 : vector<2x32xf32>
    %cst_353 = arith.constant dense<0.000000e+00> : vector<2xf32>
    %1111 = vector.multi_reduction <add>, %1110, %cst_353 [1] : vector<2x32xf32> to vector<2xf32>
    %1112 = vector.shape_cast %1111 : vector<2xf32> to vector<2x1xf32>
    %1113 = vector.broadcast %1096 : vector<1x1xf32> to vector<2x1xf32>
    %1114 = arith.addf %1112, %1113 : vector<2x1xf32>
    %1115 = vector.broadcast %1095 : vector<1x32xf32> to vector<2x32xf32>
    %1116 = arith.mulf %554, %1115 : vector<2x32xf32>
    %cst_354 = arith.constant dense<0.000000e+00> : vector<2xf32>
    %1117 = vector.multi_reduction <add>, %1116, %cst_354 [1] : vector<2x32xf32> to vector<2xf32>
    %1118 = vector.shape_cast %1117 : vector<2xf32> to vector<2x1xf32>
    %1119 = vector.broadcast %1096 : vector<1x1xf32> to vector<2x1xf32>
    %1120 = arith.addf %1118, %1119 : vector<2x1xf32>
    %1121 = vector.broadcast %1095 : vector<1x32xf32> to vector<2x32xf32>
    %1122 = arith.mulf %689, %1121 : vector<2x32xf32>
    %cst_355 = arith.constant dense<0.000000e+00> : vector<2xf32>
    %1123 = vector.multi_reduction <add>, %1122, %cst_355 [1] : vector<2x32xf32> to vector<2xf32>
    %1124 = vector.shape_cast %1123 : vector<2xf32> to vector<2x1xf32>
    %1125 = vector.broadcast %1096 : vector<1x1xf32> to vector<2x1xf32>
    %1126 = arith.addf %1124, %1125 : vector<2x1xf32>
    %1127 = vector.broadcast %1095 : vector<1x32xf32> to vector<2x32xf32>
    %1128 = arith.mulf %824, %1127 : vector<2x32xf32>
    %cst_356 = arith.constant dense<0.000000e+00> : vector<2xf32>
    %1129 = vector.multi_reduction <add>, %1128, %cst_356 [1] : vector<2x32xf32> to vector<2xf32>
    %1130 = vector.shape_cast %1129 : vector<2xf32> to vector<2x1xf32>
    %1131 = vector.broadcast %1096 : vector<1x1xf32> to vector<2x1xf32>
    %1132 = arith.addf %1130, %1131 : vector<2x1xf32>
    %1133 = vector.broadcast %1095 : vector<1x32xf32> to vector<2x32xf32>
    %1134 = arith.mulf %959, %1133 : vector<2x32xf32>
    %cst_357 = arith.constant dense<0.000000e+00> : vector<2xf32>
    %1135 = vector.multi_reduction <add>, %1134, %cst_357 [1] : vector<2x32xf32> to vector<2xf32>
    %1136 = vector.shape_cast %1135 : vector<2xf32> to vector<2x1xf32>
    %1137 = vector.broadcast %1096 : vector<1x1xf32> to vector<2x1xf32>
    %1138 = arith.addf %1136, %1137 : vector<2x1xf32>
    %1139 = vector.broadcast %1095 : vector<1x32xf32> to vector<2x32xf32>
    %1140 = arith.mulf %1094, %1139 : vector<2x32xf32>
    %cst_358 = arith.constant dense<0.000000e+00> : vector<2xf32>
    %1141 = vector.multi_reduction <add>, %1140, %cst_358 [1] : vector<2x32xf32> to vector<2xf32>
    %1142 = vector.shape_cast %1141 : vector<2xf32> to vector<2x1xf32>
    %1143 = vector.broadcast %1096 : vector<1x1xf32> to vector<2x1xf32>
    %1144 = arith.addf %1142, %1143 : vector<2x1xf32>
    %1145 = arith.maximumf %1102, %1108 : vector<2x1xf32>
    %1146 = arith.maximumf %1145, %1114 : vector<2x1xf32>
    %1147 = arith.maximumf %1146, %1120 : vector<2x1xf32>
    %1148 = arith.maximumf %1147, %1126 : vector<2x1xf32>
    %1149 = arith.maximumf %1148, %1132 : vector<2x1xf32>
    %1150 = arith.maximumf %1149, %1138 : vector<2x1xf32>
    %1151 = arith.maximumf %1150, %1144 : vector<2x1xf32>
    %1152 = arith.subf %1102, %1151 : vector<2x1xf32>
    %1153 = math.exp %1152 : vector<2x1xf32>
    %1154 = arith.subf %1108, %1151 : vector<2x1xf32>
    %1155 = math.exp %1154 : vector<2x1xf32>
    %1156 = arith.subf %1114, %1151 : vector<2x1xf32>
    %1157 = math.exp %1156 : vector<2x1xf32>
    %1158 = arith.subf %1120, %1151 : vector<2x1xf32>
    %1159 = math.exp %1158 : vector<2x1xf32>
    %1160 = arith.subf %1126, %1151 : vector<2x1xf32>
    %1161 = math.exp %1160 : vector<2x1xf32>
    %1162 = arith.subf %1132, %1151 : vector<2x1xf32>
    %1163 = math.exp %1162 : vector<2x1xf32>
    %1164 = arith.subf %1138, %1151 : vector<2x1xf32>
    %1165 = math.exp %1164 : vector<2x1xf32>
    %1166 = arith.subf %1144, %1151 : vector<2x1xf32>
    %1167 = math.exp %1166 : vector<2x1xf32>
    %1168 = arith.addf %1153, %1155 : vector<2x1xf32>
    %1169 = arith.addf %1168, %1157 : vector<2x1xf32>
    %1170 = arith.addf %1169, %1159 : vector<2x1xf32>
    %1171 = arith.addf %1170, %1161 : vector<2x1xf32>
    %1172 = arith.addf %1171, %1163 : vector<2x1xf32>
    %1173 = arith.addf %1172, %1165 : vector<2x1xf32>
    %1174 = arith.addf %1173, %1167 : vector<2x1xf32>
    %1175 = tpu.reciprocal %1174 {approx = true} : vector<2x1xf32> -> vector<2x1xf32>
    %cst_359 = arith.constant 0.000000e+00 : f32
    %1176 = vector.broadcast %cst_359 : f32 to vector<2x32xf32>
    %1177 = arith.mulf %1153, %1175 : vector<2x1xf32>
    %1178 = vector.broadcast %1177 : vector<2x1xf32> to vector<2x32xf32>
    %1179 = arith.mulf %149, %1178 : vector<2x32xf32>
    %1180 = arith.addf %1176, %1179 : vector<2x32xf32>
    %1181 = arith.mulf %1155, %1175 : vector<2x1xf32>
    %1182 = vector.broadcast %1181 : vector<2x1xf32> to vector<2x32xf32>
    %1183 = arith.mulf %284, %1182 : vector<2x32xf32>
    %1184 = arith.addf %1180, %1183 : vector<2x32xf32>
    %1185 = arith.mulf %1157, %1175 : vector<2x1xf32>
    %1186 = vector.broadcast %1185 : vector<2x1xf32> to vector<2x32xf32>
    %1187 = arith.mulf %419, %1186 : vector<2x32xf32>
    %1188 = arith.addf %1184, %1187 : vector<2x32xf32>
    %1189 = arith.mulf %1159, %1175 : vector<2x1xf32>
    %1190 = vector.broadcast %1189 : vector<2x1xf32> to vector<2x32xf32>
    %1191 = arith.mulf %554, %1190 : vector<2x32xf32>
    %1192 = arith.addf %1188, %1191 : vector<2x32xf32>
    %1193 = arith.mulf %1161, %1175 : vector<2x1xf32>
    %1194 = vector.broadcast %1193 : vector<2x1xf32> to vector<2x32xf32>
    %1195 = arith.mulf %689, %1194 : vector<2x32xf32>
    %1196 = arith.addf %1192, %1195 : vector<2x32xf32>
    %1197 = arith.mulf %1163, %1175 : vector<2x1xf32>
    %1198 = vector.broadcast %1197 : vector<2x1xf32> to vector<2x32xf32>
    %1199 = arith.mulf %824, %1198 : vector<2x32xf32>
    %1200 = arith.addf %1196, %1199 : vector<2x32xf32>
    %1201 = arith.mulf %1165, %1175 : vector<2x1xf32>
    %1202 = vector.broadcast %1201 : vector<2x1xf32> to vector<2x32xf32>
    %1203 = arith.mulf %959, %1202 : vector<2x32xf32>
    %1204 = arith.addf %1200, %1203 : vector<2x32xf32>
    %1205 = arith.mulf %1167, %1175 : vector<2x1xf32>
    %1206 = vector.broadcast %1205 : vector<2x1xf32> to vector<2x32xf32>
    %1207 = arith.mulf %1094, %1206 : vector<2x32xf32>
    %1208 = arith.addf %1204, %1207 : vector<2x32xf32>
    %c0_360 = arith.constant 0 : index
    %c0_361 = arith.constant 0 : index
    %1209 = vector.load %arg16[%c0_360, %c0_361] : memref<1x32xf32, #tpu.memory_space<vmem>>, vector<1x32xf32>
    %c0_362 = arith.constant 0 : index
    %c0_363 = arith.constant 0 : index
    %1210 = vector.load %arg17[%c0_362, %c0_363] : memref<1x1xf32, #tpu.memory_space<vmem>>, vector<1x1xf32>
    %1211 = vector.broadcast %1209 : vector<1x32xf32> to vector<2x32xf32>
    %1212 = arith.mulf %149, %1211 : vector<2x32xf32>
    %cst_364 = arith.constant dense<0.000000e+00> : vector<2xf32>
    %1213 = vector.multi_reduction <add>, %1212, %cst_364 [1] : vector<2x32xf32> to vector<2xf32>
    %1214 = vector.shape_cast %1213 : vector<2xf32> to vector<2x1xf32>
    %1215 = vector.broadcast %1210 : vector<1x1xf32> to vector<2x1xf32>
    %1216 = arith.addf %1214, %1215 : vector<2x1xf32>
    %1217 = vector.broadcast %1209 : vector<1x32xf32> to vector<2x32xf32>
    %1218 = arith.mulf %284, %1217 : vector<2x32xf32>
    %cst_365 = arith.constant dense<0.000000e+00> : vector<2xf32>
    %1219 = vector.multi_reduction <add>, %1218, %cst_365 [1] : vector<2x32xf32> to vector<2xf32>
    %1220 = vector.shape_cast %1219 : vector<2xf32> to vector<2x1xf32>
    %1221 = vector.broadcast %1210 : vector<1x1xf32> to vector<2x1xf32>
    %1222 = arith.addf %1220, %1221 : vector<2x1xf32>
    %1223 = vector.broadcast %1209 : vector<1x32xf32> to vector<2x32xf32>
    %1224 = arith.mulf %419, %1223 : vector<2x32xf32>
    %cst_366 = arith.constant dense<0.000000e+00> : vector<2xf32>
    %1225 = vector.multi_reduction <add>, %1224, %cst_366 [1] : vector<2x32xf32> to vector<2xf32>
    %1226 = vector.shape_cast %1225 : vector<2xf32> to vector<2x1xf32>
    %1227 = vector.broadcast %1210 : vector<1x1xf32> to vector<2x1xf32>
    %1228 = arith.addf %1226, %1227 : vector<2x1xf32>
    %1229 = vector.broadcast %1209 : vector<1x32xf32> to vector<2x32xf32>
    %1230 = arith.mulf %554, %1229 : vector<2x32xf32>
    %cst_367 = arith.constant dense<0.000000e+00> : vector<2xf32>
    %1231 = vector.multi_reduction <add>, %1230, %cst_367 [1] : vector<2x32xf32> to vector<2xf32>
    %1232 = vector.shape_cast %1231 : vector<2xf32> to vector<2x1xf32>
    %1233 = vector.broadcast %1210 : vector<1x1xf32> to vector<2x1xf32>
    %1234 = arith.addf %1232, %1233 : vector<2x1xf32>
    %1235 = vector.broadcast %1209 : vector<1x32xf32> to vector<2x32xf32>
    %1236 = arith.mulf %689, %1235 : vector<2x32xf32>
    %cst_368 = arith.constant dense<0.000000e+00> : vector<2xf32>
    %1237 = vector.multi_reduction <add>, %1236, %cst_368 [1] : vector<2x32xf32> to vector<2xf32>
    %1238 = vector.shape_cast %1237 : vector<2xf32> to vector<2x1xf32>
    %1239 = vector.broadcast %1210 : vector<1x1xf32> to vector<2x1xf32>
    %1240 = arith.addf %1238, %1239 : vector<2x1xf32>
    %1241 = vector.broadcast %1209 : vector<1x32xf32> to vector<2x32xf32>
    %1242 = arith.mulf %824, %1241 : vector<2x32xf32>
    %cst_369 = arith.constant dense<0.000000e+00> : vector<2xf32>
    %1243 = vector.multi_reduction <add>, %1242, %cst_369 [1] : vector<2x32xf32> to vector<2xf32>
    %1244 = vector.shape_cast %1243 : vector<2xf32> to vector<2x1xf32>
    %1245 = vector.broadcast %1210 : vector<1x1xf32> to vector<2x1xf32>
    %1246 = arith.addf %1244, %1245 : vector<2x1xf32>
    %1247 = vector.broadcast %1209 : vector<1x32xf32> to vector<2x32xf32>
    %1248 = arith.mulf %959, %1247 : vector<2x32xf32>
    %cst_370 = arith.constant dense<0.000000e+00> : vector<2xf32>
    %1249 = vector.multi_reduction <add>, %1248, %cst_370 [1] : vector<2x32xf32> to vector<2xf32>
    %1250 = vector.shape_cast %1249 : vector<2xf32> to vector<2x1xf32>
    %1251 = vector.broadcast %1210 : vector<1x1xf32> to vector<2x1xf32>
    %1252 = arith.addf %1250, %1251 : vector<2x1xf32>
    %1253 = vector.broadcast %1209 : vector<1x32xf32> to vector<2x32xf32>
    %1254 = arith.mulf %1094, %1253 : vector<2x32xf32>
    %cst_371 = arith.constant dense<0.000000e+00> : vector<2xf32>
    %1255 = vector.multi_reduction <add>, %1254, %cst_371 [1] : vector<2x32xf32> to vector<2xf32>
    %1256 = vector.shape_cast %1255 : vector<2xf32> to vector<2x1xf32>
    %1257 = vector.broadcast %1210 : vector<1x1xf32> to vector<2x1xf32>
    %1258 = arith.addf %1256, %1257 : vector<2x1xf32>
    %1259 = arith.maximumf %1216, %1222 : vector<2x1xf32>
    %1260 = arith.maximumf %1259, %1228 : vector<2x1xf32>
    %1261 = arith.maximumf %1260, %1234 : vector<2x1xf32>
    %1262 = arith.maximumf %1261, %1240 : vector<2x1xf32>
    %1263 = arith.maximumf %1262, %1246 : vector<2x1xf32>
    %1264 = arith.maximumf %1263, %1252 : vector<2x1xf32>
    %1265 = arith.maximumf %1264, %1258 : vector<2x1xf32>
    %1266 = arith.subf %1216, %1265 : vector<2x1xf32>
    %1267 = math.exp %1266 : vector<2x1xf32>
    %1268 = arith.subf %1222, %1265 : vector<2x1xf32>
    %1269 = math.exp %1268 : vector<2x1xf32>
    %1270 = arith.subf %1228, %1265 : vector<2x1xf32>
    %1271 = math.exp %1270 : vector<2x1xf32>
    %1272 = arith.subf %1234, %1265 : vector<2x1xf32>
    %1273 = math.exp %1272 : vector<2x1xf32>
    %1274 = arith.subf %1240, %1265 : vector<2x1xf32>
    %1275 = math.exp %1274 : vector<2x1xf32>
    %1276 = arith.subf %1246, %1265 : vector<2x1xf32>
    %1277 = math.exp %1276 : vector<2x1xf32>
    %1278 = arith.subf %1252, %1265 : vector<2x1xf32>
    %1279 = math.exp %1278 : vector<2x1xf32>
    %1280 = arith.subf %1258, %1265 : vector<2x1xf32>
    %1281 = math.exp %1280 : vector<2x1xf32>
    %1282 = arith.addf %1267, %1269 : vector<2x1xf32>
    %1283 = arith.addf %1282, %1271 : vector<2x1xf32>
    %1284 = arith.addf %1283, %1273 : vector<2x1xf32>
    %1285 = arith.addf %1284, %1275 : vector<2x1xf32>
    %1286 = arith.addf %1285, %1277 : vector<2x1xf32>
    %1287 = arith.addf %1286, %1279 : vector<2x1xf32>
    %1288 = arith.addf %1287, %1281 : vector<2x1xf32>
    %1289 = tpu.reciprocal %1288 {approx = true} : vector<2x1xf32> -> vector<2x1xf32>
    %cst_372 = arith.constant 0.000000e+00 : f32
    %1290 = vector.broadcast %cst_372 : f32 to vector<2x32xf32>
    %1291 = arith.mulf %1267, %1289 : vector<2x1xf32>
    %1292 = vector.broadcast %1291 : vector<2x1xf32> to vector<2x32xf32>
    %1293 = arith.mulf %149, %1292 : vector<2x32xf32>
    %1294 = arith.addf %1290, %1293 : vector<2x32xf32>
    %1295 = arith.mulf %1269, %1289 : vector<2x1xf32>
    %1296 = vector.broadcast %1295 : vector<2x1xf32> to vector<2x32xf32>
    %1297 = arith.mulf %284, %1296 : vector<2x32xf32>
    %1298 = arith.addf %1294, %1297 : vector<2x32xf32>
    %1299 = arith.mulf %1271, %1289 : vector<2x1xf32>
    %1300 = vector.broadcast %1299 : vector<2x1xf32> to vector<2x32xf32>
    %1301 = arith.mulf %419, %1300 : vector<2x32xf32>
    %1302 = arith.addf %1298, %1301 : vector<2x32xf32>
    %1303 = arith.mulf %1273, %1289 : vector<2x1xf32>
    %1304 = vector.broadcast %1303 : vector<2x1xf32> to vector<2x32xf32>
    %1305 = arith.mulf %554, %1304 : vector<2x32xf32>
    %1306 = arith.addf %1302, %1305 : vector<2x32xf32>
    %1307 = arith.mulf %1275, %1289 : vector<2x1xf32>
    %1308 = vector.broadcast %1307 : vector<2x1xf32> to vector<2x32xf32>
    %1309 = arith.mulf %689, %1308 : vector<2x32xf32>
    %1310 = arith.addf %1306, %1309 : vector<2x32xf32>
    %1311 = arith.mulf %1277, %1289 : vector<2x1xf32>
    %1312 = vector.broadcast %1311 : vector<2x1xf32> to vector<2x32xf32>
    %1313 = arith.mulf %824, %1312 : vector<2x32xf32>
    %1314 = arith.addf %1310, %1313 : vector<2x32xf32>
    %1315 = arith.mulf %1279, %1289 : vector<2x1xf32>
    %1316 = vector.broadcast %1315 : vector<2x1xf32> to vector<2x32xf32>
    %1317 = arith.mulf %959, %1316 : vector<2x32xf32>
    %1318 = arith.addf %1314, %1317 : vector<2x32xf32>
    %1319 = arith.mulf %1281, %1289 : vector<2x1xf32>
    %1320 = vector.broadcast %1319 : vector<2x1xf32> to vector<2x32xf32>
    %1321 = arith.mulf %1094, %1320 : vector<2x32xf32>
    %1322 = arith.addf %1318, %1321 : vector<2x32xf32>
    %c0_373 = arith.constant 0 : index
    %c0_374 = arith.constant 0 : index
    %1323 = vector.load %arg2[%c0_373, %c0_374] : memref<2x8xf32, #tpu.memory_space<vmem>>, vector<2x8xf32>
    %c0_375 = arith.constant 0 : index
    %c0_376 = arith.constant 0 : index
    %1324 = vector.load %arg18[%c0_375, %c0_376] : memref<32x20xf32, #tpu.memory_space<vmem>>, vector<32x20xf32>
    %cst_377 = arith.constant dense<0.000000e+00> : vector<2x20xf32>
    %1325 = tpu.matmul %1208, %1324, %cst_377 {dimension_numbers = #tpu.dot_dimension_numbers<[1], [0], [0], [1], [0, 0, 1, 1], [], []>} : vector<2x32xf32>, vector<32x20xf32>, vector<2x20xf32> -> vector<2x20xf32>
    %c0_378 = arith.constant 0 : index
    %c0_379 = arith.constant 0 : index
    %1326 = vector.load %arg19[%c0_378, %c0_379] : memref<8x20xf32, #tpu.memory_space<vmem>>, vector<8x20xf32>
    %cst_380 = arith.constant dense<0.000000e+00> : vector<2x20xf32>
    %1327 = tpu.matmul %1323, %1326, %cst_380 {dimension_numbers = #tpu.dot_dimension_numbers<[1], [0], [0], [1], [0, 0, 1, 1], [], []>} : vector<2x8xf32>, vector<8x20xf32>, vector<2x20xf32> -> vector<2x20xf32>
    %1328 = arith.addf %1325, %1327 : vector<2x20xf32>
    %c0_381 = arith.constant 0 : index
    %c0_382 = arith.constant 0 : index
    %1329 = vector.load %arg20[%c0_381, %c0_382] : memref<1x20xf32, #tpu.memory_space<vmem>>, vector<1x20xf32>
    %1330 = vector.broadcast %1329 : vector<1x20xf32> to vector<2x20xf32>
    %1331 = arith.addf %1328, %1330 : vector<2x20xf32>
    %cst_383 = arith.constant 0.000000e+00 : f32
    %1332 = vector.broadcast %cst_383 : f32 to vector<2x20xf32>
    %1333 = arith.cmpf ogt, %1331, %1332 : vector<2x20xf32>
    %cst_384 = arith.constant 0.000000e+00 : f32
    %1334 = vector.broadcast %cst_384 : f32 to vector<2x20xf32>
    %1335 = arith.minimumf %1331, %1334 : vector<2x20xf32>
    %1336 = math.exp %1335 : vector<2x20xf32>
    %cst_385 = arith.constant 1.000000e+00 : f32
    %1337 = vector.broadcast %cst_385 : f32 to vector<2x20xf32>
    %1338 = arith.subf %1336, %1337 : vector<2x20xf32>
    %1339 = arith.select %1333, %1331, %1338 : vector<2x20xi1>, vector<2x20xf32>
    %c0_386 = arith.constant 0 : index
    %c0_387 = arith.constant 0 : index
    %1340 = vector.load %arg21[%c0_386, %c0_387] : memref<20x1xf32, #tpu.memory_space<vmem>>, vector<20x1xf32>
    %cst_388 = arith.constant dense<0.000000e+00> : vector<2x1xf32>
    %1341 = tpu.matmul %1339, %1340, %cst_388 {dimension_numbers = #tpu.dot_dimension_numbers<[1], [0], [0], [1], [0, 0, 1, 1], [], []>} : vector<2x20xf32>, vector<20x1xf32>, vector<2x1xf32> -> vector<2x1xf32>
    %c0_389 = arith.constant 0 : index
    %c0_390 = arith.constant 0 : index
    %1342 = vector.load %arg22[%c0_389, %c0_390] : memref<1x1xf32, #tpu.memory_space<vmem>>, vector<1x1xf32>
    %1343 = vector.broadcast %1342 : vector<1x1xf32> to vector<2x1xf32>
    %1344 = arith.addf %1341, %1343 : vector<2x1xf32>
    %c0_391 = arith.constant 0 : index
    %c0_392 = arith.constant 0 : index
    %1345 = vector.load %arg23[%c0_391, %c0_392] : memref<32x20xf32, #tpu.memory_space<vmem>>, vector<32x20xf32>
    %cst_393 = arith.constant dense<0.000000e+00> : vector<2x20xf32>
    %1346 = tpu.matmul %1322, %1345, %cst_393 {dimension_numbers = #tpu.dot_dimension_numbers<[1], [0], [0], [1], [0, 0, 1, 1], [], []>} : vector<2x32xf32>, vector<32x20xf32>, vector<2x20xf32> -> vector<2x20xf32>
    %c0_394 = arith.constant 0 : index
    %c0_395 = arith.constant 0 : index
    %1347 = vector.load %arg24[%c0_394, %c0_395] : memref<8x20xf32, #tpu.memory_space<vmem>>, vector<8x20xf32>
    %cst_396 = arith.constant dense<0.000000e+00> : vector<2x20xf32>
    %1348 = tpu.matmul %1323, %1347, %cst_396 {dimension_numbers = #tpu.dot_dimension_numbers<[1], [0], [0], [1], [0, 0, 1, 1], [], []>} : vector<2x8xf32>, vector<8x20xf32>, vector<2x20xf32> -> vector<2x20xf32>
    %1349 = arith.addf %1346, %1348 : vector<2x20xf32>
    %c0_397 = arith.constant 0 : index
    %c0_398 = arith.constant 0 : index
    %1350 = vector.load %arg25[%c0_397, %c0_398] : memref<1x20xf32, #tpu.memory_space<vmem>>, vector<1x20xf32>
    %1351 = vector.broadcast %1350 : vector<1x20xf32> to vector<2x20xf32>
    %1352 = arith.addf %1349, %1351 : vector<2x20xf32>
    %cst_399 = arith.constant 0.000000e+00 : f32
    %1353 = vector.broadcast %cst_399 : f32 to vector<2x20xf32>
    %1354 = arith.cmpf ogt, %1352, %1353 : vector<2x20xf32>
    %cst_400 = arith.constant 0.000000e+00 : f32
    %1355 = vector.broadcast %cst_400 : f32 to vector<2x20xf32>
    %1356 = arith.minimumf %1352, %1355 : vector<2x20xf32>
    %1357 = math.exp %1356 : vector<2x20xf32>
    %cst_401 = arith.constant 1.000000e+00 : f32
    %1358 = vector.broadcast %cst_401 : f32 to vector<2x20xf32>
    %1359 = arith.subf %1357, %1358 : vector<2x20xf32>
    %1360 = arith.select %1354, %1352, %1359 : vector<2x20xi1>, vector<2x20xf32>
    %c0_402 = arith.constant 0 : index
    %c0_403 = arith.constant 0 : index
    %1361 = vector.load %arg26[%c0_402, %c0_403] : memref<20x1xf32, #tpu.memory_space<vmem>>, vector<20x1xf32>
    %cst_404 = arith.constant dense<0.000000e+00> : vector<2x1xf32>
    %1362 = tpu.matmul %1360, %1361, %cst_404 {dimension_numbers = #tpu.dot_dimension_numbers<[1], [0], [0], [1], [0, 0, 1, 1], [], []>} : vector<2x20xf32>, vector<20x1xf32>, vector<2x1xf32> -> vector<2x1xf32>
    %c0_405 = arith.constant 0 : index
    %c0_406 = arith.constant 0 : index
    %1363 = vector.load %arg27[%c0_405, %c0_406] : memref<1x1xf32, #tpu.memory_space<vmem>>, vector<1x1xf32>
    %1364 = vector.broadcast %1363 : vector<1x1xf32> to vector<2x1xf32>
    %1365 = arith.addf %1362, %1364 : vector<2x1xf32>
    %cst_407 = arith.constant 5.000000e-01 : f32
    %1366 = vector.broadcast %cst_407 : f32 to vector<2x1xf32>
    %1367 = arith.mulf %1366, %1344 : vector<2x1xf32>
    %1368 = math.tanh %1367 : vector<2x1xf32>
    %cst_408 = arith.constant 1.000000e+00 : f32
    %1369 = vector.broadcast %cst_408 : f32 to vector<2x1xf32>
    %1370 = arith.addf %1368, %1369 : vector<2x1xf32>
    %cst_409 = arith.constant 5.000000e-01 : f32
    %1371 = vector.broadcast %cst_409 : f32 to vector<2x1xf32>
    %1372 = arith.mulf %1371, %1370 : vector<2x1xf32>
    %cst_410 = arith.constant 3.900000e+00 : f32
    %1373 = vector.broadcast %cst_410 : f32 to vector<2x1xf32>
    %1374 = arith.mulf %1372, %1373 : vector<2x1xf32>
    %cst_411 = arith.constant 1.000000e-01 : f32
    %1375 = vector.broadcast %cst_411 : f32 to vector<2x1xf32>
    %1376 = arith.addf %1375, %1374 : vector<2x1xf32>
    %cst_412 = arith.constant 5.000000e-01 : f32
    %1377 = vector.broadcast %cst_412 : f32 to vector<2x1xf32>
    %1378 = arith.mulf %1377, %1365 : vector<2x1xf32>
    %1379 = math.tanh %1378 : vector<2x1xf32>
    %cst_413 = arith.constant 1.000000e+00 : f32
    %1380 = vector.broadcast %cst_413 : f32 to vector<2x1xf32>
    %1381 = arith.addf %1379, %1380 : vector<2x1xf32>
    %cst_414 = arith.constant 5.000000e-01 : f32
    %1382 = vector.broadcast %cst_414 : f32 to vector<2x1xf32>
    %1383 = arith.mulf %1382, %1381 : vector<2x1xf32>
    %cst_415 = arith.constant 1.500000e+00 : f32
    %1384 = vector.broadcast %cst_415 : f32 to vector<2x1xf32>
    %1385 = arith.mulf %1383, %1384 : vector<2x1xf32>
    %cst_416 = arith.constant 5.000000e-01 : f32
    %1386 = vector.broadcast %cst_416 : f32 to vector<2x1xf32>
    %1387 = arith.addf %1386, %1385 : vector<2x1xf32>
    %c0_417 = arith.constant 0 : index
    %c0_418 = arith.constant 0 : index
    %1388 = vector.load %arg30[%c0_417, %c0_418] : memref<2x1xf32, #tpu.memory_space<vmem>>, vector<2x1xf32>
    tpu.vector_store %arg30[%c0_417, %c0_418], %1376 {strides = array<i32>} : memref<2x1xf32, #tpu.memory_space<vmem>>, vector<2x1xf32>,
    %c0_419 = arith.constant 0 : index
    %c0_420 = arith.constant 0 : index
    %1389 = vector.load %arg31[%c0_419, %c0_420] : memref<2x1xf32, #tpu.memory_space<vmem>>, vector<2x1xf32>
    tpu.vector_store %arg31[%c0_419, %c0_420], %1387 {strides = array<i32>} : memref<2x1xf32, #tpu.memory_space<vmem>>, vector<2x1xf32>,
    %cst_421 = arith.constant 1.000000e+00 : f32
    %1390 = vector.broadcast %cst_421 : f32 to vector<2x1xf32>
    %1391 = arith.divf %1390, %1376 : vector<2x1xf32>
    %c0_422 = arith.constant 0 : index
    %c0_423 = arith.constant 0 : index
    %1392 = vector.load %arg5[%c0_422, %c0_423] : memref<2x1xf32, #tpu.memory_space<vmem>>, vector<2x1xf32>
    %cst_424 = arith.constant 0.000000e+00 : f32
    %1393 = vector.broadcast %cst_424 : f32 to vector<2x1xf32>
    %1394 = arith.subf %1393, %1392 : vector<2x1xf32>
    %1395 = arith.mulf %1394, %1391 : vector<2x1xf32>
    %1396 = math.exp %1395 : vector<2x1xf32>
    %cst_425 = arith.constant 1.000000e+00 : f32
    %1397 = vector.broadcast %cst_425 : f32 to vector<2x1xf32>
    %1398 = arith.subf %1397, %1396 : vector<2x1xf32>
    %c0_426 = arith.constant 0 : index
    %c0_427 = arith.constant 0 : index
    %1399 = vector.load %arg3[%c0_426, %c0_427] : memref<2x8xf32, #tpu.memory_space<vmem>>, vector<2x8xf32>
    %1400 = vector.broadcast %1398 : vector<2x1xf32> to vector<2x8xf32>
    %1401 = arith.mulf %1400, %1399 : vector<2x8xf32>
    %c0_428 = arith.constant 0 : index
    %c0_429 = arith.constant 0 : index
    %1402 = vector.load %arg4[%c0_428, %c0_429] : memref<2x8xf32, #tpu.memory_space<vmem>>, vector<2x8xf32>
    %1403 = vector.broadcast %1396 : vector<2x1xf32> to vector<2x8xf32>
    %1404 = arith.mulf %1402, %1403 : vector<2x8xf32>
    %cst_430 = arith.constant 1.000000e+00 : f32
    %1405 = vector.broadcast %cst_430 : f32 to vector<2x8xf32>
    %1406 = arith.subf %1405, %1404 : vector<2x8xf32>
    %1407 = tpu.reciprocal %1406 {approx = true} : vector<2x8xf32> -> vector<2x8xf32>
    %1408 = arith.mulf %1401, %1407 : vector<2x8xf32>
    %1409 = vector.broadcast %1387 : vector<2x1xf32> to vector<2x8xf32>
    %1410 = arith.mulf %1408, %1409 : vector<2x8xf32>
    %c0_431 = arith.constant 0 : index
    %c0_432 = arith.constant 0 : index
    %1411 = vector.load %arg28[%c0_431, %c0_432] : memref<2x8xf32, #tpu.memory_space<vmem>>, vector<2x8xf32>
    tpu.vector_store %arg28[%c0_431, %c0_432], %1410 {strides = array<i32>} : memref<2x8xf32, #tpu.memory_space<vmem>>, vector<2x8xf32>,
    %c0_433 = arith.constant 0 : index
    %c0_434 = arith.constant 0 : index
    %1412 = vector.load %arg6[%c0_433, %c0_434] : memref<2x16xf32, #tpu.memory_space<vmem>>, vector<2x16xf32>
    %c0_435 = arith.constant 0 : index
    %c0_436 = arith.constant 0 : index
    %1413 = vector.load %arg7[%c0_435, %c0_436] : memref<2x1xf32, #tpu.memory_space<vmem>>, vector<2x1xf32>
    %1414 = vector.broadcast %1413 : vector<2x1xf32> to vector<2x16xf32>
    %1415 = arith.divf %1412, %1414 : vector<2x16xf32>
    %cst_437 = arith.constant 0.000000e+00 : f32
    %1416 = vector.broadcast %cst_437 : f32 to vector<2x1xf32>
    %1417 = arith.subf %1416, %1391 : vector<2x1xf32>
    %cst_438 = arith.constant 5.000000e-03 : f32
    %1418 = vector.broadcast %cst_438 : f32 to vector<2x1xf32>
    %1419 = arith.mulf %1417, %1418 : vector<2x1xf32>
    %1420 = math.exp %1419 : vector<2x1xf32>
    %cst_439 = arith.constant 1.000000e+00 : f32
    %1421 = vector.broadcast %cst_439 : f32 to vector<2x16xf32>
    %1422 = arith.subf %1421, %1415 : vector<2x16xf32>
    %1423 = vector.broadcast %1420 : vector<2x1xf32> to vector<2x16xf32>
    %1424 = arith.mulf %1415, %1423 : vector<2x16xf32>
    %1425 = arith.addf %1422, %1424 : vector<2x16xf32>
    %cst_440 = arith.constant 0.965925812 : f32
    %1426 = vector.broadcast %cst_440 : f32 to vector<2x1xf32>
    %1427 = arith.mulf %1420, %1426 : vector<2x1xf32>
    %1428 = vector.broadcast %1427 : vector<2x1xf32> to vector<2x16xf32>
    %1429 = arith.subf %1425, %1428 : vector<2x16xf32>
    %cst_441 = arith.constant 0.965925812 : f32
    %1430 = vector.broadcast %cst_441 : f32 to vector<2x16xf32>
    %1431 = arith.mulf %1415, %1430 : vector<2x16xf32>
    %cst_442 = arith.constant 1.000000e+00 : f32
    %1432 = vector.broadcast %cst_442 : f32 to vector<2x16xf32>
    %1433 = arith.subf %1432, %1431 : vector<2x16xf32>
    %1434 = vector.broadcast %1420 : vector<2x1xf32> to vector<2x16xf32>
    %1435 = arith.mulf %1415, %1434 : vector<2x16xf32>
    %cst_443 = arith.constant 0.965925812 : f32
    %1436 = vector.broadcast %cst_443 : f32 to vector<2x16xf32>
    %1437 = arith.mulf %1435, %1436 : vector<2x16xf32>
    %1438 = arith.addf %1433, %1437 : vector<2x16xf32>
    %cst_444 = arith.constant 0.965925812 : f32
    %1439 = vector.broadcast %cst_444 : f32 to vector<2x1xf32>
    %1440 = arith.mulf %1420, %1439 : vector<2x1xf32>
    %1441 = vector.broadcast %1440 : vector<2x1xf32> to vector<2x16xf32>
    %1442 = arith.subf %1438, %1441 : vector<2x16xf32>
    %1443 = arith.divf %1429, %1442 : vector<2x16xf32>
    %1444 = math.log %1443 : vector<2x16xf32>
    %cst_445 = arith.constant -2.000000e+02 : f32
    %1445 = vector.broadcast %cst_445 : f32 to vector<2x16xf32>
    %1446 = arith.mulf %1445, %1444 : vector<2x16xf32>
    %1447 = vector.broadcast %1391 : vector<2x1xf32> to vector<2x16xf32>
    %1448 = arith.subf %1446, %1447 : vector<2x16xf32>
    %cst_446 = arith.constant 4.500000e+00 : f32
    %1449 = vector.broadcast %cst_446 : f32 to vector<2x16xf32>
    %1450 = arith.divf %1448, %1449 : vector<2x16xf32>
    %1451 = arith.cmpf one, %1450, %1450 : vector<2x16xf32>
    %cst_447 = arith.constant 0.000000e+00 : f32
    %1452 = vector.broadcast %cst_447 : f32 to vector<2x16xf32>
    %1453 = arith.select %1451, %1452, %1450 : vector<2x16xi1>, vector<2x16xf32>
    %c0_448 = arith.constant 0 : index
    %c0_449 = arith.constant 0 : index
    %1454 = vector.load %arg29[%c0_448, %c0_449] : memref<2x16xf32, #tpu.memory_space<vmem>>, vector<2x16xf32>
    tpu.vector_store %arg29[%c0_448, %c0_449], %1453 {strides = array<i32>} : memref<2x16xf32, #tpu.memory_space<vmem>>, vector<2x16xf32>,
    return
  }
  func.func @transform_0(%arg0: i32) -> (i32, i32) {
    %c0_i32 = arith.constant 0 : i32
    %c0_i32_0 = arith.constant 0 : i32
    return %arg0, %c0_i32 : i32, i32
  }
  func.func @transform_1(%arg0: i32) -> (i32, i32) {
    %c0_i32 = arith.constant 0 : i32
    %c0_i32_0 = arith.constant 0 : i32
    return %arg0, %c0_i32 : i32, i32
  }
  func.func @transform_2(%arg0: i32) -> (i32, i32) {
    %c0_i32 = arith.constant 0 : i32
    %c0_i32_0 = arith.constant 0 : i32
    return %arg0, %c0_i32 : i32, i32
  }
  func.func @transform_3(%arg0: i32) -> (i32, i32) {
    %c0_i32 = arith.constant 0 : i32
    %c0_i32_0 = arith.constant 0 : i32
    return %arg0, %c0_i32 : i32, i32
  }
  func.func @transform_4(%arg0: i32) -> (i32, i32) {
    %c0_i32 = arith.constant 0 : i32
    %c0_i32_0 = arith.constant 0 : i32
    return %arg0, %c0_i32 : i32, i32
  }
  func.func @transform_5(%arg0: i32) -> (i32, i32) {
    %c0_i32 = arith.constant 0 : i32
    %c0_i32_0 = arith.constant 0 : i32
    return %arg0, %c0_i32 : i32, i32
  }
  func.func @transform_6(%arg0: i32) -> (i32, i32) {
    %c0_i32 = arith.constant 0 : i32
    %c0_i32_0 = arith.constant 0 : i32
    return %arg0, %c0_i32 : i32, i32
  }
  func.func @transform_7(%arg0: i32) -> (i32, i32) {
    %c0_i32 = arith.constant 0 : i32
    %c0_i32_0 = arith.constant 0 : i32
    %c0_i32_1 = arith.constant 0 : i32
    return %c0_i32, %c0_i32_0 : i32, i32
  }
  func.func @transform_8(%arg0: i32) -> (i32, i32) {
    %c0_i32 = arith.constant 0 : i32
    %c0_i32_0 = arith.constant 0 : i32
    %c0_i32_1 = arith.constant 0 : i32
    return %c0_i32, %c0_i32_0 : i32, i32
  }
  func.func @transform_9(%arg0: i32) -> (i32, i32) {
    %c0_i32 = arith.constant 0 : i32
    %c0_i32_0 = arith.constant 0 : i32
    %c0_i32_1 = arith.constant 0 : i32
    return %c0_i32, %c0_i32_0 : i32, i32
  }
  func.func @transform_10(%arg0: i32) -> (i32, i32) {
    %c0_i32 = arith.constant 0 : i32
    %c0_i32_0 = arith.constant 0 : i32
    %c0_i32_1 = arith.constant 0 : i32
    return %c0_i32, %c0_i32_0 : i32, i32
  }
  func.func @transform_11(%arg0: i32) -> (i32, i32, i32) {
    %c0_i32 = arith.constant 0 : i32
    %c0_i32_0 = arith.constant 0 : i32
    %c0_i32_1 = arith.constant 0 : i32
    %c0_i32_2 = arith.constant 0 : i32
    return %c0_i32, %c0_i32_0, %c0_i32_1 : i32, i32, i32
  }
  func.func @transform_12(%arg0: i32) -> (i32, i32, i32) {
    %c0_i32 = arith.constant 0 : i32
    %c0_i32_0 = arith.constant 0 : i32
    %c0_i32_1 = arith.constant 0 : i32
    %c0_i32_2 = arith.constant 0 : i32
    return %c0_i32, %c0_i32_0, %c0_i32_1 : i32, i32, i32
  }
  func.func @transform_13(%arg0: i32) -> (i32, i32) {
    %c0_i32 = arith.constant 0 : i32
    %c0_i32_0 = arith.constant 0 : i32
    %c0_i32_1 = arith.constant 0 : i32
    return %c0_i32, %c0_i32_0 : i32, i32
  }
  func.func @transform_14(%arg0: i32) -> (i32, i32) {
    %c0_i32 = arith.constant 0 : i32
    %c0_i32_0 = arith.constant 0 : i32
    %c0_i32_1 = arith.constant 0 : i32
    return %c0_i32, %c0_i32_0 : i32, i32
  }
  func.func @transform_15(%arg0: i32) -> (i32, i32) {
    %c0_i32 = arith.constant 0 : i32
    %c0_i32_0 = arith.constant 0 : i32
    %c0_i32_1 = arith.constant 0 : i32
    return %c0_i32, %c0_i32_0 : i32, i32
  }
  func.func @transform_16(%arg0: i32) -> (i32, i32) {
    %c0_i32 = arith.constant 0 : i32
    %c0_i32_0 = arith.constant 0 : i32
    %c0_i32_1 = arith.constant 0 : i32
    return %c0_i32, %c0_i32_0 : i32, i32
  }
  func.func @transform_17(%arg0: i32) -> (i32, i32) {
    %c0_i32 = arith.constant 0 : i32
    %c0_i32_0 = arith.constant 0 : i32
    %c0_i32_1 = arith.constant 0 : i32
    return %c0_i32, %c0_i32_0 : i32, i32
  }
  func.func @transform_18(%arg0: i32) -> (i32, i32) {
    %c0_i32 = arith.constant 0 : i32
    %c0_i32_0 = arith.constant 0 : i32
    %c0_i32_1 = arith.constant 0 : i32
    return %c0_i32, %c0_i32_0 : i32, i32
  }
  func.func @transform_19(%arg0: i32) -> (i32, i32) {
    %c0_i32 = arith.constant 0 : i32
    %c0_i32_0 = arith.constant 0 : i32
    %c0_i32_1 = arith.constant 0 : i32
    return %c0_i32, %c0_i32_0 : i32, i32
  }
  func.func @transform_20(%arg0: i32) -> (i32, i32) {
    %c0_i32 = arith.constant 0 : i32
    %c0_i32_0 = arith.constant 0 : i32
    %c0_i32_1 = arith.constant 0 : i32
    return %c0_i32, %c0_i32_0 : i32, i32
  }
  func.func @transform_21(%arg0: i32) -> (i32, i32) {
    %c0_i32 = arith.constant 0 : i32
    %c0_i32_0 = arith.constant 0 : i32
    %c0_i32_1 = arith.constant 0 : i32
    return %c0_i32, %c0_i32_0 : i32, i32
  }
  func.func @transform_22(%arg0: i32) -> (i32, i32) {
    %c0_i32 = arith.constant 0 : i32
    %c0_i32_0 = arith.constant 0 : i32
    %c0_i32_1 = arith.constant 0 : i32
    return %c0_i32, %c0_i32_0 : i32, i32
  }
  func.func @transform_23(%arg0: i32) -> (i32, i32) {
    %c0_i32 = arith.constant 0 : i32
    %c0_i32_0 = arith.constant 0 : i32
    %c0_i32_1 = arith.constant 0 : i32
    return %c0_i32, %c0_i32_0 : i32, i32
  }
  func.func @transform_24(%arg0: i32) -> (i32, i32) {
    %c0_i32 = arith.constant 0 : i32
    %c0_i32_0 = arith.constant 0 : i32
    %c0_i32_1 = arith.constant 0 : i32
    return %c0_i32, %c0_i32_0 : i32, i32
  }
  func.func @transform_25(%arg0: i32) -> (i32, i32) {
    %c0_i32 = arith.constant 0 : i32
    %c0_i32_0 = arith.constant 0 : i32
    %c0_i32_1 = arith.constant 0 : i32
    return %c0_i32, %c0_i32_0 : i32, i32
  }
  func.func @transform_26(%arg0: i32) -> (i32, i32) {
    %c0_i32 = arith.constant 0 : i32
    %c0_i32_0 = arith.constant 0 : i32
    %c0_i32_1 = arith.constant 0 : i32
    return %c0_i32, %c0_i32_0 : i32, i32
  }
  func.func @transform_27(%arg0: i32) -> (i32, i32) {
    %c0_i32 = arith.constant 0 : i32
    %c0_i32_0 = arith.constant 0 : i32
    return %arg0, %c0_i32 : i32, i32
  }
  func.func @transform_28(%arg0: i32) -> (i32, i32) {
    %c0_i32 = arith.constant 0 : i32
    %c0_i32_0 = arith.constant 0 : i32
    return %arg0, %c0_i32 : i32, i32
  }
  func.func @transform_29(%arg0: i32) -> (i32, i32) {
    %c0_i32 = arith.constant 0 : i32
    %c0_i32_0 = arith.constant 0 : i32
    return %arg0, %c0_i32 : i32, i32
  }
  func.func @transform_30(%arg0: i32) -> (i32, i32) {
    %c0_i32 = arith.constant 0 : i32
    %c0_i32_0 = arith.constant 0 : i32
    return %arg0, %c0_i32 : i32, i32
  }
}

</mosaic_0001>

<llo_original>
// kernel: t10_forward.1
$region0: #{t10_forward.1}
  #allocation0 [shape = 'u32[]', space=smem, size = 0x4, offset = 0x4, fixed_abs, tag = 'smem constant byte address 0x4 - core index']
  #allocation1 [shape = 'u32[144,128]{1,0:T(1,128)}', space=vmem, size = 0x12000, scoped, tag = 'internal scratch']
  #allocation2 [shape = 'f32[1,1]{1,0:T(1,128)S(1)}', space=vmem, size = 0x200, scoped, tag = 'scoped memory for t10_forward.1']
  #allocation3 [shape = 'f32[1,1]{1,0:T(1,128)S(1)}', space=vmem, size = 0x200, scoped, tag = 'scoped memory for t10_forward.1']
  #allocation4 [shape = 'f32[1,1]{1,0:T(1,128)S(1)}', space=vmem, size = 0x200, scoped, tag = 'scoped memory for t10_forward.1']
  #allocation5 [shape = 'f32[1,1]{1,0:T(1,128)S(1)}', space=vmem, size = 0x200, scoped, tag = 'scoped memory for t10_forward.1']
  %s0 = inlined_call_operand.smem [shape: u32[31], index: -1, kind: input, shape index: {}]
  %s1 = sld [smem:[%s0]]
  %s2 = scalar_lea.smem %s0, 1
  %s3 = sld [smem:[%s2]]
  %s4 = scalar_lea.smem %s0, 2
  %s5 = sld [smem:[%s4]]
  %s6 = scalar_lea.smem %s0, 3
  %s7 = sld [smem:[%s6]]
  %s8 = scalar_lea.smem %s0, 4
  %s9 = sld [smem:[%s8]]
  %s10 = scalar_lea.smem %s0, 5
  %s11 = sld [smem:[%s10]]
  %s12 = scalar_lea.smem %s0, 6
  %s13 = sld [smem:[%s12]]
  %s14 = scalar_lea.smem %s0, 7
  %s15 = sld [smem:[%s14]]
  %s16 = scalar_lea.smem %s0, 8
  %s17 = sld [smem:[%s16]]
  %s18 = scalar_lea.smem %s0, 9
  %s19 = sld [smem:[%s18]]
  %s20 = scalar_lea.smem %s0, 10
  %s21 = sld [smem:[%s20]]
  %s22 = scalar_lea.smem %s0, 11
  %s23 = sld [smem:[%s22]]
  %s24 = scalar_lea.smem %s0, 12
  %s25 = sld [smem:[%s24]]
  %s26 = scalar_lea.smem %s0, 13
  %s27 = sld [smem:[%s26]]
  %s28 = scalar_lea.smem %s0, 14
  %s29 = sld [smem:[%s28]]
  %s30 = scalar_lea.smem %s0, 15
  %s31 = sld [smem:[%s30]]
  %s32 = scalar_lea.smem %s0, 16
  %s33 = sld [smem:[%s32]]
  %s34 = scalar_lea.smem %s0, 17
  %s35 = sld [smem:[%s34]]
  %s36 = scalar_lea.smem %s0, 18
  %s37 = sld [smem:[%s36]]
  %s38 = scalar_lea.smem %s0, 19
  %s39 = sld [smem:[%s38]]
  %s40 = scalar_lea.smem %s0, 20
  %s41 = sld [smem:[%s40]]
  %s42 = scalar_lea.smem %s0, 21
  %s43 = sld [smem:[%s42]]
  %s44 = scalar_lea.smem %s0, 22
  %s45 = sld [smem:[%s44]]
  %s46 = scalar_lea.smem %s0, 23
  %s47 = sld [smem:[%s46]]
  %s48 = scalar_lea.smem %s0, 24
  %s49 = sld [smem:[%s48]]
  %s50 = scalar_lea.smem %s0, 25
  %s51 = sld [smem:[%s50]]
  %s52 = scalar_lea.smem %s0, 26
  %s53 = sld [smem:[%s52]]
  %s54 = scalar_lea.smem %s0, 27
  %s55 = sld [smem:[%s54]]
  %s56 = scalar_lea.smem %s0, 28
  %s57 = sld [smem:[%s56]]
  %s58 = scalar_lea.smem %s0, 29
  %s59 = sld [smem:[%s58]]
  %s60 = scalar_lea.smem %s0, 30
  %s61 = sld [smem:[%s60]]
  %62 = xla_tuple %s55, %s57, %s59, %s61
  %s63 = sld [smem:[#allocation0]]
  $region146: #{t10_forward.1} parent=0
    _
  %s65 = ssub.s32 1, %s63
  %s66 = scalar_select 0, %s65, %s63
  %v67 = vstv %s29
  %68 = vst [vmem:[#allocation2] sm:$0x1] %v67
  %v69 = vstv %s33
  %70 = vst [vmem:[#allocation3] sm:$0x1] %v69
  %v71 = vstv %s43
  %72 = vst [vmem:[#allocation4] sm:$0x1] %v71
  %v73 = vstv %s53
  %74 = vst [vmem:[#allocation5] sm:$0x1] %v73
  $region1: #{t10_forward.1} parent=0
    #allocation6 [shape = 'u8[393216]{0}', space=vmem, size = 0x60000, scoped, tag = 'input window, operand 11, single buffered']
    #allocation7 [shape = 's32[1]{0}', space=sflag, size = 0x4, scoped, tag = 'scoped memory for t10_forward.1']
    #allocation8 [shape = 's32[1]{0}', space=sflag, size = 0x4, scoped, tag = 'scoped memory for t10_forward.1']
    #allocation9 [shape = 'u8[1024]{0}', space=vmem, size = 0x400, scoped, tag = 'output window, operand 0, single buffered']
    #allocation10 [shape = 'u8[1024]{0}', space=vmem, size = 0x400, scoped, tag = 'output window, operand 1, single buffered']
    #allocation11 [shape = 's32[1]{0}', space=sflag, size = 0x4, scoped, tag = 'scoped memory for t10_forward.1']
    %75 = vsyncpa [#allocation7], 0
    %76 = vsyncpa [#allocation8], 0
    %77 = vsyncpa [#allocation11], 0
    // Predicated region
    $region2: #{t10_forward.1} parent=1 // pred_check
      _
    $region3: #{t10_forward.1} parent=1 // pred_check_branch
      %79 = sbr.rel (0) target = $region5
    $region4: #{t10_forward.1} parent=1 // pred_region
      _
    $region5: #{t10_forward.1} parent=1 // pred_fallthru
      _
    // Predicated region
    $region6: #{t10_forward.1} parent=1 // pred_check
      _
    $region7: #{t10_forward.1} parent=1 // pred_check_branch
      %81 = sbr.rel (0) target = $region9
    $region8: #{t10_forward.1} parent=1 // pred_region
      _
    $region9: #{t10_forward.1} parent=1 // pred_fallthru
      _
    // Predicated region
    $region10: #{t10_forward.1} parent=1 // pred_check
      _
    $region11: #{t10_forward.1} parent=1 // pred_check_branch
      %83 = sbr.rel (0) target = $region13
    $region12: #{t10_forward.1} parent=1 // pred_region
      _
    $region13: #{t10_forward.1} parent=1 // pred_fallthru
      _
    // Predicated region
    $region14: #{t10_forward.1} parent=1 // pred_check
      _
    $region15: #{t10_forward.1} parent=1 // pred_check_branch
      %85 = sbr.rel (0) target = $region17
    $region16: #{t10_forward.1} parent=1 // pred_region
      _
    $region17: #{t10_forward.1} parent=1 // pred_fallthru
      _
    // Predicated region
    $region18: #{t10_forward.1} parent=1 // pred_check
      _
    $region19: #{t10_forward.1} parent=1 // pred_check_branch
      %87 = sbr.rel (0) target = $region21
    $region20: #{t10_forward.1} parent=1 // pred_region
      _
    $region21: #{t10_forward.1} parent=1 // pred_fallthru
      _
    // Predicated region
    $region22: #{t10_forward.1} parent=1 // pred_check
      _
    $region23: #{t10_forward.1} parent=1 // pred_check_branch
      %89 = sbr.rel (0) target = $region25
    $region24: #{t10_forward.1} parent=1 // pred_region
      _
    $region25: #{t10_forward.1} parent=1 // pred_fallthru
      _
    // Predicated region
    $region26: #{t10_forward.1} parent=1 // pred_check
      _
    $region27: #{t10_forward.1} parent=1 // pred_check_branch
      %91 = sbr.rel (0) target = $region29
    $region28: #{t10_forward.1} parent=1 // pred_region
      _
    $region29: #{t10_forward.1} parent=1 // pred_fallthru
      _
    // Predicated region
    $region30: #{t10_forward.1} parent=1 // pred_check
      _
    $region31: #{t10_forward.1} parent=1 // pred_check_branch
      %93 = sbr.rel (0) target = $region33
    $region32: #{t10_forward.1} parent=1 // pred_region
      _
    $region33: #{t10_forward.1} parent=1 // pred_fallthru
      _
    // Predicated region
    $region34: #{t10_forward.1} parent=1 // pred_check
      _
    $region35: #{t10_forward.1} parent=1 // pred_check_branch
      %95 = sbr.rel (0) target = $region37
    $region36: #{t10_forward.1} parent=1 // pred_region
      _
    $region37: #{t10_forward.1} parent=1 // pred_fallthru
      _
    // Predicated region
    $region38: #{t10_forward.1} parent=1 // pred_check
      _
    $region39: #{t10_forward.1} parent=1 // pred_check_branch
      %97 = sbr.rel (0) target = $region41
    $region40: #{t10_forward.1} parent=1 // pred_region
      _
    $region41: #{t10_forward.1} parent=1 // pred_fallthru
      _
    // Predicated region
    $region42: #{t10_forward.1} parent=1 // pred_check
      _
    $region43: #{t10_forward.1} parent=1 // pred_check_branch
      %99 = sbr.rel (0) target = $region45
    $region44: #{t10_forward.1} parent=1 // pred_region
      _
    $region45: #{t10_forward.1} parent=1 // pred_fallthru
      _
    // Predicated region
    $region46: #{t10_forward.1} parent=1 // pred_check
      _
    $region47: #{t10_forward.1} parent=1 // pred_check_branch
      %101 = sbr.rel (0) target = $region49
    $region48: #{t10_forward.1} parent=1 // pred_region
      %s103 = ssub.s32 12288, 12288
      %104 = vsyncadd [#allocation7], %s103
      %s105 = sshll.u32 [#allocation6], 4
      %s106 = int_to_ptr.vmem [resolvable:$true] %s105
      %111 = dma.hbm_to_vmem [thread:$0]  %s23, 12288, %s106, [#allocation7], 512, 512, 32
    $region49: #{t10_forward.1} parent=1 // pred_fallthru
      _
    // Predicated region
    $region50: #{t10_forward.1} parent=1 // pred_check
      _
    $region51: #{t10_forward.1} parent=1 // pred_check_branch
      %113 = sbr.rel (0) target = $region53
    $region52: #{t10_forward.1} parent=1 // pred_region
      _
    $region53: #{t10_forward.1} parent=1 // pred_fallthru
      _
    // Predicated region
    $region54: #{t10_forward.1} parent=1 // pred_check
      _
    $region55: #{t10_forward.1} parent=1 // pred_check_branch
      %115 = sbr.rel (0) target = $region57
    $region56: #{t10_forward.1} parent=1 // pred_region
      _
    $region57: #{t10_forward.1} parent=1 // pred_fallthru
      _
    // Predicated region
    $region58: #{t10_forward.1} parent=1 // pred_check
      _
    $region59: #{t10_forward.1} parent=1 // pred_check_branch
      %117 = sbr.rel (0) target = $region61
    $region60: #{t10_forward.1} parent=1 // pred_region
      _
    $region61: #{t10_forward.1} parent=1 // pred_fallthru
      _
    // Predicated region
    $region62: #{t10_forward.1} parent=1 // pred_check
      _
    $region63: #{t10_forward.1} parent=1 // pred_check_branch
      %119 = sbr.rel (0) target = $region65
    $region64: #{t10_forward.1} parent=1 // pred_region
      _
    $region65: #{t10_forward.1} parent=1 // pred_fallthru
      _
    // Predicated region
    $region66: #{t10_forward.1} parent=1 // pred_check
      _
    $region67: #{t10_forward.1} parent=1 // pred_check_branch
      %121 = sbr.rel (0) target = $region69
    $region68: #{t10_forward.1} parent=1 // pred_region
      _
    $region69: #{t10_forward.1} parent=1 // pred_fallthru
      _
    // Predicated region
    $region70: #{t10_forward.1} parent=1 // pred_check
      _
    $region71: #{t10_forward.1} parent=1 // pred_check_branch
      %123 = sbr.rel (0) target = $region73
    $region72: #{t10_forward.1} parent=1 // pred_region
      _
    $region73: #{t10_forward.1} parent=1 // pred_fallthru
      _
    // Predicated region
    $region74: #{t10_forward.1} parent=1 // pred_check
      _
    $region75: #{t10_forward.1} parent=1 // pred_check_branch
      %125 = sbr.rel (0) target = $region77
    $region76: #{t10_forward.1} parent=1 // pred_region
      _
    $region77: #{t10_forward.1} parent=1 // pred_fallthru
      _
    // Predicated region
    $region78: #{t10_forward.1} parent=1 // pred_check
      _
    $region79: #{t10_forward.1} parent=1 // pred_check_branch
      %127 = sbr.rel (0) target = $region81
    $region80: #{t10_forward.1} parent=1 // pred_region
      _
    $region81: #{t10_forward.1} parent=1 // pred_fallthru
      _
    // Predicated region
    $region82: #{t10_forward.1} parent=1 // pred_check
      _
    $region83: #{t10_forward.1} parent=1 // pred_check_branch
      %129 = sbr.rel (0) target = $region85
    $region84: #{t10_forward.1} parent=1 // pred_region
      _
    $region85: #{t10_forward.1} parent=1 // pred_fallthru
      _
    // Predicated region
    $region86: #{t10_forward.1} parent=1 // pred_check
      _
    $region87: #{t10_forward.1} parent=1 // pred_check_branch
      %131 = sbr.rel (0) target = $region89
    $region88: #{t10_forward.1} parent=1 // pred_region
      _
    $region89: #{t10_forward.1} parent=1 // pred_fallthru
      _
    // Predicated region
    $region90: #{t10_forward.1} parent=1 // pred_check
      _
    $region91: #{t10_forward.1} parent=1 // pred_check_branch
      %133 = sbr.rel (0) target = $region93
    $region92: #{t10_forward.1} parent=1 // pred_region
      _
    $region93: #{t10_forward.1} parent=1 // pred_fallthru
      _
    // Predicated region
    $region94: #{t10_forward.1} parent=1 // pred_check
      _
    $region95: #{t10_forward.1} parent=1 // pred_check_branch
      %135 = sbr.rel (0) target = $region97
    $region96: #{t10_forward.1} parent=1 // pred_region
      _
    $region97: #{t10_forward.1} parent=1 // pred_fallthru
      _
    // Predicated region
    $region98: #{t10_forward.1} parent=1 // pred_check
      _
    $region99: #{t10_forward.1} parent=1 // pred_check_branch
      %137 = sbr.rel (0) target = $region101
    $region100: #{t10_forward.1} parent=1 // pred_region
      _
    $region101: #{t10_forward.1} parent=1 // pred_fallthru
      _
    // Predicated region
    $region102: #{t10_forward.1} parent=1 // pred_check
      _
    $region103: #{t10_forward.1} parent=1 // pred_check_branch
      %139 = sbr.rel (0) target = $region105
    $region104: #{t10_forward.1} parent=1 // pred_region
      _
    $region105: #{t10_forward.1} parent=1 // pred_fallthru
      _
    // Predicated region
    $region106: #{t10_forward.1} parent=1 // pred_check
      _
    $region107: #{t10_forward.1} parent=1 // pred_check_branch
      %141 = sbr.rel (0) target = $region109
    $region108: #{t10_forward.1} parent=1 // pred_region
      _
    $region109: #{t10_forward.1} parent=1 // pred_fallthru
      _
    // Predicated region
    $region110: #{t10_forward.1} parent=1 // pred_check
      _
    $region111: #{t10_forward.1} parent=1 // pred_check_branch
      %143 = sbr.rel (0) target = $region113
    $region112: #{t10_forward.1} parent=1 // pred_region
      %144 = dma.done [#allocation7], 12288
    $region113: #{t10_forward.1} parent=1 // pred_fallthru
      _
    %v145 = vld [vmem:[%s1] sm:$0x3]
    %v146 = vld [vmem:[%s15] sm:$0x7]
    %v147 = vld [vmem:[%s17] sm:$0x7]
    %v148 = vld [vmem:[%s19] sm:$0xff]
    %v149 = vld [vmem:[%s19 + $0x8] sm:$0xff]
    %v150 = vld [vmem:[%s19 + $0x10] sm:$0xff]
    %v151 = vld [vmem:[%s19 + $0x18] sm:$0xff]
    %v152 = vld [vmem:[%s19 + $0x20] sm:$0xff]
    %v153 = vld [vmem:[%s19 + $0x28] sm:$0xff]
    %v154 = vld [vmem:[%s19 + $0x30] sm:$0xff]
    %v155 = vld [vmem:[%s19 + $0x38] sm:$0xff]
    %v156 = vld [vmem:[%s19 + $0x40] sm:$0xff]
    %v157 = vld [vmem:[%s19 + $0x48] sm:$0xff]
    %v158 = vld [vmem:[%s19 + $0x50] sm:$0xff]
    %v159 = vld [vmem:[%s19 + $0x58] sm:$0xff]
    %v160 = vld [vmem:[%s21] sm:$0x7]
    %v161 = vld [vmem:[%s25] sm:$0xf]
    %s162 = scalar_lea.vmem %s25, 4
    %v163 = vld [vmem:[%s162] sm:$0xf]
    %s164 = scalar_lea.vmem %s25, 8
    %v165 = vld [vmem:[%s164] sm:$0xf]
    %167 = vset.pattern.permute.xlu0 0
    %168 = vperm.xlu0 %167, %v145
    %v169 = vpop.permute.xlu0 %168
    %v172 = vlaneseq
    %v173 = vshrl.u32 %v172, 7
    %v174 = vsub.s32 0, %v173
    %v175 = vrot.slane %v146, %v174
    %v176 = vlaneseq
    %v177 = vshrl.u32 %v176, 7
    %v178 = vsub.s32 1, %v177
    %v179 = vrot.slane %v146, %v178
    %v180 = vlaneseq
    %v181 = vshrl.u32 %v180, 7
    %v182 = vsub.s32 2, %v181
    %v183 = vrot.slane %v146, %v182
    %v187 = vmul.f32 %v169, %v175
    %v188 = vmul.f32 %v169, %v179
    %v189 = vmul.f32 %v169, %v183
    %v191 = vlaneseq
    %v192 = vshrl.u32 %v191, 7
    %v193 = vsub.s32 0, %v192
    %v194 = vrot.slane %v147, %v193
    %v195 = vlaneseq
    %v196 = vshrl.u32 %v195, 7
    %v197 = vsub.s32 1, %v196
    %v198 = vrot.slane %v147, %v197
    %v199 = vlaneseq
    %v200 = vshrl.u32 %v199, 7
    %v201 = vsub.s32 2, %v200
    %v202 = vrot.slane %v147, %v201
    %v206 = vadd.f32 %v187, %v194
    %v207 = vadd.f32 %v188, %v198
    %v208 = vadd.f32 %v189, %v202
    %v210 = vlaneseq
    %v211 = vshrl.u32 %v210, 7
    %v212 = vsub.s32 0, %v211
    %v213 = vrot.slane %v160, %v212
    %v214 = vlaneseq
    %v215 = vshrl.u32 %v214, 7
    %v216 = vsub.s32 1, %v215
    %v217 = vrot.slane %v160, %v216
    %v218 = vlaneseq
    %v219 = vshrl.u32 %v218, 7
    %v220 = vsub.s32 2, %v219
    %v221 = vrot.slane %v160, %v220
    %vm225 = vcmask 261120
    %v227 = vsel %vm225, 0.0, 0
    %229 = vmatprep.subr.mxu0 %v149
    %230 = vmatpush1.msra.mxu0 %v148
    %231 = vmatprep.subr.mxu0 %v152
    %232 = vmatpush1.msra.mxu0 %v151
    %233 = vmatprep.subr.mxu0 %v155
    %234 = vmatpush1.msra.mxu0 %v154
    %235 = vmatprep.subr.mxu0 %v158
    %236 = vmatpush1.msra.mxu0 %v157
    %237 = vmatprep.subr.mxu0 0.0
    %238 = vmatpush1.msra.mxu0 0.0
    %239 = vmatprep.subr.mxu0 0.0
    %240 = vmatpush1.msra.mxu0 0.0
    %241 = vmatprep.subr.mxu0 0.0
    %242 = vmatpush1.msra.mxu0 0.0
    %243 = vmatprep.subr.mxu0 0.0
    %244 = vmatpush1.msra.mxu0 0.0
    %245 = vmatprep.subr.mxu0 0.0
    %246 = vmatpush1.msra.mxu0 0.0
    %247 = vmatprep.subr.mxu0 0.0
    %248 = vmatpush1.msra.mxu0 0.0
    %249 = vmatprep.subr.mxu0 0.0
    %250 = vmatpush1.msra.mxu0 0.0
    %251 = vmatprep.subr.mxu0 0.0
    %252 = vmatpush1.msra.mxu0 0.0
    %253 = vmatprep.subr.mxu0 0.0
    %254 = vmatpush1.msra.mxu0 0.0
    %255 = vmatprep.subr.mxu0 0.0
    %256 = vmatpush1.msra.mxu0 0.0
    %257 = vmatprep.subr.mxu0 0.0
    %258 = vmatpush1.msra.mxu0 0.0
    %259 = vmatprep.subr.mxu0 0.0
    %260 = vmatpush1.msra.mxu0 0.0
    %261 = vmatprep.subr.mxu0 0.0
    %262 = vmatpush1.msra.mxu0 0.0
    %263 = vmatprep.subr.mxu0 0.0
    %264 = vmatpush1.msra.mxu0 0.0
    %265 = vmatprep.subr.mxu0 0.0
    %266 = vmatpush1.msra.mxu0 0.0
    %267 = vmatprep.subr.mxu0 0.0
    %268 = vmatpush1.msra.mxu0 0.0
    %269 = vmatprep.subr.mxu0 0.0
    %270 = vmatpush1.msra.mxu0 0.0
    %271 = vmatprep.subr.mxu0 0.0
    %272 = vmatpush1.msra.mxu0 0.0
    %273 = vmatprep.subr.mxu0 0.0
    %274 = vmatpush1.msra.mxu0 0.0
    %275 = vmatprep.subr.mxu0 0.0
    %276 = vmatpush1.msra.mxu0 0.0
    %277 = vmatprep.subr.mxu0 0.0
    %278 = vmatpush1.msra.mxu0 0.0
    %279 = vmatprep.subr.mxu0 0.0
    %280 = vmatpush1.msra.mxu0 0.0
    %281 = vmatprep.subr.mxu0 0.0
    %282 = vmatpush1.msra.mxu0 0.0
    %283 = vmatprep.subr.mxu0 0.0
    %284 = vmatpush1.msra.mxu0 0.0
    %285 = vmatprep.subr.mxu0 0.0
    %286 = vmatpush1.msra.mxu0 0.0
    %287 = vmatprep.subr.mxu0 0.0
    %288 = vmatpush1.msra.mxu0 0.0
    %289 = vmatprep.subr.mxu0 0.0
    %290 = vmatpush1.msra.mxu0 0.0
    %291 = vmatprep.subr.mxu0 0.0
    %292 = vmatpush1.msra.mxu0 0.0
    %293 = vmatprep.mubr.f32.mxu0 0.0
    %294 = vmatmul.mubr.f32.gmra.mrb[0].mxu0 %v227
    %v295 = vpop.f32.mrb[0].mxu0
    %v296 = vadd.f32 %v213, %v295
    %v297 = vpop.f32.mrb[0].mxu0
    %v298 = vadd.f32 %v217, %v297
    %299 = vdwg.mxu0
    %300 = vmatprep.subr.mxu0 0.0
    %301 = vmatpush1.msra.mxu0 %v150
    %302 = vmatprep.subr.mxu0 0.0
    %303 = vmatpush1.msra.mxu0 %v153
    %304 = vmatprep.subr.mxu0 0.0
    %305 = vmatpush1.msra.mxu0 %v156
    %306 = vmatprep.subr.mxu0 0.0
    %307 = vmatpush1.msra.mxu0 %v159
    %308 = vmatprep.subr.mxu0 0.0
    %309 = vmatpush1.msra.mxu0 0.0
    %310 = vmatprep.subr.mxu0 0.0
    %311 = vmatpush1.msra.mxu0 0.0
    %312 = vmatprep.subr.mxu0 0.0
    %313 = vmatpush1.msra.mxu0 0.0
    %314 = vmatprep.subr.mxu0 0.0
    %315 = vmatpush1.msra.mxu0 0.0
    %316 = vmatprep.subr.mxu0 0.0
    %317 = vmatpush1.msra.mxu0 0.0
    %318 = vmatprep.subr.mxu0 0.0
    %319 = vmatpush1.msra.mxu0 0.0
    %320 = vmatprep.subr.mxu0 0.0
    %321 = vmatpush1.msra.mxu0 0.0
    %322 = vmatprep.subr.mxu0 0.0
    %323 = vmatpush1.msra.mxu0 0.0
    %324 = vmatprep.subr.mxu0 0.0
    %325 = vmatpush1.msra.mxu0 0.0
    %326 = vmatprep.subr.mxu0 0.0
    %327 = vmatpush1.msra.mxu0 0.0
    %328 = vmatprep.subr.mxu0 0.0
    %329 = vmatpush1.msra.mxu0 0.0
    %330 = vmatprep.subr.mxu0 0.0
    %331 = vmatpush1.msra.mxu0 0.0
    %332 = vmatprep.subr.mxu0 0.0
    %333 = vmatpush1.msra.mxu0 0.0
    %334 = vmatprep.subr.mxu0 0.0
    %335 = vmatpush1.msra.mxu0 0.0
    %336 = vmatprep.subr.mxu0 0.0
    %337 = vmatpush1.msra.mxu0 0.0
    %338 = vmatprep.subr.mxu0 0.0
    %339 = vmatpush1.msra.mxu0 0.0
    %340 = vmatprep.subr.mxu0 0.0
    %341 = vmatpush1.msra.mxu0 0.0
    %342 = vmatprep.subr.mxu0 0.0
    %343 = vmatpush1.msra.mxu0 0.0
    %344 = vmatprep.subr.mxu0 0.0
    %345 = vmatpush1.msra.mxu0 0.0
    %346 = vmatprep.subr.mxu0 0.0
    %347 = vmatpush1.msra.mxu0 0.0
    %348 = vmatprep.subr.mxu0 0.0
    %349 = vmatpush1.msra.mxu0 0.0
    %350 = vmatprep.subr.mxu0 0.0
    %351 = vmatpush1.msra.mxu0 0.0
    %352 = vmatprep.subr.mxu0 0.0
    %353 = vmatpush1.msra.mxu0 0.0
    %354 = vmatprep.subr.mxu0 0.0
    %355 = vmatpush1.msra.mxu0 0.0
    %356 = vmatprep.subr.mxu0 0.0
    %357 = vmatpush1.msra.mxu0 0.0
    %358 = vmatprep.subr.mxu0 0.0
    %359 = vmatpush1.msra.mxu0 0.0
    %360 = vmatprep.subr.mxu0 0.0
    %361 = vmatpush1.msra.mxu0 0.0
    %362 = vmatprep.subr.mxu0 0.0
    %363 = vmatpush1.msra.mxu0 0.0
    %364 = vmatprep.mubr.f32.mxu0 0.0
    %365 = vmatmul.mubr.f32.gmra.mrb[0].mxu0 %v227
    %v366 = vpop.f32.mrb[0].mxu0
    %v367 = vadd.f32 %v221, %v366
    %v368 = vpop.f32.mrb[0].mxu0
    %369 = vdwg.mxu0
    %v370 = vadd.f32 %v206, %v296
    %v371 = vmul.f32 %v370, 0.5
    %v372 = vtanh.pop %v371
    %v373 = vadd.f32 %v372, 1.0
    %v374 = vmul.f32 %v373, 0.5
    %v375 = vadd.f32 %v207, %v298
    %v376 = vmul.f32 %v375, 0.5
    %v377 = vtanh.pop %v376
    %v378 = vadd.f32 %v377, 1.0
    %v379 = vmul.f32 %v378, 0.5
    %v380 = vmul.f32 %v374, %v367
    %v381 = vadd.f32 %v208, %v380
    %v382 = vtanh.pop %v381
    %v383 = vsub.f32 1.0, %v379
    %v384 = vmul.f32 %v383, %v382
    %v385 = vmul.f32 %v379, 0.0
    %v386 = vadd.f32 %v384, %v385
    %v387 = vsel %vm225, %v386, 0.0
    %v388 = vld [vmem:[#allocation6] sm:$0xff]
    %v389 = vld [vmem:[#allocation6 + $0x8] sm:$0xff]
    %v390 = vld [vmem:[#allocation6 + $0x10] sm:$0xff]
    %v391 = vld [vmem:[#allocation6 + $0x18] sm:$0xff]
    %v392 = vld [vmem:[#allocation6 + $0x20] sm:$0xff]
    %v393 = vld [vmem:[#allocation6 + $0x28] sm:$0xff]
    %v394 = vld [vmem:[#allocation6 + $0x30] sm:$0xff]
    %v395 = vld [vmem:[#allocation6 + $0x38] sm:$0xff]
    %v396 = vld [vmem:[#allocation6 + $0x40] sm:$0xff]
    %v397 = vld [vmem:[#allocation6 + $0x48] sm:$0xff]
    %v398 = vld [vmem:[#allocation6 + $0x50] sm:$0xff]
    %v399 = vld [vmem:[#allocation6 + $0x58] sm:$0xff]
    %v400 = vld [vmem:[#allocation6 + $0x60] sm:$0xff]
    %v401 = vld [vmem:[#allocation6 + $0x68] sm:$0xff]
    %v402 = vld [vmem:[#allocation6 + $0x70] sm:$0xff]
    %v403 = vld [vmem:[#allocation6 + $0x78] sm:$0xff]
    %v404 = vld [vmem:[#allocation6 + $0x80] sm:$0xff]
    %v405 = vld [vmem:[#allocation6 + $0x88] sm:$0xff]
    %v406 = vld [vmem:[#allocation6 + $0x90] sm:$0xff]
    %v407 = vld [vmem:[#allocation6 + $0x98] sm:$0xff]
    %v408 = vld [vmem:[#allocation6 + $0xa0] sm:$0xff]
    %v409 = vld [vmem:[#allocation6 + $0xa8] sm:$0xff]
    %v410 = vld [vmem:[#allocation6 + $0xb0] sm:$0xff]
    %v411 = vld [vmem:[#allocation6 + $0xb8] sm:$0xff]
    %v412 = vld [vmem:[#allocation6 + $0xc0] sm:$0xff]
    %v413 = vld [vmem:[#allocation6 + $0xc8] sm:$0xff]
    %v414 = vld [vmem:[#allocation6 + $0xd0] sm:$0xff]
    %v415 = vld [vmem:[#allocation6 + $0xd8] sm:$0xff]
    %v416 = vld [vmem:[#allocation6 + $0xe0] sm:$0xff]
    %v417 = vld [vmem:[#allocation6 + $0xe8] sm:$0xff]
    %v418 = vld [vmem:[#allocation6 + $0xf0] sm:$0xff]
    %v419 = vld [vmem:[#allocation6 + $0xf8] sm:$0xff]
    %v421 = vlaneseq
    %v422 = vshrl.u32 %v421, 7
    %v423 = vsub.s32 0, %v422
    %v424 = vrot.slane %v161, %v423
    %v425 = vlaneseq
    %v426 = vshrl.u32 %v425, 7
    %v427 = vsub.s32 1, %v426
    %v428 = vrot.slane %v161, %v427
    %v429 = vlaneseq
    %v430 = vshrl.u32 %v429, 7
    %v431 = vsub.s32 2, %v430
    %v432 = vrot.slane %v161, %v431
    %v433 = vlaneseq
    %v434 = vshrl.u32 %v433, 7
    %v435 = vsub.s32 3, %v434
    %v436 = vrot.slane %v161, %v435
    %vm441 = vcmask 523264
    %v443 = vsel %vm441, %v387, 0
    %445 = vmatprep.subr.mxu0 %v389
    %446 = vmatpush1.msra.mxu0 %v388
    %447 = vmatprep.subr.mxu0 %v393
    %448 = vmatpush1.msra.mxu0 %v392
    %449 = vmatprep.subr.mxu0 %v397
    %450 = vmatpush1.msra.mxu0 %v396
    %451 = vmatprep.subr.mxu0 %v401
    %452 = vmatpush1.msra.mxu0 %v400
    %453 = vmatprep.subr.mxu0 %v405
    %454 = vmatpush1.msra.mxu0 %v404
    %455 = vmatprep.subr.mxu0 %v409
    %456 = vmatpush1.msra.mxu0 %v408
    %457 = vmatprep.subr.mxu0 %v413
    %458 = vmatpush1.msra.mxu0 %v412
    %459 = vmatprep.subr.mxu0 %v417
    %460 = vmatpush1.msra.mxu0 %v416
    %461 = vmatprep.subr.mxu0 0.0
    %462 = vmatpush1.msra.mxu0 0.0
    %463 = vmatprep.subr.mxu0 0.0
    %464 = vmatpush1.msra.mxu0 0.0
    %465 = vmatprep.subr.mxu0 0.0
    %466 = vmatpush1.msra.mxu0 0.0
    %467 = vmatprep.subr.mxu0 0.0
    %468 = vmatpush1.msra.mxu0 0.0
    %469 = vmatprep.subr.mxu0 0.0
    %470 = vmatpush1.msra.mxu0 0.0
    %471 = vmatprep.subr.mxu0 0.0
    %472 = vmatpush1.msra.mxu0 0.0
    %473 = vmatprep.subr.mxu0 0.0
    %474 = vmatpush1.msra.mxu0 0.0
    %475 = vmatprep.subr.mxu0 0.0
    %476 = vmatpush1.msra.mxu0 0.0
    %477 = vmatprep.subr.mxu0 0.0
    %478 = vmatpush1.msra.mxu0 0.0
    %479 = vmatprep.subr.mxu0 0.0
    %480 = vmatpush1.msra.mxu0 0.0
    %481 = vmatprep.subr.mxu0 0.0
    %482 = vmatpush1.msra.mxu0 0.0
    %483 = vmatprep.subr.mxu0 0.0
    %484 = vmatpush1.msra.mxu0 0.0
    %485 = vmatprep.subr.mxu0 0.0
    %486 = vmatpush1.msra.mxu0 0.0
    %487 = vmatprep.subr.mxu0 0.0
    %488 = vmatpush1.msra.mxu0 0.0
    %489 = vmatprep.subr.mxu0 0.0
    %490 = vmatpush1.msra.mxu0 0.0
    %491 = vmatprep.subr.mxu0 0.0
    %492 = vmatpush1.msra.mxu0 0.0
    %493 = vmatprep.subr.mxu0 0.0
    %494 = vmatpush1.msra.mxu0 0.0
    %495 = vmatprep.subr.mxu0 0.0
    %496 = vmatpush1.msra.mxu0 0.0
    %497 = vmatprep.subr.mxu0 0.0
    %498 = vmatpush1.msra.mxu0 0.0
    %499 = vmatprep.subr.mxu0 0.0
    %500 = vmatpush1.msra.mxu0 0.0
    %501 = vmatprep.subr.mxu0 0.0
    %502 = vmatpush1.msra.mxu0 0.0
    %503 = vmatprep.subr.mxu0 0.0
    %504 = vmatpush1.msra.mxu0 0.0
    %505 = vmatprep.subr.mxu0 0.0
    %506 = vmatpush1.msra.mxu0 0.0
    %507 = vmatprep.subr.mxu0 0.0
    %508 = vmatpush1.msra.mxu0 0.0
    %509 = vmatprep.mubr.f32.mxu0 0.0
    %510 = vmatmul.mubr.f32.gmra.mrb[0].mxu0 %v443
    %v511 = vpop.f32.mrb[0].mxu0
    %v512 = vadd.f32 %v424, %v511
    %v513 = vpop.f32.mrb[0].mxu0
    %v514 = vadd.f32 %v428, %v513
    %515 = vdwg.mxu0
    %516 = vmatprep.subr.mxu0 %v391
    %517 = vmatpush1.msra.mxu0 %v390
    %518 = vmatprep.subr.mxu0 %v395
    %519 = vmatpush1.msra.mxu0 %v394
    %520 = vmatprep.subr.mxu0 %v399
    %521 = vmatpush1.msra.mxu0 %v398
    %522 = vmatprep.subr.mxu0 %v403
    %523 = vmatpush1.msra.mxu0 %v402
    %524 = vmatprep.subr.mxu0 %v407
    %525 = vmatpush1.msra.mxu0 %v406
    %526 = vmatprep.subr.mxu0 %v411
    %527 = vmatpush1.msra.mxu0 %v410
    %528 = vmatprep.subr.mxu0 %v415
    %529 = vmatpush1.msra.mxu0 %v414
    %530 = vmatprep.subr.mxu0 %v419
    %531 = vmatpush1.msra.mxu0 %v418
    %532 = vmatprep.subr.mxu0 0.0
    %533 = vmatpush1.msra.mxu0 0.0
    %534 = vmatprep.subr.mxu0 0.0
    %535 = vmatpush1.msra.mxu0 0.0
    %536 = vmatprep.subr.mxu0 0.0
    %537 = vmatpush1.msra.mxu0 0.0
    %538 = vmatprep.subr.mxu0 0.0
    %539 = vmatpush1.msra.mxu0 0.0
    %540 = vmatprep.subr.mxu0 0.0
    %541 = vmatpush1.msra.mxu0 0.0
    %542 = vmatprep.subr.mxu0 0.0
    %543 = vmatpush1.msra.mxu0 0.0
    %544 = vmatprep.subr.mxu0 0.0
    %545 = vmatpush1.msra.mxu0 0.0
    %546 = vmatprep.subr.mxu0 0.0
    %547 = vmatpush1.msra.mxu0 0.0
    %548 = vmatprep.subr.mxu0 0.0
    %549 = vmatpush1.msra.mxu0 0.0
    %550 = vmatprep.subr.mxu0 0.0
    %551 = vmatpush1.msra.mxu0 0.0
    %552 = vmatprep.subr.mxu0 0.0
    %553 = vmatpush1.msra.mxu0 0.0
    %554 = vmatprep.subr.mxu0 0.0
    %555 = vmatpush1.msra.mxu0 0.0
    %556 = vmatprep.subr.mxu0 0.0
    %557 = vmatpush1.msra.mxu0 0.0
    %558 = vmatprep.subr.mxu0 0.0
    %559 = vmatpush1.msra.mxu0 0.0
    %560 = vmatprep.subr.mxu0 0.0
    %561 = vmatpush1.msra.mxu0 0.0
    %562 = vmatprep.subr.mxu0 0.0
    %563 = vmatpush1.msra.mxu0 0.0
    %564 = vmatprep.subr.mxu0 0.0
    %565 = vmatpush1.msra.mxu0 0.0
    %566 = vmatprep.subr.mxu0 0.0
    %567 = vmatpush1.msra.mxu0 0.0
    %568 = vmatprep.subr.mxu0 0.0
    %569 = vmatpush1.msra.mxu0 0.0
    %570 = vmatprep.subr.mxu0 0.0
    %571 = vmatpush1.msra.mxu0 0.0
    %572 = vmatprep.subr.mxu0 0.0
    %573 = vmatpush1.msra.mxu0 0.0
    %574 = vmatprep.subr.mxu0 0.0
    %575 = vmatpush1.msra.mxu0 0.0
    %576 = vmatprep.subr.mxu0 0.0
    %577 = vmatpush1.msra.mxu0 0.0
    %578 = vmatprep.subr.mxu0 0.0
    %579 = vmatpush1.msra.mxu0 0.0
    %580 = vmatprep.mubr.f32.mxu0 0.0
    %581 = vmatmul.mubr.f32.gmra.mrb[0].mxu0 %v443
    %v582 = vpop.f32.mrb[0].mxu0
    %v583 = vadd.f32 %v432, %v582
    %v584 = vpop.f32.mrb[0].mxu0
    %v585 = vadd.f32 %v436, %v584
    %586 = vdwg.mxu0
    %v587 = vmul.f32 %v512, 0.5
    %v588 = vtanh.pop %v587
    %v589 = vadd.f32 %v588, 1.0
    %v590 = vmul.f32 %v589, 0.5
    %v591 = vmul.f32 %v514, 0.5
    %v592 = vtanh.pop %v591
    %v593 = vadd.f32 %v592, 1.0
    %v594 = vmul.f32 %v593, 0.5
    %v595 = vmul.f32 %v590, %v585
    %v596 = vadd.f32 %v583, %v595
    %v597 = vtanh.pop %v596
    %v598 = vsub.f32 1.0, %v594
    %v599 = vmul.f32 %v598, %v597
    %v600 = vmul.f32 %v594, 0.0
    %v601 = vadd.f32 %v599, %v600
    %v602 = vsel %vm225, %v601, 0.0
    %s603 = scalar_lea.vmem [#allocation6], 256
    %v604 = vld [vmem:[%s603] sm:$0xff]
    %v605 = vld [vmem:[%s603 + $0x8] sm:$0xff]
    %v606 = vld [vmem:[%s603 + $0x10] sm:$0xff]
    %v607 = vld [vmem:[%s603 + $0x18] sm:$0xff]
    %v608 = vld [vmem:[%s603 + $0x20] sm:$0xff]
    %v609 = vld [vmem:[%s603 + $0x28] sm:$0xff]
    %v610 = vld [vmem:[%s603 + $0x30] sm:$0xff]
    %v611 = vld [vmem:[%s603 + $0x38] sm:$0xff]
    %v612 = vld [vmem:[%s603 + $0x40] sm:$0xff]
    %v613 = vld [vmem:[%s603 + $0x48] sm:$0xff]
    %v614 = vld [vmem:[%s603 + $0x50] sm:$0xff]
    %v615 = vld [vmem:[%s603 + $0x58] sm:$0xff]
    %v616 = vld [vmem:[%s603 + $0x60] sm:$0xff]
    %v617 = vld [vmem:[%s603 + $0x68] sm:$0xff]
    %v618 = vld [vmem:[%s603 + $0x70] sm:$0xff]
    %v619 = vld [vmem:[%s603 + $0x78] sm:$0xff]
    %v620 = vld [vmem:[%s603 + $0x80] sm:$0xff]
    %v621 = vld [vmem:[%s603 + $0x88] sm:$0xff]
    %v622 = vld [vmem:[%s603 + $0x90] sm:$0xff]
    %v623 = vld [vmem:[%s603 + $0x98] sm:$0xff]
    %v624 = vld [vmem:[%s603 + $0xa0] sm:$0xff]
    %v625 = vld [vmem:[%s603 + $0xa8] sm:$0xff]
    %v626 = vld [vmem:[%s603 + $0xb0] sm:$0xff]
    %v627 = vld [vmem:[%s603 + $0xb8] sm:$0xff]
    %v628 = vld [vmem:[%s603 + $0xc0] sm:$0xff]
    %v629 = vld [vmem:[%s603 + $0xc8] sm:$0xff]
    %v630 = vld [vmem:[%s603 + $0xd0] sm:$0xff]
    %v631 = vld [vmem:[%s603 + $0xd8] sm:$0xff]
    %v632 = vld [vmem:[%s603 + $0xe0] sm:$0xff]
    %v633 = vld [vmem:[%s603 + $0xe8] sm:$0xff]
    %v634 = vld [vmem:[%s603 + $0xf0] sm:$0xff]
    %v635 = vld [vmem:[%s603 + $0xf8] sm:$0xff]
    %v637 = vlaneseq
    %v638 = vshrl.u32 %v637, 7
    %v639 = vsub.s32 0, %v638
    %v640 = vrot.slane %v163, %v639
    %v641 = vlaneseq
    %v642 = vshrl.u32 %v641, 7
    %v643 = vsub.s32 1, %v642
    %v644 = vrot.slane %v163, %v643
    %v645 = vlaneseq
    %v646 = vshrl.u32 %v645, 7
    %v647 = vsub.s32 2, %v646
    %v648 = vrot.slane %v163, %v647
    %v649 = vlaneseq
    %v650 = vshrl.u32 %v649, 7
    %v651 = vsub.s32 3, %v650
    %v652 = vrot.slane %v163, %v651
    %v658 = vsel %vm441, %v602, 0
    %660 = vmatprep.subr.mxu0 %v605
    %661 = vmatpush1.msra.mxu0 %v604
    %662 = vmatprep.subr.mxu0 %v609
    %663 = vmatpush1.msra.mxu0 %v608
    %664 = vmatprep.subr.mxu0 %v613
    %665 = vmatpush1.msra.mxu0 %v612
    %666 = vmatprep.subr.mxu0 %v617
    %667 = vmatpush1.msra.mxu0 %v616
    %668 = vmatprep.subr.mxu0 %v621
    %669 = vmatpush1.msra.mxu0 %v620
    %670 = vmatprep.subr.mxu0 %v625
    %671 = vmatpush1.msra.mxu0 %v624
    %672 = vmatprep.subr.mxu0 %v629
    %673 = vmatpush1.msra.mxu0 %v628
    %674 = vmatprep.subr.mxu0 %v633
    %675 = vmatpush1.msra.mxu0 %v632
    %676 = vmatprep.subr.mxu0 0.0
    %677 = vmatpush1.msra.mxu0 0.0
    %678 = vmatprep.subr.mxu0 0.0
    %679 = vmatpush1.msra.mxu0 0.0
    %680 = vmatprep.subr.mxu0 0.0
    %681 = vmatpush1.msra.mxu0 0.0
    %682 = vmatprep.subr.mxu0 0.0
    %683 = vmatpush1.msra.mxu0 0.0
    %684 = vmatprep.subr.mxu0 0.0
    %685 = vmatpush1.msra.mxu0 0.0
    %686 = vmatprep.subr.mxu0 0.0
    %687 = vmatpush1.msra.mxu0 0.0
    %688 = vmatprep.subr.mxu0 0.0
    %689 = vmatpush1.msra.mxu0 0.0
    %690 = vmatprep.subr.mxu0 0.0
    %691 = vmatpush1.msra.mxu0 0.0
    %692 = vmatprep.subr.mxu0 0.0
    %693 = vmatpush1.msra.mxu0 0.0
    %694 = vmatprep.subr.mxu0 0.0
    %695 = vmatpush1.msra.mxu0 0.0
    %696 = vmatprep.subr.mxu0 0.0
    %697 = vmatpush1.msra.mxu0 0.0
    %698 = vmatprep.subr.mxu0 0.0
    %699 = vmatpush1.msra.mxu0 0.0
    %700 = vmatprep.subr.mxu0 0.0
    %701 = vmatpush1.msra.mxu0 0.0
    %702 = vmatprep.subr.mxu0 0.0
    %703 = vmatpush1.msra.mxu0 0.0
    %704 = vmatprep.subr.mxu0 0.0
    %705 = vmatpush1.msra.mxu0 0.0
    %706 = vmatprep.subr.mxu0 0.0
    %707 = vmatpush1.msra.mxu0 0.0
    %708 = vmatprep.subr.mxu0 0.0
    %709 = vmatpush1.msra.mxu0 0.0
    %710 = vmatprep.subr.mxu0 0.0
    %711 = vmatpush1.msra.mxu0 0.0
    %712 = vmatprep.subr.mxu0 0.0
    %713 = vmatpush1.msra.mxu0 0.0
    %714 = vmatprep.subr.mxu0 0.0
    %715 = vmatpush1.msra.mxu0 0.0
    %716 = vmatprep.subr.mxu0 0.0
    %717 = vmatpush1.msra.mxu0 0.0
    %718 = vmatprep.subr.mxu0 0.0
    %719 = vmatpush1.msra.mxu0 0.0
    %720 = vmatprep.subr.mxu0 0.0
    %721 = vmatpush1.msra.mxu0 0.0
    %722 = vmatprep.subr.mxu0 0.0
    %723 = vmatpush1.msra.mxu0 0.0
    %724 = vmatprep.mubr.f32.mxu0 0.0
    %725 = vmatmul.mubr.f32.gmra.mrb[0].mxu0 %v658
    %v726 = vpop.f32.mrb[0].mxu0
    %v727 = vadd.f32 %v640, %v726
    %v728 = vpop.f32.mrb[0].mxu0
    %v729 = vadd.f32 %v644, %v728
    %730 = vdwg.mxu0
    %731 = vmatprep.subr.mxu0 %v607
    %732 = vmatpush1.msra.mxu0 %v606
    %733 = vmatprep.subr.mxu0 %v611
    %734 = vmatpush1.msra.mxu0 %v610
    %735 = vmatprep.subr.mxu0 %v615
    %736 = vmatpush1.msra.mxu0 %v614
    %737 = vmatprep.subr.mxu0 %v619
    %738 = vmatpush1.msra.mxu0 %v618
    %739 = vmatprep.subr.mxu0 %v623
    %740 = vmatpush1.msra.mxu0 %v622
    %741 = vmatprep.subr.mxu0 %v627
    %742 = vmatpush1.msra.mxu0 %v626
    %743 = vmatprep.subr.mxu0 %v631
    %744 = vmatpush1.msra.mxu0 %v630
    %745 = vmatprep.subr.mxu0 %v635
    %746 = vmatpush1.msra.mxu0 %v634
    %747 = vmatprep.subr.mxu0 0.0
    %748 = vmatpush1.msra.mxu0 0.0
    %749 = vmatprep.subr.mxu0 0.0
    %750 = vmatpush1.msra.mxu0 0.0
    %751 = vmatprep.subr.mxu0 0.0
    %752 = vmatpush1.msra.mxu0 0.0
    %753 = vmatprep.subr.mxu0 0.0
    %754 = vmatpush1.msra.mxu0 0.0
    %755 = vmatprep.subr.mxu0 0.0
    %756 = vmatpush1.msra.mxu0 0.0
    %757 = vmatprep.subr.mxu0 0.0
    %758 = vmatpush1.msra.mxu0 0.0
    %759 = vmatprep.subr.mxu0 0.0
    %760 = vmatpush1.msra.mxu0 0.0
    %761 = vmatprep.subr.mxu0 0.0
    %762 = vmatpush1.msra.mxu0 0.0
    %763 = vmatprep.subr.mxu0 0.0
    %764 = vmatpush1.msra.mxu0 0.0
    %765 = vmatprep.subr.mxu0 0.0
    %766 = vmatpush1.msra.mxu0 0.0
    %767 = vmatprep.subr.mxu0 0.0
    %768 = vmatpush1.msra.mxu0 0.0
    %769 = vmatprep.subr.mxu0 0.0
    %770 = vmatpush1.msra.mxu0 0.0
    %771 = vmatprep.subr.mxu0 0.0
    %772 = vmatpush1.msra.mxu0 0.0
    %773 = vmatprep.subr.mxu0 0.0
    %774 = vmatpush1.msra.mxu0 0.0
    %775 = vmatprep.subr.mxu0 0.0
    %776 = vmatpush1.msra.mxu0 0.0
    %777 = vmatprep.subr.mxu0 0.0
    %778 = vmatpush1.msra.mxu0 0.0
    %779 = vmatprep.subr.mxu0 0.0
    %780 = vmatpush1.msra.mxu0 0.0
    %781 = vmatprep.subr.mxu0 0.0
    %782 = vmatpush1.msra.mxu0 0.0
    %783 = vmatprep.subr.mxu0 0.0
    %784 = vmatpush1.msra.mxu0 0.0
    %785 = vmatprep.subr.mxu0 0.0
    %786 = vmatpush1.msra.mxu0 0.0
    %787 = vmatprep.subr.mxu0 0.0
    %788 = vmatpush1.msra.mxu0 0.0
    %789 = vmatprep.subr.mxu0 0.0
    %790 = vmatpush1.msra.mxu0 0.0
    %791 = vmatprep.subr.mxu0 0.0
    %792 = vmatpush1.msra.mxu0 0.0
    %793 = vmatprep.subr.mxu0 0.0
    %794 = vmatpush1.msra.mxu0 0.0
    %795 = vmatprep.mubr.f32.mxu0 0.0
    %796 = vmatmul.mubr.f32.gmra.mrb[0].mxu0 %v658
    %v797 = vpop.f32.mrb[0].mxu0
    %v798 = vadd.f32 %v648, %v797
    %v799 = vpop.f32.mrb[0].mxu0
    %v800 = vadd.f32 %v652, %v799
    %801 = vdwg.mxu0
    %v802 = vmul.f32 %v727, 0.5
    %v803 = vtanh.pop %v802
    %v804 = vadd.f32 %v803, 1.0
    %v805 = vmul.f32 %v804, 0.5
    %v806 = vmul.f32 %v729, 0.5
    %v807 = vtanh.pop %v806
    %v808 = vadd.f32 %v807, 1.0
    %v809 = vmul.f32 %v808, 0.5
    %v810 = vmul.f32 %v805, %v800
    %v811 = vadd.f32 %v798, %v810
    %v812 = vtanh.pop %v811
    %v813 = vsub.f32 1.0, %v809
    %v814 = vmul.f32 %v813, %v812
    %v815 = vmul.f32 %v809, 0.0
    %v816 = vadd.f32 %v814, %v815
    %v817 = vsel %vm225, %v816, 0.0
    %s818 = scalar_lea.vmem [#allocation6], 512
    %v819 = vld [vmem:[%s818] sm:$0xff]
    %v820 = vld [vmem:[%s818 + $0x8] sm:$0xff]
    %v821 = vld [vmem:[%s818 + $0x10] sm:$0xff]
    %v822 = vld [vmem:[%s818 + $0x18] sm:$0xff]
    %v823 = vld [vmem:[%s818 + $0x20] sm:$0xff]
    %v824 = vld [vmem:[%s818 + $0x28] sm:$0xff]
    %v825 = vld [vmem:[%s818 + $0x30] sm:$0xff]
    %v826 = vld [vmem:[%s818 + $0x38] sm:$0xff]
    %v827 = vld [vmem:[%s818 + $0x40] sm:$0xff]
    %v828 = vld [vmem:[%s818 + $0x48] sm:$0xff]
    %v829 = vld [vmem:[%s818 + $0x50] sm:$0xff]
    %v830 = vld [vmem:[%s818 + $0x58] sm:$0xff]
    %v831 = vld [vmem:[%s818 + $0x60] sm:$0xff]
    %v832 = vld [vmem:[%s818 + $0x68] sm:$0xff]
    %v833 = vld [vmem:[%s818 + $0x70] sm:$0xff]
    %v834 = vld [vmem:[%s818 + $0x78] sm:$0xff]
    %v835 = vld [vmem:[%s818 + $0x80] sm:$0xff]
    %v836 = vld [vmem:[%s818 + $0x88] sm:$0xff]
    %v837 = vld [vmem:[%s818 + $0x90] sm:$0xff]
    %v838 = vld [vmem:[%s818 + $0x98] sm:$0xff]
    %v839 = vld [vmem:[%s818 + $0xa0] sm:$0xff]
    %v840 = vld [vmem:[%s818 + $0xa8] sm:$0xff]
    %v841 = vld [vmem:[%s818 + $0xb0] sm:$0xff]
    %v842 = vld [vmem:[%s818 + $0xb8] sm:$0xff]
    %v843 = vld [vmem:[%s818 + $0xc0] sm:$0xff]
    %v844 = vld [vmem:[%s818 + $0xc8] sm:$0xff]
    %v845 = vld [vmem:[%s818 + $0xd0] sm:$0xff]
    %v846 = vld [vmem:[%s818 + $0xd8] sm:$0xff]
    %v847 = vld [vmem:[%s818 + $0xe0] sm:$0xff]
    %v848 = vld [vmem:[%s818 + $0xe8] sm:$0xff]
    %v849 = vld [vmem:[%s818 + $0xf0] sm:$0xff]
    %v850 = vld [vmem:[%s818 + $0xf8] sm:$0xff]
    %v852 = vlaneseq
    %v853 = vshrl.u32 %v852, 7
    %v854 = vsub.s32 0, %v853
    %v855 = vrot.slane %v165, %v854
    %v856 = vlaneseq
    %v857 = vshrl.u32 %v856, 7
    %v858 = vsub.s32 1, %v857
    %v859 = vrot.slane %v165, %v858
    %v860 = vlaneseq
    %v861 = vshrl.u32 %v860, 7
    %v862 = vsub.s32 2, %v861
    %v863 = vrot.slane %v165, %v862
    %v864 = vlaneseq
    %v865 = vshrl.u32 %v864, 7
    %v866 = vsub.s32 3, %v865
    %v867 = vrot.slane %v165, %v866
    %v873 = vsel %vm441, %v817, 0
    %875 = vmatprep.subr.mxu0 %v820
    %876 = vmatpush1.msra.mxu0 %v819
    %877 = vmatprep.subr.mxu0 %v824
    %878 = vmatpush1.msra.mxu0 %v823
    %879 = vmatprep.subr.mxu0 %v828
    %880 = vmatpush1.msra.mxu0 %v827
    %881 = vmatprep.subr.mxu0 %v832
    %882 = vmatpush1.msra.mxu0 %v831
    %883 = vmatprep.subr.mxu0 %v836
    %884 = vmatpush1.msra.mxu0 %v835
    %885 = vmatprep.subr.mxu0 %v840
    %886 = vmatpush1.msra.mxu0 %v839
    %887 = vmatprep.subr.mxu0 %v844
    %888 = vmatpush1.msra.mxu0 %v843
    %889 = vmatprep.subr.mxu0 %v848
    %890 = vmatpush1.msra.mxu0 %v847
    %891 = vmatprep.subr.mxu0 0.0
    %892 = vmatpush1.msra.mxu0 0.0
    %893 = vmatprep.subr.mxu0 0.0
    %894 = vmatpush1.msra.mxu0 0.0
    %895 = vmatprep.subr.mxu0 0.0
    %896 = vmatpush1.msra.mxu0 0.0
    %897 = vmatprep.subr.mxu0 0.0
    %898 = vmatpush1.msra.mxu0 0.0
    %899 = vmatprep.subr.mxu0 0.0
    %900 = vmatpush1.msra.mxu0 0.0
    %901 = vmatprep.subr.mxu0 0.0
    %902 = vmatpush1.msra.mxu0 0.0
    %903 = vmatprep.subr.mxu0 0.0
    %904 = vmatpush1.msra.mxu0 0.0
    %905 = vmatprep.subr.mxu0 0.0
    %906 = vmatpush1.msra.mxu0 0.0
    %907 = vmatprep.subr.mxu0 0.0
    %908 = vmatpush1.msra.mxu0 0.0
    %909 = vmatprep.subr.mxu0 0.0
    %910 = vmatpush1.msra.mxu0 0.0
    %911 = vmatprep.subr.mxu0 0.0
    %912 = vmatpush1.msra.mxu0 0.0
    %913 = vmatprep.subr.mxu0 0.0
    %914 = vmatpush1.msra.mxu0 0.0
    %915 = vmatprep.subr.mxu0 0.0
    %916 = vmatpush1.msra.mxu0 0.0
    %917 = vmatprep.subr.mxu0 0.0
    %918 = vmatpush1.msra.mxu0 0.0
    %919 = vmatprep.subr.mxu0 0.0
    %920 = vmatpush1.msra.mxu0 0.0
    %921 = vmatprep.subr.mxu0 0.0
    %922 = vmatpush1.msra.mxu0 0.0
    %923 = vmatprep.subr.mxu0 0.0
    %924 = vmatpush1.msra.mxu0 0.0
    %925 = vmatprep.subr.mxu0 0.0
    %926 = vmatpush1.msra.mxu0 0.0
    %927 = vmatprep.subr.mxu0 0.0
    %928 = vmatpush1.msra.mxu0 0.0
    %929 = vmatprep.subr.mxu0 0.0
    %930 = vmatpush1.msra.mxu0 0.0
    %931 = vmatprep.subr.mxu0 0.0
    %932 = vmatpush1.msra.mxu0 0.0
    %933 = vmatprep.subr.mxu0 0.0
    %934 = vmatpush1.msra.mxu0 0.0
    %935 = vmatprep.subr.mxu0 0.0
    %936 = vmatpush1.msra.mxu0 0.0
    %937 = vmatprep.subr.mxu0 0.0
    %938 = vmatpush1.msra.mxu0 0.0
    %939 = vmatprep.mubr.f32.mxu0 0.0
    %940 = vmatmul.mubr.f32.gmra.mrb[0].mxu0 %v873
    %v941 = vpop.f32.mrb[0].mxu0
    %v942 = vadd.f32 %v855, %v941
    %v943 = vpop.f32.mrb[0].mxu0
    %v944 = vadd.f32 %v859, %v943
    %945 = vdwg.mxu0
    %946 = vmatprep.subr.mxu0 %v822
    %947 = vmatpush1.msra.mxu0 %v821
    %948 = vmatprep.subr.mxu0 %v826
    %949 = vmatpush1.msra.mxu0 %v825
    %950 = vmatprep.subr.mxu0 %v830
    %951 = vmatpush1.msra.mxu0 %v829
    %952 = vmatprep.subr.mxu0 %v834
    %953 = vmatpush1.msra.mxu0 %v833
    %954 = vmatprep.subr.mxu0 %v838
    %955 = vmatpush1.msra.mxu0 %v837
    %956 = vmatprep.subr.mxu0 %v842
    %957 = vmatpush1.msra.mxu0 %v841
    %958 = vmatprep.subr.mxu0 %v846
    %959 = vmatpush1.msra.mxu0 %v845
    %960 = vmatprep.subr.mxu0 %v850
    %961 = vmatpush1.msra.mxu0 %v849
    %962 = vmatprep.subr.mxu0 0.0
    %963 = vmatpush1.msra.mxu0 0.0
    %964 = vmatprep.subr.mxu0 0.0
    %965 = vmatpush1.msra.mxu0 0.0
    %966 = vmatprep.subr.mxu0 0.0
    %967 = vmatpush1.msra.mxu0 0.0
    %968 = vmatprep.subr.mxu0 0.0
    %969 = vmatpush1.msra.mxu0 0.0
    %970 = vmatprep.subr.mxu0 0.0
    %971 = vmatpush1.msra.mxu0 0.0
    %972 = vmatprep.subr.mxu0 0.0
    %973 = vmatpush1.msra.mxu0 0.0
    %974 = vmatprep.subr.mxu0 0.0
    %975 = vmatpush1.msra.mxu0 0.0
    %976 = vmatprep.subr.mxu0 0.0
    %977 = vmatpush1.msra.mxu0 0.0
    %978 = vmatprep.subr.mxu0 0.0
    %979 = vmatpush1.msra.mxu0 0.0
    %980 = vmatprep.subr.mxu0 0.0
    %981 = vmatpush1.msra.mxu0 0.0
    %982 = vmatprep.subr.mxu0 0.0
    %983 = vmatpush1.msra.mxu0 0.0
    %984 = vmatprep.subr.mxu0 0.0
    %985 = vmatpush1.msra.mxu0 0.0
    %986 = vmatprep.subr.mxu0 0.0
    %987 = vmatpush1.msra.mxu0 0.0
    %988 = vmatprep.subr.mxu0 0.0
    %989 = vmatpush1.msra.mxu0 0.0
    %990 = vmatprep.subr.mxu0 0.0
    %991 = vmatpush1.msra.mxu0 0.0
    %992 = vmatprep.subr.mxu0 0.0
    %993 = vmatpush1.msra.mxu0 0.0
    %994 = vmatprep.subr.mxu0 0.0
    %995 = vmatpush1.msra.mxu0 0.0
    %996 = vmatprep.subr.mxu0 0.0
    %997 = vmatpush1.msra.mxu0 0.0
    %998 = vmatprep.subr.mxu0 0.0
    %999 = vmatpush1.msra.mxu0 0.0
    %1000 = vmatprep.subr.mxu0 0.0
    %1001 = vmatpush1.msra.mxu0 0.0
    %1002 = vmatprep.subr.mxu0 0.0
    %1003 = vmatpush1.msra.mxu0 0.0
    %1004 = vmatprep.subr.mxu0 0.0
    %1005 = vmatpush1.msra.mxu0 0.0
    %1006 = vmatprep.subr.mxu0 0.0
    %1007 = vmatpush1.msra.mxu0 0.0
    %1008 = vmatprep.subr.mxu0 0.0
    %1009 = vmatpush1.msra.mxu0 0.0
    %1010 = vmatprep.mubr.f32.mxu0 0.0
    %1011 = vmatmul.mubr.f32.gmra.mrb[0].mxu0 %v873
    %v1012 = vpop.f32.mrb[0].mxu0
    %v1013 = vadd.f32 %v863, %v1012
    %v1014 = vpop.f32.mrb[0].mxu0
    %v1015 = vadd.f32 %v867, %v1014
    %1016 = vdwg.mxu0
    %v1017 = vmul.f32 %v942, 0.5
    %v1018 = vtanh.pop %v1017
    %v1019 = vadd.f32 %v1018, 1.0
    %v1020 = vmul.f32 %v1019, 0.5
    %v1021 = vmul.f32 %v944, 0.5
    %v1022 = vtanh.pop %v1021
    %v1023 = vadd.f32 %v1022, 1.0
    %v1024 = vmul.f32 %v1023, 0.5
    %v1025 = vmul.f32 %v1020, %v1015
    %v1026 = vadd.f32 %v1013, %v1025
    %v1027 = vtanh.pop %v1026
    %v1028 = vsub.f32 1.0, %v1024
    %v1029 = vmul.f32 %v1028, %v1027
    %v1030 = vmul.f32 %v1024, 0.0
    %v1031 = vadd.f32 %v1029, %v1030
    %1032 = vset.pattern.permute.xlu0 1
    %1033 = vperm.xlu0 %1032, %v145
    %v1034 = vpop.permute.xlu0 %1033
    %v1036 = vmul.f32 %v1034, %v175
    %v1037 = vmul.f32 %v1034, %v179
    %v1038 = vmul.f32 %v1034, %v183
    %v1039 = vadd.f32 %v1036, %v194
    %v1040 = vadd.f32 %v1037, %v198
    %v1041 = vadd.f32 %v1038, %v202
    %v1043 = vsel %vm225, %v386, 0
    %1045 = vmatprep.subr.mxu0 %v149
    %1046 = vmatpush1.msra.mxu0 %v148
    %1047 = vmatprep.subr.mxu0 %v152
    %1048 = vmatpush1.msra.mxu0 %v151
    %1049 = vmatprep.subr.mxu0 %v155
    %1050 = vmatpush1.msra.mxu0 %v154
    %1051 = vmatprep.subr.mxu0 %v158
    %1052 = vmatpush1.msra.mxu0 %v157
    %1053 = vmatprep.subr.mxu0 0.0
    %1054 = vmatpush1.msra.mxu0 0.0
    %1055 = vmatprep.subr.mxu0 0.0
    %1056 = vmatpush1.msra.mxu0 0.0
    %1057 = vmatprep.subr.mxu0 0.0
    %1058 = vmatpush1.msra.mxu0 0.0
    %1059 = vmatprep.subr.mxu0 0.0
    %1060 = vmatpush1.msra.mxu0 0.0
    %1061 = vmatprep.subr.mxu0 0.0
    %1062 = vmatpush1.msra.mxu0 0.0
    %1063 = vmatprep.subr.mxu0 0.0
    %1064 = vmatpush1.msra.mxu0 0.0
    %1065 = vmatprep.subr.mxu0 0.0
    %1066 = vmatpush1.msra.mxu0 0.0
    %1067 = vmatprep.subr.mxu0 0.0
    %1068 = vmatpush1.msra.mxu0 0.0
    %1069 = vmatprep.subr.mxu0 0.0
    %1070 = vmatpush1.msra.mxu0 0.0
    %1071 = vmatprep.subr.mxu0 0.0
    %1072 = vmatpush1.msra.mxu0 0.0
    %1073 = vmatprep.subr.mxu0 0.0
    %1074 = vmatpush1.msra.mxu0 0.0
    %1075 = vmatprep.subr.mxu0 0.0
    %1076 = vmatpush1.msra.mxu0 0.0
    %1077 = vmatprep.subr.mxu0 0.0
    %1078 = vmatpush1.msra.mxu0 0.0
    %1079 = vmatprep.subr.mxu0 0.0
    %1080 = vmatpush1.msra.mxu0 0.0
    %1081 = vmatprep.subr.mxu0 0.0
    %1082 = vmatpush1.msra.mxu0 0.0
    %1083 = vmatprep.subr.mxu0 0.0
    %1084 = vmatpush1.msra.mxu0 0.0
    %1085 = vmatprep.subr.mxu0 0.0
    %1086 = vmatpush1.msra.mxu0 0.0
    %1087 = vmatprep.subr.mxu0 0.0
    %1088 = vmatpush1.msra.mxu0 0.0
    %1089 = vmatprep.subr.mxu0 0.0
    %1090 = vmatpush1.msra.mxu0 0.0
    %1091 = vmatprep.subr.mxu0 0.0
    %1092 = vmatpush1.msra.mxu0 0.0
    %1093 = vmatprep.subr.mxu0 0.0
    %1094 = vmatpush1.msra.mxu0 0.0
    %1095 = vmatprep.subr.mxu0 0.0
    %1096 = vmatpush1.msra.mxu0 0.0
    %1097 = vmatprep.subr.mxu0 0.0
    %1098 = vmatpush1.msra.mxu0 0.0
    %1099 = vmatprep.subr.mxu0 0.0
    %1100 = vmatpush1.msra.mxu0 0.0
    %1101 = vmatprep.subr.mxu0 0.0
    %1102 = vmatpush1.msra.mxu0 0.0
    %1103 = vmatprep.subr.mxu0 0.0
    %1104 = vmatpush1.msra.mxu0 0.0
    %1105 = vmatprep.subr.mxu0 0.0
    %1106 = vmatpush1.msra.mxu0 0.0
    %1107 = vmatprep.subr.mxu0 0.0
    %1108 = vmatpush1.msra.mxu0 0.0
    %1109 = vmatprep.mubr.f32.mxu0 0.0
    %1110 = vmatmul.mubr.f32.gmra.mrb[0].mxu0 %v1043
    %v1111 = vpop.f32.mrb[0].mxu0
    %v1112 = vadd.f32 %v213, %v1111
    %v1113 = vpop.f32.mrb[0].mxu0
    %v1114 = vadd.f32 %v217, %v1113
    %1115 = vdwg.mxu0
    %1116 = vmatprep.subr.mxu0 0.0
    %1117 = vmatpush1.msra.mxu0 %v150
    %1118 = vmatprep.subr.mxu0 0.0
    %1119 = vmatpush1.msra.mxu0 %v153
    %1120 = vmatprep.subr.mxu0 0.0
    %1121 = vmatpush1.msra.mxu0 %v156
    %1122 = vmatprep.subr.mxu0 0.0
    %1123 = vmatpush1.msra.mxu0 %v159
    %1124 = vmatprep.subr.mxu0 0.0
    %1125 = vmatpush1.msra.mxu0 0.0
    %1126 = vmatprep.subr.mxu0 0.0
    %1127 = vmatpush1.msra.mxu0 0.0
    %1128 = vmatprep.subr.mxu0 0.0
    %1129 = vmatpush1.msra.mxu0 0.0
    %1130 = vmatprep.subr.mxu0 0.0
    %1131 = vmatpush1.msra.mxu0 0.0
    %1132 = vmatprep.subr.mxu0 0.0
    %1133 = vmatpush1.msra.mxu0 0.0
    %1134 = vmatprep.subr.mxu0 0.0
    %1135 = vmatpush1.msra.mxu0 0.0
    %1136 = vmatprep.subr.mxu0 0.0
    %1137 = vmatpush1.msra.mxu0 0.0
    %1138 = vmatprep.subr.mxu0 0.0
    %1139 = vmatpush1.msra.mxu0 0.0
    %1140 = vmatprep.subr.mxu0 0.0
    %1141 = vmatpush1.msra.mxu0 0.0
    %1142 = vmatprep.subr.mxu0 0.0
    %1143 = vmatpush1.msra.mxu0 0.0
    %1144 = vmatprep.subr.mxu0 0.0
    %1145 = vmatpush1.msra.mxu0 0.0
    %1146 = vmatprep.subr.mxu0 0.0
    %1147 = vmatpush1.msra.mxu0 0.0
    %1148 = vmatprep.subr.mxu0 0.0
    %1149 = vmatpush1.msra.mxu0 0.0
    %1150 = vmatprep.subr.mxu0 0.0
    %1151 = vmatpush1.msra.mxu0 0.0
    %1152 = vmatprep.subr.mxu0 0.0
    %1153 = vmatpush1.msra.mxu0 0.0
    %1154 = vmatprep.subr.mxu0 0.0
    %1155 = vmatpush1.msra.mxu0 0.0
    %1156 = vmatprep.subr.mxu0 0.0
    %1157 = vmatpush1.msra.mxu0 0.0
    %1158 = vmatprep.subr.mxu0 0.0
    %1159 = vmatpush1.msra.mxu0 0.0
    %1160 = vmatprep.subr.mxu0 0.0
    %1161 = vmatpush1.msra.mxu0 0.0
    %1162 = vmatprep.subr.mxu0 0.0
    %1163 = vmatpush1.msra.mxu0 0.0
    %1164 = vmatprep.subr.mxu0 0.0
    %1165 = vmatpush1.msra.mxu0 0.0
    %1166 = vmatprep.subr.mxu0 0.0
    %1167 = vmatpush1.msra.mxu0 0.0
    %1168 = vmatprep.subr.mxu0 0.0
    %1169 = vmatpush1.msra.mxu0 0.0
    %1170 = vmatprep.subr.mxu0 0.0
    %1171 = vmatpush1.msra.mxu0 0.0
    %1172 = vmatprep.subr.mxu0 0.0
    %1173 = vmatpush1.msra.mxu0 0.0
    %1174 = vmatprep.subr.mxu0 0.0
    %1175 = vmatpush1.msra.mxu0 0.0
    %1176 = vmatprep.subr.mxu0 0.0
    %1177 = vmatpush1.msra.mxu0 0.0
    %1178 = vmatprep.subr.mxu0 0.0
    %1179 = vmatpush1.msra.mxu0 0.0
    %1180 = vmatprep.mubr.f32.mxu0 0.0
    %1181 = vmatmul.mubr.f32.gmra.mrb[0].mxu0 %v1043
    %v1182 = vpop.f32.mrb[0].mxu0
    %v1183 = vadd.f32 %v221, %v1182
    %v1184 = vpop.f32.mrb[0].mxu0
    %1185 = vdwg.mxu0
    %v1186 = vadd.f32 %v1039, %v1112
    %v1187 = vmul.f32 %v1186, 0.5
    %v1188 = vtanh.pop %v1187
    %v1189 = vadd.f32 %v1188, 1.0
    %v1190 = vmul.f32 %v1189, 0.5
    %v1191 = vadd.f32 %v1040, %v1114
    %v1192 = vmul.f32 %v1191, 0.5
    %v1193 = vtanh.pop %v1192
    %v1194 = vadd.f32 %v1193, 1.0
    %v1195 = vmul.f32 %v1194, 0.5
    %v1196 = vmul.f32 %v1190, %v1183
    %v1197 = vadd.f32 %v1041, %v1196
    %v1198 = vtanh.pop %v1197
    %v1199 = vsub.f32 1.0, %v1195
    %v1200 = vmul.f32 %v1199, %v1198
    %v1201 = vmul.f32 %v1195, %v386
    %v1202 = vadd.f32 %v1200, %v1201
    %1204 = vrot.lane.b32.xlu0 %v601, 32
    %v1205 = vpop.permute.xlu0 %1204
    %v1207 = vsel %vm225, %v1202, %v1205
    %v1209 = vsel %vm441, %v1207, 0
    %1211 = vmatprep.subr.mxu0 %v389
    %1212 = vmatpush1.msra.mxu0 %v388
    %1213 = vmatprep.subr.mxu0 %v393
    %1214 = vmatpush1.msra.mxu0 %v392
    %1215 = vmatprep.subr.mxu0 %v397
    %1216 = vmatpush1.msra.mxu0 %v396
    %1217 = vmatprep.subr.mxu0 %v401
    %1218 = vmatpush1.msra.mxu0 %v400
    %1219 = vmatprep.subr.mxu0 %v405
    %1220 = vmatpush1.msra.mxu0 %v404
    %1221 = vmatprep.subr.mxu0 %v409
    %1222 = vmatpush1.msra.mxu0 %v408
    %1223 = vmatprep.subr.mxu0 %v413
    %1224 = vmatpush1.msra.mxu0 %v412
    %1225 = vmatprep.subr.mxu0 %v417
    %1226 = vmatpush1.msra.mxu0 %v416
    %1227 = vmatprep.subr.mxu0 0.0
    %1228 = vmatpush1.msra.mxu0 0.0
    %1229 = vmatprep.subr.mxu0 0.0
    %1230 = vmatpush1.msra.mxu0 0.0
    %1231 = vmatprep.subr.mxu0 0.0
    %1232 = vmatpush1.msra.mxu0 0.0
    %1233 = vmatprep.subr.mxu0 0.0
    %1234 = vmatpush1.msra.mxu0 0.0
    %1235 = vmatprep.subr.mxu0 0.0
    %1236 = vmatpush1.msra.mxu0 0.0
    %1237 = vmatprep.subr.mxu0 0.0
    %1238 = vmatpush1.msra.mxu0 0.0
    %1239 = vmatprep.subr.mxu0 0.0
    %1240 = vmatpush1.msra.mxu0 0.0
    %1241 = vmatprep.subr.mxu0 0.0
    %1242 = vmatpush1.msra.mxu0 0.0
    %1243 = vmatprep.subr.mxu0 0.0
    %1244 = vmatpush1.msra.mxu0 0.0
    %1245 = vmatprep.subr.mxu0 0.0
    %1246 = vmatpush1.msra.mxu0 0.0
    %1247 = vmatprep.subr.mxu0 0.0
    %1248 = vmatpush1.msra.mxu0 0.0
    %1249 = vmatprep.subr.mxu0 0.0
    %1250 = vmatpush1.msra.mxu0 0.0
    %1251 = vmatprep.subr.mxu0 0.0
    %1252 = vmatpush1.msra.mxu0 0.0
    %1253 = vmatprep.subr.mxu0 0.0
    %1254 = vmatpush1.msra.mxu0 0.0
    %1255 = vmatprep.subr.mxu0 0.0
    %1256 = vmatpush1.msra.mxu0 0.0
    %1257 = vmatprep.subr.mxu0 0.0
    %1258 = vmatpush1.msra.mxu0 0.0
    %1259 = vmatprep.subr.mxu0 0.0
    %1260 = vmatpush1.msra.mxu0 0.0
    %1261 = vmatprep.subr.mxu0 0.0
    %1262 = vmatpush1.msra.mxu0 0.0
    %1263 = vmatprep.subr.mxu0 0.0
    %1264 = vmatpush1.msra.mxu0 0.0
    %1265 = vmatprep.subr.mxu0 0.0
    %1266 = vmatpush1.msra.mxu0 0.0
    %1267 = vmatprep.subr.mxu0 0.0
    %1268 = vmatpush1.msra.mxu0 0.0
    %1269 = vmatprep.subr.mxu0 0.0
    %1270 = vmatpush1.msra.mxu0 0.0
    %1271 = vmatprep.subr.mxu0 0.0
    %1272 = vmatpush1.msra.mxu0 0.0
    %1273 = vmatprep.subr.mxu0 0.0
    %1274 = vmatpush1.msra.mxu0 0.0
    %1275 = vmatprep.mubr.f32.mxu0 0.0
    %1276 = vmatmul.mubr.f32.gmra.mrb[0].mxu0 %v1209
    %v1277 = vpop.f32.mrb[0].mxu0
    %v1278 = vadd.f32 %v424, %v1277
    %v1279 = vpop.f32.mrb[0].mxu0
    %v1280 = vadd.f32 %v428, %v1279
    %1281 = vdwg.mxu0
    %1282 = vmatprep.subr.mxu0 %v391
    %1283 = vmatpush1.msra.mxu0 %v390
    %1284 = vmatprep.subr.mxu0 %v395
    %1285 = vmatpush1.msra.mxu0 %v394
    %1286 = vmatprep.subr.mxu0 %v399
    %1287 = vmatpush1.msra.mxu0 %v398
    %1288 = vmatprep.subr.mxu0 %v403
    %1289 = vmatpush1.msra.mxu0 %v402
    %1290 = vmatprep.subr.mxu0 %v407
    %1291 = vmatpush1.msra.mxu0 %v406
    %1292 = vmatprep.subr.mxu0 %v411
    %1293 = vmatpush1.msra.mxu0 %v410
    %1294 = vmatprep.subr.mxu0 %v415
    %1295 = vmatpush1.msra.mxu0 %v414
    %1296 = vmatprep.subr.mxu0 %v419
    %1297 = vmatpush1.msra.mxu0 %v418
    %1298 = vmatprep.subr.mxu0 0.0
    %1299 = vmatpush1.msra.mxu0 0.0
    %1300 = vmatprep.subr.mxu0 0.0
    %1301 = vmatpush1.msra.mxu0 0.0
    %1302 = vmatprep.subr.mxu0 0.0
    %1303 = vmatpush1.msra.mxu0 0.0
    %1304 = vmatprep.subr.mxu0 0.0
    %1305 = vmatpush1.msra.mxu0 0.0
    %1306 = vmatprep.subr.mxu0 0.0
    %1307 = vmatpush1.msra.mxu0 0.0
    %1308 = vmatprep.subr.mxu0 0.0
    %1309 = vmatpush1.msra.mxu0 0.0
    %1310 = vmatprep.subr.mxu0 0.0
    %1311 = vmatpush1.msra.mxu0 0.0
    %1312 = vmatprep.subr.mxu0 0.0
    %1313 = vmatpush1.msra.mxu0 0.0
    %1314 = vmatprep.subr.mxu0 0.0
    %1315 = vmatpush1.msra.mxu0 0.0
    %1316 = vmatprep.subr.mxu0 0.0
    %1317 = vmatpush1.msra.mxu0 0.0
    %1318 = vmatprep.subr.mxu0 0.0
    %1319 = vmatpush1.msra.mxu0 0.0
    %1320 = vmatprep.subr.mxu0 0.0
    %1321 = vmatpush1.msra.mxu0 0.0
    %1322 = vmatprep.subr.mxu0 0.0
    %1323 = vmatpush1.msra.mxu0 0.0
    %1324 = vmatprep.subr.mxu0 0.0
    %1325 = vmatpush1.msra.mxu0 0.0
    %1326 = vmatprep.subr.mxu0 0.0
    %1327 = vmatpush1.msra.mxu0 0.0
    %1328 = vmatprep.subr.mxu0 0.0
    %1329 = vmatpush1.msra.mxu0 0.0
    %1330 = vmatprep.subr.mxu0 0.0
    %1331 = vmatpush1.msra.mxu0 0.0
    %1332 = vmatprep.subr.mxu0 0.0
    %1333 = vmatpush1.msra.mxu0 0.0
    %1334 = vmatprep.subr.mxu0 0.0
    %1335 = vmatpush1.msra.mxu0 0.0
    %1336 = vmatprep.subr.mxu0 0.0
    %1337 = vmatpush1.msra.mxu0 0.0
    %1338 = vmatprep.subr.mxu0 0.0
    %1339 = vmatpush1.msra.mxu0 0.0
    %1340 = vmatprep.subr.mxu0 0.0
    %1341 = vmatpush1.msra.mxu0 0.0
    %1342 = vmatprep.subr.mxu0 0.0
    %1343 = vmatpush1.msra.mxu0 0.0
    %1344 = vmatprep.subr.mxu0 0.0
    %1345 = vmatpush1.msra.mxu0 0.0
    %1346 = vmatprep.mubr.f32.mxu0 0.0
    %1347 = vmatmul.mubr.f32.gmra.mrb[0].mxu0 %v1209
    %v1348 = vpop.f32.mrb[0].mxu0
    %v1349 = vadd.f32 %v432, %v1348
    %v1350 = vpop.f32.mrb[0].mxu0
    %v1351 = vadd.f32 %v436, %v1350
    %1352 = vdwg.mxu0
    %v1353 = vmul.f32 %v1278, 0.5
    %v1354 = vtanh.pop %v1353
    %v1355 = vadd.f32 %v1354, 1.0
    %v1356 = vmul.f32 %v1355, 0.5
    %v1357 = vmul.f32 %v1280, 0.5
    %v1358 = vtanh.pop %v1357
    %v1359 = vadd.f32 %v1358, 1.0
    %v1360 = vmul.f32 %v1359, 0.5
    %v1361 = vmul.f32 %v1356, %v1351
    %v1362 = vadd.f32 %v1349, %v1361
    %v1363 = vtanh.pop %v1362
    %v1364 = vsub.f32 1.0, %v1360
    %v1365 = vmul.f32 %v1364, %v1363
    %v1366 = vmul.f32 %v1360, %v601
    %v1367 = vadd.f32 %v1365, %v1366
    %1369 = vrot.lane.b32.xlu0 %v816, 32
    %v1370 = vpop.permute.xlu0 %1369
    %v1372 = vsel %vm225, %v1367, %v1370
    %v1374 = vsel %vm441, %v1372, 0
    %1376 = vmatprep.subr.mxu0 %v605
    %1377 = vmatpush1.msra.mxu0 %v604
    %1378 = vmatprep.subr.mxu0 %v609
    %1379 = vmatpush1.msra.mxu0 %v608
    %1380 = vmatprep.subr.mxu0 %v613
    %1381 = vmatpush1.msra.mxu0 %v612
    %1382 = vmatprep.subr.mxu0 %v617
    %1383 = vmatpush1.msra.mxu0 %v616
    %1384 = vmatprep.subr.mxu0 %v621
    %1385 = vmatpush1.msra.mxu0 %v620
    %1386 = vmatprep.subr.mxu0 %v625
    %1387 = vmatpush1.msra.mxu0 %v624
    %1388 = vmatprep.subr.mxu0 %v629
    %1389 = vmatpush1.msra.mxu0 %v628
    %1390 = vmatprep.subr.mxu0 %v633
    %1391 = vmatpush1.msra.mxu0 %v632
    %1392 = vmatprep.subr.mxu0 0.0
    %1393 = vmatpush1.msra.mxu0 0.0
    %1394 = vmatprep.subr.mxu0 0.0
    %1395 = vmatpush1.msra.mxu0 0.0
    %1396 = vmatprep.subr.mxu0 0.0
    %1397 = vmatpush1.msra.mxu0 0.0
    %1398 = vmatprep.subr.mxu0 0.0
    %1399 = vmatpush1.msra.mxu0 0.0
    %1400 = vmatprep.subr.mxu0 0.0
    %1401 = vmatpush1.msra.mxu0 0.0
    %1402 = vmatprep.subr.mxu0 0.0
    %1403 = vmatpush1.msra.mxu0 0.0
    %1404 = vmatprep.subr.mxu0 0.0
    %1405 = vmatpush1.msra.mxu0 0.0
    %1406 = vmatprep.subr.mxu0 0.0
    %1407 = vmatpush1.msra.mxu0 0.0
    %1408 = vmatprep.subr.mxu0 0.0
    %1409 = vmatpush1.msra.mxu0 0.0
    %1410 = vmatprep.subr.mxu0 0.0
    %1411 = vmatpush1.msra.mxu0 0.0
    %1412 = vmatprep.subr.mxu0 0.0
    %1413 = vmatpush1.msra.mxu0 0.0
    %1414 = vmatprep.subr.mxu0 0.0
    %1415 = vmatpush1.msra.mxu0 0.0
    %1416 = vmatprep.subr.mxu0 0.0
    %1417 = vmatpush1.msra.mxu0 0.0
    %1418 = vmatprep.subr.mxu0 0.0
    %1419 = vmatpush1.msra.mxu0 0.0
    %1420 = vmatprep.subr.mxu0 0.0
    %1421 = vmatpush1.msra.mxu0 0.0
    %1422 = vmatprep.subr.mxu0 0.0
    %1423 = vmatpush1.msra.mxu0 0.0
    %1424 = vmatprep.subr.mxu0 0.0
    %1425 = vmatpush1.msra.mxu0 0.0
    %1426 = vmatprep.subr.mxu0 0.0
    %1427 = vmatpush1.msra.mxu0 0.0
    %1428 = vmatprep.subr.mxu0 0.0
    %1429 = vmatpush1.msra.mxu0 0.0
    %1430 = vmatprep.subr.mxu0 0.0
    %1431 = vmatpush1.msra.mxu0 0.0
    %1432 = vmatprep.subr.mxu0 0.0
    %1433 = vmatpush1.msra.mxu0 0.0
    %1434 = vmatprep.subr.mxu0 0.0
    %1435 = vmatpush1.msra.mxu0 0.0
    %1436 = vmatprep.subr.mxu0 0.0
    %1437 = vmatpush1.msra.mxu0 0.0
    %1438 = vmatprep.subr.mxu0 0.0
    %1439 = vmatpush1.msra.mxu0 0.0
    %1440 = vmatprep.mubr.f32.mxu0 0.0
    %1441 = vmatmul.mubr.f32.gmra.mrb[0].mxu0 %v1374
    %v1442 = vpop.f32.mrb[0].mxu0
    %v1443 = vadd.f32 %v640, %v1442
    %v1444 = vpop.f32.mrb[0].mxu0
    %v1445 = vadd.f32 %v644, %v1444
    %1446 = vdwg.mxu0
    %1447 = vmatprep.subr.mxu0 %v607
    %1448 = vmatpush1.msra.mxu0 %v606
    %1449 = vmatprep.subr.mxu0 %v611
    %1450 = vmatpush1.msra.mxu0 %v610
    %1451 = vmatprep.subr.mxu0 %v615
    %1452 = vmatpush1.msra.mxu0 %v614
    %1453 = vmatprep.subr.mxu0 %v619
    %1454 = vmatpush1.msra.mxu0 %v618
    %1455 = vmatprep.subr.mxu0 %v623
    %1456 = vmatpush1.msra.mxu0 %v622
    %1457 = vmatprep.subr.mxu0 %v627
    %1458 = vmatpush1.msra.mxu0 %v626
    %1459 = vmatprep.subr.mxu0 %v631
    %1460 = vmatpush1.msra.mxu0 %v630
    %1461 = vmatprep.subr.mxu0 %v635
    %1462 = vmatpush1.msra.mxu0 %v634
    %1463 = vmatprep.subr.mxu0 0.0
    %1464 = vmatpush1.msra.mxu0 0.0
    %1465 = vmatprep.subr.mxu0 0.0
    %1466 = vmatpush1.msra.mxu0 0.0
    %1467 = vmatprep.subr.mxu0 0.0
    %1468 = vmatpush1.msra.mxu0 0.0
    %1469 = vmatprep.subr.mxu0 0.0
    %1470 = vmatpush1.msra.mxu0 0.0
    %1471 = vmatprep.subr.mxu0 0.0
    %1472 = vmatpush1.msra.mxu0 0.0
    %1473 = vmatprep.subr.mxu0 0.0
    %1474 = vmatpush1.msra.mxu0 0.0
    %1475 = vmatprep.subr.mxu0 0.0
    %1476 = vmatpush1.msra.mxu0 0.0
    %1477 = vmatprep.subr.mxu0 0.0
    %1478 = vmatpush1.msra.mxu0 0.0
    %1479 = vmatprep.subr.mxu0 0.0
    %1480 = vmatpush1.msra.mxu0 0.0
    %1481 = vmatprep.subr.mxu0 0.0
    %1482 = vmatpush1.msra.mxu0 0.0
    %1483 = vmatprep.subr.mxu0 0.0
    %1484 = vmatpush1.msra.mxu0 0.0
    %1485 = vmatprep.subr.mxu0 0.0
    %1486 = vmatpush1.msra.mxu0 0.0
    %1487 = vmatprep.subr.mxu0 0.0
    %1488 = vmatpush1.msra.mxu0 0.0
    %1489 = vmatprep.subr.mxu0 0.0
    %1490 = vmatpush1.msra.mxu0 0.0
    %1491 = vmatprep.subr.mxu0 0.0
    %1492 = vmatpush1.msra.mxu0 0.0
    %1493 = vmatprep.subr.mxu0 0.0
    %1494 = vmatpush1.msra.mxu0 0.0
    %1495 = vmatprep.subr.mxu0 0.0
    %1496 = vmatpush1.msra.mxu0 0.0
    %1497 = vmatprep.subr.mxu0 0.0
    %1498 = vmatpush1.msra.mxu0 0.0
    %1499 = vmatprep.subr.mxu0 0.0
    %1500 = vmatpush1.msra.mxu0 0.0
    %1501 = vmatprep.subr.mxu0 0.0
    %1502 = vmatpush1.msra.mxu0 0.0
    %1503 = vmatprep.subr.mxu0 0.0
    %1504 = vmatpush1.msra.mxu0 0.0
    %1505 = vmatprep.subr.mxu0 0.0
    %1506 = vmatpush1.msra.mxu0 0.0
    %1507 = vmatprep.subr.mxu0 0.0
    %1508 = vmatpush1.msra.mxu0 0.0
    %1509 = vmatprep.subr.mxu0 0.0
    %1510 = vmatpush1.msra.mxu0 0.0
    %1511 = vmatprep.mubr.f32.mxu0 0.0
    %1512 = vmatmul.mubr.f32.gmra.mrb[0].mxu0 %v1374
    %v1513 = vpop.f32.mrb[0].mxu0
    %v1514 = vadd.f32 %v648, %v1513
    %v1515 = vpop.f32.mrb[0].mxu0
    %v1516 = vadd.f32 %v652, %v1515
    %1517 = vdwg.mxu0
    %v1518 = vmul.f32 %v1443, 0.5
    %v1519 = vtanh.pop %v1518
    %v1520 = vadd.f32 %v1519, 1.0
    %v1521 = vmul.f32 %v1520, 0.5
    %v1522 = vmul.f32 %v1445, 0.5
    %v1523 = vtanh.pop %v1522
    %v1524 = vadd.f32 %v1523, 1.0
    %v1525 = vmul.f32 %v1524, 0.5
    %v1526 = vmul.f32 %v1521, %v1516
    %v1527 = vadd.f32 %v1514, %v1526
    %v1528 = vtanh.pop %v1527
    %v1529 = vsub.f32 1.0, %v1525
    %v1530 = vmul.f32 %v1529, %v1528
    %v1531 = vmul.f32 %v1525, %v816
    %v1532 = vadd.f32 %v1530, %v1531
    %1534 = vrot.lane.b32.xlu0 %v1031, 32
    %v1535 = vpop.permute.xlu0 %1534
    %v1537 = vsel %vm225, %v1532, %v1535
    %v1539 = vsel %vm441, %v1537, 0
    %1541 = vmatprep.subr.mxu0 %v820
    %1542 = vmatpush1.msra.mxu0 %v819
    %1543 = vmatprep.subr.mxu0 %v824
    %1544 = vmatpush1.msra.mxu0 %v823
    %1545 = vmatprep.subr.mxu0 %v828
    %1546 = vmatpush1.msra.mxu0 %v827
    %1547 = vmatprep.subr.mxu0 %v832
    %1548 = vmatpush1.msra.mxu0 %v831
    %1549 = vmatprep.subr.mxu0 %v836
    %1550 = vmatpush1.msra.mxu0 %v835
    %1551 = vmatprep.subr.mxu0 %v840
    %1552 = vmatpush1.msra.mxu0 %v839
    %1553 = vmatprep.subr.mxu0 %v844
    %1554 = vmatpush1.msra.mxu0 %v843
    %1555 = vmatprep.subr.mxu0 %v848
    %1556 = vmatpush1.msra.mxu0 %v847
    %1557 = vmatprep.subr.mxu0 0.0
    %1558 = vmatpush1.msra.mxu0 0.0
    %1559 = vmatprep.subr.mxu0 0.0
    %1560 = vmatpush1.msra.mxu0 0.0
    %1561 = vmatprep.subr.mxu0 0.0
    %1562 = vmatpush1.msra.mxu0 0.0
    %1563 = vmatprep.subr.mxu0 0.0
    %1564 = vmatpush1.msra.mxu0 0.0
    %1565 = vmatprep.subr.mxu0 0.0
    %1566 = vmatpush1.msra.mxu0 0.0
    %1567 = vmatprep.subr.mxu0 0.0
    %1568 = vmatpush1.msra.mxu0 0.0
    %1569 = vmatprep.subr.mxu0 0.0
    %1570 = vmatpush1.msra.mxu0 0.0
    %1571 = vmatprep.subr.mxu0 0.0
    %1572 = vmatpush1.msra.mxu0 0.0
    %1573 = vmatprep.subr.mxu0 0.0
    %1574 = vmatpush1.msra.mxu0 0.0
    %1575 = vmatprep.subr.mxu0 0.0
    %1576 = vmatpush1.msra.mxu0 0.0
    %1577 = vmatprep.subr.mxu0 0.0
    %1578 = vmatpush1.msra.mxu0 0.0
    %1579 = vmatprep.subr.mxu0 0.0
    %1580 = vmatpush1.msra.mxu0 0.0
    %1581 = vmatprep.subr.mxu0 0.0
    %1582 = vmatpush1.msra.mxu0 0.0
    %1583 = vmatprep.subr.mxu0 0.0
    %1584 = vmatpush1.msra.mxu0 0.0
    %1585 = vmatprep.subr.mxu0 0.0
    %1586 = vmatpush1.msra.mxu0 0.0
    %1587 = vmatprep.subr.mxu0 0.0
    %1588 = vmatpush1.msra.mxu0 0.0
    %1589 = vmatprep.subr.mxu0 0.0
    %1590 = vmatpush1.msra.mxu0 0.0
    %1591 = vmatprep.subr.mxu0 0.0
    %1592 = vmatpush1.msra.mxu0 0.0
    %1593 = vmatprep.subr.mxu0 0.0
    %1594 = vmatpush1.msra.mxu0 0.0
    %1595 = vmatprep.subr.mxu0 0.0
    %1596 = vmatpush1.msra.mxu0 0.0
    %1597 = vmatprep.subr.mxu0 0.0
    %1598 = vmatpush1.msra.mxu0 0.0
    %1599 = vmatprep.subr.mxu0 0.0
    %1600 = vmatpush1.msra.mxu0 0.0
    %1601 = vmatprep.subr.mxu0 0.0
    %1602 = vmatpush1.msra.mxu0 0.0
    %1603 = vmatprep.subr.mxu0 0.0
    %1604 = vmatpush1.msra.mxu0 0.0
    %1605 = vmatprep.mubr.f32.mxu0 0.0
    %1606 = vmatmul.mubr.f32.gmra.mrb[0].mxu0 %v1539
    %v1607 = vpop.f32.mrb[0].mxu0
    %v1608 = vadd.f32 %v855, %v1607
    %v1609 = vpop.f32.mrb[0].mxu0
    %v1610 = vadd.f32 %v859, %v1609
    %1611 = vdwg.mxu0
    %1612 = vmatprep.subr.mxu0 %v822
    %1613 = vmatpush1.msra.mxu0 %v821
    %1614 = vmatprep.subr.mxu0 %v826
    %1615 = vmatpush1.msra.mxu0 %v825
    %1616 = vmatprep.subr.mxu0 %v830
    %1617 = vmatpush1.msra.mxu0 %v829
    %1618 = vmatprep.subr.mxu0 %v834
    %1619 = vmatpush1.msra.mxu0 %v833
    %1620 = vmatprep.subr.mxu0 %v838
    %1621 = vmatpush1.msra.mxu0 %v837
    %1622 = vmatprep.subr.mxu0 %v842
    %1623 = vmatpush1.msra.mxu0 %v841
    %1624 = vmatprep.subr.mxu0 %v846
    %1625 = vmatpush1.msra.mxu0 %v845
    %1626 = vmatprep.subr.mxu0 %v850
    %1627 = vmatpush1.msra.mxu0 %v849
    %1628 = vmatprep.subr.mxu0 0.0
    %1629 = vmatpush1.msra.mxu0 0.0
    %1630 = vmatprep.subr.mxu0 0.0
    %1631 = vmatpush1.msra.mxu0 0.0
    %1632 = vmatprep.subr.mxu0 0.0
    %1633 = vmatpush1.msra.mxu0 0.0
    %1634 = vmatprep.subr.mxu0 0.0
    %1635 = vmatpush1.msra.mxu0 0.0
    %1636 = vmatprep.subr.mxu0 0.0
    %1637 = vmatpush1.msra.mxu0 0.0
    %1638 = vmatprep.subr.mxu0 0.0
    %1639 = vmatpush1.msra.mxu0 0.0
    %1640 = vmatprep.subr.mxu0 0.0
    %1641 = vmatpush1.msra.mxu0 0.0
    %1642 = vmatprep.subr.mxu0 0.0
    %1643 = vmatpush1.msra.mxu0 0.0
    %1644 = vmatprep.subr.mxu0 0.0
    %1645 = vmatpush1.msra.mxu0 0.0
    %1646 = vmatprep.subr.mxu0 0.0
    %1647 = vmatpush1.msra.mxu0 0.0
    %1648 = vmatprep.subr.mxu0 0.0
    %1649 = vmatpush1.msra.mxu0 0.0
    %1650 = vmatprep.subr.mxu0 0.0
    %1651 = vmatpush1.msra.mxu0 0.0
    %1652 = vmatprep.subr.mxu0 0.0
    %1653 = vmatpush1.msra.mxu0 0.0
    %1654 = vmatprep.subr.mxu0 0.0
    %1655 = vmatpush1.msra.mxu0 0.0
    %1656 = vmatprep.subr.mxu0 0.0
    %1657 = vmatpush1.msra.mxu0 0.0
    %1658 = vmatprep.subr.mxu0 0.0
    %1659 = vmatpush1.msra.mxu0 0.0
    %1660 = vmatprep.subr.mxu0 0.0
    %1661 = vmatpush1.msra.mxu0 0.0
    %1662 = vmatprep.subr.mxu0 0.0
    %1663 = vmatpush1.msra.mxu0 0.0
    %1664 = vmatprep.subr.mxu0 0.0
    %1665 = vmatpush1.msra.mxu0 0.0
    %1666 = vmatprep.subr.mxu0 0.0
    %1667 = vmatpush1.msra.mxu0 0.0
    %1668 = vmatprep.subr.mxu0 0.0
    %1669 = vmatpush1.msra.mxu0 0.0
    %1670 = vmatprep.subr.mxu0 0.0
    %1671 = vmatpush1.msra.mxu0 0.0
    %1672 = vmatprep.subr.mxu0 0.0
    %1673 = vmatpush1.msra.mxu0 0.0
    %1674 = vmatprep.subr.mxu0 0.0
    %1675 = vmatpush1.msra.mxu0 0.0
    %1676 = vmatprep.mubr.f32.mxu0 0.0
    %1677 = vmatmul.mubr.f32.gmra.mrb[0].mxu0 %v1539
    %v1678 = vpop.f32.mrb[0].mxu0
    %v1679 = vadd.f32 %v863, %v1678
    %v1680 = vpop.f32.mrb[0].mxu0
    %v1681 = vadd.f32 %v867, %v1680
    %1682 = vdwg.mxu0
    %v1683 = vmul.f32 %v1608, 0.5
    %v1684 = vtanh.pop %v1683
    %v1685 = vadd.f32 %v1684, 1.0
    %v1686 = vmul.f32 %v1685, 0.5
    %v1687 = vmul.f32 %v1610, 0.5
    %v1688 = vtanh.pop %v1687
    %v1689 = vadd.f32 %v1688, 1.0
    %v1690 = vmul.f32 %v1689, 0.5
    %v1691 = vmul.f32 %v1686, %v1681
    %v1692 = vadd.f32 %v1679, %v1691
    %v1693 = vtanh.pop %v1692
    %v1694 = vsub.f32 1.0, %v1690
    %v1695 = vmul.f32 %v1694, %v1693
    %v1696 = vmul.f32 %v1690, %v1031
    %v1697 = vadd.f32 %v1695, %v1696
    %1698 = vset.pattern.permute.xlu0 2
    %1699 = vperm.xlu0 %1698, %v145
    %v1700 = vpop.permute.xlu0 %1699
    %v1702 = vmul.f32 %v1700, %v175
    %v1703 = vmul.f32 %v1700, %v179
    %v1704 = vmul.f32 %v1700, %v183
    %v1705 = vadd.f32 %v1702, %v194
    %v1706 = vadd.f32 %v1703, %v198
    %v1707 = vadd.f32 %v1704, %v202
    %v1709 = vsel %vm225, %v1202, 0
    %1711 = vmatprep.subr.mxu0 %v149
    %1712 = vmatpush1.msra.mxu0 %v148
    %1713 = vmatprep.subr.mxu0 %v152
    %1714 = vmatpush1.msra.mxu0 %v151
    %1715 = vmatprep.subr.mxu0 %v155
    %1716 = vmatpush1.msra.mxu0 %v154
    %1717 = vmatprep.subr.mxu0 %v158
    %1718 = vmatpush1.msra.mxu0 %v157
    %1719 = vmatprep.subr.mxu0 0.0
    %1720 = vmatpush1.msra.mxu0 0.0
    %1721 = vmatprep.subr.mxu0 0.0
    %1722 = vmatpush1.msra.mxu0 0.0
    %1723 = vmatprep.subr.mxu0 0.0
    %1724 = vmatpush1.msra.mxu0 0.0
    %1725 = vmatprep.subr.mxu0 0.0
    %1726 = vmatpush1.msra.mxu0 0.0
    %1727 = vmatprep.subr.mxu0 0.0
    %1728 = vmatpush1.msra.mxu0 0.0
    %1729 = vmatprep.subr.mxu0 0.0
    %1730 = vmatpush1.msra.mxu0 0.0
    %1731 = vmatprep.subr.mxu0 0.0
    %1732 = vmatpush1.msra.mxu0 0.0
    %1733 = vmatprep.subr.mxu0 0.0
    %1734 = vmatpush1.msra.mxu0 0.0
    %1735 = vmatprep.subr.mxu0 0.0
    %1736 = vmatpush1.msra.mxu0 0.0
    %1737 = vmatprep.subr.mxu0 0.0
    %1738 = vmatpush1.msra.mxu0 0.0
    %1739 = vmatprep.subr.mxu0 0.0
    %1740 = vmatpush1.msra.mxu0 0.0
    %1741 = vmatprep.subr.mxu0 0.0
    %1742 = vmatpush1.msra.mxu0 0.0
    %1743 = vmatprep.subr.mxu0 0.0
    %1744 = vmatpush1.msra.mxu0 0.0
    %1745 = vmatprep.subr.mxu0 0.0
    %1746 = vmatpush1.msra.mxu0 0.0
    %1747 = vmatprep.subr.mxu0 0.0
    %1748 = vmatpush1.msra.mxu0 0.0
    %1749 = vmatprep.subr.mxu0 0.0
    %1750 = vmatpush1.msra.mxu0 0.0
    %1751 = vmatprep.subr.mxu0 0.0
    %1752 = vmatpush1.msra.mxu0 0.0
    %1753 = vmatprep.subr.mxu0 0.0
    %1754 = vmatpush1.msra.mxu0 0.0
    %1755 = vmatprep.subr.mxu0 0.0
    %1756 = vmatpush1.msra.mxu0 0.0
    %1757 = vmatprep.subr.mxu0 0.0
    %1758 = vmatpush1.msra.mxu0 0.0
    %1759 = vmatprep.subr.mxu0 0.0
    %1760 = vmatpush1.msra.mxu0 0.0
    %1761 = vmatprep.subr.mxu0 0.0
    %1762 = vmatpush1.msra.mxu0 0.0
    %1763 = vmatprep.subr.mxu0 0.0
    %1764 = vmatpush1.msra.mxu0 0.0
    %1765 = vmatprep.subr.mxu0 0.0
    %1766 = vmatpush1.msra.mxu0 0.0
    %1767 = vmatprep.subr.mxu0 0.0
    %1768 = vmatpush1.msra.mxu0 0.0
    %1769 = vmatprep.subr.mxu0 0.0
    %1770 = vmatpush1.msra.mxu0 0.0
    %1771 = vmatprep.subr.mxu0 0.0
    %1772 = vmatpush1.msra.mxu0 0.0
    %1773 = vmatprep.subr.mxu0 0.0
    %1774 = vmatpush1.msra.mxu0 0.0
    %1775 = vmatprep.mubr.f32.mxu0 0.0
    %1776 = vmatmul.mubr.f32.gmra.mrb[0].mxu0 %v1709
    %v1777 = vpop.f32.mrb[0].mxu0
    %v1778 = vadd.f32 %v213, %v1777
    %v1779 = vpop.f32.mrb[0].mxu0
    %v1780 = vadd.f32 %v217, %v1779
    %1781 = vdwg.mxu0
    %1782 = vmatprep.subr.mxu0 0.0
    %1783 = vmatpush1.msra.mxu0 %v150
    %1784 = vmatprep.subr.mxu0 0.0
    %1785 = vmatpush1.msra.mxu0 %v153
    %1786 = vmatprep.subr.mxu0 0.0
    %1787 = vmatpush1.msra.mxu0 %v156
    %1788 = vmatprep.subr.mxu0 0.0
    %1789 = vmatpush1.msra.mxu0 %v159
    %1790 = vmatprep.subr.mxu0 0.0
    %1791 = vmatpush1.msra.mxu0 0.0
    %1792 = vmatprep.subr.mxu0 0.0
    %1793 = vmatpush1.msra.mxu0 0.0
    %1794 = vmatprep.subr.mxu0 0.0
    %1795 = vmatpush1.msra.mxu0 0.0
    %1796 = vmatprep.subr.mxu0 0.0
    %1797 = vmatpush1.msra.mxu0 0.0
    %1798 = vmatprep.subr.mxu0 0.0
    %1799 = vmatpush1.msra.mxu0 0.0
    %1800 = vmatprep.subr.mxu0 0.0
    %1801 = vmatpush1.msra.mxu0 0.0
    %1802 = vmatprep.subr.mxu0 0.0
    %1803 = vmatpush1.msra.mxu0 0.0
    %1804 = vmatprep.subr.mxu0 0.0
    %1805 = vmatpush1.msra.mxu0 0.0
    %1806 = vmatprep.subr.mxu0 0.0
    %1807 = vmatpush1.msra.mxu0 0.0
    %1808 = vmatprep.subr.mxu0 0.0
    %1809 = vmatpush1.msra.mxu0 0.0
    %1810 = vmatprep.subr.mxu0 0.0
    %1811 = vmatpush1.msra.mxu0 0.0
    %1812 = vmatprep.subr.mxu0 0.0
    %1813 = vmatpush1.msra.mxu0 0.0
    %1814 = vmatprep.subr.mxu0 0.0
    %1815 = vmatpush1.msra.mxu0 0.0
    %1816 = vmatprep.subr.mxu0 0.0
    %1817 = vmatpush1.msra.mxu0 0.0
    %1818 = vmatprep.subr.mxu0 0.0
    %1819 = vmatpush1.msra.mxu0 0.0
    %1820 = vmatprep.subr.mxu0 0.0
    %1821 = vmatpush1.msra.mxu0 0.0
    %1822 = vmatprep.subr.mxu0 0.0
    %1823 = vmatpush1.msra.mxu0 0.0
    %1824 = vmatprep.subr.mxu0 0.0
    %1825 = vmatpush1.msra.mxu0 0.0
    %1826 = vmatprep.subr.mxu0 0.0
    %1827 = vmatpush1.msra.mxu0 0.0
    %1828 = vmatprep.subr.mxu0 0.0
    %1829 = vmatpush1.msra.mxu0 0.0
    %1830 = vmatprep.subr.mxu0 0.0
    %1831 = vmatpush1.msra.mxu0 0.0
    %1832 = vmatprep.subr.mxu0 0.0
    %1833 = vmatpush1.msra.mxu0 0.0
    %1834 = vmatprep.subr.mxu0 0.0
    %1835 = vmatpush1.msra.mxu0 0.0
    %1836 = vmatprep.subr.mxu0 0.0
    %1837 = vmatpush1.msra.mxu0 0.0
    %1838 = vmatprep.subr.mxu0 0.0
    %1839 = vmatpush1.msra.mxu0 0.0
    %1840 = vmatprep.subr.mxu0 0.0
    %1841 = vmatpush1.msra.mxu0 0.0
    %1842 = vmatprep.subr.mxu0 0.0
    %1843 = vmatpush1.msra.mxu0 0.0
    %1844 = vmatprep.subr.mxu0 0.0
    %1845 = vmatpush1.msra.mxu0 0.0
    %1846 = vmatprep.mubr.f32.mxu0 0.0
    %1847 = vmatmul.mubr.f32.gmra.mrb[0].mxu0 %v1709
    %v1848 = vpop.f32.mrb[0].mxu0
    %v1849 = vadd.f32 %v221, %v1848
    %v1850 = vpop.f32.mrb[0].mxu0
    %1851 = vdwg.mxu0
    %v1852 = vadd.f32 %v1705, %v1778
    %v1853 = vmul.f32 %v1852, 0.5
    %v1854 = vtanh.pop %v1853
    %v1855 = vadd.f32 %v1854, 1.0
    %v1856 = vmul.f32 %v1855, 0.5
    %v1857 = vadd.f32 %v1706, %v1780
    %v1858 = vmul.f32 %v1857, 0.5
    %v1859 = vtanh.pop %v1858
    %v1860 = vadd.f32 %v1859, 1.0
    %v1861 = vmul.f32 %v1860, 0.5
    %v1862 = vmul.f32 %v1856, %v1849
    %v1863 = vadd.f32 %v1707, %v1862
    %v1864 = vtanh.pop %v1863
    %v1865 = vsub.f32 1.0, %v1861
    %v1866 = vmul.f32 %v1865, %v1864
    %v1867 = vmul.f32 %v1861, %v1202
    %v1868 = vadd.f32 %v1866, %v1867
    %1870 = vrot.lane.b32.xlu0 %v1367, 32
    %v1871 = vpop.permute.xlu0 %1870
    %v1873 = vsel %vm225, %v1868, %v1871
    %v1875 = vsel %vm441, %v1873, 0
    %1877 = vmatprep.subr.mxu0 %v389
    %1878 = vmatpush1.msra.mxu0 %v388
    %1879 = vmatprep.subr.mxu0 %v393
    %1880 = vmatpush1.msra.mxu0 %v392
    %1881 = vmatprep.subr.mxu0 %v397
    %1882 = vmatpush1.msra.mxu0 %v396
    %1883 = vmatprep.subr.mxu0 %v401
    %1884 = vmatpush1.msra.mxu0 %v400
    %1885 = vmatprep.subr.mxu0 %v405
    %1886 = vmatpush1.msra.mxu0 %v404
    %1887 = vmatprep.subr.mxu0 %v409
    %1888 = vmatpush1.msra.mxu0 %v408
    %1889 = vmatprep.subr.mxu0 %v413
    %1890 = vmatpush1.msra.mxu0 %v412
    %1891 = vmatprep.subr.mxu0 %v417
    %1892 = vmatpush1.msra.mxu0 %v416
    %1893 = vmatprep.subr.mxu0 0.0
    %1894 = vmatpush1.msra.mxu0 0.0
    %1895 = vmatprep.subr.mxu0 0.0
    %1896 = vmatpush1.msra.mxu0 0.0
    %1897 = vmatprep.subr.mxu0 0.0
    %1898 = vmatpush1.msra.mxu0 0.0
    %1899 = vmatprep.subr.mxu0 0.0
    %1900 = vmatpush1.msra.mxu0 0.0
    %1901 = vmatprep.subr.mxu0 0.0
    %1902 = vmatpush1.msra.mxu0 0.0
    %1903 = vmatprep.subr.mxu0 0.0
    %1904 = vmatpush1.msra.mxu0 0.0
    %1905 = vmatprep.subr.mxu0 0.0
    %1906 = vmatpush1.msra.mxu0 0.0
    %1907 = vmatprep.subr.mxu0 0.0
    %1908 = vmatpush1.msra.mxu0 0.0
    %1909 = vmatprep.subr.mxu0 0.0
    %1910 = vmatpush1.msra.mxu0 0.0
    %1911 = vmatprep.subr.mxu0 0.0
    %1912 = vmatpush1.msra.mxu0 0.0
    %1913 = vmatprep.subr.mxu0 0.0
    %1914 = vmatpush1.msra.mxu0 0.0
    %1915 = vmatprep.subr.mxu0 0.0
    %1916 = vmatpush1.msra.mxu0 0.0
    %1917 = vmatprep.subr.mxu0 0.0
    %1918 = vmatpush1.msra.mxu0 0.0
    %1919 = vmatprep.subr.mxu0 0.0
    %1920 = vmatpush1.msra.mxu0 0.0
    %1921 = vmatprep.subr.mxu0 0.0
    %1922 = vmatpush1.msra.mxu0 0.0
    %1923 = vmatprep.subr.mxu0 0.0
    %1924 = vmatpush1.msra.mxu0 0.0
    %1925 = vmatprep.subr.mxu0 0.0
    %1926 = vmatpush1.msra.mxu0 0.0
    %1927 = vmatprep.subr.mxu0 0.0
    %1928 = vmatpush1.msra.mxu0 0.0
    %1929 = vmatprep.subr.mxu0 0.0
    %1930 = vmatpush1.msra.mxu0 0.0
    %1931 = vmatprep.subr.mxu0 0.0
    %1932 = vmatpush1.msra.mxu0 0.0
    %1933 = vmatprep.subr.mxu0 0.0
    %1934 = vmatpush1.msra.mxu0 0.0
    %1935 = vmatprep.subr.mxu0 0.0
    %1936 = vmatpush1.msra.mxu0 0.0
    %1937 = vmatprep.subr.mxu0 0.0
    %1938 = vmatpush1.msra.mxu0 0.0
    %1939 = vmatprep.subr.mxu0 0.0
    %1940 = vmatpush1.msra.mxu0 0.0
    %1941 = vmatprep.mubr.f32.mxu0 0.0
    %1942 = vmatmul.mubr.f32.gmra.mrb[0].mxu0 %v1875
    %v1943 = vpop.f32.mrb[0].mxu0
    %v1944 = vadd.f32 %v424, %v1943
    %v1945 = vpop.f32.mrb[0].mxu0
    %v1946 = vadd.f32 %v428, %v1945
    %1947 = vdwg.mxu0
    %1948 = vmatprep.subr.mxu0 %v391
    %1949 = vmatpush1.msra.mxu0 %v390
    %1950 = vmatprep.subr.mxu0 %v395
    %1951 = vmatpush1.msra.mxu0 %v394
    %1952 = vmatprep.subr.mxu0 %v399
    %1953 = vmatpush1.msra.mxu0 %v398
    %1954 = vmatprep.subr.mxu0 %v403
    %1955 = vmatpush1.msra.mxu0 %v402
    %1956 = vmatprep.subr.mxu0 %v407
    %1957 = vmatpush1.msra.mxu0 %v406
    %1958 = vmatprep.subr.mxu0 %v411
    %1959 = vmatpush1.msra.mxu0 %v410
    %1960 = vmatprep.subr.mxu0 %v415
    %1961 = vmatpush1.msra.mxu0 %v414
    %1962 = vmatprep.subr.mxu0 %v419
    %1963 = vmatpush1.msra.mxu0 %v418
    %1964 = vmatprep.subr.mxu0 0.0
    %1965 = vmatpush1.msra.mxu0 0.0
    %1966 = vmatprep.subr.mxu0 0.0
    %1967 = vmatpush1.msra.mxu0 0.0
    %1968 = vmatprep.subr.mxu0 0.0
    %1969 = vmatpush1.msra.mxu0 0.0
    %1970 = vmatprep.subr.mxu0 0.0
    %1971 = vmatpush1.msra.mxu0 0.0
    %1972 = vmatprep.subr.mxu0 0.0
    %1973 = vmatpush1.msra.mxu0 0.0
    %1974 = vmatprep.subr.mxu0 0.0
    %1975 = vmatpush1.msra.mxu0 0.0
    %1976 = vmatprep.subr.mxu0 0.0
    %1977 = vmatpush1.msra.mxu0 0.0
    %1978 = vmatprep.subr.mxu0 0.0
    %1979 = vmatpush1.msra.mxu0 0.0
    %1980 = vmatprep.subr.mxu0 0.0
    %1981 = vmatpush1.msra.mxu0 0.0
    %1982 = vmatprep.subr.mxu0 0.0
    %1983 = vmatpush1.msra.mxu0 0.0
    %1984 = vmatprep.subr.mxu0 0.0
    %1985 = vmatpush1.msra.mxu0 0.0
    %1986 = vmatprep.subr.mxu0 0.0
    %1987 = vmatpush1.msra.mxu0 0.0
    %1988 = vmatprep.subr.mxu0 0.0
    %1989 = vmatpush1.msra.mxu0 0.0
    %1990 = vmatprep.subr.mxu0 0.0
    %1991 = vmatpush1.msra.mxu0 0.0
    %1992 = vmatprep.subr.mxu0 0.0
    %1993 = vmatpush1.msra.mxu0 0.0
    %1994 = vmatprep.subr.mxu0 0.0
    %1995 = vmatpush1.msra.mxu0 0.0
    %1996 = vmatprep.subr.mxu0 0.0
    %1997 = vmatpush1.msra.mxu0 0.0
    %1998 = vmatprep.subr.mxu0 0.0
    %1999 = vmatpush1.msra.mxu0 0.0
    %2000 = vmatprep.subr.mxu0 0.0
    %2001 = vmatpush1.msra.mxu0 0.0
    %2002 = vmatprep.subr.mxu0 0.0
    %2003 = vmatpush1.msra.mxu0 0.0
    %2004 = vmatprep.subr.mxu0 0.0
    %2005 = vmatpush1.msra.mxu0 0.0
    %2006 = vmatprep.subr.mxu0 0.0
    %2007 = vmatpush1.msra.mxu0 0.0
    %2008 = vmatprep.subr.mxu0 0.0
    %2009 = vmatpush1.msra.mxu0 0.0
    %2010 = vmatprep.subr.mxu0 0.0
    %2011 = vmatpush1.msra.mxu0 0.0
    %2012 = vmatprep.mubr.f32.mxu0 0.0
    %2013 = vmatmul.mubr.f32.gmra.mrb[0].mxu0 %v1875
    %v2014 = vpop.f32.mrb[0].mxu0
    %v2015 = vadd.f32 %v432, %v2014
    %v2016 = vpop.f32.mrb[0].mxu0
    %v2017 = vadd.f32 %v436, %v2016
    %2018 = vdwg.mxu0
    %v2019 = vmul.f32 %v1944, 0.5
    %v2020 = vtanh.pop %v2019
    %v2021 = vadd.f32 %v2020, 1.0
    %v2022 = vmul.f32 %v2021, 0.5
    %v2023 = vmul.f32 %v1946, 0.5
    %v2024 = vtanh.pop %v2023
    %v2025 = vadd.f32 %v2024, 1.0
    %v2026 = vmul.f32 %v2025, 0.5
    %v2027 = vmul.f32 %v2022, %v2017
    %v2028 = vadd.f32 %v2015, %v2027
    %v2029 = vtanh.pop %v2028
    %v2030 = vsub.f32 1.0, %v2026
    %v2031 = vmul.f32 %v2030, %v2029
    %v2032 = vmul.f32 %v2026, %v1367
    %v2033 = vadd.f32 %v2031, %v2032
    %2035 = vrot.lane.b32.xlu0 %v1532, 32
    %v2036 = vpop.permute.xlu0 %2035
    %v2038 = vsel %vm225, %v2033, %v2036
    %v2040 = vsel %vm441, %v2038, 0
    %2042 = vmatprep.subr.mxu0 %v605
    %2043 = vmatpush1.msra.mxu0 %v604
    %2044 = vmatprep.subr.mxu0 %v609
    %2045 = vmatpush1.msra.mxu0 %v608
    %2046 = vmatprep.subr.mxu0 %v613
    %2047 = vmatpush1.msra.mxu0 %v612
    %2048 = vmatprep.subr.mxu0 %v617
    %2049 = vmatpush1.msra.mxu0 %v616
    %2050 = vmatprep.subr.mxu0 %v621
    %2051 = vmatpush1.msra.mxu0 %v620
    %2052 = vmatprep.subr.mxu0 %v625
    %2053 = vmatpush1.msra.mxu0 %v624
    %2054 = vmatprep.subr.mxu0 %v629
    %2055 = vmatpush1.msra.mxu0 %v628
    %2056 = vmatprep.subr.mxu0 %v633
    %2057 = vmatpush1.msra.mxu0 %v632
    %2058 = vmatprep.subr.mxu0 0.0
    %2059 = vmatpush1.msra.mxu0 0.0
    %2060 = vmatprep.subr.mxu0 0.0
    %2061 = vmatpush1.msra.mxu0 0.0
    %2062 = vmatprep.subr.mxu0 0.0
    %2063 = vmatpush1.msra.mxu0 0.0
    %2064 = vmatprep.subr.mxu0 0.0
    %2065 = vmatpush1.msra.mxu0 0.0
    %2066 = vmatprep.subr.mxu0 0.0
    %2067 = vmatpush1.msra.mxu0 0.0
    %2068 = vmatprep.subr.mxu0 0.0
    %2069 = vmatpush1.msra.mxu0 0.0
    %2070 = vmatprep.subr.mxu0 0.0
    %2071 = vmatpush1.msra.mxu0 0.0
    %2072 = vmatprep.subr.mxu0 0.0
    %2073 = vmatpush1.msra.mxu0 0.0
    %2074 = vmatprep.subr.mxu0 0.0
    %2075 = vmatpush1.msra.mxu0 0.0
    %2076 = vmatprep.subr.mxu0 0.0
    %2077 = vmatpush1.msra.mxu0 0.0
    %2078 = vmatprep.subr.mxu0 0.0
    %2079 = vmatpush1.msra.mxu0 0.0
    %2080 = vmatprep.subr.mxu0 0.0
    %2081 = vmatpush1.msra.mxu0 0.0
    %2082 = vmatprep.subr.mxu0 0.0
    %2083 = vmatpush1.msra.mxu0 0.0
    %2084 = vmatprep.subr.mxu0 0.0
    %2085 = vmatpush1.msra.mxu0 0.0
    %2086 = vmatprep.subr.mxu0 0.0
    %2087 = vmatpush1.msra.mxu0 0.0
    %2088 = vmatprep.subr.mxu0 0.0
    %2089 = vmatpush1.msra.mxu0 0.0
    %2090 = vmatprep.subr.mxu0 0.0
    %2091 = vmatpush1.msra.mxu0 0.0
    %2092 = vmatprep.subr.mxu0 0.0
    %2093 = vmatpush1.msra.mxu0 0.0
    %2094 = vmatprep.subr.mxu0 0.0
    %2095 = vmatpush1.msra.mxu0 0.0
    %2096 = vmatprep.subr.mxu0 0.0
    %2097 = vmatpush1.msra.mxu0 0.0
    %2098 = vmatprep.subr.mxu0 0.0
    %2099 = vmatpush1.msra.mxu0 0.0
    %2100 = vmatprep.subr.mxu0 0.0
    %2101 = vmatpush1.msra.mxu0 0.0
    %2102 = vmatprep.subr.mxu0 0.0
    %2103 = vmatpush1.msra.mxu0 0.0
    %2104 = vmatprep.subr.mxu0 0.0
    %2105 = vmatpush1.msra.mxu0 0.0
    %2106 = vmatprep.mubr.f32.mxu0 0.0
    %2107 = vmatmul.mubr.f32.gmra.mrb[0].mxu0 %v2040
    %v2108 = vpop.f32.mrb[0].mxu0
    %v2109 = vadd.f32 %v640, %v2108
    %v2110 = vpop.f32.mrb[0].mxu0
    %v2111 = vadd.f32 %v644, %v2110
    %2112 = vdwg.mxu0
    %2113 = vmatprep.subr.mxu0 %v607
    %2114 = vmatpush1.msra.mxu0 %v606
    %2115 = vmatprep.subr.mxu0 %v611
    %2116 = vmatpush1.msra.mxu0 %v610
    %2117 = vmatprep.subr.mxu0 %v615
    %2118 = vmatpush1.msra.mxu0 %v614
    %2119 = vmatprep.subr.mxu0 %v619
    %2120 = vmatpush1.msra.mxu0 %v618
    %2121 = vmatprep.subr.mxu0 %v623
    %2122 = vmatpush1.msra.mxu0 %v622
    %2123 = vmatprep.subr.mxu0 %v627
    %2124 = vmatpush1.msra.mxu0 %v626
    %2125 = vmatprep.subr.mxu0 %v631
    %2126 = vmatpush1.msra.mxu0 %v630
    %2127 = vmatprep.subr.mxu0 %v635
    %2128 = vmatpush1.msra.mxu0 %v634
    %2129 = vmatprep.subr.mxu0 0.0
    %2130 = vmatpush1.msra.mxu0 0.0
    %2131 = vmatprep.subr.mxu0 0.0
    %2132 = vmatpush1.msra.mxu0 0.0
    %2133 = vmatprep.subr.mxu0 0.0
    %2134 = vmatpush1.msra.mxu0 0.0
    %2135 = vmatprep.subr.mxu0 0.0
    %2136 = vmatpush1.msra.mxu0 0.0
    %2137 = vmatprep.subr.mxu0 0.0
    %2138 = vmatpush1.msra.mxu0 0.0
    %2139 = vmatprep.subr.mxu0 0.0
    %2140 = vmatpush1.msra.mxu0 0.0
    %2141 = vmatprep.subr.mxu0 0.0
    %2142 = vmatpush1.msra.mxu0 0.0
    %2143 = vmatprep.subr.mxu0 0.0
    %2144 = vmatpush1.msra.mxu0 0.0
    %2145 = vmatprep.subr.mxu0 0.0
    %2146 = vmatpush1.msra.mxu0 0.0
    %2147 = vmatprep.subr.mxu0 0.0
    %2148 = vmatpush1.msra.mxu0 0.0
    %2149 = vmatprep.subr.mxu0 0.0
    %2150 = vmatpush1.msra.mxu0 0.0
    %2151 = vmatprep.subr.mxu0 0.0
    %2152 = vmatpush1.msra.mxu0 0.0
    %2153 = vmatprep.subr.mxu0 0.0
    %2154 = vmatpush1.msra.mxu0 0.0
    %2155 = vmatprep.subr.mxu0 0.0
    %2156 = vmatpush1.msra.mxu0 0.0
    %2157 = vmatprep.subr.mxu0 0.0
    %2158 = vmatpush1.msra.mxu0 0.0
    %2159 = vmatprep.subr.mxu0 0.0
    %2160 = vmatpush1.msra.mxu0 0.0
    %2161 = vmatprep.subr.mxu0 0.0
    %2162 = vmatpush1.msra.mxu0 0.0
    %2163 = vmatprep.subr.mxu0 0.0
    %2164 = vmatpush1.msra.mxu0 0.0
    %2165 = vmatprep.subr.mxu0 0.0
    %2166 = vmatpush1.msra.mxu0 0.0
    %2167 = vmatprep.subr.mxu0 0.0
    %2168 = vmatpush1.msra.mxu0 0.0
    %2169 = vmatprep.subr.mxu0 0.0
    %2170 = vmatpush1.msra.mxu0 0.0
    %2171 = vmatprep.subr.mxu0 0.0
    %2172 = vmatpush1.msra.mxu0 0.0
    %2173 = vmatprep.subr.mxu0 0.0
    %2174 = vmatpush1.msra.mxu0 0.0
    %2175 = vmatprep.subr.mxu0 0.0
    %2176 = vmatpush1.msra.mxu0 0.0
    %2177 = vmatprep.mubr.f32.mxu0 0.0
    %2178 = vmatmul.mubr.f32.gmra.mrb[0].mxu0 %v2040
    %v2179 = vpop.f32.mrb[0].mxu0
    %v2180 = vadd.f32 %v648, %v2179
    %v2181 = vpop.f32.mrb[0].mxu0
    %v2182 = vadd.f32 %v652, %v2181
    %2183 = vdwg.mxu0
    %v2184 = vmul.f32 %v2109, 0.5
    %v2185 = vtanh.pop %v2184
    %v2186 = vadd.f32 %v2185, 1.0
    %v2187 = vmul.f32 %v2186, 0.5
    %v2188 = vmul.f32 %v2111, 0.5
    %v2189 = vtanh.pop %v2188
    %v2190 = vadd.f32 %v2189, 1.0
    %v2191 = vmul.f32 %v2190, 0.5
    %v2192 = vmul.f32 %v2187, %v2182
    %v2193 = vadd.f32 %v2180, %v2192
    %v2194 = vtanh.pop %v2193
    %v2195 = vsub.f32 1.0, %v2191
    %v2196 = vmul.f32 %v2195, %v2194
    %v2197 = vmul.f32 %v2191, %v1532
    %v2198 = vadd.f32 %v2196, %v2197
    %2200 = vrot.lane.b32.xlu0 %v1697, 32
    %v2201 = vpop.permute.xlu0 %2200
    %v2203 = vsel %vm225, %v2198, %v2201
    %v2205 = vsel %vm441, %v2203, 0
    %2207 = vmatprep.subr.mxu0 %v820
    %2208 = vmatpush1.msra.mxu0 %v819
    %2209 = vmatprep.subr.mxu0 %v824
    %2210 = vmatpush1.msra.mxu0 %v823
    %2211 = vmatprep.subr.mxu0 %v828
    %2212 = vmatpush1.msra.mxu0 %v827
    %2213 = vmatprep.subr.mxu0 %v832
    %2214 = vmatpush1.msra.mxu0 %v831
    %2215 = vmatprep.subr.mxu0 %v836
    %2216 = vmatpush1.msra.mxu0 %v835
    %2217 = vmatprep.subr.mxu0 %v840
    %2218 = vmatpush1.msra.mxu0 %v839
    %2219 = vmatprep.subr.mxu0 %v844
    %2220 = vmatpush1.msra.mxu0 %v843
    %2221 = vmatprep.subr.mxu0 %v848
    %2222 = vmatpush1.msra.mxu0 %v847
    %2223 = vmatprep.subr.mxu0 0.0
    %2224 = vmatpush1.msra.mxu0 0.0
    %2225 = vmatprep.subr.mxu0 0.0
    %2226 = vmatpush1.msra.mxu0 0.0
    %2227 = vmatprep.subr.mxu0 0.0
    %2228 = vmatpush1.msra.mxu0 0.0
    %2229 = vmatprep.subr.mxu0 0.0
    %2230 = vmatpush1.msra.mxu0 0.0
    %2231 = vmatprep.subr.mxu0 0.0
    %2232 = vmatpush1.msra.mxu0 0.0
    %2233 = vmatprep.subr.mxu0 0.0
    %2234 = vmatpush1.msra.mxu0 0.0
    %2235 = vmatprep.subr.mxu0 0.0
    %2236 = vmatpush1.msra.mxu0 0.0
    %2237 = vmatprep.subr.mxu0 0.0
    %2238 = vmatpush1.msra.mxu0 0.0
    %2239 = vmatprep.subr.mxu0 0.0
    %2240 = vmatpush1.msra.mxu0 0.0
    %2241 = vmatprep.subr.mxu0 0.0
    %2242 = vmatpush1.msra.mxu0 0.0
    %2243 = vmatprep.subr.mxu0 0.0
    %2244 = vmatpush1.msra.mxu0 0.0
    %2245 = vmatprep.subr.mxu0 0.0
    %2246 = vmatpush1.msra.mxu0 0.0
    %2247 = vmatprep.subr.mxu0 0.0
    %2248 = vmatpush1.msra.mxu0 0.0
    %2249 = vmatprep.subr.mxu0 0.0
    %2250 = vmatpush1.msra.mxu0 0.0
    %2251 = vmatprep.subr.mxu0 0.0
    %2252 = vmatpush1.msra.mxu0 0.0
    %2253 = vmatprep.subr.mxu0 0.0
    %2254 = vmatpush1.msra.mxu0 0.0
    %2255 = vmatprep.subr.mxu0 0.0
    %2256 = vmatpush1.msra.mxu0 0.0
    %2257 = vmatprep.subr.mxu0 0.0
    %2258 = vmatpush1.msra.mxu0 0.0
    %2259 = vmatprep.subr.mxu0 0.0
    %2260 = vmatpush1.msra.mxu0 0.0
    %2261 = vmatprep.subr.mxu0 0.0
    %2262 = vmatpush1.msra.mxu0 0.0
    %2263 = vmatprep.subr.mxu0 0.0
    %2264 = vmatpush1.msra.mxu0 0.0
    %2265 = vmatprep.subr.mxu0 0.0
    %2266 = vmatpush1.msra.mxu0 0.0
    %2267 = vmatprep.subr.mxu0 0.0
    %2268 = vmatpush1.msra.mxu0 0.0
    %2269 = vmatprep.subr.mxu0 0.0
    %2270 = vmatpush1.msra.mxu0 0.0
    %2271 = vmatprep.mubr.f32.mxu0 0.0
    %2272 = vmatmul.mubr.f32.gmra.mrb[0].mxu0 %v2205
    %v2273 = vpop.f32.mrb[0].mxu0
    %v2274 = vadd.f32 %v855, %v2273
    %v2275 = vpop.f32.mrb[0].mxu0
    %v2276 = vadd.f32 %v859, %v2275
    %2277 = vdwg.mxu0
    %2278 = vmatprep.subr.mxu0 %v822
    %2279 = vmatpush1.msra.mxu0 %v821
    %2280 = vmatprep.subr.mxu0 %v826
    %2281 = vmatpush1.msra.mxu0 %v825
    %2282 = vmatprep.subr.mxu0 %v830
    %2283 = vmatpush1.msra.mxu0 %v829
    %2284 = vmatprep.subr.mxu0 %v834
    %2285 = vmatpush1.msra.mxu0 %v833
    %2286 = vmatprep.subr.mxu0 %v838
    %2287 = vmatpush1.msra.mxu0 %v837
    %2288 = vmatprep.subr.mxu0 %v842
    %2289 = vmatpush1.msra.mxu0 %v841
    %2290 = vmatprep.subr.mxu0 %v846
    %2291 = vmatpush1.msra.mxu0 %v845
    %2292 = vmatprep.subr.mxu0 %v850
    %2293 = vmatpush1.msra.mxu0 %v849
    %2294 = vmatprep.subr.mxu0 0.0
    %2295 = vmatpush1.msra.mxu0 0.0
    %2296 = vmatprep.subr.mxu0 0.0
    %2297 = vmatpush1.msra.mxu0 0.0
    %2298 = vmatprep.subr.mxu0 0.0
    %2299 = vmatpush1.msra.mxu0 0.0
    %2300 = vmatprep.subr.mxu0 0.0
    %2301 = vmatpush1.msra.mxu0 0.0
    %2302 = vmatprep.subr.mxu0 0.0
    %2303 = vmatpush1.msra.mxu0 0.0
    %2304 = vmatprep.subr.mxu0 0.0
    %2305 = vmatpush1.msra.mxu0 0.0
    %2306 = vmatprep.subr.mxu0 0.0
    %2307 = vmatpush1.msra.mxu0 0.0
    %2308 = vmatprep.subr.mxu0 0.0
    %2309 = vmatpush1.msra.mxu0 0.0
    %2310 = vmatprep.subr.mxu0 0.0
    %2311 = vmatpush1.msra.mxu0 0.0
    %2312 = vmatprep.subr.mxu0 0.0
    %2313 = vmatpush1.msra.mxu0 0.0
    %2314 = vmatprep.subr.mxu0 0.0
    %2315 = vmatpush1.msra.mxu0 0.0
    %2316 = vmatprep.subr.mxu0 0.0
    %2317 = vmatpush1.msra.mxu0 0.0
    %2318 = vmatprep.subr.mxu0 0.0
    %2319 = vmatpush1.msra.mxu0 0.0
    %2320 = vmatprep.subr.mxu0 0.0
    %2321 = vmatpush1.msra.mxu0 0.0
    %2322 = vmatprep.subr.mxu0 0.0
    %2323 = vmatpush1.msra.mxu0 0.0
    %2324 = vmatprep.subr.mxu0 0.0
    %2325 = vmatpush1.msra.mxu0 0.0
    %2326 = vmatprep.subr.mxu0 0.0
    %2327 = vmatpush1.msra.mxu0 0.0
    %2328 = vmatprep.subr.mxu0 0.0
    %2329 = vmatpush1.msra.mxu0 0.0
    %2330 = vmatprep.subr.mxu0 0.0
    %2331 = vmatpush1.msra.mxu0 0.0
    %2332 = vmatprep.subr.mxu0 0.0
    %2333 = vmatpush1.msra.mxu0 0.0
    %2334 = vmatprep.subr.mxu0 0.0
    %2335 = vmatpush1.msra.mxu0 0.0
    %2336 = vmatprep.subr.mxu0 0.0
    %2337 = vmatpush1.msra.mxu0 0.0
    %2338 = vmatprep.subr.mxu0 0.0
    %2339 = vmatpush1.msra.mxu0 0.0
    %2340 = vmatprep.subr.mxu0 0.0
    %2341 = vmatpush1.msra.mxu0 0.0
    %2342 = vmatprep.mubr.f32.mxu0 0.0
    %2343 = vmatmul.mubr.f32.gmra.mrb[0].mxu0 %v2205
    %v2344 = vpop.f32.mrb[0].mxu0
    %v2345 = vadd.f32 %v863, %v2344
    %v2346 = vpop.f32.mrb[0].mxu0
    %v2347 = vadd.f32 %v867, %v2346
    %2348 = vdwg.mxu0
    %v2349 = vmul.f32 %v2274, 0.5
    %v2350 = vtanh.pop %v2349
    %v2351 = vadd.f32 %v2350, 1.0
    %v2352 = vmul.f32 %v2351, 0.5
    %v2353 = vmul.f32 %v2276, 0.5
    %v2354 = vtanh.pop %v2353
    %v2355 = vadd.f32 %v2354, 1.0
    %v2356 = vmul.f32 %v2355, 0.5
    %v2357 = vmul.f32 %v2352, %v2347
    %v2358 = vadd.f32 %v2345, %v2357
    %v2359 = vtanh.pop %v2358
    %v2360 = vsub.f32 1.0, %v2356
    %v2361 = vmul.f32 %v2360, %v2359
    %v2362 = vmul.f32 %v2356, %v1697
    %v2363 = vadd.f32 %v2361, %v2362
    %2364 = vset.pattern.permute.xlu0 3
    %2365 = vperm.xlu0 %2364, %v145
    %v2366 = vpop.permute.xlu0 %2365
    %v2368 = vmul.f32 %v2366, %v175
    %v2369 = vmul.f32 %v2366, %v179
    %v2370 = vmul.f32 %v2366, %v183
    %v2371 = vadd.f32 %v2368, %v194
    %v2372 = vadd.f32 %v2369, %v198
    %v2373 = vadd.f32 %v2370, %v202
    %v2375 = vsel %vm225, %v1868, 0
    %2377 = vmatprep.subr.mxu0 %v149
    %2378 = vmatpush1.msra.mxu0 %v148
    %2379 = vmatprep.subr.mxu0 %v152
    %2380 = vmatpush1.msra.mxu0 %v151
    %2381 = vmatprep.subr.mxu0 %v155
    %2382 = vmatpush1.msra.mxu0 %v154
    %2383 = vmatprep.subr.mxu0 %v158
    %2384 = vmatpush1.msra.mxu0 %v157
    %2385 = vmatprep.subr.mxu0 0.0
    %2386 = vmatpush1.msra.mxu0 0.0
    %2387 = vmatprep.subr.mxu0 0.0
    %2388 = vmatpush1.msra.mxu0 0.0
    %2389 = vmatprep.subr.mxu0 0.0
    %2390 = vmatpush1.msra.mxu0 0.0
    %2391 = vmatprep.subr.mxu0 0.0
    %2392 = vmatpush1.msra.mxu0 0.0
    %2393 = vmatprep.subr.mxu0 0.0
    %2394 = vmatpush1.msra.mxu0 0.0
    %2395 = vmatprep.subr.mxu0 0.0
    %2396 = vmatpush1.msra.mxu0 0.0
    %2397 = vmatprep.subr.mxu0 0.0
    %2398 = vmatpush1.msra.mxu0 0.0
    %2399 = vmatprep.subr.mxu0 0.0
    %2400 = vmatpush1.msra.mxu0 0.0
    %2401 = vmatprep.subr.mxu0 0.0
    %2402 = vmatpush1.msra.mxu0 0.0
    %2403 = vmatprep.subr.mxu0 0.0
    %2404 = vmatpush1.msra.mxu0 0.0
    %2405 = vmatprep.subr.mxu0 0.0
    %2406 = vmatpush1.msra.mxu0 0.0
    %2407 = vmatprep.subr.mxu0 0.0
    %2408 = vmatpush1.msra.mxu0 0.0
    %2409 = vmatprep.subr.mxu0 0.0
    %2410 = vmatpush1.msra.mxu0 0.0
    %2411 = vmatprep.subr.mxu0 0.0
    %2412 = vmatpush1.msra.mxu0 0.0
    %2413 = vmatprep.subr.mxu0 0.0
    %2414 = vmatpush1.msra.mxu0 0.0
    %2415 = vmatprep.subr.mxu0 0.0
    %2416 = vmatpush1.msra.mxu0 0.0
    %2417 = vmatprep.subr.mxu0 0.0
    %2418 = vmatpush1.msra.mxu0 0.0
    %2419 = vmatprep.subr.mxu0 0.0
    %2420 = vmatpush1.msra.mxu0 0.0
    %2421 = vmatprep.subr.mxu0 0.0
    %2422 = vmatpush1.msra.mxu0 0.0
    %2423 = vmatprep.subr.mxu0 0.0
    %2424 = vmatpush1.msra.mxu0 0.0
    %2425 = vmatprep.subr.mxu0 0.0
    %2426 = vmatpush1.msra.mxu0 0.0
    %2427 = vmatprep.subr.mxu0 0.0
    %2428 = vmatpush1.msra.mxu0 0.0
    %2429 = vmatprep.subr.mxu0 0.0
    %2430 = vmatpush1.msra.mxu0 0.0
    %2431 = vmatprep.subr.mxu0 0.0
    %2432 = vmatpush1.msra.mxu0 0.0
    %2433 = vmatprep.subr.mxu0 0.0
    %2434 = vmatpush1.msra.mxu0 0.0
    %2435 = vmatprep.subr.mxu0 0.0
    %2436 = vmatpush1.msra.mxu0 0.0
    %2437 = vmatprep.subr.mxu0 0.0
    %2438 = vmatpush1.msra.mxu0 0.0
    %2439 = vmatprep.subr.mxu0 0.0
    %2440 = vmatpush1.msra.mxu0 0.0
    %2441 = vmatprep.mubr.f32.mxu0 0.0
    %2442 = vmatmul.mubr.f32.gmra.mrb[0].mxu0 %v2375
    %v2443 = vpop.f32.mrb[0].mxu0
    %v2444 = vadd.f32 %v213, %v2443
    %v2445 = vpop.f32.mrb[0].mxu0
    %v2446 = vadd.f32 %v217, %v2445
    %2447 = vdwg.mxu0
    %2448 = vmatprep.subr.mxu0 0.0
    %2449 = vmatpush1.msra.mxu0 %v150
    %2450 = vmatprep.subr.mxu0 0.0
    %2451 = vmatpush1.msra.mxu0 %v153
    %2452 = vmatprep.subr.mxu0 0.0
    %2453 = vmatpush1.msra.mxu0 %v156
    %2454 = vmatprep.subr.mxu0 0.0
    %2455 = vmatpush1.msra.mxu0 %v159
    %2456 = vmatprep.subr.mxu0 0.0
    %2457 = vmatpush1.msra.mxu0 0.0
    %2458 = vmatprep.subr.mxu0 0.0
    %2459 = vmatpush1.msra.mxu0 0.0
    %2460 = vmatprep.subr.mxu0 0.0
    %2461 = vmatpush1.msra.mxu0 0.0
    %2462 = vmatprep.subr.mxu0 0.0
    %2463 = vmatpush1.msra.mxu0 0.0
    %2464 = vmatprep.subr.mxu0 0.0
    %2465 = vmatpush1.msra.mxu0 0.0
    %2466 = vmatprep.subr.mxu0 0.0
    %2467 = vmatpush1.msra.mxu0 0.0
    %2468 = vmatprep.subr.mxu0 0.0
    %2469 = vmatpush1.msra.mxu0 0.0
    %2470 = vmatprep.subr.mxu0 0.0
    %2471 = vmatpush1.msra.mxu0 0.0
    %2472 = vmatprep.subr.mxu0 0.0
    %2473 = vmatpush1.msra.mxu0 0.0
    %2474 = vmatprep.subr.mxu0 0.0
    %2475 = vmatpush1.msra.mxu0 0.0
    %2476 = vmatprep.subr.mxu0 0.0
    %2477 = vmatpush1.msra.mxu0 0.0
    %2478 = vmatprep.subr.mxu0 0.0
    %2479 = vmatpush1.msra.mxu0 0.0
    %2480 = vmatprep.subr.mxu0 0.0
    %2481 = vmatpush1.msra.mxu0 0.0
    %2482 = vmatprep.subr.mxu0 0.0
    %2483 = vmatpush1.msra.mxu0 0.0
    %2484 = vmatprep.subr.mxu0 0.0
    %2485 = vmatpush1.msra.mxu0 0.0
    %2486 = vmatprep.subr.mxu0 0.0
    %2487 = vmatpush1.msra.mxu0 0.0
    %2488 = vmatprep.subr.mxu0 0.0
    %2489 = vmatpush1.msra.mxu0 0.0
    %2490 = vmatprep.subr.mxu0 0.0
    %2491 = vmatpush1.msra.mxu0 0.0
    %2492 = vmatprep.subr.mxu0 0.0
    %2493 = vmatpush1.msra.mxu0 0.0
    %2494 = vmatprep.subr.mxu0 0.0
    %2495 = vmatpush1.msra.mxu0 0.0
    %2496 = vmatprep.subr.mxu0 0.0
    %2497 = vmatpush1.msra.mxu0 0.0
    %2498 = vmatprep.subr.mxu0 0.0
    %2499 = vmatpush1.msra.mxu0 0.0
    %2500 = vmatprep.subr.mxu0 0.0
    %2501 = vmatpush1.msra.mxu0 0.0
    %2502 = vmatprep.subr.mxu0 0.0
    %2503 = vmatpush1.msra.mxu0 0.0
    %2504 = vmatprep.subr.mxu0 0.0
    %2505 = vmatpush1.msra.mxu0 0.0
    %2506 = vmatprep.subr.mxu0 0.0
    %2507 = vmatpush1.msra.mxu0 0.0
    %2508 = vmatprep.subr.mxu0 0.0
    %2509 = vmatpush1.msra.mxu0 0.0
    %2510 = vmatprep.subr.mxu0 0.0
    %2511 = vmatpush1.msra.mxu0 0.0
    %2512 = vmatprep.mubr.f32.mxu0 0.0
    %2513 = vmatmul.mubr.f32.gmra.mrb[0].mxu0 %v2375
    %v2514 = vpop.f32.mrb[0].mxu0
    %v2515 = vadd.f32 %v221, %v2514
    %v2516 = vpop.f32.mrb[0].mxu0
    %2517 = vdwg.mxu0
    %v2518 = vadd.f32 %v2371, %v2444
    %v2519 = vmul.f32 %v2518, 0.5
    %v2520 = vtanh.pop %v2519
    %v2521 = vadd.f32 %v2520, 1.0
    %v2522 = vmul.f32 %v2521, 0.5
    %v2523 = vadd.f32 %v2372, %v2446
    %v2524 = vmul.f32 %v2523, 0.5
    %v2525 = vtanh.pop %v2524
    %v2526 = vadd.f32 %v2525, 1.0
    %v2527 = vmul.f32 %v2526, 0.5
    %v2528 = vmul.f32 %v2522, %v2515
    %v2529 = vadd.f32 %v2373, %v2528
    %v2530 = vtanh.pop %v2529
    %v2531 = vsub.f32 1.0, %v2527
    %v2532 = vmul.f32 %v2531, %v2530
    %v2533 = vmul.f32 %v2527, %v1868
    %v2534 = vadd.f32 %v2532, %v2533
    %2536 = vrot.lane.b32.xlu0 %v2033, 32
    %v2537 = vpop.permute.xlu0 %2536
    %v2539 = vsel %vm225, %v2534, %v2537
    %v2541 = vsel %vm441, %v2539, 0
    %2543 = vmatprep.subr.mxu0 %v389
    %2544 = vmatpush1.msra.mxu0 %v388
    %2545 = vmatprep.subr.mxu0 %v393
    %2546 = vmatpush1.msra.mxu0 %v392
    %2547 = vmatprep.subr.mxu0 %v397
    %2548 = vmatpush1.msra.mxu0 %v396
    %2549 = vmatprep.subr.mxu0 %v401
    %2550 = vmatpush1.msra.mxu0 %v400
    %2551 = vmatprep.subr.mxu0 %v405
    %2552 = vmatpush1.msra.mxu0 %v404
    %2553 = vmatprep.subr.mxu0 %v409
    %2554 = vmatpush1.msra.mxu0 %v408
    %2555 = vmatprep.subr.mxu0 %v413
    %2556 = vmatpush1.msra.mxu0 %v412
    %2557 = vmatprep.subr.mxu0 %v417
    %2558 = vmatpush1.msra.mxu0 %v416
    %2559 = vmatprep.subr.mxu0 0.0
    %2560 = vmatpush1.msra.mxu0 0.0
    %2561 = vmatprep.subr.mxu0 0.0
    %2562 = vmatpush1.msra.mxu0 0.0
    %2563 = vmatprep.subr.mxu0 0.0
    %2564 = vmatpush1.msra.mxu0 0.0
    %2565 = vmatprep.subr.mxu0 0.0
    %2566 = vmatpush1.msra.mxu0 0.0
    %2567 = vmatprep.subr.mxu0 0.0
    %2568 = vmatpush1.msra.mxu0 0.0
    %2569 = vmatprep.subr.mxu0 0.0
    %2570 = vmatpush1.msra.mxu0 0.0
    %2571 = vmatprep.subr.mxu0 0.0
    %2572 = vmatpush1.msra.mxu0 0.0
    %2573 = vmatprep.subr.mxu0 0.0
    %2574 = vmatpush1.msra.mxu0 0.0
    %2575 = vmatprep.subr.mxu0 0.0
    %2576 = vmatpush1.msra.mxu0 0.0
    %2577 = vmatprep.subr.mxu0 0.0
    %2578 = vmatpush1.msra.mxu0 0.0
    %2579 = vmatprep.subr.mxu0 0.0
    %2580 = vmatpush1.msra.mxu0 0.0
    %2581 = vmatprep.subr.mxu0 0.0
    %2582 = vmatpush1.msra.mxu0 0.0
    %2583 = vmatprep.subr.mxu0 0.0
    %2584 = vmatpush1.msra.mxu0 0.0
    %2585 = vmatprep.subr.mxu0 0.0
    %2586 = vmatpush1.msra.mxu0 0.0
    %2587 = vmatprep.subr.mxu0 0.0
    %2588 = vmatpush1.msra.mxu0 0.0
    %2589 = vmatprep.subr.mxu0 0.0
    %2590 = vmatpush1.msra.mxu0 0.0
    %2591 = vmatprep.subr.mxu0 0.0
    %2592 = vmatpush1.msra.mxu0 0.0
    %2593 = vmatprep.subr.mxu0 0.0
    %2594 = vmatpush1.msra.mxu0 0.0
    %2595 = vmatprep.subr.mxu0 0.0
    %2596 = vmatpush1.msra.mxu0 0.0
    %2597 = vmatprep.subr.mxu0 0.0
    %2598 = vmatpush1.msra.mxu0 0.0
    %2599 = vmatprep.subr.mxu0 0.0
    %2600 = vmatpush1.msra.mxu0 0.0
    %2601 = vmatprep.subr.mxu0 0.0
    %2602 = vmatpush1.msra.mxu0 0.0
    %2603 = vmatprep.subr.mxu0 0.0
    %2604 = vmatpush1.msra.mxu0 0.0
    %2605 = vmatprep.subr.mxu0 0.0
    %2606 = vmatpush1.msra.mxu0 0.0
    %2607 = vmatprep.mubr.f32.mxu0 0.0
    %2608 = vmatmul.mubr.f32.gmra.mrb[0].mxu0 %v2541
    %v2609 = vpop.f32.mrb[0].mxu0
    %v2610 = vadd.f32 %v424, %v2609
    %v2611 = vpop.f32.mrb[0].mxu0
    %v2612 = vadd.f32 %v428, %v2611
    %2613 = vdwg.mxu0
    %2614 = vmatprep.subr.mxu0 %v391
    %2615 = vmatpush1.msra.mxu0 %v390
    %2616 = vmatprep.subr.mxu0 %v395
    %2617 = vmatpush1.msra.mxu0 %v394
    %2618 = vmatprep.subr.mxu0 %v399
    %2619 = vmatpush1.msra.mxu0 %v398
    %2620 = vmatprep.subr.mxu0 %v403
    %2621 = vmatpush1.msra.mxu0 %v402
    %2622 = vmatprep.subr.mxu0 %v407
    %2623 = vmatpush1.msra.mxu0 %v406
    %2624 = vmatprep.subr.mxu0 %v411
    %2625 = vmatpush1.msra.mxu0 %v410
    %2626 = vmatprep.subr.mxu0 %v415
    %2627 = vmatpush1.msra.mxu0 %v414
    %2628 = vmatprep.subr.mxu0 %v419
    %2629 = vmatpush1.msra.mxu0 %v418
    %2630 = vmatprep.subr.mxu0 0.0
    %2631 = vmatpush1.msra.mxu0 0.0
    %2632 = vmatprep.subr.mxu0 0.0
    %2633 = vmatpush1.msra.mxu0 0.0
    %2634 = vmatprep.subr.mxu0 0.0
    %2635 = vmatpush1.msra.mxu0 0.0
    %2636 = vmatprep.subr.mxu0 0.0
    %2637 = vmatpush1.msra.mxu0 0.0
    %2638 = vmatprep.subr.mxu0 0.0
    %2639 = vmatpush1.msra.mxu0 0.0
    %2640 = vmatprep.subr.mxu0 0.0
    %2641 = vmatpush1.msra.mxu0 0.0
    %2642 = vmatprep.subr.mxu0 0.0
    %2643 = vmatpush1.msra.mxu0 0.0
    %2644 = vmatprep.subr.mxu0 0.0
    %2645 = vmatpush1.msra.mxu0 0.0
    %2646 = vmatprep.subr.mxu0 0.0
    %2647 = vmatpush1.msra.mxu0 0.0
    %2648 = vmatprep.subr.mxu0 0.0
    %2649 = vmatpush1.msra.mxu0 0.0
    %2650 = vmatprep.subr.mxu0 0.0
    %2651 = vmatpush1.msra.mxu0 0.0
    %2652 = vmatprep.subr.mxu0 0.0
    %2653 = vmatpush1.msra.mxu0 0.0
    %2654 = vmatprep.subr.mxu0 0.0
    %2655 = vmatpush1.msra.mxu0 0.0
    %2656 = vmatprep.subr.mxu0 0.0
    %2657 = vmatpush1.msra.mxu0 0.0
    %2658 = vmatprep.subr.mxu0 0.0
    %2659 = vmatpush1.msra.mxu0 0.0
    %2660 = vmatprep.subr.mxu0 0.0
    %2661 = vmatpush1.msra.mxu0 0.0
    %2662 = vmatprep.subr.mxu0 0.0
    %2663 = vmatpush1.msra.mxu0 0.0
    %2664 = vmatprep.subr.mxu0 0.0
    %2665 = vmatpush1.msra.mxu0 0.0
    %2666 = vmatprep.subr.mxu0 0.0
    %2667 = vmatpush1.msra.mxu0 0.0
    %2668 = vmatprep.subr.mxu0 0.0
    %2669 = vmatpush1.msra.mxu0 0.0
    %2670 = vmatprep.subr.mxu0 0.0
    %2671 = vmatpush1.msra.mxu0 0.0
    %2672 = vmatprep.subr.mxu0 0.0
    %2673 = vmatpush1.msra.mxu0 0.0
    %2674 = vmatprep.subr.mxu0 0.0
    %2675 = vmatpush1.msra.mxu0 0.0
    %2676 = vmatprep.subr.mxu0 0.0
    %2677 = vmatpush1.msra.mxu0 0.0
    %2678 = vmatprep.mubr.f32.mxu0 0.0
    %2679 = vmatmul.mubr.f32.gmra.mrb[0].mxu0 %v2541
    %v2680 = vpop.f32.mrb[0].mxu0
    %v2681 = vadd.f32 %v432, %v2680
    %v2682 = vpop.f32.mrb[0].mxu0
    %v2683 = vadd.f32 %v436, %v2682
    %2684 = vdwg.mxu0
    %v2685 = vmul.f32 %v2610, 0.5
    %v2686 = vtanh.pop %v2685
    %v2687 = vadd.f32 %v2686, 1.0
    %v2688 = vmul.f32 %v2687, 0.5
    %v2689 = vmul.f32 %v2612, 0.5
    %v2690 = vtanh.pop %v2689
    %v2691 = vadd.f32 %v2690, 1.0
    %v2692 = vmul.f32 %v2691, 0.5
    %v2693 = vmul.f32 %v2688, %v2683
    %v2694 = vadd.f32 %v2681, %v2693
    %v2695 = vtanh.pop %v2694
    %v2696 = vsub.f32 1.0, %v2692
    %v2697 = vmul.f32 %v2696, %v2695
    %v2698 = vmul.f32 %v2692, %v2033
    %v2699 = vadd.f32 %v2697, %v2698
    %2701 = vrot.lane.b32.xlu0 %v2198, 32
    %v2702 = vpop.permute.xlu0 %2701
    %v2704 = vsel %vm225, %v2699, %v2702
    %v2706 = vsel %vm441, %v2704, 0
    %2708 = vmatprep.subr.mxu0 %v605
    %2709 = vmatpush1.msra.mxu0 %v604
    %2710 = vmatprep.subr.mxu0 %v609
    %2711 = vmatpush1.msra.mxu0 %v608
    %2712 = vmatprep.subr.mxu0 %v613
    %2713 = vmatpush1.msra.mxu0 %v612
    %2714 = vmatprep.subr.mxu0 %v617
    %2715 = vmatpush1.msra.mxu0 %v616
    %2716 = vmatprep.subr.mxu0 %v621
    %2717 = vmatpush1.msra.mxu0 %v620
    %2718 = vmatprep.subr.mxu0 %v625
    %2719 = vmatpush1.msra.mxu0 %v624
    %2720 = vmatprep.subr.mxu0 %v629
    %2721 = vmatpush1.msra.mxu0 %v628
    %2722 = vmatprep.subr.mxu0 %v633
    %2723 = vmatpush1.msra.mxu0 %v632
    %2724 = vmatprep.subr.mxu0 0.0
    %2725 = vmatpush1.msra.mxu0 0.0
    %2726 = vmatprep.subr.mxu0 0.0
    %2727 = vmatpush1.msra.mxu0 0.0
    %2728 = vmatprep.subr.mxu0 0.0
    %2729 = vmatpush1.msra.mxu0 0.0
    %2730 = vmatprep.subr.mxu0 0.0
    %2731 = vmatpush1.msra.mxu0 0.0
    %2732 = vmatprep.subr.mxu0 0.0
    %2733 = vmatpush1.msra.mxu0 0.0
    %2734 = vmatprep.subr.mxu0 0.0
    %2735 = vmatpush1.msra.mxu0 0.0
    %2736 = vmatprep.subr.mxu0 0.0
    %2737 = vmatpush1.msra.mxu0 0.0
    %2738 = vmatprep.subr.mxu0 0.0
    %2739 = vmatpush1.msra.mxu0 0.0
    %2740 = vmatprep.subr.mxu0 0.0
    %2741 = vmatpush1.msra.mxu0 0.0
    %2742 = vmatprep.subr.mxu0 0.0
    %2743 = vmatpush1.msra.mxu0 0.0
    %2744 = vmatprep.subr.mxu0 0.0
    %2745 = vmatpush1.msra.mxu0 0.0
    %2746 = vmatprep.subr.mxu0 0.0
    %2747 = vmatpush1.msra.mxu0 0.0
    %2748 = vmatprep.subr.mxu0 0.0
    %2749 = vmatpush1.msra.mxu0 0.0
    %2750 = vmatprep.subr.mxu0 0.0
    %2751 = vmatpush1.msra.mxu0 0.0
    %2752 = vmatprep.subr.mxu0 0.0
    %2753 = vmatpush1.msra.mxu0 0.0
    %2754 = vmatprep.subr.mxu0 0.0
    %2755 = vmatpush1.msra.mxu0 0.0
    %2756 = vmatprep.subr.mxu0 0.0
    %2757 = vmatpush1.msra.mxu0 0.0
    %2758 = vmatprep.subr.mxu0 0.0
    %2759 = vmatpush1.msra.mxu0 0.0
    %2760 = vmatprep.subr.mxu0 0.0
    %2761 = vmatpush1.msra.mxu0 0.0
    %2762 = vmatprep.subr.mxu0 0.0
    %2763 = vmatpush1.msra.mxu0 0.0
    %2764 = vmatprep.subr.mxu0 0.0
    %2765 = vmatpush1.msra.mxu0 0.0
    %2766 = vmatprep.subr.mxu0 0.0
    %2767 = vmatpush1.msra.mxu0 0.0
    %2768 = vmatprep.subr.mxu0 0.0
    %2769 = vmatpush1.msra.mxu0 0.0
    %2770 = vmatprep.subr.mxu0 0.0
    %2771 = vmatpush1.msra.mxu0 0.0
    %2772 = vmatprep.mubr.f32.mxu0 0.0
    %2773 = vmatmul.mubr.f32.gmra.mrb[0].mxu0 %v2706
    %v2774 = vpop.f32.mrb[0].mxu0
    %v2775 = vadd.f32 %v640, %v2774
    %v2776 = vpop.f32.mrb[0].mxu0
    %v2777 = vadd.f32 %v644, %v2776
    %2778 = vdwg.mxu0
    %2779 = vmatprep.subr.mxu0 %v607
    %2780 = vmatpush1.msra.mxu0 %v606
    %2781 = vmatprep.subr.mxu0 %v611
    %2782 = vmatpush1.msra.mxu0 %v610
    %2783 = vmatprep.subr.mxu0 %v615
    %2784 = vmatpush1.msra.mxu0 %v614
    %2785 = vmatprep.subr.mxu0 %v619
    %2786 = vmatpush1.msra.mxu0 %v618
    %2787 = vmatprep.subr.mxu0 %v623
    %2788 = vmatpush1.msra.mxu0 %v622
    %2789 = vmatprep.subr.mxu0 %v627
    %2790 = vmatpush1.msra.mxu0 %v626
    %2791 = vmatprep.subr.mxu0 %v631
    %2792 = vmatpush1.msra.mxu0 %v630
    %2793 = vmatprep.subr.mxu0 %v635
    %2794 = vmatpush1.msra.mxu0 %v634
    %2795 = vmatprep.subr.mxu0 0.0
    %2796 = vmatpush1.msra.mxu0 0.0
    %2797 = vmatprep.subr.mxu0 0.0
    %2798 = vmatpush1.msra.mxu0 0.0
    %2799 = vmatprep.subr.mxu0 0.0
    %2800 = vmatpush1.msra.mxu0 0.0
    %2801 = vmatprep.subr.mxu0 0.0
    %2802 = vmatpush1.msra.mxu0 0.0
    %2803 = vmatprep.subr.mxu0 0.0
    %2804 = vmatpush1.msra.mxu0 0.0
    %2805 = vmatprep.subr.mxu0 0.0
    %2806 = vmatpush1.msra.mxu0 0.0
    %2807 = vmatprep.subr.mxu0 0.0
    %2808 = vmatpush1.msra.mxu0 0.0
    %2809 = vmatprep.subr.mxu0 0.0
    %2810 = vmatpush1.msra.mxu0 0.0
    %2811 = vmatprep.subr.mxu0 0.0
    %2812 = vmatpush1.msra.mxu0 0.0
    %2813 = vmatprep.subr.mxu0 0.0
    %2814 = vmatpush1.msra.mxu0 0.0
    %2815 = vmatprep.subr.mxu0 0.0
    %2816 = vmatpush1.msra.mxu0 0.0
    %2817 = vmatprep.subr.mxu0 0.0
    %2818 = vmatpush1.msra.mxu0 0.0
    %2819 = vmatprep.subr.mxu0 0.0
    %2820 = vmatpush1.msra.mxu0 0.0
    %2821 = vmatprep.subr.mxu0 0.0
    %2822 = vmatpush1.msra.mxu0 0.0
    %2823 = vmatprep.subr.mxu0 0.0
    %2824 = vmatpush1.msra.mxu0 0.0
    %2825 = vmatprep.subr.mxu0 0.0
    %2826 = vmatpush1.msra.mxu0 0.0
    %2827 = vmatprep.subr.mxu0 0.0
    %2828 = vmatpush1.msra.mxu0 0.0
    %2829 = vmatprep.subr.mxu0 0.0
    %2830 = vmatpush1.msra.mxu0 0.0
    %2831 = vmatprep.subr.mxu0 0.0
    %2832 = vmatpush1.msra.mxu0 0.0
    %2833 = vmatprep.subr.mxu0 0.0
    %2834 = vmatpush1.msra.mxu0 0.0
    %2835 = vmatprep.subr.mxu0 0.0
    %2836 = vmatpush1.msra.mxu0 0.0
    %2837 = vmatprep.subr.mxu0 0.0
    %2838 = vmatpush1.msra.mxu0 0.0
    %2839 = vmatprep.subr.mxu0 0.0
    %2840 = vmatpush1.msra.mxu0 0.0
    %2841 = vmatprep.subr.mxu0 0.0
    %2842 = vmatpush1.msra.mxu0 0.0
    %2843 = vmatprep.mubr.f32.mxu0 0.0
    %2844 = vmatmul.mubr.f32.gmra.mrb[0].mxu0 %v2706
    %v2845 = vpop.f32.mrb[0].mxu0
    %v2846 = vadd.f32 %v648, %v2845
    %v2847 = vpop.f32.mrb[0].mxu0
    %v2848 = vadd.f32 %v652, %v2847
    %2849 = vdwg.mxu0
    %v2850 = vmul.f32 %v2775, 0.5
    %v2851 = vtanh.pop %v2850
    %v2852 = vadd.f32 %v2851, 1.0
    %v2853 = vmul.f32 %v2852, 0.5
    %v2854 = vmul.f32 %v2777, 0.5
    %v2855 = vtanh.pop %v2854
    %v2856 = vadd.f32 %v2855, 1.0
    %v2857 = vmul.f32 %v2856, 0.5
    %v2858 = vmul.f32 %v2853, %v2848
    %v2859 = vadd.f32 %v2846, %v2858
    %v2860 = vtanh.pop %v2859
    %v2861 = vsub.f32 1.0, %v2857
    %v2862 = vmul.f32 %v2861, %v2860
    %v2863 = vmul.f32 %v2857, %v2198
    %v2864 = vadd.f32 %v2862, %v2863
    %2866 = vrot.lane.b32.xlu0 %v2363, 32
    %v2867 = vpop.permute.xlu0 %2866
    %v2869 = vsel %vm225, %v2864, %v2867
    %v2871 = vsel %vm441, %v2869, 0
    %2873 = vmatprep.subr.mxu0 %v820
    %2874 = vmatpush1.msra.mxu0 %v819
    %2875 = vmatprep.subr.mxu0 %v824
    %2876 = vmatpush1.msra.mxu0 %v823
    %2877 = vmatprep.subr.mxu0 %v828
    %2878 = vmatpush1.msra.mxu0 %v827
    %2879 = vmatprep.subr.mxu0 %v832
    %2880 = vmatpush1.msra.mxu0 %v831
    %2881 = vmatprep.subr.mxu0 %v836
    %2882 = vmatpush1.msra.mxu0 %v835
    %2883 = vmatprep.subr.mxu0 %v840
    %2884 = vmatpush1.msra.mxu0 %v839
    %2885 = vmatprep.subr.mxu0 %v844
    %2886 = vmatpush1.msra.mxu0 %v843
    %2887 = vmatprep.subr.mxu0 %v848
    %2888 = vmatpush1.msra.mxu0 %v847
    %2889 = vmatprep.subr.mxu0 0.0
    %2890 = vmatpush1.msra.mxu0 0.0
    %2891 = vmatprep.subr.mxu0 0.0
    %2892 = vmatpush1.msra.mxu0 0.0
    %2893 = vmatprep.subr.mxu0 0.0
    %2894 = vmatpush1.msra.mxu0 0.0
    %2895 = vmatprep.subr.mxu0 0.0
    %2896 = vmatpush1.msra.mxu0 0.0
    %2897 = vmatprep.subr.mxu0 0.0
    %2898 = vmatpush1.msra.mxu0 0.0
    %2899 = vmatprep.subr.mxu0 0.0
    %2900 = vmatpush1.msra.mxu0 0.0
    %2901 = vmatprep.subr.mxu0 0.0
    %2902 = vmatpush1.msra.mxu0 0.0
    %2903 = vmatprep.subr.mxu0 0.0
    %2904 = vmatpush1.msra.mxu0 0.0
    %2905 = vmatprep.subr.mxu0 0.0
    %2906 = vmatpush1.msra.mxu0 0.0
    %2907 = vmatprep.subr.mxu0 0.0
    %2908 = vmatpush1.msra.mxu0 0.0
    %2909 = vmatprep.subr.mxu0 0.0
    %2910 = vmatpush1.msra.mxu0 0.0
    %2911 = vmatprep.subr.mxu0 0.0
    %2912 = vmatpush1.msra.mxu0 0.0
    %2913 = vmatprep.subr.mxu0 0.0
    %2914 = vmatpush1.msra.mxu0 0.0
    %2915 = vmatprep.subr.mxu0 0.0
    %2916 = vmatpush1.msra.mxu0 0.0
    %2917 = vmatprep.subr.mxu0 0.0
    %2918 = vmatpush1.msra.mxu0 0.0
    %2919 = vmatprep.subr.mxu0 0.0
    %2920 = vmatpush1.msra.mxu0 0.0
    %2921 = vmatprep.subr.mxu0 0.0
    %2922 = vmatpush1.msra.mxu0 0.0
    %2923 = vmatprep.subr.mxu0 0.0
    %2924 = vmatpush1.msra.mxu0 0.0
    %2925 = vmatprep.subr.mxu0 0.0
    %2926 = vmatpush1.msra.mxu0 0.0
    %2927 = vmatprep.subr.mxu0 0.0
    %2928 = vmatpush1.msra.mxu0 0.0
    %2929 = vmatprep.subr.mxu0 0.0
    %2930 = vmatpush1.msra.mxu0 0.0
    %2931 = vmatprep.subr.mxu0 0.0
    %2932 = vmatpush1.msra.mxu0 0.0
    %2933 = vmatprep.subr.mxu0 0.0
    %2934 = vmatpush1.msra.mxu0 0.0
    %2935 = vmatprep.subr.mxu0 0.0
    %2936 = vmatpush1.msra.mxu0 0.0
    %2937 = vmatprep.mubr.f32.mxu0 0.0
    %2938 = vmatmul.mubr.f32.gmra.mrb[0].mxu0 %v2871
    %v2939 = vpop.f32.mrb[0].mxu0
    %v2940 = vadd.f32 %v855, %v2939
    %v2941 = vpop.f32.mrb[0].mxu0
    %v2942 = vadd.f32 %v859, %v2941
    %2943 = vdwg.mxu0
    %2944 = vmatprep.subr.mxu0 %v822
    %2945 = vmatpush1.msra.mxu0 %v821
    %2946 = vmatprep.subr.mxu0 %v826
    %2947 = vmatpush1.msra.mxu0 %v825
    %2948 = vmatprep.subr.mxu0 %v830
    %2949 = vmatpush1.msra.mxu0 %v829
    %2950 = vmatprep.subr.mxu0 %v834
    %2951 = vmatpush1.msra.mxu0 %v833
    %2952 = vmatprep.subr.mxu0 %v838
    %2953 = vmatpush1.msra.mxu0 %v837
    %2954 = vmatprep.subr.mxu0 %v842
    %2955 = vmatpush1.msra.mxu0 %v841
    %2956 = vmatprep.subr.mxu0 %v846
    %2957 = vmatpush1.msra.mxu0 %v845
    %2958 = vmatprep.subr.mxu0 %v850
    %2959 = vmatpush1.msra.mxu0 %v849
    %2960 = vmatprep.subr.mxu0 0.0
    %2961 = vmatpush1.msra.mxu0 0.0
    %2962 = vmatprep.subr.mxu0 0.0
    %2963 = vmatpush1.msra.mxu0 0.0
    %2964 = vmatprep.subr.mxu0 0.0
    %2965 = vmatpush1.msra.mxu0 0.0
    %2966 = vmatprep.subr.mxu0 0.0
    %2967 = vmatpush1.msra.mxu0 0.0
    %2968 = vmatprep.subr.mxu0 0.0
    %2969 = vmatpush1.msra.mxu0 0.0
    %2970 = vmatprep.subr.mxu0 0.0
    %2971 = vmatpush1.msra.mxu0 0.0
    %2972 = vmatprep.subr.mxu0 0.0
    %2973 = vmatpush1.msra.mxu0 0.0
    %2974 = vmatprep.subr.mxu0 0.0
    %2975 = vmatpush1.msra.mxu0 0.0
    %2976 = vmatprep.subr.mxu0 0.0
    %2977 = vmatpush1.msra.mxu0 0.0
    %2978 = vmatprep.subr.mxu0 0.0
    %2979 = vmatpush1.msra.mxu0 0.0
    %2980 = vmatprep.subr.mxu0 0.0
    %2981 = vmatpush1.msra.mxu0 0.0
    %2982 = vmatprep.subr.mxu0 0.0
    %2983 = vmatpush1.msra.mxu0 0.0
    %2984 = vmatprep.subr.mxu0 0.0
    %2985 = vmatpush1.msra.mxu0 0.0
    %2986 = vmatprep.subr.mxu0 0.0
    %2987 = vmatpush1.msra.mxu0 0.0
    %2988 = vmatprep.subr.mxu0 0.0
    %2989 = vmatpush1.msra.mxu0 0.0
    %2990 = vmatprep.subr.mxu0 0.0
    %2991 = vmatpush1.msra.mxu0 0.0
    %2992 = vmatprep.subr.mxu0 0.0
    %2993 = vmatpush1.msra.mxu0 0.0
    %2994 = vmatprep.subr.mxu0 0.0
    %2995 = vmatpush1.msra.mxu0 0.0
    %2996 = vmatprep.subr.mxu0 0.0
    %2997 = vmatpush1.msra.mxu0 0.0
    %2998 = vmatprep.subr.mxu0 0.0
    %2999 = vmatpush1.msra.mxu0 0.0
    %3000 = vmatprep.subr.mxu0 0.0
    %3001 = vmatpush1.msra.mxu0 0.0
    %3002 = vmatprep.subr.mxu0 0.0
    %3003 = vmatpush1.msra.mxu0 0.0
    %3004 = vmatprep.subr.mxu0 0.0
    %3005 = vmatpush1.msra.mxu0 0.0
    %3006 = vmatprep.subr.mxu0 0.0
    %3007 = vmatpush1.msra.mxu0 0.0
    %3008 = vmatprep.mubr.f32.mxu0 0.0
    %3009 = vmatmul.mubr.f32.gmra.mrb[0].mxu0 %v2871
    %v3010 = vpop.f32.mrb[0].mxu0
    %v3011 = vadd.f32 %v863, %v3010
    %v3012 = vpop.f32.mrb[0].mxu0
    %v3013 = vadd.f32 %v867, %v3012
    %3014 = vdwg.mxu0
    %v3015 = vmul.f32 %v2940, 0.5
    %v3016 = vtanh.pop %v3015
    %v3017 = vadd.f32 %v3016, 1.0
    %v3018 = vmul.f32 %v3017, 0.5
    %v3019 = vmul.f32 %v2942, 0.5
    %v3020 = vtanh.pop %v3019
    %v3021 = vadd.f32 %v3020, 1.0
    %v3022 = vmul.f32 %v3021, 0.5
    %v3023 = vmul.f32 %v3018, %v3013
    %v3024 = vadd.f32 %v3011, %v3023
    %v3025 = vtanh.pop %v3024
    %v3026 = vsub.f32 1.0, %v3022
    %v3027 = vmul.f32 %v3026, %v3025
    %v3028 = vmul.f32 %v3022, %v2363
    %v3029 = vadd.f32 %v3027, %v3028
    %3030 = vset.pattern.permute.xlu0 4
    %3031 = vperm.xlu0 %3030, %v145
    %v3032 = vpop.permute.xlu0 %3031
    %v3034 = vmul.f32 %v3032, %v175
    %v3035 = vmul.f32 %v3032, %v179
    %v3036 = vmul.f32 %v3032, %v183
    %v3037 = vadd.f32 %v3034, %v194
    %v3038 = vadd.f32 %v3035, %v198
    %v3039 = vadd.f32 %v3036, %v202
    %v3041 = vsel %vm225, %v2534, 0
    %3043 = vmatprep.subr.mxu0 %v149
    %3044 = vmatpush1.msra.mxu0 %v148
    %3045 = vmatprep.subr.mxu0 %v152
    %3046 = vmatpush1.msra.mxu0 %v151
    %3047 = vmatprep.subr.mxu0 %v155
    %3048 = vmatpush1.msra.mxu0 %v154
    %3049 = vmatprep.subr.mxu0 %v158
    %3050 = vmatpush1.msra.mxu0 %v157
    %3051 = vmatprep.subr.mxu0 0.0
    %3052 = vmatpush1.msra.mxu0 0.0
    %3053 = vmatprep.subr.mxu0 0.0
    %3054 = vmatpush1.msra.mxu0 0.0
    %3055 = vmatprep.subr.mxu0 0.0
    %3056 = vmatpush1.msra.mxu0 0.0
    %3057 = vmatprep.subr.mxu0 0.0
    %3058 = vmatpush1.msra.mxu0 0.0
    %3059 = vmatprep.subr.mxu0 0.0
    %3060 = vmatpush1.msra.mxu0 0.0
    %3061 = vmatprep.subr.mxu0 0.0
    %3062 = vmatpush1.msra.mxu0 0.0
    %3063 = vmatprep.subr.mxu0 0.0
    %3064 = vmatpush1.msra.mxu0 0.0
    %3065 = vmatprep.subr.mxu0 0.0
    %3066 = vmatpush1.msra.mxu0 0.0
    %3067 = vmatprep.subr.mxu0 0.0
    %3068 = vmatpush1.msra.mxu0 0.0
    %3069 = vmatprep.subr.mxu0 0.0
    %3070 = vmatpush1.msra.mxu0 0.0
    %3071 = vmatprep.subr.mxu0 0.0
    %3072 = vmatpush1.msra.mxu0 0.0
    %3073 = vmatprep.subr.mxu0 0.0
    %3074 = vmatpush1.msra.mxu0 0.0
    %3075 = vmatprep.subr.mxu0 0.0
    %3076 = vmatpush1.msra.mxu0 0.0
    %3077 = vmatprep.subr.mxu0 0.0
    %3078 = vmatpush1.msra.mxu0 0.0
    %3079 = vmatprep.subr.mxu0 0.0
    %3080 = vmatpush1.msra.mxu0 0.0
    %3081 = vmatprep.subr.mxu0 0.0
    %3082 = vmatpush1.msra.mxu0 0.0
    %3083 = vmatprep.subr.mxu0 0.0
    %3084 = vmatpush1.msra.mxu0 0.0
    %3085 = vmatprep.subr.mxu0 0.0
    %3086 = vmatpush1.msra.mxu0 0.0
    %3087 = vmatprep.subr.mxu0 0.0
    %3088 = vmatpush1.msra.mxu0 0.0
    %3089 = vmatprep.subr.mxu0 0.0
    %3090 = vmatpush1.msra.mxu0 0.0
    %3091 = vmatprep.subr.mxu0 0.0
    %3092 = vmatpush1.msra.mxu0 0.0
    %3093 = vmatprep.subr.mxu0 0.0
    %3094 = vmatpush1.msra.mxu0 0.0
    %3095 = vmatprep.subr.mxu0 0.0
    %3096 = vmatpush1.msra.mxu0 0.0
    %3097 = vmatprep.subr.mxu0 0.0
    %3098 = vmatpush1.msra.mxu0 0.0
    %3099 = vmatprep.subr.mxu0 0.0
    %3100 = vmatpush1.msra.mxu0 0.0
    %3101 = vmatprep.subr.mxu0 0.0
    %3102 = vmatpush1.msra.mxu0 0.0
    %3103 = vmatprep.subr.mxu0 0.0
    %3104 = vmatpush1.msra.mxu0 0.0
    %3105 = vmatprep.subr.mxu0 0.0
    %3106 = vmatpush1.msra.mxu0 0.0
    %3107 = vmatprep.mubr.f32.mxu0 0.0
    %3108 = vmatmul.mubr.f32.gmra.mrb[0].mxu0 %v3041
    %v3109 = vpop.f32.mrb[0].mxu0
    %v3110 = vadd.f32 %v213, %v3109
    %v3111 = vpop.f32.mrb[0].mxu0
    %v3112 = vadd.f32 %v217, %v3111
    %3113 = vdwg.mxu0
    %3114 = vmatprep.subr.mxu0 0.0
    %3115 = vmatpush1.msra.mxu0 %v150
    %3116 = vmatprep.subr.mxu0 0.0
    %3117 = vmatpush1.msra.mxu0 %v153
    %3118 = vmatprep.subr.mxu0 0.0
    %3119 = vmatpush1.msra.mxu0 %v156
    %3120 = vmatprep.subr.mxu0 0.0
    %3121 = vmatpush1.msra.mxu0 %v159
    %3122 = vmatprep.subr.mxu0 0.0
    %3123 = vmatpush1.msra.mxu0 0.0
    %3124 = vmatprep.subr.mxu0 0.0
    %3125 = vmatpush1.msra.mxu0 0.0
    %3126 = vmatprep.subr.mxu0 0.0
    %3127 = vmatpush1.msra.mxu0 0.0
    %3128 = vmatprep.subr.mxu0 0.0
    %3129 = vmatpush1.msra.mxu0 0.0
    %3130 = vmatprep.subr.mxu0 0.0
    %3131 = vmatpush1.msra.mxu0 0.0
    %3132 = vmatprep.subr.mxu0 0.0
    %3133 = vmatpush1.msra.mxu0 0.0
    %3134 = vmatprep.subr.mxu0 0.0
    %3135 = vmatpush1.msra.mxu0 0.0
    %3136 = vmatprep.subr.mxu0 0.0
    %3137 = vmatpush1.msra.mxu0 0.0
    %3138 = vmatprep.subr.mxu0 0.0
    %3139 = vmatpush1.msra.mxu0 0.0
    %3140 = vmatprep.subr.mxu0 0.0
    %3141 = vmatpush1.msra.mxu0 0.0
    %3142 = vmatprep.subr.mxu0 0.0
    %3143 = vmatpush1.msra.mxu0 0.0
    %3144 = vmatprep.subr.mxu0 0.0
    %3145 = vmatpush1.msra.mxu0 0.0
    %3146 = vmatprep.subr.mxu0 0.0
    %3147 = vmatpush1.msra.mxu0 0.0
    %3148 = vmatprep.subr.mxu0 0.0
    %3149 = vmatpush1.msra.mxu0 0.0
    %3150 = vmatprep.subr.mxu0 0.0
    %3151 = vmatpush1.msra.mxu0 0.0
    %3152 = vmatprep.subr.mxu0 0.0
    %3153 = vmatpush1.msra.mxu0 0.0
    %3154 = vmatprep.subr.mxu0 0.0
    %3155 = vmatpush1.msra.mxu0 0.0
    %3156 = vmatprep.subr.mxu0 0.0
    %3157 = vmatpush1.msra.mxu0 0.0
    %3158 = vmatprep.subr.mxu0 0.0
    %3159 = vmatpush1.msra.mxu0 0.0
    %3160 = vmatprep.subr.mxu0 0.0
    %3161 = vmatpush1.msra.mxu0 0.0
    %3162 = vmatprep.subr.mxu0 0.0
    %3163 = vmatpush1.msra.mxu0 0.0
    %3164 = vmatprep.subr.mxu0 0.0
    %3165 = vmatpush1.msra.mxu0 0.0
    %3166 = vmatprep.subr.mxu0 0.0
    %3167 = vmatpush1.msra.mxu0 0.0
    %3168 = vmatprep.subr.mxu0 0.0
    %3169 = vmatpush1.msra.mxu0 0.0
    %3170 = vmatprep.subr.mxu0 0.0
    %3171 = vmatpush1.msra.mxu0 0.0
    %3172 = vmatprep.subr.mxu0 0.0
    %3173 = vmatpush1.msra.mxu0 0.0
    %3174 = vmatprep.subr.mxu0 0.0
    %3175 = vmatpush1.msra.mxu0 0.0
    %3176 = vmatprep.subr.mxu0 0.0
    %3177 = vmatpush1.msra.mxu0 0.0
    %3178 = vmatprep.mubr.f32.mxu0 0.0
    %3179 = vmatmul.mubr.f32.gmra.mrb[0].mxu0 %v3041
    %v3180 = vpop.f32.mrb[0].mxu0
    %v3181 = vadd.f32 %v221, %v3180
    %v3182 = vpop.f32.mrb[0].mxu0
    %3183 = vdwg.mxu0
    %v3184 = vadd.f32 %v3037, %v3110
    %v3185 = vmul.f32 %v3184, 0.5
    %v3186 = vtanh.pop %v3185
    %v3187 = vadd.f32 %v3186, 1.0
    %v3188 = vmul.f32 %v3187, 0.5
    %v3189 = vadd.f32 %v3038, %v3112
    %v3190 = vmul.f32 %v3189, 0.5
    %v3191 = vtanh.pop %v3190
    %v3192 = vadd.f32 %v3191, 1.0
    %v3193 = vmul.f32 %v3192, 0.5
    %v3194 = vmul.f32 %v3188, %v3181
    %v3195 = vadd.f32 %v3039, %v3194
    %v3196 = vtanh.pop %v3195
    %v3197 = vsub.f32 1.0, %v3193
    %v3198 = vmul.f32 %v3197, %v3196
    %v3199 = vmul.f32 %v3193, %v2534
    %v3200 = vadd.f32 %v3198, %v3199
    %3202 = vrot.lane.b32.xlu0 %v2699, 32
    %v3203 = vpop.permute.xlu0 %3202
    %v3205 = vsel %vm225, %v3200, %v3203
    %v3207 = vsel %vm441, %v3205, 0
    %3209 = vmatprep.subr.mxu0 %v389
    %3210 = vmatpush1.msra.mxu0 %v388
    %3211 = vmatprep.subr.mxu0 %v393
    %3212 = vmatpush1.msra.mxu0 %v392
    %3213 = vmatprep.subr.mxu0 %v397
    %3214 = vmatpush1.msra.mxu0 %v396
    %3215 = vmatprep.subr.mxu0 %v401
    %3216 = vmatpush1.msra.mxu0 %v400
    %3217 = vmatprep.subr.mxu0 %v405
    %3218 = vmatpush1.msra.mxu0 %v404
    %3219 = vmatprep.subr.mxu0 %v409
    %3220 = vmatpush1.msra.mxu0 %v408
    %3221 = vmatprep.subr.mxu0 %v413
    %3222 = vmatpush1.msra.mxu0 %v412
    %3223 = vmatprep.subr.mxu0 %v417
    %3224 = vmatpush1.msra.mxu0 %v416
    %3225 = vmatprep.subr.mxu0 0.0
    %3226 = vmatpush1.msra.mxu0 0.0
    %3227 = vmatprep.subr.mxu0 0.0
    %3228 = vmatpush1.msra.mxu0 0.0
    %3229 = vmatprep.subr.mxu0 0.0
    %3230 = vmatpush1.msra.mxu0 0.0
    %3231 = vmatprep.subr.mxu0 0.0
    %3232 = vmatpush1.msra.mxu0 0.0
    %3233 = vmatprep.subr.mxu0 0.0
    %3234 = vmatpush1.msra.mxu0 0.0
    %3235 = vmatprep.subr.mxu0 0.0
    %3236 = vmatpush1.msra.mxu0 0.0
    %3237 = vmatprep.subr.mxu0 0.0
    %3238 = vmatpush1.msra.mxu0 0.0
    %3239 = vmatprep.subr.mxu0 0.0
    %3240 = vmatpush1.msra.mxu0 0.0
    %3241 = vmatprep.subr.mxu0 0.0
    %3242 = vmatpush1.msra.mxu0 0.0
    %3243 = vmatprep.subr.mxu0 0.0
    %3244 = vmatpush1.msra.mxu0 0.0
    %3245 = vmatprep.subr.mxu0 0.0
    %3246 = vmatpush1.msra.mxu0 0.0
    %3247 = vmatprep.subr.mxu0 0.0
    %3248 = vmatpush1.msra.mxu0 0.0
    %3249 = vmatprep.subr.mxu0 0.0
    %3250 = vmatpush1.msra.mxu0 0.0
    %3251 = vmatprep.subr.mxu0 0.0
    %3252 = vmatpush1.msra.mxu0 0.0
    %3253 = vmatprep.subr.mxu0 0.0
    %3254 = vmatpush1.msra.mxu0 0.0
    %3255 = vmatprep.subr.mxu0 0.0
    %3256 = vmatpush1.msra.mxu0 0.0
    %3257 = vmatprep.subr.mxu0 0.0
    %3258 = vmatpush1.msra.mxu0 0.0
    %3259 = vmatprep.subr.mxu0 0.0
    %3260 = vmatpush1.msra.mxu0 0.0
    %3261 = vmatprep.subr.mxu0 0.0
    %3262 = vmatpush1.msra.mxu0 0.0
    %3263 = vmatprep.subr.mxu0 0.0
    %3264 = vmatpush1.msra.mxu0 0.0
    %3265 = vmatprep.subr.mxu0 0.0
    %3266 = vmatpush1.msra.mxu0 0.0
    %3267 = vmatprep.subr.mxu0 0.0
    %3268 = vmatpush1.msra.mxu0 0.0
    %3269 = vmatprep.subr.mxu0 0.0
    %3270 = vmatpush1.msra.mxu0 0.0
    %3271 = vmatprep.subr.mxu0 0.0
    %3272 = vmatpush1.msra.mxu0 0.0
    %3273 = vmatprep.mubr.f32.mxu0 0.0
    %3274 = vmatmul.mubr.f32.gmra.mrb[0].mxu0 %v3207
    %v3275 = vpop.f32.mrb[0].mxu0
    %v3276 = vadd.f32 %v424, %v3275
    %v3277 = vpop.f32.mrb[0].mxu0
    %v3278 = vadd.f32 %v428, %v3277
    %3279 = vdwg.mxu0
    %3280 = vmatprep.subr.mxu0 %v391
    %3281 = vmatpush1.msra.mxu0 %v390
    %3282 = vmatprep.subr.mxu0 %v395
    %3283 = vmatpush1.msra.mxu0 %v394
    %3284 = vmatprep.subr.mxu0 %v399
    %3285 = vmatpush1.msra.mxu0 %v398
    %3286 = vmatprep.subr.mxu0 %v403
    %3287 = vmatpush1.msra.mxu0 %v402
    %3288 = vmatprep.subr.mxu0 %v407
    %3289 = vmatpush1.msra.mxu0 %v406
    %3290 = vmatprep.subr.mxu0 %v411
    %3291 = vmatpush1.msra.mxu0 %v410
    %3292 = vmatprep.subr.mxu0 %v415
    %3293 = vmatpush1.msra.mxu0 %v414
    %3294 = vmatprep.subr.mxu0 %v419
    %3295 = vmatpush1.msra.mxu0 %v418
    %3296 = vmatprep.subr.mxu0 0.0
    %3297 = vmatpush1.msra.mxu0 0.0
    %3298 = vmatprep.subr.mxu0 0.0
    %3299 = vmatpush1.msra.mxu0 0.0
    %3300 = vmatprep.subr.mxu0 0.0
    %3301 = vmatpush1.msra.mxu0 0.0
    %3302 = vmatprep.subr.mxu0 0.0
    %3303 = vmatpush1.msra.mxu0 0.0
    %3304 = vmatprep.subr.mxu0 0.0
    %3305 = vmatpush1.msra.mxu0 0.0
    %3306 = vmatprep.subr.mxu0 0.0
    %3307 = vmatpush1.msra.mxu0 0.0
    %3308 = vmatprep.subr.mxu0 0.0
    %3309 = vmatpush1.msra.mxu0 0.0
    %3310 = vmatprep.subr.mxu0 0.0
    %3311 = vmatpush1.msra.mxu0 0.0
    %3312 = vmatprep.subr.mxu0 0.0
    %3313 = vmatpush1.msra.mxu0 0.0
    %3314 = vmatprep.subr.mxu0 0.0
    %3315 = vmatpush1.msra.mxu0 0.0
    %3316 = vmatprep.subr.mxu0 0.0
    %3317 = vmatpush1.msra.mxu0 0.0
    %3318 = vmatprep.subr.mxu0 0.0
    %3319 = vmatpush1.msra.mxu0 0.0
    %3320 = vmatprep.subr.mxu0 0.0
    %3321 = vmatpush1.msra.mxu0 0.0
    %3322 = vmatprep.subr.mxu0 0.0
    %3323 = vmatpush1.msra.mxu0 0.0
    %3324 = vmatprep.subr.mxu0 0.0
    %3325 = vmatpush1.msra.mxu0 0.0
    %3326 = vmatprep.subr.mxu0 0.0
    %3327 = vmatpush1.msra.mxu0 0.0
    %3328 = vmatprep.subr.mxu0 0.0
    %3329 = vmatpush1.msra.mxu0 0.0
    %3330 = vmatprep.subr.mxu0 0.0
    %3331 = vmatpush1.msra.mxu0 0.0
    %3332 = vmatprep.subr.mxu0 0.0
    %3333 = vmatpush1.msra.mxu0 0.0
    %3334 = vmatprep.subr.mxu0 0.0
    %3335 = vmatpush1.msra.mxu0 0.0
    %3336 = vmatprep.subr.mxu0 0.0
    %3337 = vmatpush1.msra.mxu0 0.0
    %3338 = vmatprep.subr.mxu0 0.0
    %3339 = vmatpush1.msra.mxu0 0.0
    %3340 = vmatprep.subr.mxu0 0.0
    %3341 = vmatpush1.msra.mxu0 0.0
    %3342 = vmatprep.subr.mxu0 0.0
    %3343 = vmatpush1.msra.mxu0 0.0
    %3344 = vmatprep.mubr.f32.mxu0 0.0
    %3345 = vmatmul.mubr.f32.gmra.mrb[0].mxu0 %v3207
    %v3346 = vpop.f32.mrb[0].mxu0
    %v3347 = vadd.f32 %v432, %v3346
    %v3348 = vpop.f32.mrb[0].mxu0
    %v3349 = vadd.f32 %v436, %v3348
    %3350 = vdwg.mxu0
    %v3351 = vmul.f32 %v3276, 0.5
    %v3352 = vtanh.pop %v3351
    %v3353 = vadd.f32 %v3352, 1.0
    %v3354 = vmul.f32 %v3353, 0.5
    %v3355 = vmul.f32 %v3278, 0.5
    %v3356 = vtanh.pop %v3355
    %v3357 = vadd.f32 %v3356, 1.0
    %v3358 = vmul.f32 %v3357, 0.5
    %v3359 = vmul.f32 %v3354, %v3349
    %v3360 = vadd.f32 %v3347, %v3359
    %v3361 = vtanh.pop %v3360
    %v3362 = vsub.f32 1.0, %v3358
    %v3363 = vmul.f32 %v3362, %v3361
    %v3364 = vmul.f32 %v3358, %v2699
    %v3365 = vadd.f32 %v3363, %v3364
    %3367 = vrot.lane.b32.xlu0 %v2864, 32
    %v3368 = vpop.permute.xlu0 %3367
    %v3370 = vsel %vm225, %v3365, %v3368
    %v3372 = vsel %vm441, %v3370, 0
    %3374 = vmatprep.subr.mxu0 %v605
    %3375 = vmatpush1.msra.mxu0 %v604
    %3376 = vmatprep.subr.mxu0 %v609
    %3377 = vmatpush1.msra.mxu0 %v608
    %3378 = vmatprep.subr.mxu0 %v613
    %3379 = vmatpush1.msra.mxu0 %v612
    %3380 = vmatprep.subr.mxu0 %v617
    %3381 = vmatpush1.msra.mxu0 %v616
    %3382 = vmatprep.subr.mxu0 %v621
    %3383 = vmatpush1.msra.mxu0 %v620
    %3384 = vmatprep.subr.mxu0 %v625
    %3385 = vmatpush1.msra.mxu0 %v624
    %3386 = vmatprep.subr.mxu0 %v629
    %3387 = vmatpush1.msra.mxu0 %v628
    %3388 = vmatprep.subr.mxu0 %v633
    %3389 = vmatpush1.msra.mxu0 %v632
    %3390 = vmatprep.subr.mxu0 0.0
    %3391 = vmatpush1.msra.mxu0 0.0
    %3392 = vmatprep.subr.mxu0 0.0
    %3393 = vmatpush1.msra.mxu0 0.0
    %3394 = vmatprep.subr.mxu0 0.0
    %3395 = vmatpush1.msra.mxu0 0.0
    %3396 = vmatprep.subr.mxu0 0.0
    %3397 = vmatpush1.msra.mxu0 0.0
    %3398 = vmatprep.subr.mxu0 0.0
    %3399 = vmatpush1.msra.mxu0 0.0
    %3400 = vmatprep.subr.mxu0 0.0
    %3401 = vmatpush1.msra.mxu0 0.0
    %3402 = vmatprep.subr.mxu0 0.0
    %3403 = vmatpush1.msra.mxu0 0.0
    %3404 = vmatprep.subr.mxu0 0.0
    %3405 = vmatpush1.msra.mxu0 0.0
    %3406 = vmatprep.subr.mxu0 0.0
    %3407 = vmatpush1.msra.mxu0 0.0
    %3408 = vmatprep.subr.mxu0 0.0
    %3409 = vmatpush1.msra.mxu0 0.0
    %3410 = vmatprep.subr.mxu0 0.0
    %3411 = vmatpush1.msra.mxu0 0.0
    %3412 = vmatprep.subr.mxu0 0.0
    %3413 = vmatpush1.msra.mxu0 0.0
    %3414 = vmatprep.subr.mxu0 0.0
    %3415 = vmatpush1.msra.mxu0 0.0
    %3416 = vmatprep.subr.mxu0 0.0
    %3417 = vmatpush1.msra.mxu0 0.0
    %3418 = vmatprep.subr.mxu0 0.0
    %3419 = vmatpush1.msra.mxu0 0.0
    %3420 = vmatprep.subr.mxu0 0.0
    %3421 = vmatpush1.msra.mxu0 0.0
    %3422 = vmatprep.subr.mxu0 0.0
    %3423 = vmatpush1.msra.mxu0 0.0
    %3424 = vmatprep.subr.mxu0 0.0
    %3425 = vmatpush1.msra.mxu0 0.0
    %3426 = vmatprep.subr.mxu0 0.0
    %3427 = vmatpush1.msra.mxu0 0.0
    %3428 = vmatprep.subr.mxu0 0.0
    %3429 = vmatpush1.msra.mxu0 0.0
    %3430 = vmatprep.subr.mxu0 0.0
    %3431 = vmatpush1.msra.mxu0 0.0
    %3432 = vmatprep.subr.mxu0 0.0
    %3433 = vmatpush1.msra.mxu0 0.0
    %3434 = vmatprep.subr.mxu0 0.0
    %3435 = vmatpush1.msra.mxu0 0.0
    %3436 = vmatprep.subr.mxu0 0.0
    %3437 = vmatpush1.msra.mxu0 0.0
    %3438 = vmatprep.mubr.f32.mxu0 0.0
    %3439 = vmatmul.mubr.f32.gmra.mrb[0].mxu0 %v3372
    %v3440 = vpop.f32.mrb[0].mxu0
    %v3441 = vadd.f32 %v640, %v3440
    %v3442 = vpop.f32.mrb[0].mxu0
    %v3443 = vadd.f32 %v644, %v3442
    %3444 = vdwg.mxu0
    %3445 = vmatprep.subr.mxu0 %v607
    %3446 = vmatpush1.msra.mxu0 %v606
    %3447 = vmatprep.subr.mxu0 %v611
    %3448 = vmatpush1.msra.mxu0 %v610
    %3449 = vmatprep.subr.mxu0 %v615
    %3450 = vmatpush1.msra.mxu0 %v614
    %3451 = vmatprep.subr.mxu0 %v619
    %3452 = vmatpush1.msra.mxu0 %v618
    %3453 = vmatprep.subr.mxu0 %v623
    %3454 = vmatpush1.msra.mxu0 %v622
    %3455 = vmatprep.subr.mxu0 %v627
    %3456 = vmatpush1.msra.mxu0 %v626
    %3457 = vmatprep.subr.mxu0 %v631
    %3458 = vmatpush1.msra.mxu0 %v630
    %3459 = vmatprep.subr.mxu0 %v635
    %3460 = vmatpush1.msra.mxu0 %v634
    %3461 = vmatprep.subr.mxu0 0.0
    %3462 = vmatpush1.msra.mxu0 0.0
    %3463 = vmatprep.subr.mxu0 0.0
    %3464 = vmatpush1.msra.mxu0 0.0
    %3465 = vmatprep.subr.mxu0 0.0
    %3466 = vmatpush1.msra.mxu0 0.0
    %3467 = vmatprep.subr.mxu0 0.0
    %3468 = vmatpush1.msra.mxu0 0.0
    %3469 = vmatprep.subr.mxu0 0.0
    %3470 = vmatpush1.msra.mxu0 0.0
    %3471 = vmatprep.subr.mxu0 0.0
    %3472 = vmatpush1.msra.mxu0 0.0
    %3473 = vmatprep.subr.mxu0 0.0
    %3474 = vmatpush1.msra.mxu0 0.0
    %3475 = vmatprep.subr.mxu0 0.0
    %3476 = vmatpush1.msra.mxu0 0.0
    %3477 = vmatprep.subr.mxu0 0.0
    %3478 = vmatpush1.msra.mxu0 0.0
    %3479 = vmatprep.subr.mxu0 0.0
    %3480 = vmatpush1.msra.mxu0 0.0
    %3481 = vmatprep.subr.mxu0 0.0
    %3482 = vmatpush1.msra.mxu0 0.0
    %3483 = vmatprep.subr.mxu0 0.0
    %3484 = vmatpush1.msra.mxu0 0.0
    %3485 = vmatprep.subr.mxu0 0.0
    %3486 = vmatpush1.msra.mxu0 0.0
    %3487 = vmatprep.subr.mxu0 0.0
    %3488 = vmatpush1.msra.mxu0 0.0
    %3489 = vmatprep.subr.mxu0 0.0
    %3490 = vmatpush1.msra.mxu0 0.0
    %3491 = vmatprep.subr.mxu0 0.0
    %3492 = vmatpush1.msra.mxu0 0.0
    %3493 = vmatprep.subr.mxu0 0.0
    %3494 = vmatpush1.msra.mxu0 0.0
    %3495 = vmatprep.subr.mxu0 0.0
    %3496 = vmatpush1.msra.mxu0 0.0
    %3497 = vmatprep.subr.mxu0 0.0
    %3498 = vmatpush1.msra.mxu0 0.0
    %3499 = vmatprep.subr.mxu0 0.0
    %3500 = vmatpush1.msra.mxu0 0.0
    %3501 = vmatprep.subr.mxu0 0.0
    %3502 = vmatpush1.msra.mxu0 0.0
    %3503 = vmatprep.subr.mxu0 0.0
    %3504 = vmatpush1.msra.mxu0 0.0
    %3505 = vmatprep.subr.mxu0 0.0
    %3506 = vmatpush1.msra.mxu0 0.0
    %3507 = vmatprep.subr.mxu0 0.0
    %3508 = vmatpush1.msra.mxu0 0.0
    %3509 = vmatprep.mubr.f32.mxu0 0.0
    %3510 = vmatmul.mubr.f32.gmra.mrb[0].mxu0 %v3372
    %v3511 = vpop.f32.mrb[0].mxu0
    %v3512 = vadd.f32 %v648, %v3511
    %v3513 = vpop.f32.mrb[0].mxu0
    %v3514 = vadd.f32 %v652, %v3513
    %3515 = vdwg.mxu0
    %v3516 = vmul.f32 %v3441, 0.5
    %v3517 = vtanh.pop %v3516
    %v3518 = vadd.f32 %v3517, 1.0
    %v3519 = vmul.f32 %v3518, 0.5
    %v3520 = vmul.f32 %v3443, 0.5
    %v3521 = vtanh.pop %v3520
    %v3522 = vadd.f32 %v3521, 1.0
    %v3523 = vmul.f32 %v3522, 0.5
    %v3524 = vmul.f32 %v3519, %v3514
    %v3525 = vadd.f32 %v3512, %v3524
    %v3526 = vtanh.pop %v3525
    %v3527 = vsub.f32 1.0, %v3523
    %v3528 = vmul.f32 %v3527, %v3526
    %v3529 = vmul.f32 %v3523, %v2864
    %v3530 = vadd.f32 %v3528, %v3529
    %3532 = vrot.lane.b32.xlu0 %v3029, 32
    %v3533 = vpop.permute.xlu0 %3532
    %v3535 = vsel %vm225, %v3530, %v3533
    %v3537 = vsel %vm441, %v3535, 0
    %3539 = vmatprep.subr.mxu0 %v820
    %3540 = vmatpush1.msra.mxu0 %v819
    %3541 = vmatprep.subr.mxu0 %v824
    %3542 = vmatpush1.msra.mxu0 %v823
    %3543 = vmatprep.subr.mxu0 %v828
    %3544 = vmatpush1.msra.mxu0 %v827
    %3545 = vmatprep.subr.mxu0 %v832
    %3546 = vmatpush1.msra.mxu0 %v831
    %3547 = vmatprep.subr.mxu0 %v836
    %3548 = vmatpush1.msra.mxu0 %v835
    %3549 = vmatprep.subr.mxu0 %v840
    %3550 = vmatpush1.msra.mxu0 %v839
    %3551 = vmatprep.subr.mxu0 %v844
    %3552 = vmatpush1.msra.mxu0 %v843
    %3553 = vmatprep.subr.mxu0 %v848
    %3554 = vmatpush1.msra.mxu0 %v847
    %3555 = vmatprep.subr.mxu0 0.0
    %3556 = vmatpush1.msra.mxu0 0.0
    %3557 = vmatprep.subr.mxu0 0.0
    %3558 = vmatpush1.msra.mxu0 0.0
    %3559 = vmatprep.subr.mxu0 0.0
    %3560 = vmatpush1.msra.mxu0 0.0
    %3561 = vmatprep.subr.mxu0 0.0
    %3562 = vmatpush1.msra.mxu0 0.0
    %3563 = vmatprep.subr.mxu0 0.0
    %3564 = vmatpush1.msra.mxu0 0.0
    %3565 = vmatprep.subr.mxu0 0.0
    %3566 = vmatpush1.msra.mxu0 0.0
    %3567 = vmatprep.subr.mxu0 0.0
    %3568 = vmatpush1.msra.mxu0 0.0
    %3569 = vmatprep.subr.mxu0 0.0
    %3570 = vmatpush1.msra.mxu0 0.0
    %3571 = vmatprep.subr.mxu0 0.0
    %3572 = vmatpush1.msra.mxu0 0.0
    %3573 = vmatprep.subr.mxu0 0.0
    %3574 = vmatpush1.msra.mxu0 0.0
    %3575 = vmatprep.subr.mxu0 0.0
    %3576 = vmatpush1.msra.mxu0 0.0
    %3577 = vmatprep.subr.mxu0 0.0
    %3578 = vmatpush1.msra.mxu0 0.0
    %3579 = vmatprep.subr.mxu0 0.0
    %3580 = vmatpush1.msra.mxu0 0.0
    %3581 = vmatprep.subr.mxu0 0.0
    %3582 = vmatpush1.msra.mxu0 0.0
    %3583 = vmatprep.subr.mxu0 0.0
    %3584 = vmatpush1.msra.mxu0 0.0
    %3585 = vmatprep.subr.mxu0 0.0
    %3586 = vmatpush1.msra.mxu0 0.0
    %3587 = vmatprep.subr.mxu0 0.0
    %3588 = vmatpush1.msra.mxu0 0.0
    %3589 = vmatprep.subr.mxu0 0.0
    %3590 = vmatpush1.msra.mxu0 0.0
    %3591 = vmatprep.subr.mxu0 0.0
    %3592 = vmatpush1.msra.mxu0 0.0
    %3593 = vmatprep.subr.mxu0 0.0
    %3594 = vmatpush1.msra.mxu0 0.0
    %3595 = vmatprep.subr.mxu0 0.0
    %3596 = vmatpush1.msra.mxu0 0.0
    %3597 = vmatprep.subr.mxu0 0.0
    %3598 = vmatpush1.msra.mxu0 0.0
    %3599 = vmatprep.subr.mxu0 0.0
    %3600 = vmatpush1.msra.mxu0 0.0
    %3601 = vmatprep.subr.mxu0 0.0
    %3602 = vmatpush1.msra.mxu0 0.0
    %3603 = vmatprep.mubr.f32.mxu0 0.0
    %3604 = vmatmul.mubr.f32.gmra.mrb[0].mxu0 %v3537
    %v3605 = vpop.f32.mrb[0].mxu0
    %v3606 = vadd.f32 %v855, %v3605
    %v3607 = vpop.f32.mrb[0].mxu0
    %v3608 = vadd.f32 %v859, %v3607
    %3609 = vdwg.mxu0
    %3610 = vmatprep.subr.mxu0 %v822
    %3611 = vmatpush1.msra.mxu0 %v821
    %3612 = vmatprep.subr.mxu0 %v826
    %3613 = vmatpush1.msra.mxu0 %v825
    %3614 = vmatprep.subr.mxu0 %v830
    %3615 = vmatpush1.msra.mxu0 %v829
    %3616 = vmatprep.subr.mxu0 %v834
    %3617 = vmatpush1.msra.mxu0 %v833
    %3618 = vmatprep.subr.mxu0 %v838
    %3619 = vmatpush1.msra.mxu0 %v837
    %3620 = vmatprep.subr.mxu0 %v842
    %3621 = vmatpush1.msra.mxu0 %v841
    %3622 = vmatprep.subr.mxu0 %v846
    %3623 = vmatpush1.msra.mxu0 %v845
    %3624 = vmatprep.subr.mxu0 %v850
    %3625 = vmatpush1.msra.mxu0 %v849
    %3626 = vmatprep.subr.mxu0 0.0
    %3627 = vmatpush1.msra.mxu0 0.0
    %3628 = vmatprep.subr.mxu0 0.0
    %3629 = vmatpush1.msra.mxu0 0.0
    %3630 = vmatprep.subr.mxu0 0.0
    %3631 = vmatpush1.msra.mxu0 0.0
    %3632 = vmatprep.subr.mxu0 0.0
    %3633 = vmatpush1.msra.mxu0 0.0
    %3634 = vmatprep.subr.mxu0 0.0
    %3635 = vmatpush1.msra.mxu0 0.0
    %3636 = vmatprep.subr.mxu0 0.0
    %3637 = vmatpush1.msra.mxu0 0.0
    %3638 = vmatprep.subr.mxu0 0.0
    %3639 = vmatpush1.msra.mxu0 0.0
    %3640 = vmatprep.subr.mxu0 0.0
    %3641 = vmatpush1.msra.mxu0 0.0
    %3642 = vmatprep.subr.mxu0 0.0
    %3643 = vmatpush1.msra.mxu0 0.0
    %3644 = vmatprep.subr.mxu0 0.0
    %3645 = vmatpush1.msra.mxu0 0.0
    %3646 = vmatprep.subr.mxu0 0.0
    %3647 = vmatpush1.msra.mxu0 0.0
    %3648 = vmatprep.subr.mxu0 0.0
    %3649 = vmatpush1.msra.mxu0 0.0
    %3650 = vmatprep.subr.mxu0 0.0
    %3651 = vmatpush1.msra.mxu0 0.0
    %3652 = vmatprep.subr.mxu0 0.0
    %3653 = vmatpush1.msra.mxu0 0.0
    %3654 = vmatprep.subr.mxu0 0.0
    %3655 = vmatpush1.msra.mxu0 0.0
    %3656 = vmatprep.subr.mxu0 0.0
    %3657 = vmatpush1.msra.mxu0 0.0
    %3658 = vmatprep.subr.mxu0 0.0
    %3659 = vmatpush1.msra.mxu0 0.0
    %3660 = vmatprep.subr.mxu0 0.0
    %3661 = vmatpush1.msra.mxu0 0.0
    %3662 = vmatprep.subr.mxu0 0.0
    %3663 = vmatpush1.msra.mxu0 0.0
    %3664 = vmatprep.subr.mxu0 0.0
    %3665 = vmatpush1.msra.mxu0 0.0
    %3666 = vmatprep.subr.mxu0 0.0
    %3667 = vmatpush1.msra.mxu0 0.0
    %3668 = vmatprep.subr.mxu0 0.0
    %3669 = vmatpush1.msra.mxu0 0.0
    %3670 = vmatprep.subr.mxu0 0.0
    %3671 = vmatpush1.msra.mxu0 0.0
    %3672 = vmatprep.subr.mxu0 0.0
    %3673 = vmatpush1.msra.mxu0 0.0
    %3674 = vmatprep.mubr.f32.mxu0 0.0
    %3675 = vmatmul.mubr.f32.gmra.mrb[0].mxu0 %v3537
    %v3676 = vpop.f32.mrb[0].mxu0
    %v3677 = vadd.f32 %v863, %v3676
    %v3678 = vpop.f32.mrb[0].mxu0
    %v3679 = vadd.f32 %v867, %v3678
    %3680 = vdwg.mxu0
    %v3681 = vmul.f32 %v3606, 0.5
    %v3682 = vtanh.pop %v3681
    %v3683 = vadd.f32 %v3682, 1.0
    %v3684 = vmul.f32 %v3683, 0.5
    %v3685 = vmul.f32 %v3608, 0.5
    %v3686 = vtanh.pop %v3685
    %v3687 = vadd.f32 %v3686, 1.0
    %v3688 = vmul.f32 %v3687, 0.5
    %v3689 = vmul.f32 %v3684, %v3679
    %v3690 = vadd.f32 %v3677, %v3689
    %v3691 = vtanh.pop %v3690
    %v3692 = vsub.f32 1.0, %v3688
    %v3693 = vmul.f32 %v3692, %v3691
    %v3694 = vmul.f32 %v3688, %v3029
    %v3695 = vadd.f32 %v3693, %v3694
    %3696 = vset.pattern.permute.xlu0 5
    %3697 = vperm.xlu0 %3696, %v145
    %v3698 = vpop.permute.xlu0 %3697
    %v3700 = vmul.f32 %v3698, %v175
    %v3701 = vmul.f32 %v3698, %v179
    %v3702 = vmul.f32 %v3698, %v183
    %v3703 = vadd.f32 %v3700, %v194
    %v3704 = vadd.f32 %v3701, %v198
    %v3705 = vadd.f32 %v3702, %v202
    %v3707 = vsel %vm225, %v3200, 0
    %3709 = vmatprep.subr.mxu0 %v149
    %3710 = vmatpush1.msra.mxu0 %v148
    %3711 = vmatprep.subr.mxu0 %v152
    %3712 = vmatpush1.msra.mxu0 %v151
    %3713 = vmatprep.subr.mxu0 %v155
    %3714 = vmatpush1.msra.mxu0 %v154
    %3715 = vmatprep.subr.mxu0 %v158
    %3716 = vmatpush1.msra.mxu0 %v157
    %3717 = vmatprep.subr.mxu0 0.0
    %3718 = vmatpush1.msra.mxu0 0.0
    %3719 = vmatprep.subr.mxu0 0.0
    %3720 = vmatpush1.msra.mxu0 0.0
    %3721 = vmatprep.subr.mxu0 0.0
    %3722 = vmatpush1.msra.mxu0 0.0
    %3723 = vmatprep.subr.mxu0 0.0
    %3724 = vmatpush1.msra.mxu0 0.0
    %3725 = vmatprep.subr.mxu0 0.0
    %3726 = vmatpush1.msra.mxu0 0.0
    %3727 = vmatprep.subr.mxu0 0.0
    %3728 = vmatpush1.msra.mxu0 0.0
    %3729 = vmatprep.subr.mxu0 0.0
    %3730 = vmatpush1.msra.mxu0 0.0
    %3731 = vmatprep.subr.mxu0 0.0
    %3732 = vmatpush1.msra.mxu0 0.0
    %3733 = vmatprep.subr.mxu0 0.0
    %3734 = vmatpush1.msra.mxu0 0.0
    %3735 = vmatprep.subr.mxu0 0.0
    %3736 = vmatpush1.msra.mxu0 0.0
    %3737 = vmatprep.subr.mxu0 0.0
    %3738 = vmatpush1.msra.mxu0 0.0
    %3739 = vmatprep.subr.mxu0 0.0
    %3740 = vmatpush1.msra.mxu0 0.0
    %3741 = vmatprep.subr.mxu0 0.0
    %3742 = vmatpush1.msra.mxu0 0.0
    %3743 = vmatprep.subr.mxu0 0.0
    %3744 = vmatpush1.msra.mxu0 0.0
    %3745 = vmatprep.subr.mxu0 0.0
    %3746 = vmatpush1.msra.mxu0 0.0
    %3747 = vmatprep.subr.mxu0 0.0
    %3748 = vmatpush1.msra.mxu0 0.0
    %3749 = vmatprep.subr.mxu0 0.0
    %3750 = vmatpush1.msra.mxu0 0.0
    %3751 = vmatprep.subr.mxu0 0.0
    %3752 = vmatpush1.msra.mxu0 0.0
    %3753 = vmatprep.subr.mxu0 0.0
    %3754 = vmatpush1.msra.mxu0 0.0
    %3755 = vmatprep.subr.mxu0 0.0
    %3756 = vmatpush1.msra.mxu0 0.0
    %3757 = vmatprep.subr.mxu0 0.0
    %3758 = vmatpush1.msra.mxu0 0.0
    %3759 = vmatprep.subr.mxu0 0.0
    %3760 = vmatpush1.msra.mxu0 0.0
    %3761 = vmatprep.subr.mxu0 0.0
    %3762 = vmatpush1.msra.mxu0 0.0
    %3763 = vmatprep.subr.mxu0 0.0
    %3764 = vmatpush1.msra.mxu0 0.0
    %3765 = vmatprep.subr.mxu0 0.0
    %3766 = vmatpush1.msra.mxu0 0.0
    %3767 = vmatprep.subr.mxu0 0.0
    %3768 = vmatpush1.msra.mxu0 0.0
    %3769 = vmatprep.subr.mxu0 0.0
    %3770 = vmatpush1.msra.mxu0 0.0
    %3771 = vmatprep.subr.mxu0 0.0
    %3772 = vmatpush1.msra.mxu0 0.0
    %3773 = vmatprep.mubr.f32.mxu0 0.0
    %3774 = vmatmul.mubr.f32.gmra.mrb[0].mxu0 %v3707
    %v3775 = vpop.f32.mrb[0].mxu0
    %v3776 = vadd.f32 %v213, %v3775
    %v3777 = vpop.f32.mrb[0].mxu0
    %v3778 = vadd.f32 %v217, %v3777
    %3779 = vdwg.mxu0
    %3780 = vmatprep.subr.mxu0 0.0
    %3781 = vmatpush1.msra.mxu0 %v150
    %3782 = vmatprep.subr.mxu0 0.0
    %3783 = vmatpush1.msra.mxu0 %v153
    %3784 = vmatprep.subr.mxu0 0.0
    %3785 = vmatpush1.msra.mxu0 %v156
    %3786 = vmatprep.subr.mxu0 0.0
    %3787 = vmatpush1.msra.mxu0 %v159
    %3788 = vmatprep.subr.mxu0 0.0
    %3789 = vmatpush1.msra.mxu0 0.0
    %3790 = vmatprep.subr.mxu0 0.0
    %3791 = vmatpush1.msra.mxu0 0.0
    %3792 = vmatprep.subr.mxu0 0.0
    %3793 = vmatpush1.msra.mxu0 0.0
    %3794 = vmatprep.subr.mxu0 0.0
    %3795 = vmatpush1.msra.mxu0 0.0
    %3796 = vmatprep.subr.mxu0 0.0
    %3797 = vmatpush1.msra.mxu0 0.0
    %3798 = vmatprep.subr.mxu0 0.0
    %3799 = vmatpush1.msra.mxu0 0.0
    %3800 = vmatprep.subr.mxu0 0.0
    %3801 = vmatpush1.msra.mxu0 0.0
    %3802 = vmatprep.subr.mxu0 0.0
    %3803 = vmatpush1.msra.mxu0 0.0
    %3804 = vmatprep.subr.mxu0 0.0
    %3805 = vmatpush1.msra.mxu0 0.0
    %3806 = vmatprep.subr.mxu0 0.0
    %3807 = vmatpush1.msra.mxu0 0.0
    %3808 = vmatprep.subr.mxu0 0.0
    %3809 = vmatpush1.msra.mxu0 0.0
    %3810 = vmatprep.subr.mxu0 0.0
    %3811 = vmatpush1.msra.mxu0 0.0
    %3812 = vmatprep.subr.mxu0 0.0
    %3813 = vmatpush1.msra.mxu0 0.0
    %3814 = vmatprep.subr.mxu0 0.0
    %3815 = vmatpush1.msra.mxu0 0.0
    %3816 = vmatprep.subr.mxu0 0.0
    %3817 = vmatpush1.msra.mxu0 0.0
    %3818 = vmatprep.subr.mxu0 0.0
    %3819 = vmatpush1.msra.mxu0 0.0
    %3820 = vmatprep.subr.mxu0 0.0
    %3821 = vmatpush1.msra.mxu0 0.0
    %3822 = vmatprep.subr.mxu0 0.0
    %3823 = vmatpush1.msra.mxu0 0.0
    %3824 = vmatprep.subr.mxu0 0.0
    %3825 = vmatpush1.msra.mxu0 0.0
    %3826 = vmatprep.subr.mxu0 0.0
    %3827 = vmatpush1.msra.mxu0 0.0
    %3828 = vmatprep.subr.mxu0 0.0
    %3829 = vmatpush1.msra.mxu0 0.0
    %3830 = vmatprep.subr.mxu0 0.0
    %3831 = vmatpush1.msra.mxu0 0.0
    %3832 = vmatprep.subr.mxu0 0.0
    %3833 = vmatpush1.msra.mxu0 0.0
    %3834 = vmatprep.subr.mxu0 0.0
    %3835 = vmatpush1.msra.mxu0 0.0
    %3836 = vmatprep.subr.mxu0 0.0
    %3837 = vmatpush1.msra.mxu0 0.0
    %3838 = vmatprep.subr.mxu0 0.0
    %3839 = vmatpush1.msra.mxu0 0.0
    %3840 = vmatprep.subr.mxu0 0.0
    %3841 = vmatpush1.msra.mxu0 0.0
    %3842 = vmatprep.subr.mxu0 0.0
    %3843 = vmatpush1.msra.mxu0 0.0
    %3844 = vmatprep.mubr.f32.mxu0 0.0
    %3845 = vmatmul.mubr.f32.gmra.mrb[0].mxu0 %v3707
    %v3846 = vpop.f32.mrb[0].mxu0
    %v3847 = vadd.f32 %v221, %v3846
    %v3848 = vpop.f32.mrb[0].mxu0
    %3849 = vdwg.mxu0
    %v3850 = vadd.f32 %v3703, %v3776
    %v3851 = vmul.f32 %v3850, 0.5
    %v3852 = vtanh.pop %v3851
    %v3853 = vadd.f32 %v3852, 1.0
    %v3854 = vmul.f32 %v3853, 0.5
    %v3855 = vadd.f32 %v3704, %v3778
    %v3856 = vmul.f32 %v3855, 0.5
    %v3857 = vtanh.pop %v3856
    %v3858 = vadd.f32 %v3857, 1.0
    %v3859 = vmul.f32 %v3858, 0.5
    %v3860 = vmul.f32 %v3854, %v3847
    %v3861 = vadd.f32 %v3705, %v3860
    %v3862 = vtanh.pop %v3861
    %v3863 = vsub.f32 1.0, %v3859
    %v3864 = vmul.f32 %v3863, %v3862
    %v3865 = vmul.f32 %v3859, %v3200
    %v3866 = vadd.f32 %v3864, %v3865
    %3868 = vrot.lane.b32.xlu0 %v3365, 32
    %v3869 = vpop.permute.xlu0 %3868
    %v3871 = vsel %vm225, %v3866, %v3869
    %v3873 = vsel %vm441, %v3871, 0
    %3875 = vmatprep.subr.mxu0 %v389
    %3876 = vmatpush1.msra.mxu0 %v388
    %3877 = vmatprep.subr.mxu0 %v393
    %3878 = vmatpush1.msra.mxu0 %v392
    %3879 = vmatprep.subr.mxu0 %v397
    %3880 = vmatpush1.msra.mxu0 %v396
    %3881 = vmatprep.subr.mxu0 %v401
    %3882 = vmatpush1.msra.mxu0 %v400
    %3883 = vmatprep.subr.mxu0 %v405
    %3884 = vmatpush1.msra.mxu0 %v404
    %3885 = vmatprep.subr.mxu0 %v409
    %3886 = vmatpush1.msra.mxu0 %v408
    %3887 = vmatprep.subr.mxu0 %v413
    %3888 = vmatpush1.msra.mxu0 %v412
    %3889 = vmatprep.subr.mxu0 %v417
    %3890 = vmatpush1.msra.mxu0 %v416
    %3891 = vmatprep.subr.mxu0 0.0
    %3892 = vmatpush1.msra.mxu0 0.0
    %3893 = vmatprep.subr.mxu0 0.0
    %3894 = vmatpush1.msra.mxu0 0.0
    %3895 = vmatprep.subr.mxu0 0.0
    %3896 = vmatpush1.msra.mxu0 0.0
    %3897 = vmatprep.subr.mxu0 0.0
    %3898 = vmatpush1.msra.mxu0 0.0
    %3899 = vmatprep.subr.mxu0 0.0
    %3900 = vmatpush1.msra.mxu0 0.0
    %3901 = vmatprep.subr.mxu0 0.0
    %3902 = vmatpush1.msra.mxu0 0.0
    %3903 = vmatprep.subr.mxu0 0.0
    %3904 = vmatpush1.msra.mxu0 0.0
    %3905 = vmatprep.subr.mxu0 0.0
    %3906 = vmatpush1.msra.mxu0 0.0
    %3907 = vmatprep.subr.mxu0 0.0
    %3908 = vmatpush1.msra.mxu0 0.0
    %3909 = vmatprep.subr.mxu0 0.0
    %3910 = vmatpush1.msra.mxu0 0.0
    %3911 = vmatprep.subr.mxu0 0.0
    %3912 = vmatpush1.msra.mxu0 0.0
    %3913 = vmatprep.subr.mxu0 0.0
    %3914 = vmatpush1.msra.mxu0 0.0
    %3915 = vmatprep.subr.mxu0 0.0
    %3916 = vmatpush1.msra.mxu0 0.0
    %3917 = vmatprep.subr.mxu0 0.0
    %3918 = vmatpush1.msra.mxu0 0.0
    %3919 = vmatprep.subr.mxu0 0.0
    %3920 = vmatpush1.msra.mxu0 0.0
    %3921 = vmatprep.subr.mxu0 0.0
    %3922 = vmatpush1.msra.mxu0 0.0
    %3923 = vmatprep.subr.mxu0 0.0
    %3924 = vmatpush1.msra.mxu0 0.0
    %3925 = vmatprep.subr.mxu0 0.0
    %3926 = vmatpush1.msra.mxu0 0.0
    %3927 = vmatprep.subr.mxu0 0.0
    %3928 = vmatpush1.msra.mxu0 0.0
    %3929 = vmatprep.subr.mxu0 0.0
    %3930 = vmatpush1.msra.mxu0 0.0
    %3931 = vmatprep.subr.mxu0 0.0
    %3932 = vmatpush1.msra.mxu0 0.0
    %3933 = vmatprep.subr.mxu0 0.0
    %3934 = vmatpush1.msra.mxu0 0.0
    %3935 = vmatprep.subr.mxu0 0.0
    %3936 = vmatpush1.msra.mxu0 0.0
    %3937 = vmatprep.subr.mxu0 0.0
    %3938 = vmatpush1.msra.mxu0 0.0
    %3939 = vmatprep.mubr.f32.mxu0 0.0
    %3940 = vmatmul.mubr.f32.gmra.mrb[0].mxu0 %v3873
    %v3941 = vpop.f32.mrb[0].mxu0
    %v3942 = vadd.f32 %v424, %v3941
    %v3943 = vpop.f32.mrb[0].mxu0
    %v3944 = vadd.f32 %v428, %v3943
    %3945 = vdwg.mxu0
    %3946 = vmatprep.subr.mxu0 %v391
    %3947 = vmatpush1.msra.mxu0 %v390
    %3948 = vmatprep.subr.mxu0 %v395
    %3949 = vmatpush1.msra.mxu0 %v394
    %3950 = vmatprep.subr.mxu0 %v399
    %3951 = vmatpush1.msra.mxu0 %v398
    %3952 = vmatprep.subr.mxu0 %v403
    %3953 = vmatpush1.msra.mxu0 %v402
    %3954 = vmatprep.subr.mxu0 %v407
    %3955 = vmatpush1.msra.mxu0 %v406
    %3956 = vmatprep.subr.mxu0 %v411
    %3957 = vmatpush1.msra.mxu0 %v410
    %3958 = vmatprep.subr.mxu0 %v415
    %3959 = vmatpush1.msra.mxu0 %v414
    %3960 = vmatprep.subr.mxu0 %v419
    %3961 = vmatpush1.msra.mxu0 %v418
    %3962 = vmatprep.subr.mxu0 0.0
    %3963 = vmatpush1.msra.mxu0 0.0
    %3964 = vmatprep.subr.mxu0 0.0
    %3965 = vmatpush1.msra.mxu0 0.0
    %3966 = vmatprep.subr.mxu0 0.0
    %3967 = vmatpush1.msra.mxu0 0.0
    %3968 = vmatprep.subr.mxu0 0.0
    %3969 = vmatpush1.msra.mxu0 0.0
    %3970 = vmatprep.subr.mxu0 0.0
    %3971 = vmatpush1.msra.mxu0 0.0
    %3972 = vmatprep.subr.mxu0 0.0
    %3973 = vmatpush1.msra.mxu0 0.0
    %3974 = vmatprep.subr.mxu0 0.0
    %3975 = vmatpush1.msra.mxu0 0.0
    %3976 = vmatprep.subr.mxu0 0.0
    %3977 = vmatpush1.msra.mxu0 0.0
    %3978 = vmatprep.subr.mxu0 0.0
    %3979 = vmatpush1.msra.mxu0 0.0
    %3980 = vmatprep.subr.mxu0 0.0
    %3981 = vmatpush1.msra.mxu0 0.0
    %3982 = vmatprep.subr.mxu0 0.0
    %3983 = vmatpush1.msra.mxu0 0.0
    %3984 = vmatprep.subr.mxu0 0.0
    %3985 = vmatpush1.msra.mxu0 0.0
    %3986 = vmatprep.subr.mxu0 0.0
    %3987 = vmatpush1.msra.mxu0 0.0
    %3988 = vmatprep.subr.mxu0 0.0
    %3989 = vmatpush1.msra.mxu0 0.0
    %3990 = vmatprep.subr.mxu0 0.0
    %3991 = vmatpush1.msra.mxu0 0.0
    %3992 = vmatprep.subr.mxu0 0.0
    %3993 = vmatpush1.msra.mxu0 0.0
    %3994 = vmatprep.subr.mxu0 0.0
    %3995 = vmatpush1.msra.mxu0 0.0
    %3996 = vmatprep.subr.mxu0 0.0
    %3997 = vmatpush1.msra.mxu0 0.0
    %3998 = vmatprep.subr.mxu0 0.0
    %3999 = vmatpush1.msra.mxu0 0.0
    %4000 = vmatprep.subr.mxu0 0.0
    %4001 = vmatpush1.msra.mxu0 0.0
    %4002 = vmatprep.subr.mxu0 0.0
    %4003 = vmatpush1.msra.mxu0 0.0
    %4004 = vmatprep.subr.mxu0 0.0
    %4005 = vmatpush1.msra.mxu0 0.0
    %4006 = vmatprep.subr.mxu0 0.0
    %4007 = vmatpush1.msra.mxu0 0.0
    %4008 = vmatprep.subr.mxu0 0.0
    %4009 = vmatpush1.msra.mxu0 0.0
    %4010 = vmatprep.mubr.f32.mxu0 0.0
    %4011 = vmatmul.mubr.f32.gmra.mrb[0].mxu0 %v3873
    %v4012 = vpop.f32.mrb[0].mxu0
    %v4013 = vadd.f32 %v432, %v4012
    %v4014 = vpop.f32.mrb[0].mxu0
    %v4015 = vadd.f32 %v436, %v4014
    %4016 = vdwg.mxu0
    %v4017 = vmul.f32 %v3942, 0.5
    %v4018 = vtanh.pop %v4017
    %v4019 = vadd.f32 %v4018, 1.0
    %v4020 = vmul.f32 %v4019, 0.5
    %v4021 = vmul.f32 %v3944, 0.5
    %v4022 = vtanh.pop %v4021
    %v4023 = vadd.f32 %v4022, 1.0
    %v4024 = vmul.f32 %v4023, 0.5
    %v4025 = vmul.f32 %v4020, %v4015
    %v4026 = vadd.f32 %v4013, %v4025
    %v4027 = vtanh.pop %v4026
    %v4028 = vsub.f32 1.0, %v4024
    %v4029 = vmul.f32 %v4028, %v4027
    %v4030 = vmul.f32 %v4024, %v3365
    %v4031 = vadd.f32 %v4029, %v4030
    %4033 = vrot.lane.b32.xlu0 %v3530, 32
    %v4034 = vpop.permute.xlu0 %4033
    %v4036 = vsel %vm225, %v4031, %v4034
    %v4038 = vsel %vm441, %v4036, 0
    %4040 = vmatprep.subr.mxu0 %v605
    %4041 = vmatpush1.msra.mxu0 %v604
    %4042 = vmatprep.subr.mxu0 %v609
    %4043 = vmatpush1.msra.mxu0 %v608
    %4044 = vmatprep.subr.mxu0 %v613
    %4045 = vmatpush1.msra.mxu0 %v612
    %4046 = vmatprep.subr.mxu0 %v617
    %4047 = vmatpush1.msra.mxu0 %v616
    %4048 = vmatprep.subr.mxu0 %v621
    %4049 = vmatpush1.msra.mxu0 %v620
    %4050 = vmatprep.subr.mxu0 %v625
    %4051 = vmatpush1.msra.mxu0 %v624
    %4052 = vmatprep.subr.mxu0 %v629
    %4053 = vmatpush1.msra.mxu0 %v628
    %4054 = vmatprep.subr.mxu0 %v633
    %4055 = vmatpush1.msra.mxu0 %v632
    %4056 = vmatprep.subr.mxu0 0.0
    %4057 = vmatpush1.msra.mxu0 0.0
    %4058 = vmatprep.subr.mxu0 0.0
    %4059 = vmatpush1.msra.mxu0 0.0
    %4060 = vmatprep.subr.mxu0 0.0
    %4061 = vmatpush1.msra.mxu0 0.0
    %4062 = vmatprep.subr.mxu0 0.0
    %4063 = vmatpush1.msra.mxu0 0.0
    %4064 = vmatprep.subr.mxu0 0.0
    %4065 = vmatpush1.msra.mxu0 0.0
    %4066 = vmatprep.subr.mxu0 0.0
    %4067 = vmatpush1.msra.mxu0 0.0
    %4068 = vmatprep.subr.mxu0 0.0
    %4069 = vmatpush1.msra.mxu0 0.0
    %4070 = vmatprep.subr.mxu0 0.0
    %4071 = vmatpush1.msra.mxu0 0.0
    %4072 = vmatprep.subr.mxu0 0.0
    %4073 = vmatpush1.msra.mxu0 0.0
    %4074 = vmatprep.subr.mxu0 0.0
    %4075 = vmatpush1.msra.mxu0 0.0
    %4076 = vmatprep.subr.mxu0 0.0
    %4077 = vmatpush1.msra.mxu0 0.0
    %4078 = vmatprep.subr.mxu0 0.0
    %4079 = vmatpush1.msra.mxu0 0.0
    %4080 = vmatprep.subr.mxu0 0.0
    %4081 = vmatpush1.msra.mxu0 0.0
    %4082 = vmatprep.subr.mxu0 0.0
    %4083 = vmatpush1.msra.mxu0 0.0
    %4084 = vmatprep.subr.mxu0 0.0
    %4085 = vmatpush1.msra.mxu0 0.0
    %4086 = vmatprep.subr.mxu0 0.0
    %4087 = vmatpush1.msra.mxu0 0.0
    %4088 = vmatprep.subr.mxu0 0.0
    %4089 = vmatpush1.msra.mxu0 0.0
    %4090 = vmatprep.subr.mxu0 0.0
    %4091 = vmatpush1.msra.mxu0 0.0
    %4092 = vmatprep.subr.mxu0 0.0
    %4093 = vmatpush1.msra.mxu0 0.0
    %4094 = vmatprep.subr.mxu0 0.0
    %4095 = vmatpush1.msra.mxu0 0.0
    %4096 = vmatprep.subr.mxu0 0.0
    %4097 = vmatpush1.msra.mxu0 0.0
    %4098 = vmatprep.subr.mxu0 0.0
    %4099 = vmatpush1.msra.mxu0 0.0
    %4100 = vmatprep.subr.mxu0 0.0
    %4101 = vmatpush1.msra.mxu0 0.0
    %4102 = vmatprep.subr.mxu0 0.0
    %4103 = vmatpush1.msra.mxu0 0.0
    %4104 = vmatprep.mubr.f32.mxu0 0.0
    %4105 = vmatmul.mubr.f32.gmra.mrb[0].mxu0 %v4038
    %v4106 = vpop.f32.mrb[0].mxu0
    %v4107 = vadd.f32 %v640, %v4106
    %v4108 = vpop.f32.mrb[0].mxu0
    %v4109 = vadd.f32 %v644, %v4108
    %4110 = vdwg.mxu0
    %4111 = vmatprep.subr.mxu0 %v607
    %4112 = vmatpush1.msra.mxu0 %v606
    %4113 = vmatprep.subr.mxu0 %v611
    %4114 = vmatpush1.msra.mxu0 %v610
    %4115 = vmatprep.subr.mxu0 %v615
    %4116 = vmatpush1.msra.mxu0 %v614
    %4117 = vmatprep.subr.mxu0 %v619
    %4118 = vmatpush1.msra.mxu0 %v618
    %4119 = vmatprep.subr.mxu0 %v623
    %4120 = vmatpush1.msra.mxu0 %v622
    %4121 = vmatprep.subr.mxu0 %v627
    %4122 = vmatpush1.msra.mxu0 %v626
    %4123 = vmatprep.subr.mxu0 %v631
    %4124 = vmatpush1.msra.mxu0 %v630
    %4125 = vmatprep.subr.mxu0 %v635
    %4126 = vmatpush1.msra.mxu0 %v634
    %4127 = vmatprep.subr.mxu0 0.0
    %4128 = vmatpush1.msra.mxu0 0.0
    %4129 = vmatprep.subr.mxu0 0.0
    %4130 = vmatpush1.msra.mxu0 0.0
    %4131 = vmatprep.subr.mxu0 0.0
    %4132 = vmatpush1.msra.mxu0 0.0
    %4133 = vmatprep.subr.mxu0 0.0
    %4134 = vmatpush1.msra.mxu0 0.0
    %4135 = vmatprep.subr.mxu0 0.0
    %4136 = vmatpush1.msra.mxu0 0.0
    %4137 = vmatprep.subr.mxu0 0.0
    %4138 = vmatpush1.msra.mxu0 0.0
    %4139 = vmatprep.subr.mxu0 0.0
    %4140 = vmatpush1.msra.mxu0 0.0
    %4141 = vmatprep.subr.mxu0 0.0
    %4142 = vmatpush1.msra.mxu0 0.0
    %4143 = vmatprep.subr.mxu0 0.0
    %4144 = vmatpush1.msra.mxu0 0.0
    %4145 = vmatprep.subr.mxu0 0.0
    %4146 = vmatpush1.msra.mxu0 0.0
    %4147 = vmatprep.subr.mxu0 0.0
    %4148 = vmatpush1.msra.mxu0 0.0
    %4149 = vmatprep.subr.mxu0 0.0
    %4150 = vmatpush1.msra.mxu0 0.0
    %4151 = vmatprep.subr.mxu0 0.0
    %4152 = vmatpush1.msra.mxu0 0.0
    %4153 = vmatprep.subr.mxu0 0.0
    %4154 = vmatpush1.msra.mxu0 0.0
    %4155 = vmatprep.subr.mxu0 0.0
    %4156 = vmatpush1.msra.mxu0 0.0
    %4157 = vmatprep.subr.mxu0 0.0
    %4158 = vmatpush1.msra.mxu0 0.0
    %4159 = vmatprep.subr.mxu0 0.0
    %4160 = vmatpush1.msra.mxu0 0.0
    %4161 = vmatprep.subr.mxu0 0.0
    %4162 = vmatpush1.msra.mxu0 0.0
    %4163 = vmatprep.subr.mxu0 0.0
    %4164 = vmatpush1.msra.mxu0 0.0
    %4165 = vmatprep.subr.mxu0 0.0
    %4166 = vmatpush1.msra.mxu0 0.0
    %4167 = vmatprep.subr.mxu0 0.0
    %4168 = vmatpush1.msra.mxu0 0.0
    %4169 = vmatprep.subr.mxu0 0.0
    %4170 = vmatpush1.msra.mxu0 0.0
    %4171 = vmatprep.subr.mxu0 0.0
    %4172 = vmatpush1.msra.mxu0 0.0
    %4173 = vmatprep.subr.mxu0 0.0
    %4174 = vmatpush1.msra.mxu0 0.0
    %4175 = vmatprep.mubr.f32.mxu0 0.0
    %4176 = vmatmul.mubr.f32.gmra.mrb[0].mxu0 %v4038
    %v4177 = vpop.f32.mrb[0].mxu0
    %v4178 = vadd.f32 %v648, %v4177
    %v4179 = vpop.f32.mrb[0].mxu0
    %v4180 = vadd.f32 %v652, %v4179
    %4181 = vdwg.mxu0
    %v4182 = vmul.f32 %v4107, 0.5
    %v4183 = vtanh.pop %v4182
    %v4184 = vadd.f32 %v4183, 1.0
    %v4185 = vmul.f32 %v4184, 0.5
    %v4186 = vmul.f32 %v4109, 0.5
    %v4187 = vtanh.pop %v4186
    %v4188 = vadd.f32 %v4187, 1.0
    %v4189 = vmul.f32 %v4188, 0.5
    %v4190 = vmul.f32 %v4185, %v4180
    %v4191 = vadd.f32 %v4178, %v4190
    %v4192 = vtanh.pop %v4191
    %v4193 = vsub.f32 1.0, %v4189
    %v4194 = vmul.f32 %v4193, %v4192
    %v4195 = vmul.f32 %v4189, %v3530
    %v4196 = vadd.f32 %v4194, %v4195
    %4198 = vrot.lane.b32.xlu0 %v3695, 32
    %v4199 = vpop.permute.xlu0 %4198
    %v4201 = vsel %vm225, %v4196, %v4199
    %v4203 = vsel %vm441, %v4201, 0
    %4205 = vmatprep.subr.mxu0 %v820
    %4206 = vmatpush1.msra.mxu0 %v819
    %4207 = vmatprep.subr.mxu0 %v824
    %4208 = vmatpush1.msra.mxu0 %v823
    %4209 = vmatprep.subr.mxu0 %v828
    %4210 = vmatpush1.msra.mxu0 %v827
    %4211 = vmatprep.subr.mxu0 %v832
    %4212 = vmatpush1.msra.mxu0 %v831
    %4213 = vmatprep.subr.mxu0 %v836
    %4214 = vmatpush1.msra.mxu0 %v835
    %4215 = vmatprep.subr.mxu0 %v840
    %4216 = vmatpush1.msra.mxu0 %v839
    %4217 = vmatprep.subr.mxu0 %v844
    %4218 = vmatpush1.msra.mxu0 %v843
    %4219 = vmatprep.subr.mxu0 %v848
    %4220 = vmatpush1.msra.mxu0 %v847
    %4221 = vmatprep.subr.mxu0 0.0
    %4222 = vmatpush1.msra.mxu0 0.0
    %4223 = vmatprep.subr.mxu0 0.0
    %4224 = vmatpush1.msra.mxu0 0.0
    %4225 = vmatprep.subr.mxu0 0.0
    %4226 = vmatpush1.msra.mxu0 0.0
    %4227 = vmatprep.subr.mxu0 0.0
    %4228 = vmatpush1.msra.mxu0 0.0
    %4229 = vmatprep.subr.mxu0 0.0
    %4230 = vmatpush1.msra.mxu0 0.0
    %4231 = vmatprep.subr.mxu0 0.0
    %4232 = vmatpush1.msra.mxu0 0.0
    %4233 = vmatprep.subr.mxu0 0.0
    %4234 = vmatpush1.msra.mxu0 0.0
    %4235 = vmatprep.subr.mxu0 0.0
    %4236 = vmatpush1.msra.mxu0 0.0
    %4237 = vmatprep.subr.mxu0 0.0
    %4238 = vmatpush1.msra.mxu0 0.0
    %4239 = vmatprep.subr.mxu0 0.0
    %4240 = vmatpush1.msra.mxu0 0.0
    %4241 = vmatprep.subr.mxu0 0.0
    %4242 = vmatpush1.msra.mxu0 0.0
    %4243 = vmatprep.subr.mxu0 0.0
    %4244 = vmatpush1.msra.mxu0 0.0
    %4245 = vmatprep.subr.mxu0 0.0
    %4246 = vmatpush1.msra.mxu0 0.0
    %4247 = vmatprep.subr.mxu0 0.0
    %4248 = vmatpush1.msra.mxu0 0.0
    %4249 = vmatprep.subr.mxu0 0.0
    %4250 = vmatpush1.msra.mxu0 0.0
    %4251 = vmatprep.subr.mxu0 0.0
    %4252 = vmatpush1.msra.mxu0 0.0
    %4253 = vmatprep.subr.mxu0 0.0
    %4254 = vmatpush1.msra.mxu0 0.0
    %4255 = vmatprep.subr.mxu0 0.0
    %4256 = vmatpush1.msra.mxu0 0.0
    %4257 = vmatprep.subr.mxu0 0.0
    %4258 = vmatpush1.msra.mxu0 0.0
    %4259 = vmatprep.subr.mxu0 0.0
    %4260 = vmatpush1.msra.mxu0 0.0
    %4261 = vmatprep.subr.mxu0 0.0
    %4262 = vmatpush1.msra.mxu0 0.0
    %4263 = vmatprep.subr.mxu0 0.0
    %4264 = vmatpush1.msra.mxu0 0.0
    %4265 = vmatprep.subr.mxu0 0.0
    %4266 = vmatpush1.msra.mxu0 0.0
    %4267 = vmatprep.subr.mxu0 0.0
    %4268 = vmatpush1.msra.mxu0 0.0
    %4269 = vmatprep.mubr.f32.mxu0 0.0
    %4270 = vmatmul.mubr.f32.gmra.mrb[0].mxu0 %v4203
    %v4271 = vpop.f32.mrb[0].mxu0
    %v4272 = vadd.f32 %v855, %v4271
    %v4273 = vpop.f32.mrb[0].mxu0
    %v4274 = vadd.f32 %v859, %v4273
    %4275 = vdwg.mxu0
    %4276 = vmatprep.subr.mxu0 %v822
    %4277 = vmatpush1.msra.mxu0 %v821
    %4278 = vmatprep.subr.mxu0 %v826
    %4279 = vmatpush1.msra.mxu0 %v825
    %4280 = vmatprep.subr.mxu0 %v830
    %4281 = vmatpush1.msra.mxu0 %v829
    %4282 = vmatprep.subr.mxu0 %v834
    %4283 = vmatpush1.msra.mxu0 %v833
    %4284 = vmatprep.subr.mxu0 %v838
    %4285 = vmatpush1.msra.mxu0 %v837
    %4286 = vmatprep.subr.mxu0 %v842
    %4287 = vmatpush1.msra.mxu0 %v841
    %4288 = vmatprep.subr.mxu0 %v846
    %4289 = vmatpush1.msra.mxu0 %v845
    %4290 = vmatprep.subr.mxu0 %v850
    %4291 = vmatpush1.msra.mxu0 %v849
    %4292 = vmatprep.subr.mxu0 0.0
    %4293 = vmatpush1.msra.mxu0 0.0
    %4294 = vmatprep.subr.mxu0 0.0
    %4295 = vmatpush1.msra.mxu0 0.0
    %4296 = vmatprep.subr.mxu0 0.0
    %4297 = vmatpush1.msra.mxu0 0.0
    %4298 = vmatprep.subr.mxu0 0.0
    %4299 = vmatpush1.msra.mxu0 0.0
    %4300 = vmatprep.subr.mxu0 0.0
    %4301 = vmatpush1.msra.mxu0 0.0
    %4302 = vmatprep.subr.mxu0 0.0
    %4303 = vmatpush1.msra.mxu0 0.0
    %4304 = vmatprep.subr.mxu0 0.0
    %4305 = vmatpush1.msra.mxu0 0.0
    %4306 = vmatprep.subr.mxu0 0.0
    %4307 = vmatpush1.msra.mxu0 0.0
    %4308 = vmatprep.subr.mxu0 0.0
    %4309 = vmatpush1.msra.mxu0 0.0
    %4310 = vmatprep.subr.mxu0 0.0
    %4311 = vmatpush1.msra.mxu0 0.0
    %4312 = vmatprep.subr.mxu0 0.0
    %4313 = vmatpush1.msra.mxu0 0.0
    %4314 = vmatprep.subr.mxu0 0.0
    %4315 = vmatpush1.msra.mxu0 0.0
    %4316 = vmatprep.subr.mxu0 0.0
    %4317 = vmatpush1.msra.mxu0 0.0
    %4318 = vmatprep.subr.mxu0 0.0
    %4319 = vmatpush1.msra.mxu0 0.0
    %4320 = vmatprep.subr.mxu0 0.0
    %4321 = vmatpush1.msra.mxu0 0.0
    %4322 = vmatprep.subr.mxu0 0.0
    %4323 = vmatpush1.msra.mxu0 0.0
    %4324 = vmatprep.subr.mxu0 0.0
    %4325 = vmatpush1.msra.mxu0 0.0
    %4326 = vmatprep.subr.mxu0 0.0
    %4327 = vmatpush1.msra.mxu0 0.0
    %4328 = vmatprep.subr.mxu0 0.0
    %4329 = vmatpush1.msra.mxu0 0.0
    %4330 = vmatprep.subr.mxu0 0.0
    %4331 = vmatpush1.msra.mxu0 0.0
    %4332 = vmatprep.subr.mxu0 0.0
    %4333 = vmatpush1.msra.mxu0 0.0
    %4334 = vmatprep.subr.mxu0 0.0
    %4335 = vmatpush1.msra.mxu0 0.0
    %4336 = vmatprep.subr.mxu0 0.0
    %4337 = vmatpush1.msra.mxu0 0.0
    %4338 = vmatprep.subr.mxu0 0.0
    %4339 = vmatpush1.msra.mxu0 0.0
    %4340 = vmatprep.mubr.f32.mxu0 0.0
    %4341 = vmatmul.mubr.f32.gmra.mrb[0].mxu0 %v4203
    %v4342 = vpop.f32.mrb[0].mxu0
    %v4343 = vadd.f32 %v863, %v4342
    %v4344 = vpop.f32.mrb[0].mxu0
    %v4345 = vadd.f32 %v867, %v4344
    %4346 = vdwg.mxu0
    %v4347 = vmul.f32 %v4272, 0.5
    %v4348 = vtanh.pop %v4347
    %v4349 = vadd.f32 %v4348, 1.0
    %v4350 = vmul.f32 %v4349, 0.5
    %v4351 = vmul.f32 %v4274, 0.5
    %v4352 = vtanh.pop %v4351
    %v4353 = vadd.f32 %v4352, 1.0
    %v4354 = vmul.f32 %v4353, 0.5
    %v4355 = vmul.f32 %v4350, %v4345
    %v4356 = vadd.f32 %v4343, %v4355
    %v4357 = vtanh.pop %v4356
    %v4358 = vsub.f32 1.0, %v4354
    %v4359 = vmul.f32 %v4358, %v4357
    %v4360 = vmul.f32 %v4354, %v3695
    %v4361 = vadd.f32 %v4359, %v4360
    %4362 = vset.pattern.permute.xlu0 6
    %4363 = vperm.xlu0 %4362, %v145
    %v4364 = vpop.permute.xlu0 %4363
    %v4366 = vmul.f32 %v4364, %v175
    %v4367 = vmul.f32 %v4364, %v179
    %v4368 = vmul.f32 %v4364, %v183
    %v4369 = vadd.f32 %v4366, %v194
    %v4370 = vadd.f32 %v4367, %v198
    %v4371 = vadd.f32 %v4368, %v202
    %v4373 = vsel %vm225, %v3866, 0
    %4375 = vmatprep.subr.mxu0 %v149
    %4376 = vmatpush1.msra.mxu0 %v148
    %4377 = vmatprep.subr.mxu0 %v152
    %4378 = vmatpush1.msra.mxu0 %v151
    %4379 = vmatprep.subr.mxu0 %v155
    %4380 = vmatpush1.msra.mxu0 %v154
    %4381 = vmatprep.subr.mxu0 %v158
    %4382 = vmatpush1.msra.mxu0 %v157
    %4383 = vmatprep.subr.mxu0 0.0
    %4384 = vmatpush1.msra.mxu0 0.0
    %4385 = vmatprep.subr.mxu0 0.0
    %4386 = vmatpush1.msra.mxu0 0.0
    %4387 = vmatprep.subr.mxu0 0.0
    %4388 = vmatpush1.msra.mxu0 0.0
    %4389 = vmatprep.subr.mxu0 0.0
    %4390 = vmatpush1.msra.mxu0 0.0
    %4391 = vmatprep.subr.mxu0 0.0
    %4392 = vmatpush1.msra.mxu0 0.0
    %4393 = vmatprep.subr.mxu0 0.0
    %4394 = vmatpush1.msra.mxu0 0.0
    %4395 = vmatprep.subr.mxu0 0.0
    %4396 = vmatpush1.msra.mxu0 0.0
    %4397 = vmatprep.subr.mxu0 0.0
    %4398 = vmatpush1.msra.mxu0 0.0
    %4399 = vmatprep.subr.mxu0 0.0
    %4400 = vmatpush1.msra.mxu0 0.0
    %4401 = vmatprep.subr.mxu0 0.0
    %4402 = vmatpush1.msra.mxu0 0.0
    %4403 = vmatprep.subr.mxu0 0.0
    %4404 = vmatpush1.msra.mxu0 0.0
    %4405 = vmatprep.subr.mxu0 0.0
    %4406 = vmatpush1.msra.mxu0 0.0
    %4407 = vmatprep.subr.mxu0 0.0
    %4408 = vmatpush1.msra.mxu0 0.0
    %4409 = vmatprep.subr.mxu0 0.0
    %4410 = vmatpush1.msra.mxu0 0.0
    %4411 = vmatprep.subr.mxu0 0.0
    %4412 = vmatpush1.msra.mxu0 0.0
    %4413 = vmatprep.subr.mxu0 0.0
    %4414 = vmatpush1.msra.mxu0 0.0
    %4415 = vmatprep.subr.mxu0 0.0
    %4416 = vmatpush1.msra.mxu0 0.0
    %4417 = vmatprep.subr.mxu0 0.0
    %4418 = vmatpush1.msra.mxu0 0.0
    %4419 = vmatprep.subr.mxu0 0.0
    %4420 = vmatpush1.msra.mxu0 0.0
    %4421 = vmatprep.subr.mxu0 0.0
    %4422 = vmatpush1.msra.mxu0 0.0
    %4423 = vmatprep.subr.mxu0 0.0
    %4424 = vmatpush1.msra.mxu0 0.0
    %4425 = vmatprep.subr.mxu0 0.0
    %4426 = vmatpush1.msra.mxu0 0.0
    %4427 = vmatprep.subr.mxu0 0.0
    %4428 = vmatpush1.msra.mxu0 0.0
    %4429 = vmatprep.subr.mxu0 0.0
    %4430 = vmatpush1.msra.mxu0 0.0
    %4431 = vmatprep.subr.mxu0 0.0
    %4432 = vmatpush1.msra.mxu0 0.0
    %4433 = vmatprep.subr.mxu0 0.0
    %4434 = vmatpush1.msra.mxu0 0.0
    %4435 = vmatprep.subr.mxu0 0.0
    %4436 = vmatpush1.msra.mxu0 0.0
    %4437 = vmatprep.subr.mxu0 0.0
    %4438 = vmatpush1.msra.mxu0 0.0
    %4439 = vmatprep.mubr.f32.mxu0 0.0
    %4440 = vmatmul.mubr.f32.gmra.mrb[0].mxu0 %v4373
    %v4441 = vpop.f32.mrb[0].mxu0
    %v4442 = vadd.f32 %v213, %v4441
    %v4443 = vpop.f32.mrb[0].mxu0
    %v4444 = vadd.f32 %v217, %v4443
    %4445 = vdwg.mxu0
    %4446 = vmatprep.subr.mxu0 0.0
    %4447 = vmatpush1.msra.mxu0 %v150
    %4448 = vmatprep.subr.mxu0 0.0
    %4449 = vmatpush1.msra.mxu0 %v153
    %4450 = vmatprep.subr.mxu0 0.0
    %4451 = vmatpush1.msra.mxu0 %v156
    %4452 = vmatprep.subr.mxu0 0.0
    %4453 = vmatpush1.msra.mxu0 %v159
    %4454 = vmatprep.subr.mxu0 0.0
    %4455 = vmatpush1.msra.mxu0 0.0
    %4456 = vmatprep.subr.mxu0 0.0
    %4457 = vmatpush1.msra.mxu0 0.0
    %4458 = vmatprep.subr.mxu0 0.0
    %4459 = vmatpush1.msra.mxu0 0.0
    %4460 = vmatprep.subr.mxu0 0.0
    %4461 = vmatpush1.msra.mxu0 0.0
    %4462 = vmatprep.subr.mxu0 0.0
    %4463 = vmatpush1.msra.mxu0 0.0
    %4464 = vmatprep.subr.mxu0 0.0
    %4465 = vmatpush1.msra.mxu0 0.0
    %4466 = vmatprep.subr.mxu0 0.0
    %4467 = vmatpush1.msra.mxu0 0.0
    %4468 = vmatprep.subr.mxu0 0.0
    %4469 = vmatpush1.msra.mxu0 0.0
    %4470 = vmatprep.subr.mxu0 0.0
    %4471 = vmatpush1.msra.mxu0 0.0
    %4472 = vmatprep.subr.mxu0 0.0
    %4473 = vmatpush1.msra.mxu0 0.0
    %4474 = vmatprep.subr.mxu0 0.0
    %4475 = vmatpush1.msra.mxu0 0.0
    %4476 = vmatprep.subr.mxu0 0.0
    %4477 = vmatpush1.msra.mxu0 0.0
    %4478 = vmatprep.subr.mxu0 0.0
    %4479 = vmatpush1.msra.mxu0 0.0
    %4480 = vmatprep.subr.mxu0 0.0
    %4481 = vmatpush1.msra.mxu0 0.0
    %4482 = vmatprep.subr.mxu0 0.0
    %4483 = vmatpush1.msra.mxu0 0.0
    %4484 = vmatprep.subr.mxu0 0.0
    %4485 = vmatpush1.msra.mxu0 0.0
    %4486 = vmatprep.subr.mxu0 0.0
    %4487 = vmatpush1.msra.mxu0 0.0
    %4488 = vmatprep.subr.mxu0 0.0
    %4489 = vmatpush1.msra.mxu0 0.0
    %4490 = vmatprep.subr.mxu0 0.0
    %4491 = vmatpush1.msra.mxu0 0.0
    %4492 = vmatprep.subr.mxu0 0.0
    %4493 = vmatpush1.msra.mxu0 0.0
    %4494 = vmatprep.subr.mxu0 0.0
    %4495 = vmatpush1.msra.mxu0 0.0
    %4496 = vmatprep.subr.mxu0 0.0
    %4497 = vmatpush1.msra.mxu0 0.0
    %4498 = vmatprep.subr.mxu0 0.0
    %4499 = vmatpush1.msra.mxu0 0.0
    %4500 = vmatprep.subr.mxu0 0.0
    %4501 = vmatpush1.msra.mxu0 0.0
    %4502 = vmatprep.subr.mxu0 0.0
    %4503 = vmatpush1.msra.mxu0 0.0
    %4504 = vmatprep.subr.mxu0 0.0
    %4505 = vmatpush1.msra.mxu0 0.0
    %4506 = vmatprep.subr.mxu0 0.0
    %4507 = vmatpush1.msra.mxu0 0.0
    %4508 = vmatprep.subr.mxu0 0.0
    %4509 = vmatpush1.msra.mxu0 0.0
    %4510 = vmatprep.mubr.f32.mxu0 0.0
    %4511 = vmatmul.mubr.f32.gmra.mrb[0].mxu0 %v4373
    %v4512 = vpop.f32.mrb[0].mxu0
    %v4513 = vadd.f32 %v221, %v4512
    %v4514 = vpop.f32.mrb[0].mxu0
    %4515 = vdwg.mxu0
    %v4516 = vadd.f32 %v4369, %v4442
    %v4517 = vmul.f32 %v4516, 0.5
    %v4518 = vtanh.pop %v4517
    %v4519 = vadd.f32 %v4518, 1.0
    %v4520 = vmul.f32 %v4519, 0.5
    %v4521 = vadd.f32 %v4370, %v4444
    %v4522 = vmul.f32 %v4521, 0.5
    %v4523 = vtanh.pop %v4522
    %v4524 = vadd.f32 %v4523, 1.0
    %v4525 = vmul.f32 %v4524, 0.5
    %v4526 = vmul.f32 %v4520, %v4513
    %v4527 = vadd.f32 %v4371, %v4526
    %v4528 = vtanh.pop %v4527
    %v4529 = vsub.f32 1.0, %v4525
    %v4530 = vmul.f32 %v4529, %v4528
    %v4531 = vmul.f32 %v4525, %v3866
    %v4532 = vadd.f32 %v4530, %v4531
    %4534 = vrot.lane.b32.xlu0 %v4031, 32
    %v4535 = vpop.permute.xlu0 %4534
    %v4537 = vsel %vm225, %v4532, %v4535
    %v4539 = vsel %vm441, %v4537, 0
    %4541 = vmatprep.subr.mxu0 %v389
    %4542 = vmatpush1.msra.mxu0 %v388
    %4543 = vmatprep.subr.mxu0 %v393
    %4544 = vmatpush1.msra.mxu0 %v392
    %4545 = vmatprep.subr.mxu0 %v397
    %4546 = vmatpush1.msra.mxu0 %v396
    %4547 = vmatprep.subr.mxu0 %v401
    %4548 = vmatpush1.msra.mxu0 %v400
    %4549 = vmatprep.subr.mxu0 %v405
    %4550 = vmatpush1.msra.mxu0 %v404
    %4551 = vmatprep.subr.mxu0 %v409
    %4552 = vmatpush1.msra.mxu0 %v408
    %4553 = vmatprep.subr.mxu0 %v413
    %4554 = vmatpush1.msra.mxu0 %v412
    %4555 = vmatprep.subr.mxu0 %v417
    %4556 = vmatpush1.msra.mxu0 %v416
    %4557 = vmatprep.subr.mxu0 0.0
    %4558 = vmatpush1.msra.mxu0 0.0
    %4559 = vmatprep.subr.mxu0 0.0
    %4560 = vmatpush1.msra.mxu0 0.0
    %4561 = vmatprep.subr.mxu0 0.0
    %4562 = vmatpush1.msra.mxu0 0.0
    %4563 = vmatprep.subr.mxu0 0.0
    %4564 = vmatpush1.msra.mxu0 0.0
    %4565 = vmatprep.subr.mxu0 0.0
    %4566 = vmatpush1.msra.mxu0 0.0
    %4567 = vmatprep.subr.mxu0 0.0
    %4568 = vmatpush1.msra.mxu0 0.0
    %4569 = vmatprep.subr.mxu0 0.0
    %4570 = vmatpush1.msra.mxu0 0.0
    %4571 = vmatprep.subr.mxu0 0.0
    %4572 = vmatpush1.msra.mxu0 0.0
    %4573 = vmatprep.subr.mxu0 0.0
    %4574 = vmatpush1.msra.mxu0 0.0
    %4575 = vmatprep.subr.mxu0 0.0
    %4576 = vmatpush1.msra.mxu0 0.0
    %4577 = vmatprep.subr.mxu0 0.0
    %4578 = vmatpush1.msra.mxu0 0.0
    %4579 = vmatprep.subr.mxu0 0.0
    %4580 = vmatpush1.msra.mxu0 0.0
    %4581 = vmatprep.subr.mxu0 0.0
    %4582 = vmatpush1.msra.mxu0 0.0
    %4583 = vmatprep.subr.mxu0 0.0
    %4584 = vmatpush1.msra.mxu0 0.0
    %4585 = vmatprep.subr.mxu0 0.0
    %4586 = vmatpush1.msra.mxu0 0.0
    %4587 = vmatprep.subr.mxu0 0.0
    %4588 = vmatpush1.msra.mxu0 0.0
    %4589 = vmatprep.subr.mxu0 0.0
    %4590 = vmatpush1.msra.mxu0 0.0
    %4591 = vmatprep.subr.mxu0 0.0
    %4592 = vmatpush1.msra.mxu0 0.0
    %4593 = vmatprep.subr.mxu0 0.0
    %4594 = vmatpush1.msra.mxu0 0.0
    %4595 = vmatprep.subr.mxu0 0.0
    %4596 = vmatpush1.msra.mxu0 0.0
    %4597 = vmatprep.subr.mxu0 0.0
    %4598 = vmatpush1.msra.mxu0 0.0
    %4599 = vmatprep.subr.mxu0 0.0
    %4600 = vmatpush1.msra.mxu0 0.0
    %4601 = vmatprep.subr.mxu0 0.0
    %4602 = vmatpush1.msra.mxu0 0.0
    %4603 = vmatprep.subr.mxu0 0.0
    %4604 = vmatpush1.msra.mxu0 0.0
    %4605 = vmatprep.mubr.f32.mxu0 0.0
    %4606 = vmatmul.mubr.f32.gmra.mrb[0].mxu0 %v4539
    %v4607 = vpop.f32.mrb[0].mxu0
    %v4608 = vadd.f32 %v424, %v4607
    %v4609 = vpop.f32.mrb[0].mxu0
    %v4610 = vadd.f32 %v428, %v4609
    %4611 = vdwg.mxu0
    %4612 = vmatprep.subr.mxu0 %v391
    %4613 = vmatpush1.msra.mxu0 %v390
    %4614 = vmatprep.subr.mxu0 %v395
    %4615 = vmatpush1.msra.mxu0 %v394
    %4616 = vmatprep.subr.mxu0 %v399
    %4617 = vmatpush1.msra.mxu0 %v398
    %4618 = vmatprep.subr.mxu0 %v403
    %4619 = vmatpush1.msra.mxu0 %v402
    %4620 = vmatprep.subr.mxu0 %v407
    %4621 = vmatpush1.msra.mxu0 %v406
    %4622 = vmatprep.subr.mxu0 %v411
    %4623 = vmatpush1.msra.mxu0 %v410
    %4624 = vmatprep.subr.mxu0 %v415
    %4625 = vmatpush1.msra.mxu0 %v414
    %4626 = vmatprep.subr.mxu0 %v419
    %4627 = vmatpush1.msra.mxu0 %v418
    %4628 = vmatprep.subr.mxu0 0.0
    %4629 = vmatpush1.msra.mxu0 0.0
    %4630 = vmatprep.subr.mxu0 0.0
    %4631 = vmatpush1.msra.mxu0 0.0
    %4632 = vmatprep.subr.mxu0 0.0
    %4633 = vmatpush1.msra.mxu0 0.0
    %4634 = vmatprep.subr.mxu0 0.0
    %4635 = vmatpush1.msra.mxu0 0.0
    %4636 = vmatprep.subr.mxu0 0.0
    %4637 = vmatpush1.msra.mxu0 0.0
    %4638 = vmatprep.subr.mxu0 0.0
    %4639 = vmatpush1.msra.mxu0 0.0
    %4640 = vmatprep.subr.mxu0 0.0
    %4641 = vmatpush1.msra.mxu0 0.0
    %4642 = vmatprep.subr.mxu0 0.0
    %4643 = vmatpush1.msra.mxu0 0.0
    %4644 = vmatprep.subr.mxu0 0.0
    %4645 = vmatpush1.msra.mxu0 0.0
    %4646 = vmatprep.subr.mxu0 0.0
    %4647 = vmatpush1.msra.mxu0 0.0
    %4648 = vmatprep.subr.mxu0 0.0
    %4649 = vmatpush1.msra.mxu0 0.0
    %4650 = vmatprep.subr.mxu0 0.0
    %4651 = vmatpush1.msra.mxu0 0.0
    %4652 = vmatprep.subr.mxu0 0.0
    %4653 = vmatpush1.msra.mxu0 0.0
    %4654 = vmatprep.subr.mxu0 0.0
    %4655 = vmatpush1.msra.mxu0 0.0
    %4656 = vmatprep.subr.mxu0 0.0
    %4657 = vmatpush1.msra.mxu0 0.0
    %4658 = vmatprep.subr.mxu0 0.0
    %4659 = vmatpush1.msra.mxu0 0.0
    %4660 = vmatprep.subr.mxu0 0.0
    %4661 = vmatpush1.msra.mxu0 0.0
    %4662 = vmatprep.subr.mxu0 0.0
    %4663 = vmatpush1.msra.mxu0 0.0
    %4664 = vmatprep.subr.mxu0 0.0
    %4665 = vmatpush1.msra.mxu0 0.0
    %4666 = vmatprep.subr.mxu0 0.0
    %4667 = vmatpush1.msra.mxu0 0.0
    %4668 = vmatprep.subr.mxu0 0.0
    %4669 = vmatpush1.msra.mxu0 0.0
    %4670 = vmatprep.subr.mxu0 0.0
    %4671 = vmatpush1.msra.mxu0 0.0
    %4672 = vmatprep.subr.mxu0 0.0
    %4673 = vmatpush1.msra.mxu0 0.0
    %4674 = vmatprep.subr.mxu0 0.0
    %4675 = vmatpush1.msra.mxu0 0.0
    %4676 = vmatprep.mubr.f32.mxu0 0.0
    %4677 = vmatmul.mubr.f32.gmra.mrb[0].mxu0 %v4539
    %v4678 = vpop.f32.mrb[0].mxu0
    %v4679 = vadd.f32 %v432, %v4678
    %v4680 = vpop.f32.mrb[0].mxu0
    %v4681 = vadd.f32 %v436, %v4680
    %4682 = vdwg.mxu0
    %v4683 = vmul.f32 %v4608, 0.5
    %v4684 = vtanh.pop %v4683
    %v4685 = vadd.f32 %v4684, 1.0
    %v4686 = vmul.f32 %v4685, 0.5
    %v4687 = vmul.f32 %v4610, 0.5
    %v4688 = vtanh.pop %v4687
    %v4689 = vadd.f32 %v4688, 1.0
    %v4690 = vmul.f32 %v4689, 0.5
    %v4691 = vmul.f32 %v4686, %v4681
    %v4692 = vadd.f32 %v4679, %v4691
    %v4693 = vtanh.pop %v4692
    %v4694 = vsub.f32 1.0, %v4690
    %v4695 = vmul.f32 %v4694, %v4693
    %v4696 = vmul.f32 %v4690, %v4031
    %v4697 = vadd.f32 %v4695, %v4696
    %4699 = vrot.lane.b32.xlu0 %v4196, 32
    %v4700 = vpop.permute.xlu0 %4699
    %v4702 = vsel %vm225, %v4697, %v4700
    %v4704 = vsel %vm441, %v4702, 0
    %4706 = vmatprep.subr.mxu0 %v605
    %4707 = vmatpush1.msra.mxu0 %v604
    %4708 = vmatprep.subr.mxu0 %v609
    %4709 = vmatpush1.msra.mxu0 %v608
    %4710 = vmatprep.subr.mxu0 %v613
    %4711 = vmatpush1.msra.mxu0 %v612
    %4712 = vmatprep.subr.mxu0 %v617
    %4713 = vmatpush1.msra.mxu0 %v616
    %4714 = vmatprep.subr.mxu0 %v621
    %4715 = vmatpush1.msra.mxu0 %v620
    %4716 = vmatprep.subr.mxu0 %v625
    %4717 = vmatpush1.msra.mxu0 %v624
    %4718 = vmatprep.subr.mxu0 %v629
    %4719 = vmatpush1.msra.mxu0 %v628
    %4720 = vmatprep.subr.mxu0 %v633
    %4721 = vmatpush1.msra.mxu0 %v632
    %4722 = vmatprep.subr.mxu0 0.0
    %4723 = vmatpush1.msra.mxu0 0.0
    %4724 = vmatprep.subr.mxu0 0.0
    %4725 = vmatpush1.msra.mxu0 0.0
    %4726 = vmatprep.subr.mxu0 0.0
    %4727 = vmatpush1.msra.mxu0 0.0
    %4728 = vmatprep.subr.mxu0 0.0
    %4729 = vmatpush1.msra.mxu0 0.0
    %4730 = vmatprep.subr.mxu0 0.0
    %4731 = vmatpush1.msra.mxu0 0.0
    %4732 = vmatprep.subr.mxu0 0.0
    %4733 = vmatpush1.msra.mxu0 0.0
    %4734 = vmatprep.subr.mxu0 0.0
    %4735 = vmatpush1.msra.mxu0 0.0
    %4736 = vmatprep.subr.mxu0 0.0
    %4737 = vmatpush1.msra.mxu0 0.0
    %4738 = vmatprep.subr.mxu0 0.0
    %4739 = vmatpush1.msra.mxu0 0.0
    %4740 = vmatprep.subr.mxu0 0.0
    %4741 = vmatpush1.msra.mxu0 0.0
    %4742 = vmatprep.subr.mxu0 0.0
    %4743 = vmatpush1.msra.mxu0 0.0
    %4744 = vmatprep.subr.mxu0 0.0
    %4745 = vmatpush1.msra.mxu0 0.0
    %4746 = vmatprep.subr.mxu0 0.0
    %4747 = vmatpush1.msra.mxu0 0.0
    %4748 = vmatprep.subr.mxu0 0.0
    %4749 = vmatpush1.msra.mxu0 0.0
    %4750 = vmatprep.subr.mxu0 0.0
    %4751 = vmatpush1.msra.mxu0 0.0
    %4752 = vmatprep.subr.mxu0 0.0
    %4753 = vmatpush1.msra.mxu0 0.0
    %4754 = vmatprep.subr.mxu0 0.0
    %4755 = vmatpush1.msra.mxu0 0.0
    %4756 = vmatprep.subr.mxu0 0.0
    %4757 = vmatpush1.msra.mxu0 0.0
    %4758 = vmatprep.subr.mxu0 0.0
    %4759 = vmatpush1.msra.mxu0 0.0
    %4760 = vmatprep.subr.mxu0 0.0
    %4761 = vmatpush1.msra.mxu0 0.0
    %4762 = vmatprep.subr.mxu0 0.0
    %4763 = vmatpush1.msra.mxu0 0.0
    %4764 = vmatprep.subr.mxu0 0.0
    %4765 = vmatpush1.msra.mxu0 0.0
    %4766 = vmatprep.subr.mxu0 0.0
    %4767 = vmatpush1.msra.mxu0 0.0
    %4768 = vmatprep.subr.mxu0 0.0
    %4769 = vmatpush1.msra.mxu0 0.0
    %4770 = vmatprep.mubr.f32.mxu0 0.0
    %4771 = vmatmul.mubr.f32.gmra.mrb[0].mxu0 %v4704
    %v4772 = vpop.f32.mrb[0].mxu0
    %v4773 = vadd.f32 %v640, %v4772
    %v4774 = vpop.f32.mrb[0].mxu0
    %v4775 = vadd.f32 %v644, %v4774
    %4776 = vdwg.mxu0
    %4777 = vmatprep.subr.mxu0 %v607
    %4778 = vmatpush1.msra.mxu0 %v606
    %4779 = vmatprep.subr.mxu0 %v611
    %4780 = vmatpush1.msra.mxu0 %v610
    %4781 = vmatprep.subr.mxu0 %v615
    %4782 = vmatpush1.msra.mxu0 %v614
    %4783 = vmatprep.subr.mxu0 %v619
    %4784 = vmatpush1.msra.mxu0 %v618
    %4785 = vmatprep.subr.mxu0 %v623
    %4786 = vmatpush1.msra.mxu0 %v622
    %4787 = vmatprep.subr.mxu0 %v627
    %4788 = vmatpush1.msra.mxu0 %v626
    %4789 = vmatprep.subr.mxu0 %v631
    %4790 = vmatpush1.msra.mxu0 %v630
    %4791 = vmatprep.subr.mxu0 %v635
    %4792 = vmatpush1.msra.mxu0 %v634
    %4793 = vmatprep.subr.mxu0 0.0
    %4794 = vmatpush1.msra.mxu0 0.0
    %4795 = vmatprep.subr.mxu0 0.0
    %4796 = vmatpush1.msra.mxu0 0.0
    %4797 = vmatprep.subr.mxu0 0.0
    %4798 = vmatpush1.msra.mxu0 0.0
    %4799 = vmatprep.subr.mxu0 0.0
    %4800 = vmatpush1.msra.mxu0 0.0
    %4801 = vmatprep.subr.mxu0 0.0
    %4802 = vmatpush1.msra.mxu0 0.0
    %4803 = vmatprep.subr.mxu0 0.0
    %4804 = vmatpush1.msra.mxu0 0.0
    %4805 = vmatprep.subr.mxu0 0.0
    %4806 = vmatpush1.msra.mxu0 0.0
    %4807 = vmatprep.subr.mxu0 0.0
    %4808 = vmatpush1.msra.mxu0 0.0
    %4809 = vmatprep.subr.mxu0 0.0
    %4810 = vmatpush1.msra.mxu0 0.0
    %4811 = vmatprep.subr.mxu0 0.0
    %4812 = vmatpush1.msra.mxu0 0.0
    %4813 = vmatprep.subr.mxu0 0.0
    %4814 = vmatpush1.msra.mxu0 0.0
    %4815 = vmatprep.subr.mxu0 0.0
    %4816 = vmatpush1.msra.mxu0 0.0
    %4817 = vmatprep.subr.mxu0 0.0
    %4818 = vmatpush1.msra.mxu0 0.0
    %4819 = vmatprep.subr.mxu0 0.0
    %4820 = vmatpush1.msra.mxu0 0.0
    %4821 = vmatprep.subr.mxu0 0.0
    %4822 = vmatpush1.msra.mxu0 0.0
    %4823 = vmatprep.subr.mxu0 0.0
    %4824 = vmatpush1.msra.mxu0 0.0
    %4825 = vmatprep.subr.mxu0 0.0
    %4826 = vmatpush1.msra.mxu0 0.0
    %4827 = vmatprep.subr.mxu0 0.0
    %4828 = vmatpush1.msra.mxu0 0.0
    %4829 = vmatprep.subr.mxu0 0.0
    %4830 = vmatpush1.msra.mxu0 0.0
    %4831 = vmatprep.subr.mxu0 0.0
    %4832 = vmatpush1.msra.mxu0 0.0
    %4833 = vmatprep.subr.mxu0 0.0
    %4834 = vmatpush1.msra.mxu0 0.0
    %4835 = vmatprep.subr.mxu0 0.0
    %4836 = vmatpush1.msra.mxu0 0.0
    %4837 = vmatprep.subr.mxu0 0.0
    %4838 = vmatpush1.msra.mxu0 0.0
    %4839 = vmatprep.subr.mxu0 0.0
    %4840 = vmatpush1.msra.mxu0 0.0
    %4841 = vmatprep.mubr.f32.mxu0 0.0
    %4842 = vmatmul.mubr.f32.gmra.mrb[0].mxu0 %v4704
    %v4843 = vpop.f32.mrb[0].mxu0
    %v4844 = vadd.f32 %v648, %v4843
    %v4845 = vpop.f32.mrb[0].mxu0
    %v4846 = vadd.f32 %v652, %v4845
    %4847 = vdwg.mxu0
    %v4848 = vmul.f32 %v4773, 0.5
    %v4849 = vtanh.pop %v4848
    %v4850 = vadd.f32 %v4849, 1.0
    %v4851 = vmul.f32 %v4850, 0.5
    %v4852 = vmul.f32 %v4775, 0.5
    %v4853 = vtanh.pop %v4852
    %v4854 = vadd.f32 %v4853, 1.0
    %v4855 = vmul.f32 %v4854, 0.5
    %v4856 = vmul.f32 %v4851, %v4846
    %v4857 = vadd.f32 %v4844, %v4856
    %v4858 = vtanh.pop %v4857
    %v4859 = vsub.f32 1.0, %v4855
    %v4860 = vmul.f32 %v4859, %v4858
    %v4861 = vmul.f32 %v4855, %v4196
    %v4862 = vadd.f32 %v4860, %v4861
    %4864 = vrot.lane.b32.xlu0 %v4361, 32
    %v4865 = vpop.permute.xlu0 %4864
    %v4867 = vsel %vm225, %v4862, %v4865
    %v4869 = vsel %vm441, %v4867, 0
    %4871 = vmatprep.subr.mxu0 %v820
    %4872 = vmatpush1.msra.mxu0 %v819
    %4873 = vmatprep.subr.mxu0 %v824
    %4874 = vmatpush1.msra.mxu0 %v823
    %4875 = vmatprep.subr.mxu0 %v828
    %4876 = vmatpush1.msra.mxu0 %v827
    %4877 = vmatprep.subr.mxu0 %v832
    %4878 = vmatpush1.msra.mxu0 %v831
    %4879 = vmatprep.subr.mxu0 %v836
    %4880 = vmatpush1.msra.mxu0 %v835
    %4881 = vmatprep.subr.mxu0 %v840
    %4882 = vmatpush1.msra.mxu0 %v839
    %4883 = vmatprep.subr.mxu0 %v844
    %4884 = vmatpush1.msra.mxu0 %v843
    %4885 = vmatprep.subr.mxu0 %v848
    %4886 = vmatpush1.msra.mxu0 %v847
    %4887 = vmatprep.subr.mxu0 0.0
    %4888 = vmatpush1.msra.mxu0 0.0
    %4889 = vmatprep.subr.mxu0 0.0
    %4890 = vmatpush1.msra.mxu0 0.0
    %4891 = vmatprep.subr.mxu0 0.0
    %4892 = vmatpush1.msra.mxu0 0.0
    %4893 = vmatprep.subr.mxu0 0.0
    %4894 = vmatpush1.msra.mxu0 0.0
    %4895 = vmatprep.subr.mxu0 0.0
    %4896 = vmatpush1.msra.mxu0 0.0
    %4897 = vmatprep.subr.mxu0 0.0
    %4898 = vmatpush1.msra.mxu0 0.0
    %4899 = vmatprep.subr.mxu0 0.0
    %4900 = vmatpush1.msra.mxu0 0.0
    %4901 = vmatprep.subr.mxu0 0.0
    %4902 = vmatpush1.msra.mxu0 0.0
    %4903 = vmatprep.subr.mxu0 0.0
    %4904 = vmatpush1.msra.mxu0 0.0
    %4905 = vmatprep.subr.mxu0 0.0
    %4906 = vmatpush1.msra.mxu0 0.0
    %4907 = vmatprep.subr.mxu0 0.0
    %4908 = vmatpush1.msra.mxu0 0.0
    %4909 = vmatprep.subr.mxu0 0.0
    %4910 = vmatpush1.msra.mxu0 0.0
    %4911 = vmatprep.subr.mxu0 0.0
    %4912 = vmatpush1.msra.mxu0 0.0
    %4913 = vmatprep.subr.mxu0 0.0
    %4914 = vmatpush1.msra.mxu0 0.0
    %4915 = vmatprep.subr.mxu0 0.0
    %4916 = vmatpush1.msra.mxu0 0.0
    %4917 = vmatprep.subr.mxu0 0.0
    %4918 = vmatpush1.msra.mxu0 0.0
    %4919 = vmatprep.subr.mxu0 0.0
    %4920 = vmatpush1.msra.mxu0 0.0
    %4921 = vmatprep.subr.mxu0 0.0
    %4922 = vmatpush1.msra.mxu0 0.0
    %4923 = vmatprep.subr.mxu0 0.0
    %4924 = vmatpush1.msra.mxu0 0.0
    %4925 = vmatprep.subr.mxu0 0.0
    %4926 = vmatpush1.msra.mxu0 0.0
    %4927 = vmatprep.subr.mxu0 0.0
    %4928 = vmatpush1.msra.mxu0 0.0
    %4929 = vmatprep.subr.mxu0 0.0
    %4930 = vmatpush1.msra.mxu0 0.0
    %4931 = vmatprep.subr.mxu0 0.0
    %4932 = vmatpush1.msra.mxu0 0.0
    %4933 = vmatprep.subr.mxu0 0.0
    %4934 = vmatpush1.msra.mxu0 0.0
    %4935 = vmatprep.mubr.f32.mxu0 0.0
    %4936 = vmatmul.mubr.f32.gmra.mrb[0].mxu0 %v4869
    %v4937 = vpop.f32.mrb[0].mxu0
    %v4938 = vadd.f32 %v855, %v4937
    %v4939 = vpop.f32.mrb[0].mxu0
    %v4940 = vadd.f32 %v859, %v4939
    %4941 = vdwg.mxu0
    %4942 = vmatprep.subr.mxu0 %v822
    %4943 = vmatpush1.msra.mxu0 %v821
    %4944 = vmatprep.subr.mxu0 %v826
    %4945 = vmatpush1.msra.mxu0 %v825
    %4946 = vmatprep.subr.mxu0 %v830
    %4947 = vmatpush1.msra.mxu0 %v829
    %4948 = vmatprep.subr.mxu0 %v834
    %4949 = vmatpush1.msra.mxu0 %v833
    %4950 = vmatprep.subr.mxu0 %v838
    %4951 = vmatpush1.msra.mxu0 %v837
    %4952 = vmatprep.subr.mxu0 %v842
    %4953 = vmatpush1.msra.mxu0 %v841
    %4954 = vmatprep.subr.mxu0 %v846
    %4955 = vmatpush1.msra.mxu0 %v845
    %4956 = vmatprep.subr.mxu0 %v850
    %4957 = vmatpush1.msra.mxu0 %v849
    %4958 = vmatprep.subr.mxu0 0.0
    %4959 = vmatpush1.msra.mxu0 0.0
    %4960 = vmatprep.subr.mxu0 0.0
    %4961 = vmatpush1.msra.mxu0 0.0
    %4962 = vmatprep.subr.mxu0 0.0
    %4963 = vmatpush1.msra.mxu0 0.0
    %4964 = vmatprep.subr.mxu0 0.0
    %4965 = vmatpush1.msra.mxu0 0.0
    %4966 = vmatprep.subr.mxu0 0.0
    %4967 = vmatpush1.msra.mxu0 0.0
    %4968 = vmatprep.subr.mxu0 0.0
    %4969 = vmatpush1.msra.mxu0 0.0
    %4970 = vmatprep.subr.mxu0 0.0
    %4971 = vmatpush1.msra.mxu0 0.0
    %4972 = vmatprep.subr.mxu0 0.0
    %4973 = vmatpush1.msra.mxu0 0.0
    %4974 = vmatprep.subr.mxu0 0.0
    %4975 = vmatpush1.msra.mxu0 0.0
    %4976 = vmatprep.subr.mxu0 0.0
    %4977 = vmatpush1.msra.mxu0 0.0
    %4978 = vmatprep.subr.mxu0 0.0
    %4979 = vmatpush1.msra.mxu0 0.0
    %4980 = vmatprep.subr.mxu0 0.0
    %4981 = vmatpush1.msra.mxu0 0.0
    %4982 = vmatprep.subr.mxu0 0.0
    %4983 = vmatpush1.msra.mxu0 0.0
    %4984 = vmatprep.subr.mxu0 0.0
    %4985 = vmatpush1.msra.mxu0 0.0
    %4986 = vmatprep.subr.mxu0 0.0
    %4987 = vmatpush1.msra.mxu0 0.0
    %4988 = vmatprep.subr.mxu0 0.0
    %4989 = vmatpush1.msra.mxu0 0.0
    %4990 = vmatprep.subr.mxu0 0.0
    %4991 = vmatpush1.msra.mxu0 0.0
    %4992 = vmatprep.subr.mxu0 0.0
    %4993 = vmatpush1.msra.mxu0 0.0
    %4994 = vmatprep.subr.mxu0 0.0
    %4995 = vmatpush1.msra.mxu0 0.0
    %4996 = vmatprep.subr.mxu0 0.0
    %4997 = vmatpush1.msra.mxu0 0.0
    %4998 = vmatprep.subr.mxu0 0.0
    %4999 = vmatpush1.msra.mxu0 0.0
    %5000 = vmatprep.subr.mxu0 0.0
    %5001 = vmatpush1.msra.mxu0 0.0
    %5002 = vmatprep.subr.mxu0 0.0
    %5003 = vmatpush1.msra.mxu0 0.0
    %5004 = vmatprep.subr.mxu0 0.0
    %5005 = vmatpush1.msra.mxu0 0.0
    %5006 = vmatprep.mubr.f32.mxu0 0.0
    %5007 = vmatmul.mubr.f32.gmra.mrb[0].mxu0 %v4869
    %v5008 = vpop.f32.mrb[0].mxu0
    %v5009 = vadd.f32 %v863, %v5008
    %v5010 = vpop.f32.mrb[0].mxu0
    %v5011 = vadd.f32 %v867, %v5010
    %5012 = vdwg.mxu0
    %v5013 = vmul.f32 %v4938, 0.5
    %v5014 = vtanh.pop %v5013
    %v5015 = vadd.f32 %v5014, 1.0
    %v5016 = vmul.f32 %v5015, 0.5
    %v5017 = vmul.f32 %v4940, 0.5
    %v5018 = vtanh.pop %v5017
    %v5019 = vadd.f32 %v5018, 1.0
    %v5020 = vmul.f32 %v5019, 0.5
    %v5021 = vmul.f32 %v5016, %v5011
    %v5022 = vadd.f32 %v5009, %v5021
    %v5023 = vtanh.pop %v5022
    %v5024 = vsub.f32 1.0, %v5020
    %v5025 = vmul.f32 %v5024, %v5023
    %v5026 = vmul.f32 %v5020, %v4361
    %v5027 = vadd.f32 %v5025, %v5026
    %5028 = vset.pattern.permute.xlu0 7
    %5029 = vperm.xlu0 %5028, %v145
    %v5030 = vpop.permute.xlu0 %5029
    %v5032 = vmul.f32 %v5030, %v175
    %v5033 = vmul.f32 %v5030, %v179
    %v5034 = vmul.f32 %v5030, %v183
    %v5035 = vadd.f32 %v5032, %v194
    %v5036 = vadd.f32 %v5033, %v198
    %v5037 = vadd.f32 %v5034, %v202
    %v5039 = vsel %vm225, %v4532, 0
    %5041 = vmatprep.subr.mxu0 %v149
    %5042 = vmatpush1.msra.mxu0 %v148
    %5043 = vmatprep.subr.mxu0 %v152
    %5044 = vmatpush1.msra.mxu0 %v151
    %5045 = vmatprep.subr.mxu0 %v155
    %5046 = vmatpush1.msra.mxu0 %v154
    %5047 = vmatprep.subr.mxu0 %v158
    %5048 = vmatpush1.msra.mxu0 %v157
    %5049 = vmatprep.subr.mxu0 0.0
    %5050 = vmatpush1.msra.mxu0 0.0
    %5051 = vmatprep.subr.mxu0 0.0
    %5052 = vmatpush1.msra.mxu0 0.0
    %5053 = vmatprep.subr.mxu0 0.0
    %5054 = vmatpush1.msra.mxu0 0.0
    %5055 = vmatprep.subr.mxu0 0.0
    %5056 = vmatpush1.msra.mxu0 0.0
    %5057 = vmatprep.subr.mxu0 0.0
    %5058 = vmatpush1.msra.mxu0 0.0
    %5059 = vmatprep.subr.mxu0 0.0
    %5060 = vmatpush1.msra.mxu0 0.0
    %5061 = vmatprep.subr.mxu0 0.0
    %5062 = vmatpush1.msra.mxu0 0.0
    %5063 = vmatprep.subr.mxu0 0.0
    %5064 = vmatpush1.msra.mxu0 0.0
    %5065 = vmatprep.subr.mxu0 0.0
    %5066 = vmatpush1.msra.mxu0 0.0
    %5067 = vmatprep.subr.mxu0 0.0
    %5068 = vmatpush1.msra.mxu0 0.0
    %5069 = vmatprep.subr.mxu0 0.0
    %5070 = vmatpush1.msra.mxu0 0.0
    %5071 = vmatprep.subr.mxu0 0.0
    %5072 = vmatpush1.msra.mxu0 0.0
    %5073 = vmatprep.subr.mxu0 0.0
    %5074 = vmatpush1.msra.mxu0 0.0
    %5075 = vmatprep.subr.mxu0 0.0
    %5076 = vmatpush1.msra.mxu0 0.0
    %5077 = vmatprep.subr.mxu0 0.0
    %5078 = vmatpush1.msra.mxu0 0.0
    %5079 = vmatprep.subr.mxu0 0.0
    %5080 = vmatpush1.msra.mxu0 0.0
    %5081 = vmatprep.subr.mxu0 0.0
    %5082 = vmatpush1.msra.mxu0 0.0
    %5083 = vmatprep.subr.mxu0 0.0
    %5084 = vmatpush1.msra.mxu0 0.0
    %5085 = vmatprep.subr.mxu0 0.0
    %5086 = vmatpush1.msra.mxu0 0.0
    %5087 = vmatprep.subr.mxu0 0.0
    %5088 = vmatpush1.msra.mxu0 0.0
    %5089 = vmatprep.subr.mxu0 0.0
    %5090 = vmatpush1.msra.mxu0 0.0
    %5091 = vmatprep.subr.mxu0 0.0
    %5092 = vmatpush1.msra.mxu0 0.0
    %5093 = vmatprep.subr.mxu0 0.0
    %5094 = vmatpush1.msra.mxu0 0.0
    %5095 = vmatprep.subr.mxu0 0.0
    %5096 = vmatpush1.msra.mxu0 0.0
    %5097 = vmatprep.subr.mxu0 0.0
    %5098 = vmatpush1.msra.mxu0 0.0
    %5099 = vmatprep.subr.mxu0 0.0
    %5100 = vmatpush1.msra.mxu0 0.0
    %5101 = vmatprep.subr.mxu0 0.0
    %5102 = vmatpush1.msra.mxu0 0.0
    %5103 = vmatprep.subr.mxu0 0.0
    %5104 = vmatpush1.msra.mxu0 0.0
    %5105 = vmatprep.mubr.f32.mxu0 0.0
    %5106 = vmatmul.mubr.f32.gmra.mrb[0].mxu0 %v5039
    %v5107 = vpop.f32.mrb[0].mxu0
    %v5108 = vadd.f32 %v213, %v5107
    %v5109 = vpop.f32.mrb[0].mxu0
    %v5110 = vadd.f32 %v217, %v5109
    %5111 = vdwg.mxu0
    %5112 = vmatprep.subr.mxu0 0.0
    %5113 = vmatpush1.msra.mxu0 %v150
    %5114 = vmatprep.subr.mxu0 0.0
    %5115 = vmatpush1.msra.mxu0 %v153
    %5116 = vmatprep.subr.mxu0 0.0
    %5117 = vmatpush1.msra.mxu0 %v156
    %5118 = vmatprep.subr.mxu0 0.0
    %5119 = vmatpush1.msra.mxu0 %v159
    %5120 = vmatprep.subr.mxu0 0.0
    %5121 = vmatpush1.msra.mxu0 0.0
    %5122 = vmatprep.subr.mxu0 0.0
    %5123 = vmatpush1.msra.mxu0 0.0
    %5124 = vmatprep.subr.mxu0 0.0
    %5125 = vmatpush1.msra.mxu0 0.0
    %5126 = vmatprep.subr.mxu0 0.0
    %5127 = vmatpush1.msra.mxu0 0.0
    %5128 = vmatprep.subr.mxu0 0.0
    %5129 = vmatpush1.msra.mxu0 0.0
    %5130 = vmatprep.subr.mxu0 0.0
    %5131 = vmatpush1.msra.mxu0 0.0
    %5132 = vmatprep.subr.mxu0 0.0
    %5133 = vmatpush1.msra.mxu0 0.0
    %5134 = vmatprep.subr.mxu0 0.0
    %5135 = vmatpush1.msra.mxu0 0.0
    %5136 = vmatprep.subr.mxu0 0.0
    %5137 = vmatpush1.msra.mxu0 0.0
    %5138 = vmatprep.subr.mxu0 0.0
    %5139 = vmatpush1.msra.mxu0 0.0
    %5140 = vmatprep.subr.mxu0 0.0
    %5141 = vmatpush1.msra.mxu0 0.0
    %5142 = vmatprep.subr.mxu0 0.0
    %5143 = vmatpush1.msra.mxu0 0.0
    %5144 = vmatprep.subr.mxu0 0.0
    %5145 = vmatpush1.msra.mxu0 0.0
    %5146 = vmatprep.subr.mxu0 0.0
    %5147 = vmatpush1.msra.mxu0 0.0
    %5148 = vmatprep.subr.mxu0 0.0
    %5149 = vmatpush1.msra.mxu0 0.0
    %5150 = vmatprep.subr.mxu0 0.0
    %5151 = vmatpush1.msra.mxu0 0.0
    %5152 = vmatprep.subr.mxu0 0.0
    %5153 = vmatpush1.msra.mxu0 0.0
    %5154 = vmatprep.subr.mxu0 0.0
    %5155 = vmatpush1.msra.mxu0 0.0
    %5156 = vmatprep.subr.mxu0 0.0
    %5157 = vmatpush1.msra.mxu0 0.0
    %5158 = vmatprep.subr.mxu0 0.0
    %5159 = vmatpush1.msra.mxu0 0.0
    %5160 = vmatprep.subr.mxu0 0.0
    %5161 = vmatpush1.msra.mxu0 0.0
    %5162 = vmatprep.subr.mxu0 0.0
    %5163 = vmatpush1.msra.mxu0 0.0
    %5164 = vmatprep.subr.mxu0 0.0
    %5165 = vmatpush1.msra.mxu0 0.0
    %5166 = vmatprep.subr.mxu0 0.0
    %5167 = vmatpush1.msra.mxu0 0.0
    %5168 = vmatprep.subr.mxu0 0.0
    %5169 = vmatpush1.msra.mxu0 0.0
    %5170 = vmatprep.subr.mxu0 0.0
    %5171 = vmatpush1.msra.mxu0 0.0
    %5172 = vmatprep.subr.mxu0 0.0
    %5173 = vmatpush1.msra.mxu0 0.0
    %5174 = vmatprep.subr.mxu0 0.0
    %5175 = vmatpush1.msra.mxu0 0.0
    %5176 = vmatprep.mubr.f32.mxu0 0.0
    %5177 = vmatmul.mubr.f32.gmra.mrb[0].mxu0 %v5039
    %v5178 = vpop.f32.mrb[0].mxu0
    %v5179 = vadd.f32 %v221, %v5178
    %v5180 = vpop.f32.mrb[0].mxu0
    %5181 = vdwg.mxu0
    %v5182 = vadd.f32 %v5035, %v5108
    %v5183 = vmul.f32 %v5182, 0.5
    %v5184 = vtanh.pop %v5183
    %v5185 = vadd.f32 %v5184, 1.0
    %v5186 = vmul.f32 %v5185, 0.5
    %v5187 = vadd.f32 %v5036, %v5110
    %v5188 = vmul.f32 %v5187, 0.5
    %v5189 = vtanh.pop %v5188
    %v5190 = vadd.f32 %v5189, 1.0
    %v5191 = vmul.f32 %v5190, 0.5
    %v5192 = vmul.f32 %v5186, %v5179
    %v5193 = vadd.f32 %v5037, %v5192
    %v5194 = vtanh.pop %v5193
    %v5195 = vsub.f32 1.0, %v5191
    %v5196 = vmul.f32 %v5195, %v5194
    %v5197 = vmul.f32 %v5191, %v4532
    %v5198 = vadd.f32 %v5196, %v5197
    %5200 = vrot.lane.b32.xlu0 %v4697, 32
    %v5201 = vpop.permute.xlu0 %5200
    %v5203 = vsel %vm225, %v5198, %v5201
    %v5205 = vsel %vm441, %v5203, 0
    %5207 = vmatprep.subr.mxu0 %v389
    %5208 = vmatpush1.msra.mxu0 %v388
    %5209 = vmatprep.subr.mxu0 %v393
    %5210 = vmatpush1.msra.mxu0 %v392
    %5211 = vmatprep.subr.mxu0 %v397
    %5212 = vmatpush1.msra.mxu0 %v396
    %5213 = vmatprep.subr.mxu0 %v401
    %5214 = vmatpush1.msra.mxu0 %v400
    %5215 = vmatprep.subr.mxu0 %v405
    %5216 = vmatpush1.msra.mxu0 %v404
    %5217 = vmatprep.subr.mxu0 %v409
    %5218 = vmatpush1.msra.mxu0 %v408
    %5219 = vmatprep.subr.mxu0 %v413
    %5220 = vmatpush1.msra.mxu0 %v412
    %5221 = vmatprep.subr.mxu0 %v417
    %5222 = vmatpush1.msra.mxu0 %v416
    %5223 = vmatprep.subr.mxu0 0.0
    %5224 = vmatpush1.msra.mxu0 0.0
    %5225 = vmatprep.subr.mxu0 0.0
    %5226 = vmatpush1.msra.mxu0 0.0
    %5227 = vmatprep.subr.mxu0 0.0
    %5228 = vmatpush1.msra.mxu0 0.0
    %5229 = vmatprep.subr.mxu0 0.0
    %5230 = vmatpush1.msra.mxu0 0.0
    %5231 = vmatprep.subr.mxu0 0.0
    %5232 = vmatpush1.msra.mxu0 0.0
    %5233 = vmatprep.subr.mxu0 0.0
    %5234 = vmatpush1.msra.mxu0 0.0
    %5235 = vmatprep.subr.mxu0 0.0
    %5236 = vmatpush1.msra.mxu0 0.0
    %5237 = vmatprep.subr.mxu0 0.0
    %5238 = vmatpush1.msra.mxu0 0.0
    %5239 = vmatprep.subr.mxu0 0.0
    %5240 = vmatpush1.msra.mxu0 0.0
    %5241 = vmatprep.subr.mxu0 0.0
    %5242 = vmatpush1.msra.mxu0 0.0
    %5243 = vmatprep.subr.mxu0 0.0
    %5244 = vmatpush1.msra.mxu0 0.0
    %5245 = vmatprep.subr.mxu0 0.0
    %5246 = vmatpush1.msra.mxu0 0.0
    %5247 = vmatprep.subr.mxu0 0.0
    %5248 = vmatpush1.msra.mxu0 0.0
    %5249 = vmatprep.subr.mxu0 0.0
    %5250 = vmatpush1.msra.mxu0 0.0
    %5251 = vmatprep.subr.mxu0 0.0
    %5252 = vmatpush1.msra.mxu0 0.0
    %5253 = vmatprep.subr.mxu0 0.0
    %5254 = vmatpush1.msra.mxu0 0.0
    %5255 = vmatprep.subr.mxu0 0.0
    %5256 = vmatpush1.msra.mxu0 0.0
    %5257 = vmatprep.subr.mxu0 0.0
    %5258 = vmatpush1.msra.mxu0 0.0
    %5259 = vmatprep.subr.mxu0 0.0
    %5260 = vmatpush1.msra.mxu0 0.0
    %5261 = vmatprep.subr.mxu0 0.0
    %5262 = vmatpush1.msra.mxu0 0.0
    %5263 = vmatprep.subr.mxu0 0.0
    %5264 = vmatpush1.msra.mxu0 0.0
    %5265 = vmatprep.subr.mxu0 0.0
    %5266 = vmatpush1.msra.mxu0 0.0
    %5267 = vmatprep.subr.mxu0 0.0
    %5268 = vmatpush1.msra.mxu0 0.0
    %5269 = vmatprep.subr.mxu0 0.0
    %5270 = vmatpush1.msra.mxu0 0.0
    %5271 = vmatprep.mubr.f32.mxu0 0.0
    %5272 = vmatmul.mubr.f32.gmra.mrb[0].mxu0 %v5205
    %v5273 = vpop.f32.mrb[0].mxu0
    %v5274 = vadd.f32 %v424, %v5273
    %v5275 = vpop.f32.mrb[0].mxu0
    %v5276 = vadd.f32 %v428, %v5275
    %5277 = vdwg.mxu0
    %5278 = vmatprep.subr.mxu0 %v391
    %5279 = vmatpush1.msra.mxu0 %v390
    %5280 = vmatprep.subr.mxu0 %v395
    %5281 = vmatpush1.msra.mxu0 %v394
    %5282 = vmatprep.subr.mxu0 %v399
    %5283 = vmatpush1.msra.mxu0 %v398
    %5284 = vmatprep.subr.mxu0 %v403
    %5285 = vmatpush1.msra.mxu0 %v402
    %5286 = vmatprep.subr.mxu0 %v407
    %5287 = vmatpush1.msra.mxu0 %v406
    %5288 = vmatprep.subr.mxu0 %v411
    %5289 = vmatpush1.msra.mxu0 %v410
    %5290 = vmatprep.subr.mxu0 %v415
    %5291 = vmatpush1.msra.mxu0 %v414
    %5292 = vmatprep.subr.mxu0 %v419
    %5293 = vmatpush1.msra.mxu0 %v418
    %5294 = vmatprep.subr.mxu0 0.0
    %5295 = vmatpush1.msra.mxu0 0.0
    %5296 = vmatprep.subr.mxu0 0.0
    %5297 = vmatpush1.msra.mxu0 0.0
    %5298 = vmatprep.subr.mxu0 0.0
    %5299 = vmatpush1.msra.mxu0 0.0
    %5300 = vmatprep.subr.mxu0 0.0
    %5301 = vmatpush1.msra.mxu0 0.0
    %5302 = vmatprep.subr.mxu0 0.0
    %5303 = vmatpush1.msra.mxu0 0.0
    %5304 = vmatprep.subr.mxu0 0.0
    %5305 = vmatpush1.msra.mxu0 0.0
    %5306 = vmatprep.subr.mxu0 0.0
    %5307 = vmatpush1.msra.mxu0 0.0
    %5308 = vmatprep.subr.mxu0 0.0
    %5309 = vmatpush1.msra.mxu0 0.0
    %5310 = vmatprep.subr.mxu0 0.0
    %5311 = vmatpush1.msra.mxu0 0.0
    %5312 = vmatprep.subr.mxu0 0.0
    %5313 = vmatpush1.msra.mxu0 0.0
    %5314 = vmatprep.subr.mxu0 0.0
    %5315 = vmatpush1.msra.mxu0 0.0
    %5316 = vmatprep.subr.mxu0 0.0
    %5317 = vmatpush1.msra.mxu0 0.0
    %5318 = vmatprep.subr.mxu0 0.0
    %5319 = vmatpush1.msra.mxu0 0.0
    %5320 = vmatprep.subr.mxu0 0.0
    %5321 = vmatpush1.msra.mxu0 0.0
    %5322 = vmatprep.subr.mxu0 0.0
    %5323 = vmatpush1.msra.mxu0 0.0
    %5324 = vmatprep.subr.mxu0 0.0
    %5325 = vmatpush1.msra.mxu0 0.0
    %5326 = vmatprep.subr.mxu0 0.0
    %5327 = vmatpush1.msra.mxu0 0.0
    %5328 = vmatprep.subr.mxu0 0.0
    %5329 = vmatpush1.msra.mxu0 0.0
    %5330 = vmatprep.subr.mxu0 0.0
    %5331 = vmatpush1.msra.mxu0 0.0
    %5332 = vmatprep.subr.mxu0 0.0
    %5333 = vmatpush1.msra.mxu0 0.0
    %5334 = vmatprep.subr.mxu0 0.0
    %5335 = vmatpush1.msra.mxu0 0.0
    %5336 = vmatprep.subr.mxu0 0.0
    %5337 = vmatpush1.msra.mxu0 0.0
    %5338 = vmatprep.subr.mxu0 0.0
    %5339 = vmatpush1.msra.mxu0 0.0
    %5340 = vmatprep.subr.mxu0 0.0
    %5341 = vmatpush1.msra.mxu0 0.0
    %5342 = vmatprep.mubr.f32.mxu0 0.0
    %5343 = vmatmul.mubr.f32.gmra.mrb[0].mxu0 %v5205
    %v5344 = vpop.f32.mrb[0].mxu0
    %v5345 = vadd.f32 %v432, %v5344
    %v5346 = vpop.f32.mrb[0].mxu0
    %v5347 = vadd.f32 %v436, %v5346
    %5348 = vdwg.mxu0
    %v5349 = vmul.f32 %v5274, 0.5
    %v5350 = vtanh.pop %v5349
    %v5351 = vadd.f32 %v5350, 1.0
    %v5352 = vmul.f32 %v5351, 0.5
    %v5353 = vmul.f32 %v5276, 0.5
    %v5354 = vtanh.pop %v5353
    %v5355 = vadd.f32 %v5354, 1.0
    %v5356 = vmul.f32 %v5355, 0.5
    %v5357 = vmul.f32 %v5352, %v5347
    %v5358 = vadd.f32 %v5345, %v5357
    %v5359 = vtanh.pop %v5358
    %v5360 = vsub.f32 1.0, %v5356
    %v5361 = vmul.f32 %v5360, %v5359
    %v5362 = vmul.f32 %v5356, %v4697
    %v5363 = vadd.f32 %v5361, %v5362
    %5365 = vrot.lane.b32.xlu0 %v4862, 32
    %v5366 = vpop.permute.xlu0 %5365
    %v5368 = vsel %vm225, %v5363, %v5366
    %v5370 = vsel %vm441, %v5368, 0
    %5372 = vmatprep.subr.mxu0 %v605
    %5373 = vmatpush1.msra.mxu0 %v604
    %5374 = vmatprep.subr.mxu0 %v609
    %5375 = vmatpush1.msra.mxu0 %v608
    %5376 = vmatprep.subr.mxu0 %v613
    %5377 = vmatpush1.msra.mxu0 %v612
    %5378 = vmatprep.subr.mxu0 %v617
    %5379 = vmatpush1.msra.mxu0 %v616
    %5380 = vmatprep.subr.mxu0 %v621
    %5381 = vmatpush1.msra.mxu0 %v620
    %5382 = vmatprep.subr.mxu0 %v625
    %5383 = vmatpush1.msra.mxu0 %v624
    %5384 = vmatprep.subr.mxu0 %v629
    %5385 = vmatpush1.msra.mxu0 %v628
    %5386 = vmatprep.subr.mxu0 %v633
    %5387 = vmatpush1.msra.mxu0 %v632
    %5388 = vmatprep.subr.mxu0 0.0
    %5389 = vmatpush1.msra.mxu0 0.0
    %5390 = vmatprep.subr.mxu0 0.0
    %5391 = vmatpush1.msra.mxu0 0.0
    %5392 = vmatprep.subr.mxu0 0.0
    %5393 = vmatpush1.msra.mxu0 0.0
    %5394 = vmatprep.subr.mxu0 0.0
    %5395 = vmatpush1.msra.mxu0 0.0
    %5396 = vmatprep.subr.mxu0 0.0
    %5397 = vmatpush1.msra.mxu0 0.0
    %5398 = vmatprep.subr.mxu0 0.0
    %5399 = vmatpush1.msra.mxu0 0.0
    %5400 = vmatprep.subr.mxu0 0.0
    %5401 = vmatpush1.msra.mxu0 0.0
    %5402 = vmatprep.subr.mxu0 0.0
    %5403 = vmatpush1.msra.mxu0 0.0
    %5404 = vmatprep.subr.mxu0 0.0
    %5405 = vmatpush1.msra.mxu0 0.0
    %5406 = vmatprep.subr.mxu0 0.0
    %5407 = vmatpush1.msra.mxu0 0.0
    %5408 = vmatprep.subr.mxu0 0.0
    %5409 = vmatpush1.msra.mxu0 0.0
    %5410 = vmatprep.subr.mxu0 0.0
    %5411 = vmatpush1.msra.mxu0 0.0
    %5412 = vmatprep.subr.mxu0 0.0
    %5413 = vmatpush1.msra.mxu0 0.0
    %5414 = vmatprep.subr.mxu0 0.0
    %5415 = vmatpush1.msra.mxu0 0.0
    %5416 = vmatprep.subr.mxu0 0.0
    %5417 = vmatpush1.msra.mxu0 0.0
    %5418 = vmatprep.subr.mxu0 0.0
    %5419 = vmatpush1.msra.mxu0 0.0
    %5420 = vmatprep.subr.mxu0 0.0
    %5421 = vmatpush1.msra.mxu0 0.0
    %5422 = vmatprep.subr.mxu0 0.0
    %5423 = vmatpush1.msra.mxu0 0.0
    %5424 = vmatprep.subr.mxu0 0.0
    %5425 = vmatpush1.msra.mxu0 0.0
    %5426 = vmatprep.subr.mxu0 0.0
    %5427 = vmatpush1.msra.mxu0 0.0
    %5428 = vmatprep.subr.mxu0 0.0
    %5429 = vmatpush1.msra.mxu0 0.0
    %5430 = vmatprep.subr.mxu0 0.0
    %5431 = vmatpush1.msra.mxu0 0.0
    %5432 = vmatprep.subr.mxu0 0.0
    %5433 = vmatpush1.msra.mxu0 0.0
    %5434 = vmatprep.subr.mxu0 0.0
    %5435 = vmatpush1.msra.mxu0 0.0
    %5436 = vmatprep.mubr.f32.mxu0 0.0
    %5437 = vmatmul.mubr.f32.gmra.mrb[0].mxu0 %v5370
    %v5438 = vpop.f32.mrb[0].mxu0
    %v5439 = vadd.f32 %v640, %v5438
    %v5440 = vpop.f32.mrb[0].mxu0
    %v5441 = vadd.f32 %v644, %v5440
    %5442 = vdwg.mxu0
    %5443 = vmatprep.subr.mxu0 %v607
    %5444 = vmatpush1.msra.mxu0 %v606
    %5445 = vmatprep.subr.mxu0 %v611
    %5446 = vmatpush1.msra.mxu0 %v610
    %5447 = vmatprep.subr.mxu0 %v615
    %5448 = vmatpush1.msra.mxu0 %v614
    %5449 = vmatprep.subr.mxu0 %v619
    %5450 = vmatpush1.msra.mxu0 %v618
    %5451 = vmatprep.subr.mxu0 %v623
    %5452 = vmatpush1.msra.mxu0 %v622
    %5453 = vmatprep.subr.mxu0 %v627
    %5454 = vmatpush1.msra.mxu0 %v626
    %5455 = vmatprep.subr.mxu0 %v631
    %5456 = vmatpush1.msra.mxu0 %v630
    %5457 = vmatprep.subr.mxu0 %v635
    %5458 = vmatpush1.msra.mxu0 %v634
    %5459 = vmatprep.subr.mxu0 0.0
    %5460 = vmatpush1.msra.mxu0 0.0
    %5461 = vmatprep.subr.mxu0 0.0
    %5462 = vmatpush1.msra.mxu0 0.0
    %5463 = vmatprep.subr.mxu0 0.0
    %5464 = vmatpush1.msra.mxu0 0.0
    %5465 = vmatprep.subr.mxu0 0.0
    %5466 = vmatpush1.msra.mxu0 0.0
    %5467 = vmatprep.subr.mxu0 0.0
    %5468 = vmatpush1.msra.mxu0 0.0
    %5469 = vmatprep.subr.mxu0 0.0
    %5470 = vmatpush1.msra.mxu0 0.0
    %5471 = vmatprep.subr.mxu0 0.0
    %5472 = vmatpush1.msra.mxu0 0.0
    %5473 = vmatprep.subr.mxu0 0.0
    %5474 = vmatpush1.msra.mxu0 0.0
    %5475 = vmatprep.subr.mxu0 0.0
    %5476 = vmatpush1.msra.mxu0 0.0
    %5477 = vmatprep.subr.mxu0 0.0
    %5478 = vmatpush1.msra.mxu0 0.0
    %5479 = vmatprep.subr.mxu0 0.0
    %5480 = vmatpush1.msra.mxu0 0.0
    %5481 = vmatprep.subr.mxu0 0.0
    %5482 = vmatpush1.msra.mxu0 0.0
    %5483 = vmatprep.subr.mxu0 0.0
    %5484 = vmatpush1.msra.mxu0 0.0
    %5485 = vmatprep.subr.mxu0 0.0
    %5486 = vmatpush1.msra.mxu0 0.0
    %5487 = vmatprep.subr.mxu0 0.0
    %5488 = vmatpush1.msra.mxu0 0.0
    %5489 = vmatprep.subr.mxu0 0.0
    %5490 = vmatpush1.msra.mxu0 0.0
    %5491 = vmatprep.subr.mxu0 0.0
    %5492 = vmatpush1.msra.mxu0 0.0
    %5493 = vmatprep.subr.mxu0 0.0
    %5494 = vmatpush1.msra.mxu0 0.0
    %5495 = vmatprep.subr.mxu0 0.0
    %5496 = vmatpush1.msra.mxu0 0.0
    %5497 = vmatprep.subr.mxu0 0.0
    %5498 = vmatpush1.msra.mxu0 0.0
    %5499 = vmatprep.subr.mxu0 0.0
    %5500 = vmatpush1.msra.mxu0 0.0
    %5501 = vmatprep.subr.mxu0 0.0
    %5502 = vmatpush1.msra.mxu0 0.0
    %5503 = vmatprep.subr.mxu0 0.0
    %5504 = vmatpush1.msra.mxu0 0.0
    %5505 = vmatprep.subr.mxu0 0.0
    %5506 = vmatpush1.msra.mxu0 0.0
    %5507 = vmatprep.mubr.f32.mxu0 0.0
    %5508 = vmatmul.mubr.f32.gmra.mrb[0].mxu0 %v5370
    %v5509 = vpop.f32.mrb[0].mxu0
    %v5510 = vadd.f32 %v648, %v5509
    %v5511 = vpop.f32.mrb[0].mxu0
    %v5512 = vadd.f32 %v652, %v5511
    %5513 = vdwg.mxu0
    %v5514 = vmul.f32 %v5439, 0.5
    %v5515 = vtanh.pop %v5514
    %v5516 = vadd.f32 %v5515, 1.0
    %v5517 = vmul.f32 %v5516, 0.5
    %v5518 = vmul.f32 %v5441, 0.5
    %v5519 = vtanh.pop %v5518
    %v5520 = vadd.f32 %v5519, 1.0
    %v5521 = vmul.f32 %v5520, 0.5
    %v5522 = vmul.f32 %v5517, %v5512
    %v5523 = vadd.f32 %v5510, %v5522
    %v5524 = vtanh.pop %v5523
    %v5525 = vsub.f32 1.0, %v5521
    %v5526 = vmul.f32 %v5525, %v5524
    %v5527 = vmul.f32 %v5521, %v4862
    %v5528 = vadd.f32 %v5526, %v5527
    %5530 = vrot.lane.b32.xlu0 %v5027, 32
    %v5531 = vpop.permute.xlu0 %5530
    %v5533 = vsel %vm225, %v5528, %v5531
    %v5535 = vsel %vm441, %v5533, 0
    %5537 = vmatprep.subr.mxu0 %v820
    %5538 = vmatpush1.msra.mxu0 %v819
    %5539 = vmatprep.subr.mxu0 %v824
    %5540 = vmatpush1.msra.mxu0 %v823
    %5541 = vmatprep.subr.mxu0 %v828
    %5542 = vmatpush1.msra.mxu0 %v827
    %5543 = vmatprep.subr.mxu0 %v832
    %5544 = vmatpush1.msra.mxu0 %v831
    %5545 = vmatprep.subr.mxu0 %v836
    %5546 = vmatpush1.msra.mxu0 %v835
    %5547 = vmatprep.subr.mxu0 %v840
    %5548 = vmatpush1.msra.mxu0 %v839
    %5549 = vmatprep.subr.mxu0 %v844
    %5550 = vmatpush1.msra.mxu0 %v843
    %5551 = vmatprep.subr.mxu0 %v848
    %5552 = vmatpush1.msra.mxu0 %v847
    %5553 = vmatprep.subr.mxu0 0.0
    %5554 = vmatpush1.msra.mxu0 0.0
    %5555 = vmatprep.subr.mxu0 0.0
    %5556 = vmatpush1.msra.mxu0 0.0
    %5557 = vmatprep.subr.mxu0 0.0
    %5558 = vmatpush1.msra.mxu0 0.0
    %5559 = vmatprep.subr.mxu0 0.0
    %5560 = vmatpush1.msra.mxu0 0.0
    %5561 = vmatprep.subr.mxu0 0.0
    %5562 = vmatpush1.msra.mxu0 0.0
    %5563 = vmatprep.subr.mxu0 0.0
    %5564 = vmatpush1.msra.mxu0 0.0
    %5565 = vmatprep.subr.mxu0 0.0
    %5566 = vmatpush1.msra.mxu0 0.0
    %5567 = vmatprep.subr.mxu0 0.0
    %5568 = vmatpush1.msra.mxu0 0.0
    %5569 = vmatprep.subr.mxu0 0.0
    %5570 = vmatpush1.msra.mxu0 0.0
    %5571 = vmatprep.subr.mxu0 0.0
    %5572 = vmatpush1.msra.mxu0 0.0
    %5573 = vmatprep.subr.mxu0 0.0
    %5574 = vmatpush1.msra.mxu0 0.0
    %5575 = vmatprep.subr.mxu0 0.0
    %5576 = vmatpush1.msra.mxu0 0.0
    %5577 = vmatprep.subr.mxu0 0.0
    %5578 = vmatpush1.msra.mxu0 0.0
    %5579 = vmatprep.subr.mxu0 0.0
    %5580 = vmatpush1.msra.mxu0 0.0
    %5581 = vmatprep.subr.mxu0 0.0
    %5582 = vmatpush1.msra.mxu0 0.0
    %5583 = vmatprep.subr.mxu0 0.0
    %5584 = vmatpush1.msra.mxu0 0.0
    %5585 = vmatprep.subr.mxu0 0.0
    %5586 = vmatpush1.msra.mxu0 0.0
    %5587 = vmatprep.subr.mxu0 0.0
    %5588 = vmatpush1.msra.mxu0 0.0
    %5589 = vmatprep.subr.mxu0 0.0
    %5590 = vmatpush1.msra.mxu0 0.0
    %5591 = vmatprep.subr.mxu0 0.0
    %5592 = vmatpush1.msra.mxu0 0.0
    %5593 = vmatprep.subr.mxu0 0.0
    %5594 = vmatpush1.msra.mxu0 0.0
    %5595 = vmatprep.subr.mxu0 0.0
    %5596 = vmatpush1.msra.mxu0 0.0
    %5597 = vmatprep.subr.mxu0 0.0
    %5598 = vmatpush1.msra.mxu0 0.0
    %5599 = vmatprep.subr.mxu0 0.0
    %5600 = vmatpush1.msra.mxu0 0.0
    %5601 = vmatprep.mubr.f32.mxu0 0.0
    %5602 = vmatmul.mubr.f32.gmra.mrb[0].mxu0 %v5535
    %v5603 = vpop.f32.mrb[0].mxu0
    %v5604 = vadd.f32 %v855, %v5603
    %v5605 = vpop.f32.mrb[0].mxu0
    %v5606 = vadd.f32 %v859, %v5605
    %5607 = vdwg.mxu0
    %5608 = vmatprep.subr.mxu0 %v822
    %5609 = vmatpush1.msra.mxu0 %v821
    %5610 = vmatprep.subr.mxu0 %v826
    %5611 = vmatpush1.msra.mxu0 %v825
    %5612 = vmatprep.subr.mxu0 %v830
    %5613 = vmatpush1.msra.mxu0 %v829
    %5614 = vmatprep.subr.mxu0 %v834
    %5615 = vmatpush1.msra.mxu0 %v833
    %5616 = vmatprep.subr.mxu0 %v838
    %5617 = vmatpush1.msra.mxu0 %v837
    %5618 = vmatprep.subr.mxu0 %v842
    %5619 = vmatpush1.msra.mxu0 %v841
    %5620 = vmatprep.subr.mxu0 %v846
    %5621 = vmatpush1.msra.mxu0 %v845
    %5622 = vmatprep.subr.mxu0 %v850
    %5623 = vmatpush1.msra.mxu0 %v849
    %5624 = vmatprep.subr.mxu0 0.0
    %5625 = vmatpush1.msra.mxu0 0.0
    %5626 = vmatprep.subr.mxu0 0.0
    %5627 = vmatpush1.msra.mxu0 0.0
    %5628 = vmatprep.subr.mxu0 0.0
    %5629 = vmatpush1.msra.mxu0 0.0
    %5630 = vmatprep.subr.mxu0 0.0
    %5631 = vmatpush1.msra.mxu0 0.0
    %5632 = vmatprep.subr.mxu0 0.0
    %5633 = vmatpush1.msra.mxu0 0.0
    %5634 = vmatprep.subr.mxu0 0.0
    %5635 = vmatpush1.msra.mxu0 0.0
    %5636 = vmatprep.subr.mxu0 0.0
    %5637 = vmatpush1.msra.mxu0 0.0
    %5638 = vmatprep.subr.mxu0 0.0
    %5639 = vmatpush1.msra.mxu0 0.0
    %5640 = vmatprep.subr.mxu0 0.0
    %5641 = vmatpush1.msra.mxu0 0.0
    %5642 = vmatprep.subr.mxu0 0.0
    %5643 = vmatpush1.msra.mxu0 0.0
    %5644 = vmatprep.subr.mxu0 0.0
    %5645 = vmatpush1.msra.mxu0 0.0
    %5646 = vmatprep.subr.mxu0 0.0
    %5647 = vmatpush1.msra.mxu0 0.0
    %5648 = vmatprep.subr.mxu0 0.0
    %5649 = vmatpush1.msra.mxu0 0.0
    %5650 = vmatprep.subr.mxu0 0.0
    %5651 = vmatpush1.msra.mxu0 0.0
    %5652 = vmatprep.subr.mxu0 0.0
    %5653 = vmatpush1.msra.mxu0 0.0
    %5654 = vmatprep.subr.mxu0 0.0
    %5655 = vmatpush1.msra.mxu0 0.0
    %5656 = vmatprep.subr.mxu0 0.0
    %5657 = vmatpush1.msra.mxu0 0.0
    %5658 = vmatprep.subr.mxu0 0.0
    %5659 = vmatpush1.msra.mxu0 0.0
    %5660 = vmatprep.subr.mxu0 0.0
    %5661 = vmatpush1.msra.mxu0 0.0
    %5662 = vmatprep.subr.mxu0 0.0
    %5663 = vmatpush1.msra.mxu0 0.0
    %5664 = vmatprep.subr.mxu0 0.0
    %5665 = vmatpush1.msra.mxu0 0.0
    %5666 = vmatprep.subr.mxu0 0.0
    %5667 = vmatpush1.msra.mxu0 0.0
    %5668 = vmatprep.subr.mxu0 0.0
    %5669 = vmatpush1.msra.mxu0 0.0
    %5670 = vmatprep.subr.mxu0 0.0
    %5671 = vmatpush1.msra.mxu0 0.0
    %5672 = vmatprep.mubr.f32.mxu0 0.0
    %5673 = vmatmul.mubr.f32.gmra.mrb[0].mxu0 %v5535
    %v5674 = vpop.f32.mrb[0].mxu0
    %v5675 = vadd.f32 %v863, %v5674
    %v5676 = vpop.f32.mrb[0].mxu0
    %v5677 = vadd.f32 %v867, %v5676
    %5678 = vdwg.mxu0
    %v5679 = vmul.f32 %v5604, 0.5
    %v5680 = vtanh.pop %v5679
    %v5681 = vadd.f32 %v5680, 1.0
    %v5682 = vmul.f32 %v5681, 0.5
    %v5683 = vmul.f32 %v5606, 0.5
    %v5684 = vtanh.pop %v5683
    %v5685 = vadd.f32 %v5684, 1.0
    %v5686 = vmul.f32 %v5685, 0.5
    %v5687 = vmul.f32 %v5682, %v5677
    %v5688 = vadd.f32 %v5675, %v5687
    %v5689 = vtanh.pop %v5688
    %v5690 = vsub.f32 1.0, %v5686
    %v5691 = vmul.f32 %v5690, %v5689
    %v5692 = vmul.f32 %v5686, %v5027
    %v5693 = vadd.f32 %v5691, %v5692
    %v5694 = vld [vmem:[%s27] sm:$0x1]
    %v5695 = vld [vmem:[#allocation2] sm:$0x1]
    %v5697 = vlaneseq
    %v5698 = vshrl.u32 %v5697, 7
    %v5699 = vsub.s32 0, %v5698
    %v5700 = vrot.slane %v5694, %v5699
    %v5702 = vmul.f32 %v1031, %v5700
    %vm5703 = vcmask 254976
    %v5704 = vsel %vm5703, %v5702, 0.0
    %5705 = vadd.xlane.f32.xlu0 %v5704
    %v5706 = vpop.xlane.xlu0 %5705
    %v5708 = vlaneseq
    %v5709 = vshrl.u32 %v5708, 7
    %v5710 = vsub.s32 0, %v5709
    %v5711 = vrot.slane %v5695, %v5710
    %v5713 = vadd.f32 %v5706, %v5711
    %v5714 = vmul.f32 %v1697, %v5700
    %v5715 = vsel %vm5703, %v5714, 0.0
    %5716 = vadd.xlane.f32.xlu0 %v5715
    %v5717 = vpop.xlane.xlu0 %5716
    %v5718 = vadd.f32 %v5717, %v5711
    %v5719 = vmul.f32 %v2363, %v5700
    %v5720 = vsel %vm5703, %v5719, 0.0
    %5721 = vadd.xlane.f32.xlu0 %v5720
    %v5722 = vpop.xlane.xlu0 %5721
    %v5723 = vadd.f32 %v5722, %v5711
    %v5724 = vmul.f32 %v3029, %v5700
    %v5725 = vsel %vm5703, %v5724, 0.0
    %5726 = vadd.xlane.f32.xlu0 %v5725
    %v5727 = vpop.xlane.xlu0 %5726
    %v5728 = vadd.f32 %v5727, %v5711
    %v5729 = vmul.f32 %v3695, %v5700
    %v5730 = vsel %vm5703, %v5729, 0.0
    %5731 = vadd.xlane.f32.xlu0 %v5730
    %v5732 = vpop.xlane.xlu0 %5731
    %v5733 = vadd.f32 %v5732, %v5711
    %v5734 = vmul.f32 %v4361, %v5700
    %v5735 = vsel %vm5703, %v5734, 0.0
    %5736 = vadd.xlane.f32.xlu0 %v5735
    %v5737 = vpop.xlane.xlu0 %5736
    %v5738 = vadd.f32 %v5737, %v5711
    %v5739 = vmul.f32 %v5027, %v5700
    %v5740 = vsel %vm5703, %v5739, 0.0
    %5741 = vadd.xlane.f32.xlu0 %v5740
    %v5742 = vpop.xlane.xlu0 %5741
    %v5743 = vadd.f32 %v5742, %v5711
    %v5744 = vmul.f32 %v5693, %v5700
    %v5745 = vsel %vm5703, %v5744, 0.0
    %5746 = vadd.xlane.f32.xlu0 %v5745
    %v5747 = vpop.xlane.xlu0 %5746
    %v5748 = vadd.f32 %v5747, %v5711
    %v5749 = vmax.f32 %v5713, %v5718
    %v5750 = vmax.f32 %v5749, %v5723
    %v5751 = vmax.f32 %v5750, %v5728
    %v5752 = vmax.f32 %v5751, %v5733
    %v5753 = vmax.f32 %v5752, %v5738
    %v5754 = vmax.f32 %v5753, %v5743
    %v5755 = vmax.f32 %v5754, %v5748
    %v5756 = vsub.f32 %v5713, %v5755
    %v5757 = vmul.f32 %v5756, 1.442695
    %v5758 = vpow.pop %v5757
    %v5759 = vsub.f32 %v5718, %v5755
    %v5760 = vmul.f32 %v5759, 1.442695
    %v5761 = vpow.pop %v5760
    %v5762 = vsub.f32 %v5723, %v5755
    %v5763 = vmul.f32 %v5762, 1.442695
    %v5764 = vpow.pop %v5763
    %v5765 = vsub.f32 %v5728, %v5755
    %v5766 = vmul.f32 %v5765, 1.442695
    %v5767 = vpow.pop %v5766
    %v5768 = vsub.f32 %v5733, %v5755
    %v5769 = vmul.f32 %v5768, 1.442695
    %v5770 = vpow.pop %v5769
    %v5771 = vsub.f32 %v5738, %v5755
    %v5772 = vmul.f32 %v5771, 1.442695
    %v5773 = vpow.pop %v5772
    %v5774 = vsub.f32 %v5743, %v5755
    %v5775 = vmul.f32 %v5774, 1.442695
    %v5776 = vpow.pop %v5775
    %v5777 = vsub.f32 %v5748, %v5755
    %v5778 = vmul.f32 %v5777, 1.442695
    %v5779 = vpow.pop %v5778
    %v5780 = vadd.f32 %v5758, %v5761
    %v5781 = vadd.f32 %v5780, %v5764
    %v5782 = vadd.f32 %v5781, %v5767
    %v5783 = vadd.f32 %v5782, %v5770
    %v5784 = vadd.f32 %v5783, %v5773
    %v5785 = vadd.f32 %v5784, %v5776
    %v5786 = vadd.f32 %v5785, %v5779
    %v5787 = vrcp.pop %v5786
    %v5788 = vmul.f32 %v5758, %v5787
    %5790 = vset.pattern.permute.xlu0 0
    %5791 = vperm.xlu0 %5790, %v5788
    %v5792 = vpop.permute.xlu0 %5791
    %v5794 = vmul.f32 %v1031, %v5792
    %v5795 = vadd.f32 %v5794, 0.0
    %v5796 = vmul.f32 %v5761, %v5787
    %5798 = vset.pattern.permute.xlu0 0
    %5799 = vperm.xlu0 %5798, %v5796
    %v5800 = vpop.permute.xlu0 %5799
    %v5802 = vmul.f32 %v1697, %v5800
    %v5803 = vadd.f32 %v5795, %v5802
    %v5804 = vmul.f32 %v5764, %v5787
    %5806 = vset.pattern.permute.xlu0 0
    %5807 = vperm.xlu0 %5806, %v5804
    %v5808 = vpop.permute.xlu0 %5807
    %v5810 = vmul.f32 %v2363, %v5808
    %v5811 = vadd.f32 %v5803, %v5810
    %v5812 = vmul.f32 %v5767, %v5787
    %5814 = vset.pattern.permute.xlu0 0
    %5815 = vperm.xlu0 %5814, %v5812
    %v5816 = vpop.permute.xlu0 %5815
    %v5818 = vmul.f32 %v3029, %v5816
    %v5819 = vadd.f32 %v5811, %v5818
    %v5820 = vmul.f32 %v5770, %v5787
    %5822 = vset.pattern.permute.xlu0 0
    %5823 = vperm.xlu0 %5822, %v5820
    %v5824 = vpop.permute.xlu0 %5823
    %v5826 = vmul.f32 %v3695, %v5824
    %v5827 = vadd.f32 %v5819, %v5826
    %v5828 = vmul.f32 %v5773, %v5787
    %5830 = vset.pattern.permute.xlu0 0
    %5831 = vperm.xlu0 %5830, %v5828
    %v5832 = vpop.permute.xlu0 %5831
    %v5834 = vmul.f32 %v4361, %v5832
    %v5835 = vadd.f32 %v5827, %v5834
    %v5836 = vmul.f32 %v5776, %v5787
    %5838 = vset.pattern.permute.xlu0 0
    %5839 = vperm.xlu0 %5838, %v5836
    %v5840 = vpop.permute.xlu0 %5839
    %v5842 = vmul.f32 %v5027, %v5840
    %v5843 = vadd.f32 %v5835, %v5842
    %v5844 = vmul.f32 %v5779, %v5787
    %5846 = vset.pattern.permute.xlu0 0
    %5847 = vperm.xlu0 %5846, %v5844
    %v5848 = vpop.permute.xlu0 %5847
    %v5850 = vmul.f32 %v5693, %v5848
    %v5851 = vadd.f32 %v5843, %v5850
    %v5852 = vld [vmem:[%s31] sm:$0x1]
    %v5853 = vld [vmem:[#allocation3] sm:$0x1]
    %v5855 = vlaneseq
    %v5856 = vshrl.u32 %v5855, 7
    %v5857 = vsub.s32 0, %v5856
    %v5858 = vrot.slane %v5852, %v5857
    %v5860 = vmul.f32 %v1031, %v5858
    %v5861 = vsel %vm5703, %v5860, 0.0
    %5862 = vadd.xlane.f32.xlu0 %v5861
    %v5863 = vpop.xlane.xlu0 %5862
    %v5865 = vlaneseq
    %v5866 = vshrl.u32 %v5865, 7
    %v5867 = vsub.s32 0, %v5866
    %v5868 = vrot.slane %v5853, %v5867
    %v5870 = vadd.f32 %v5863, %v5868
    %v5871 = vmul.f32 %v1697, %v5858
    %v5872 = vsel %vm5703, %v5871, 0.0
    %5873 = vadd.xlane.f32.xlu0 %v5872
    %v5874 = vpop.xlane.xlu0 %5873
    %v5875 = vadd.f32 %v5874, %v5868
    %v5876 = vmul.f32 %v2363, %v5858
    %v5877 = vsel %vm5703, %v5876, 0.0
    %5878 = vadd.xlane.f32.xlu0 %v5877
    %v5879 = vpop.xlane.xlu0 %5878
    %v5880 = vadd.f32 %v5879, %v5868
    %v5881 = vmul.f32 %v3029, %v5858
    %v5882 = vsel %vm5703, %v5881, 0.0
    %5883 = vadd.xlane.f32.xlu0 %v5882
    %v5884 = vpop.xlane.xlu0 %5883
    %v5885 = vadd.f32 %v5884, %v5868
    %v5886 = vmul.f32 %v3695, %v5858
    %v5887 = vsel %vm5703, %v5886, 0.0
    %5888 = vadd.xlane.f32.xlu0 %v5887
    %v5889 = vpop.xlane.xlu0 %5888
    %v5890 = vadd.f32 %v5889, %v5868
    %v5891 = vmul.f32 %v4361, %v5858
    %v5892 = vsel %vm5703, %v5891, 0.0
    %5893 = vadd.xlane.f32.xlu0 %v5892
    %v5894 = vpop.xlane.xlu0 %5893
    %v5895 = vadd.f32 %v5894, %v5868
    %v5896 = vmul.f32 %v5027, %v5858
    %v5897 = vsel %vm5703, %v5896, 0.0
    %5898 = vadd.xlane.f32.xlu0 %v5897
    %v5899 = vpop.xlane.xlu0 %5898
    %v5900 = vadd.f32 %v5899, %v5868
    %v5901 = vmul.f32 %v5693, %v5858
    %v5902 = vsel %vm5703, %v5901, 0.0
    %5903 = vadd.xlane.f32.xlu0 %v5902
    %v5904 = vpop.xlane.xlu0 %5903
    %v5905 = vadd.f32 %v5904, %v5868
    %v5906 = vmax.f32 %v5870, %v5875
    %v5907 = vmax.f32 %v5906, %v5880
    %v5908 = vmax.f32 %v5907, %v5885
    %v5909 = vmax.f32 %v5908, %v5890
    %v5910 = vmax.f32 %v5909, %v5895
    %v5911 = vmax.f32 %v5910, %v5900
    %v5912 = vmax.f32 %v5911, %v5905
    %v5913 = vsub.f32 %v5870, %v5912
    %v5914 = vmul.f32 %v5913, 1.442695
    %v5915 = vpow.pop %v5914
    %v5916 = vsub.f32 %v5875, %v5912
    %v5917 = vmul.f32 %v5916, 1.442695
    %v5918 = vpow.pop %v5917
    %v5919 = vsub.f32 %v5880, %v5912
    %v5920 = vmul.f32 %v5919, 1.442695
    %v5921 = vpow.pop %v5920
    %v5922 = vsub.f32 %v5885, %v5912
    %v5923 = vmul.f32 %v5922, 1.442695
    %v5924 = vpow.pop %v5923
    %v5925 = vsub.f32 %v5890, %v5912
    %v5926 = vmul.f32 %v5925, 1.442695
    %v5927 = vpow.pop %v5926
    %v5928 = vsub.f32 %v5895, %v5912
    %v5929 = vmul.f32 %v5928, 1.442695
    %v5930 = vpow.pop %v5929
    %v5931 = vsub.f32 %v5900, %v5912
    %v5932 = vmul.f32 %v5931, 1.442695
    %v5933 = vpow.pop %v5932
    %v5934 = vsub.f32 %v5905, %v5912
    %v5935 = vmul.f32 %v5934, 1.442695
    %v5936 = vpow.pop %v5935
    %v5937 = vadd.f32 %v5915, %v5918
    %v5938 = vadd.f32 %v5937, %v5921
    %v5939 = vadd.f32 %v5938, %v5924
    %v5940 = vadd.f32 %v5939, %v5927
    %v5941 = vadd.f32 %v5940, %v5930
    %v5942 = vadd.f32 %v5941, %v5933
    %v5943 = vadd.f32 %v5942, %v5936
    %v5944 = vrcp.pop %v5943
    %v5945 = vmul.f32 %v5915, %v5944
    %5947 = vset.pattern.permute.xlu0 0
    %5948 = vperm.xlu0 %5947, %v5945
    %v5949 = vpop.permute.xlu0 %5948
    %v5951 = vmul.f32 %v1031, %v5949
    %v5952 = vadd.f32 %v5951, 0.0
    %v5953 = vmul.f32 %v5918, %v5944
    %5955 = vset.pattern.permute.xlu0 0
    %5956 = vperm.xlu0 %5955, %v5953
    %v5957 = vpop.permute.xlu0 %5956
    %v5959 = vmul.f32 %v1697, %v5957
    %v5960 = vadd.f32 %v5952, %v5959
    %v5961 = vmul.f32 %v5921, %v5944
    %5963 = vset.pattern.permute.xlu0 0
    %5964 = vperm.xlu0 %5963, %v5961
    %v5965 = vpop.permute.xlu0 %5964
    %v5967 = vmul.f32 %v2363, %v5965
    %v5968 = vadd.f32 %v5960, %v5967
    %v5969 = vmul.f32 %v5924, %v5944
    %5971 = vset.pattern.permute.xlu0 0
    %5972 = vperm.xlu0 %5971, %v5969
    %v5973 = vpop.permute.xlu0 %5972
    %v5975 = vmul.f32 %v3029, %v5973
    %v5976 = vadd.f32 %v5968, %v5975
    %v5977 = vmul.f32 %v5927, %v5944
    %5979 = vset.pattern.permute.xlu0 0
    %5980 = vperm.xlu0 %5979, %v5977
    %v5981 = vpop.permute.xlu0 %5980
    %v5983 = vmul.f32 %v3695, %v5981
    %v5984 = vadd.f32 %v5976, %v5983
    %v5985 = vmul.f32 %v5930, %v5944
    %5987 = vset.pattern.permute.xlu0 0
    %5988 = vperm.xlu0 %5987, %v5985
    %v5989 = vpop.permute.xlu0 %5988
    %v5991 = vmul.f32 %v4361, %v5989
    %v5992 = vadd.f32 %v5984, %v5991
    %v5993 = vmul.f32 %v5933, %v5944
    %5995 = vset.pattern.permute.xlu0 0
    %5996 = vperm.xlu0 %5995, %v5993
    %v5997 = vpop.permute.xlu0 %5996
    %v5999 = vmul.f32 %v5027, %v5997
    %v6000 = vadd.f32 %v5992, %v5999
    %v6001 = vmul.f32 %v5936, %v5944
    %6003 = vset.pattern.permute.xlu0 0
    %6004 = vperm.xlu0 %6003, %v6001
    %v6005 = vpop.permute.xlu0 %6004
    %v6007 = vmul.f32 %v5693, %v6005
    %v6008 = vadd.f32 %v6000, %v6007
    %v6009 = vld [vmem:[%s3] sm:$0x3]
    %v6010 = vld [vmem:[%s35] sm:$0xff]
    %v6011 = vld [vmem:[%s35 + $0x8] sm:$0xff]
    %v6012 = vld [vmem:[%s35 + $0x10] sm:$0xff]
    %v6013 = vld [vmem:[%s35 + $0x18] sm:$0xff]
    %v6014 = vld [vmem:[%s37] sm:$0xff]
    %vm6015 = vcmask 64512
    %v6017 = vsel %vm6015, %v6009, 0
    %6019 = vmatprep.subr.mxu0 0.0
    %6020 = vmatpush1.msra.mxu0 %v6014
    %6021 = vmatprep.subr.mxu0 0.0
    %6022 = vmatpush1.msra.mxu0 0.0
    %6023 = vmatprep.subr.mxu0 0.0
    %6024 = vmatpush1.msra.mxu0 0.0
    %6025 = vmatprep.subr.mxu0 0.0
    %6026 = vmatpush1.msra.mxu0 0.0
    %6027 = vmatprep.subr.mxu0 0.0
    %6028 = vmatpush1.msra.mxu0 0.0
    %6029 = vmatprep.subr.mxu0 0.0
    %6030 = vmatpush1.msra.mxu0 0.0
    %6031 = vmatprep.subr.mxu0 0.0
    %6032 = vmatpush1.msra.mxu0 0.0
    %6033 = vmatprep.subr.mxu0 0.0
    %6034 = vmatpush1.msra.mxu0 0.0
    %6035 = vmatprep.subr.mxu0 0.0
    %6036 = vmatpush1.msra.mxu0 0.0
    %6037 = vmatprep.subr.mxu0 0.0
    %6038 = vmatpush1.msra.mxu0 0.0
    %6039 = vmatprep.subr.mxu0 0.0
    %6040 = vmatpush1.msra.mxu0 0.0
    %6041 = vmatprep.subr.mxu0 0.0
    %6042 = vmatpush1.msra.mxu0 0.0
    %6043 = vmatprep.subr.mxu0 0.0
    %6044 = vmatpush1.msra.mxu0 0.0
    %6045 = vmatprep.subr.mxu0 0.0
    %6046 = vmatpush1.msra.mxu0 0.0
    %6047 = vmatprep.subr.mxu0 0.0
    %6048 = vmatpush1.msra.mxu0 0.0
    %6049 = vmatprep.subr.mxu0 0.0
    %6050 = vmatpush1.msra.mxu0 0.0
    %6051 = vmatprep.subr.mxu0 0.0
    %6052 = vmatpush1.msra.mxu0 0.0
    %6053 = vmatprep.subr.mxu0 0.0
    %6054 = vmatpush1.msra.mxu0 0.0
    %6055 = vmatprep.subr.mxu0 0.0
    %6056 = vmatpush1.msra.mxu0 0.0
    %6057 = vmatprep.subr.mxu0 0.0
    %6058 = vmatpush1.msra.mxu0 0.0
    %6059 = vmatprep.subr.mxu0 0.0
    %6060 = vmatpush1.msra.mxu0 0.0
    %6061 = vmatprep.subr.mxu0 0.0
    %6062 = vmatpush1.msra.mxu0 0.0
    %6063 = vmatprep.subr.mxu0 0.0
    %6064 = vmatpush1.msra.mxu0 0.0
    %6065 = vmatprep.subr.mxu0 0.0
    %6066 = vmatpush1.msra.mxu0 0.0
    %6067 = vmatprep.subr.mxu0 0.0
    %6068 = vmatpush1.msra.mxu0 0.0
    %6069 = vmatprep.subr.mxu0 0.0
    %6070 = vmatpush1.msra.mxu0 0.0
    %6071 = vmatprep.subr.mxu0 0.0
    %6072 = vmatpush1.msra.mxu0 0.0
    %6073 = vmatprep.subr.mxu0 0.0
    %6074 = vmatpush1.msra.mxu0 0.0
    %6075 = vmatprep.subr.mxu0 0.0
    %6076 = vmatpush1.msra.mxu0 0.0
    %6077 = vmatprep.subr.mxu0 0.0
    %6078 = vmatpush1.msra.mxu0 0.0
    %6079 = vmatprep.subr.mxu0 0.0
    %6080 = vmatpush1.msra.mxu0 0.0
    %6081 = vmatprep.subr.mxu0 0.0
    %6082 = vmatpush1.msra.mxu0 0.0
    %6083 = vmatprep.mubr.f32.mxu0 0.0
    %6084 = vmatmul.mubr.f32.gmra.mrb[0].mxu0 %v6017
    %v6085 = vpop.f32.mrb[0].mxu0
    %v6086 = vadd.f32 0.0, %v6085
    %v6087 = vpop.f32.mrb[0].mxu0
    %6088 = vdwg.mxu0
    %v6090 = vsel %vm225, %v5851, 0
    %6092 = vmatprep.subr.mxu0 0.0
    %6093 = vmatpush1.msra.mxu0 %v6010
    %6094 = vmatprep.subr.mxu0 0.0
    %6095 = vmatpush1.msra.mxu0 %v6011
    %6096 = vmatprep.subr.mxu0 0.0
    %6097 = vmatpush1.msra.mxu0 %v6012
    %6098 = vmatprep.subr.mxu0 0.0
    %6099 = vmatpush1.msra.mxu0 %v6013
    %6100 = vmatprep.subr.mxu0 0.0
    %6101 = vmatpush1.msra.mxu0 0.0
    %6102 = vmatprep.subr.mxu0 0.0
    %6103 = vmatpush1.msra.mxu0 0.0
    %6104 = vmatprep.subr.mxu0 0.0
    %6105 = vmatpush1.msra.mxu0 0.0
    %6106 = vmatprep.subr.mxu0 0.0
    %6107 = vmatpush1.msra.mxu0 0.0
    %6108 = vmatprep.subr.mxu0 0.0
    %6109 = vmatpush1.msra.mxu0 0.0
    %6110 = vmatprep.subr.mxu0 0.0
    %6111 = vmatpush1.msra.mxu0 0.0
    %6112 = vmatprep.subr.mxu0 0.0
    %6113 = vmatpush1.msra.mxu0 0.0
    %6114 = vmatprep.subr.mxu0 0.0
    %6115 = vmatpush1.msra.mxu0 0.0
    %6116 = vmatprep.subr.mxu0 0.0
    %6117 = vmatpush1.msra.mxu0 0.0
    %6118 = vmatprep.subr.mxu0 0.0
    %6119 = vmatpush1.msra.mxu0 0.0
    %6120 = vmatprep.subr.mxu0 0.0
    %6121 = vmatpush1.msra.mxu0 0.0
    %6122 = vmatprep.subr.mxu0 0.0
    %6123 = vmatpush1.msra.mxu0 0.0
    %6124 = vmatprep.subr.mxu0 0.0
    %6125 = vmatpush1.msra.mxu0 0.0
    %6126 = vmatprep.subr.mxu0 0.0
    %6127 = vmatpush1.msra.mxu0 0.0
    %6128 = vmatprep.subr.mxu0 0.0
    %6129 = vmatpush1.msra.mxu0 0.0
    %6130 = vmatprep.subr.mxu0 0.0
    %6131 = vmatpush1.msra.mxu0 0.0
    %6132 = vmatprep.subr.mxu0 0.0
    %6133 = vmatpush1.msra.mxu0 0.0
    %6134 = vmatprep.subr.mxu0 0.0
    %6135 = vmatpush1.msra.mxu0 0.0
    %6136 = vmatprep.subr.mxu0 0.0
    %6137 = vmatpush1.msra.mxu0 0.0
    %6138 = vmatprep.subr.mxu0 0.0
    %6139 = vmatpush1.msra.mxu0 0.0
    %6140 = vmatprep.subr.mxu0 0.0
    %6141 = vmatpush1.msra.mxu0 0.0
    %6142 = vmatprep.subr.mxu0 0.0
    %6143 = vmatpush1.msra.mxu0 0.0
    %6144 = vmatprep.subr.mxu0 0.0
    %6145 = vmatpush1.msra.mxu0 0.0
    %6146 = vmatprep.subr.mxu0 0.0
    %6147 = vmatpush1.msra.mxu0 0.0
    %6148 = vmatprep.subr.mxu0 0.0
    %6149 = vmatpush1.msra.mxu0 0.0
    %6150 = vmatprep.subr.mxu0 0.0
    %6151 = vmatpush1.msra.mxu0 0.0
    %6152 = vmatprep.subr.mxu0 0.0
    %6153 = vmatpush1.msra.mxu0 0.0
    %6154 = vmatprep.subr.mxu0 0.0
    %6155 = vmatpush1.msra.mxu0 0.0
    %6156 = vmatprep.mubr.f32.mxu0 0.0
    %6157 = vmatmul.mubr.f32.gmra.mrb[0].mxu0 %v6090
    %v6158 = vpop.f32.mrb[0].mxu0
    %v6159 = vadd.f32 %v6086, %v6158
    %v6160 = vpop.f32.mrb[0].mxu0
    %6161 = vdwg.mxu0
    %v6162 = vld [vmem:[%s39] sm:$0x1]
    %v6164 = vlaneseq
    %v6165 = vshrl.u32 %v6164, 7
    %v6166 = vsub.s32 0, %v6165
    %v6167 = vrot.slane %v6162, %v6166
    %v6169 = vadd.f32 %v6159, %v6167
    %vm6170 = vcmp.gt.f32.partialorder %v6169, 0.0
    %v6171 = vmin.f32 %v6169, 0.0
    %v6172 = vmul.f32 %v6171, 1.442695
    %v6173 = vpow.pop %v6172
    %v6174 = vsub.f32 %v6173, 1.0
    %v6175 = vsel %vm6170, %v6169, %v6174
    %v6176 = vld [vmem:[%s41] sm:$0xff]
    %v6177 = vld [vmem:[%s41 + $0x8] sm:$0xff]
    %v6178 = vld [vmem:[%s41 + $0x10] sm:$0xf]
    %v6179 = vld [vmem:[#allocation4] sm:$0x1]
    %v6181 = vlaneseq
    %v6182 = vshrl.u32 %v6181, 7
    %v6183 = vsub.s32 0, %v6182
    %v6184 = vrot.slane %v6179, %v6183
    %vm6186 = vcmask 162816
    %v6188 = vsel %vm6186, %v6175, 0
    %vm6190 = vcmask 1043456
    %v6192 = vsel %vm6190, %v6178, 0
    %6194 = vmatprep.subr.mxu0 0.0
    %6195 = vmatpush1.msra.mxu0 %v6176
    %6196 = vmatprep.subr.mxu0 0.0
    %6197 = vmatpush1.msra.mxu0 %v6177
    %6198 = vmatprep.subr.mxu0 0.0
    %6199 = vmatpush1.msra.mxu0 %v6192
    %6200 = vmatprep.subr.mxu0 0.0
    %6201 = vmatpush1.msra.mxu0 0.0
    %6202 = vmatprep.subr.mxu0 0.0
    %6203 = vmatpush1.msra.mxu0 0.0
    %6204 = vmatprep.subr.mxu0 0.0
    %6205 = vmatpush1.msra.mxu0 0.0
    %6206 = vmatprep.subr.mxu0 0.0
    %6207 = vmatpush1.msra.mxu0 0.0
    %6208 = vmatprep.subr.mxu0 0.0
    %6209 = vmatpush1.msra.mxu0 0.0
    %6210 = vmatprep.subr.mxu0 0.0
    %6211 = vmatpush1.msra.mxu0 0.0
    %6212 = vmatprep.subr.mxu0 0.0
    %6213 = vmatpush1.msra.mxu0 0.0
    %6214 = vmatprep.subr.mxu0 0.0
    %6215 = vmatpush1.msra.mxu0 0.0
    %6216 = vmatprep.subr.mxu0 0.0
    %6217 = vmatpush1.msra.mxu0 0.0
    %6218 = vmatprep.subr.mxu0 0.0
    %6219 = vmatpush1.msra.mxu0 0.0
    %6220 = vmatprep.subr.mxu0 0.0
    %6221 = vmatpush1.msra.mxu0 0.0
    %6222 = vmatprep.subr.mxu0 0.0
    %6223 = vmatpush1.msra.mxu0 0.0
    %6224 = vmatprep.subr.mxu0 0.0
    %6225 = vmatpush1.msra.mxu0 0.0
    %6226 = vmatprep.subr.mxu0 0.0
    %6227 = vmatpush1.msra.mxu0 0.0
    %6228 = vmatprep.subr.mxu0 0.0
    %6229 = vmatpush1.msra.mxu0 0.0
    %6230 = vmatprep.subr.mxu0 0.0
    %6231 = vmatpush1.msra.mxu0 0.0
    %6232 = vmatprep.subr.mxu0 0.0
    %6233 = vmatpush1.msra.mxu0 0.0
    %6234 = vmatprep.subr.mxu0 0.0
    %6235 = vmatpush1.msra.mxu0 0.0
    %6236 = vmatprep.subr.mxu0 0.0
    %6237 = vmatpush1.msra.mxu0 0.0
    %6238 = vmatprep.subr.mxu0 0.0
    %6239 = vmatpush1.msra.mxu0 0.0
    %6240 = vmatprep.subr.mxu0 0.0
    %6241 = vmatpush1.msra.mxu0 0.0
    %6242 = vmatprep.subr.mxu0 0.0
    %6243 = vmatpush1.msra.mxu0 0.0
    %6244 = vmatprep.subr.mxu0 0.0
    %6245 = vmatpush1.msra.mxu0 0.0
    %6246 = vmatprep.subr.mxu0 0.0
    %6247 = vmatpush1.msra.mxu0 0.0
    %6248 = vmatprep.subr.mxu0 0.0
    %6249 = vmatpush1.msra.mxu0 0.0
    %6250 = vmatprep.subr.mxu0 0.0
    %6251 = vmatpush1.msra.mxu0 0.0
    %6252 = vmatprep.subr.mxu0 0.0
    %6253 = vmatpush1.msra.mxu0 0.0
    %6254 = vmatprep.subr.mxu0 0.0
    %6255 = vmatpush1.msra.mxu0 0.0
    %6256 = vmatprep.subr.mxu0 0.0
    %6257 = vmatpush1.msra.mxu0 0.0
    %6258 = vmatprep.mubr.f32.mxu0 0.0
    %6259 = vmatmul.mubr.f32.gmra.mrb[0].mxu0 %v6188
    %v6260 = vpop.f32.mrb[0].mxu0
    %v6261 = vadd.f32 %v6184, %v6260
    %v6262 = vpop.f32.mrb[0].mxu0
    %6263 = vdwg.mxu0
    %v6264 = vld [vmem:[%s45] sm:$0xff]
    %v6265 = vld [vmem:[%s45 + $0x8] sm:$0xff]
    %v6266 = vld [vmem:[%s45 + $0x10] sm:$0xff]
    %v6267 = vld [vmem:[%s45 + $0x18] sm:$0xff]
    %v6268 = vld [vmem:[%s47] sm:$0xff]
    %6269 = vmatprep.subr.mxu0 0.0
    %6270 = vmatpush1.msra.mxu0 %v6268
    %6271 = vmatprep.subr.mxu0 0.0
    %6272 = vmatpush1.msra.mxu0 0.0
    %6273 = vmatprep.subr.mxu0 0.0
    %6274 = vmatpush1.msra.mxu0 0.0
    %6275 = vmatprep.subr.mxu0 0.0
    %6276 = vmatpush1.msra.mxu0 0.0
    %6277 = vmatprep.subr.mxu0 0.0
    %6278 = vmatpush1.msra.mxu0 0.0
    %6279 = vmatprep.subr.mxu0 0.0
    %6280 = vmatpush1.msra.mxu0 0.0
    %6281 = vmatprep.subr.mxu0 0.0
    %6282 = vmatpush1.msra.mxu0 0.0
    %6283 = vmatprep.subr.mxu0 0.0
    %6284 = vmatpush1.msra.mxu0 0.0
    %6285 = vmatprep.subr.mxu0 0.0
    %6286 = vmatpush1.msra.mxu0 0.0
    %6287 = vmatprep.subr.mxu0 0.0
    %6288 = vmatpush1.msra.mxu0 0.0
    %6289 = vmatprep.subr.mxu0 0.0
    %6290 = vmatpush1.msra.mxu0 0.0
    %6291 = vmatprep.subr.mxu0 0.0
    %6292 = vmatpush1.msra.mxu0 0.0
    %6293 = vmatprep.subr.mxu0 0.0
    %6294 = vmatpush1.msra.mxu0 0.0
    %6295 = vmatprep.subr.mxu0 0.0
    %6296 = vmatpush1.msra.mxu0 0.0
    %6297 = vmatprep.subr.mxu0 0.0
    %6298 = vmatpush1.msra.mxu0 0.0
    %6299 = vmatprep.subr.mxu0 0.0
    %6300 = vmatpush1.msra.mxu0 0.0
    %6301 = vmatprep.subr.mxu0 0.0
    %6302 = vmatpush1.msra.mxu0 0.0
    %6303 = vmatprep.subr.mxu0 0.0
    %6304 = vmatpush1.msra.mxu0 0.0
    %6305 = vmatprep.subr.mxu0 0.0
    %6306 = vmatpush1.msra.mxu0 0.0
    %6307 = vmatprep.subr.mxu0 0.0
    %6308 = vmatpush1.msra.mxu0 0.0
    %6309 = vmatprep.subr.mxu0 0.0
    %6310 = vmatpush1.msra.mxu0 0.0
    %6311 = vmatprep.subr.mxu0 0.0
    %6312 = vmatpush1.msra.mxu0 0.0
    %6313 = vmatprep.subr.mxu0 0.0
    %6314 = vmatpush1.msra.mxu0 0.0
    %6315 = vmatprep.subr.mxu0 0.0
    %6316 = vmatpush1.msra.mxu0 0.0
    %6317 = vmatprep.subr.mxu0 0.0
    %6318 = vmatpush1.msra.mxu0 0.0
    %6319 = vmatprep.subr.mxu0 0.0
    %6320 = vmatpush1.msra.mxu0 0.0
    %6321 = vmatprep.subr.mxu0 0.0
    %6322 = vmatpush1.msra.mxu0 0.0
    %6323 = vmatprep.subr.mxu0 0.0
    %6324 = vmatpush1.msra.mxu0 0.0
    %6325 = vmatprep.subr.mxu0 0.0
    %6326 = vmatpush1.msra.mxu0 0.0
    %6327 = vmatprep.subr.mxu0 0.0
    %6328 = vmatpush1.msra.mxu0 0.0
    %6329 = vmatprep.subr.mxu0 0.0
    %6330 = vmatpush1.msra.mxu0 0.0
    %6331 = vmatprep.subr.mxu0 0.0
    %6332 = vmatpush1.msra.mxu0 0.0
    %6333 = vmatprep.mubr.f32.mxu0 0.0
    %6334 = vmatmul.mubr.f32.gmra.mrb[0].mxu0 %v6017
    %v6335 = vpop.f32.mrb[0].mxu0
    %v6336 = vadd.f32 0.0, %v6335
    %v6337 = vpop.f32.mrb[0].mxu0
    %6338 = vdwg.mxu0
    %v6340 = vsel %vm225, %v6008, 0
    %6342 = vmatprep.subr.mxu0 0.0
    %6343 = vmatpush1.msra.mxu0 %v6264
    %6344 = vmatprep.subr.mxu0 0.0
    %6345 = vmatpush1.msra.mxu0 %v6265
    %6346 = vmatprep.subr.mxu0 0.0
    %6347 = vmatpush1.msra.mxu0 %v6266
    %6348 = vmatprep.subr.mxu0 0.0
    %6349 = vmatpush1.msra.mxu0 %v6267
    %6350 = vmatprep.subr.mxu0 0.0
    %6351 = vmatpush1.msra.mxu0 0.0
    %6352 = vmatprep.subr.mxu0 0.0
    %6353 = vmatpush1.msra.mxu0 0.0
    %6354 = vmatprep.subr.mxu0 0.0
    %6355 = vmatpush1.msra.mxu0 0.0
    %6356 = vmatprep.subr.mxu0 0.0
    %6357 = vmatpush1.msra.mxu0 0.0
    %6358 = vmatprep.subr.mxu0 0.0
    %6359 = vmatpush1.msra.mxu0 0.0
    %6360 = vmatprep.subr.mxu0 0.0
    %6361 = vmatpush1.msra.mxu0 0.0
    %6362 = vmatprep.subr.mxu0 0.0
    %6363 = vmatpush1.msra.mxu0 0.0
    %6364 = vmatprep.subr.mxu0 0.0
    %6365 = vmatpush1.msra.mxu0 0.0
    %6366 = vmatprep.subr.mxu0 0.0
    %6367 = vmatpush1.msra.mxu0 0.0
    %6368 = vmatprep.subr.mxu0 0.0
    %6369 = vmatpush1.msra.mxu0 0.0
    %6370 = vmatprep.subr.mxu0 0.0
    %6371 = vmatpush1.msra.mxu0 0.0
    %6372 = vmatprep.subr.mxu0 0.0
    %6373 = vmatpush1.msra.mxu0 0.0
    %6374 = vmatprep.subr.mxu0 0.0
    %6375 = vmatpush1.msra.mxu0 0.0
    %6376 = vmatprep.subr.mxu0 0.0
    %6377 = vmatpush1.msra.mxu0 0.0
    %6378 = vmatprep.subr.mxu0 0.0
    %6379 = vmatpush1.msra.mxu0 0.0
    %6380 = vmatprep.subr.mxu0 0.0
    %6381 = vmatpush1.msra.mxu0 0.0
    %6382 = vmatprep.subr.mxu0 0.0
    %6383 = vmatpush1.msra.mxu0 0.0
    %6384 = vmatprep.subr.mxu0 0.0
    %6385 = vmatpush1.msra.mxu0 0.0
    %6386 = vmatprep.subr.mxu0 0.0
    %6387 = vmatpush1.msra.mxu0 0.0
    %6388 = vmatprep.subr.mxu0 0.0
    %6389 = vmatpush1.msra.mxu0 0.0
    %6390 = vmatprep.subr.mxu0 0.0
    %6391 = vmatpush1.msra.mxu0 0.0
    %6392 = vmatprep.subr.mxu0 0.0
    %6393 = vmatpush1.msra.mxu0 0.0
    %6394 = vmatprep.subr.mxu0 0.0
    %6395 = vmatpush1.msra.mxu0 0.0
    %6396 = vmatprep.subr.mxu0 0.0
    %6397 = vmatpush1.msra.mxu0 0.0
    %6398 = vmatprep.subr.mxu0 0.0
    %6399 = vmatpush1.msra.mxu0 0.0
    %6400 = vmatprep.subr.mxu0 0.0
    %6401 = vmatpush1.msra.mxu0 0.0
    %6402 = vmatprep.subr.mxu0 0.0
    %6403 = vmatpush1.msra.mxu0 0.0
    %6404 = vmatprep.subr.mxu0 0.0
    %6405 = vmatpush1.msra.mxu0 0.0
    %6406 = vmatprep.mubr.f32.mxu0 0.0
    %6407 = vmatmul.mubr.f32.gmra.mrb[0].mxu0 %v6340
    %v6408 = vpop.f32.mrb[0].mxu0
    %v6409 = vadd.f32 %v6336, %v6408
    %v6410 = vpop.f32.mrb[0].mxu0
    %6411 = vdwg.mxu0
    %v6412 = vld [vmem:[%s49] sm:$0x1]
    %v6414 = vlaneseq
    %v6415 = vshrl.u32 %v6414, 7
    %v6416 = vsub.s32 0, %v6415
    %v6417 = vrot.slane %v6412, %v6416
    %v6419 = vadd.f32 %v6409, %v6417
    %vm6420 = vcmp.gt.f32.partialorder %v6419, 0.0
    %v6421 = vmin.f32 %v6419, 0.0
    %v6422 = vmul.f32 %v6421, 1.442695
    %v6423 = vpow.pop %v6422
    %v6424 = vsub.f32 %v6423, 1.0
    %v6425 = vsel %vm6420, %v6419, %v6424
    %v6426 = vld [vmem:[%s51] sm:$0xff]
    %v6427 = vld [vmem:[%s51 + $0x8] sm:$0xff]
    %v6428 = vld [vmem:[%s51 + $0x10] sm:$0xf]
    %v6429 = vld [vmem:[#allocation5] sm:$0x1]
    %v6431 = vlaneseq
    %v6432 = vshrl.u32 %v6431, 7
    %v6433 = vsub.s32 0, %v6432
    %v6434 = vrot.slane %v6429, %v6433
    %v6437 = vsel %vm6186, %v6425, 0
    %v6440 = vsel %vm6190, %v6428, 0
    %6442 = vmatprep.subr.mxu0 0.0
    %6443 = vmatpush1.msra.mxu0 %v6426
    %6444 = vmatprep.subr.mxu0 0.0
    %6445 = vmatpush1.msra.mxu0 %v6427
    %6446 = vmatprep.subr.mxu0 0.0
    %6447 = vmatpush1.msra.mxu0 %v6440
    %6448 = vmatprep.subr.mxu0 0.0
    %6449 = vmatpush1.msra.mxu0 0.0
    %6450 = vmatprep.subr.mxu0 0.0
    %6451 = vmatpush1.msra.mxu0 0.0
    %6452 = vmatprep.subr.mxu0 0.0
    %6453 = vmatpush1.msra.mxu0 0.0
    %6454 = vmatprep.subr.mxu0 0.0
    %6455 = vmatpush1.msra.mxu0 0.0
    %6456 = vmatprep.subr.mxu0 0.0
    %6457 = vmatpush1.msra.mxu0 0.0
    %6458 = vmatprep.subr.mxu0 0.0
    %6459 = vmatpush1.msra.mxu0 0.0
    %6460 = vmatprep.subr.mxu0 0.0
    %6461 = vmatpush1.msra.mxu0 0.0
    %6462 = vmatprep.subr.mxu0 0.0
    %6463 = vmatpush1.msra.mxu0 0.0
    %6464 = vmatprep.subr.mxu0 0.0
    %6465 = vmatpush1.msra.mxu0 0.0
    %6466 = vmatprep.subr.mxu0 0.0
    %6467 = vmatpush1.msra.mxu0 0.0
    %6468 = vmatprep.subr.mxu0 0.0
    %6469 = vmatpush1.msra.mxu0 0.0
    %6470 = vmatprep.subr.mxu0 0.0
    %6471 = vmatpush1.msra.mxu0 0.0
    %6472 = vmatprep.subr.mxu0 0.0
    %6473 = vmatpush1.msra.mxu0 0.0
    %6474 = vmatprep.subr.mxu0 0.0
    %6475 = vmatpush1.msra.mxu0 0.0
    %6476 = vmatprep.subr.mxu0 0.0
    %6477 = vmatpush1.msra.mxu0 0.0
    %6478 = vmatprep.subr.mxu0 0.0
    %6479 = vmatpush1.msra.mxu0 0.0
    %6480 = vmatprep.subr.mxu0 0.0
    %6481 = vmatpush1.msra.mxu0 0.0
    %6482 = vmatprep.subr.mxu0 0.0
    %6483 = vmatpush1.msra.mxu0 0.0
    %6484 = vmatprep.subr.mxu0 0.0
    %6485 = vmatpush1.msra.mxu0 0.0
    %6486 = vmatprep.subr.mxu0 0.0
    %6487 = vmatpush1.msra.mxu0 0.0
    %6488 = vmatprep.subr.mxu0 0.0
    %6489 = vmatpush1.msra.mxu0 0.0
    %6490 = vmatprep.subr.mxu0 0.0
    %6491 = vmatpush1.msra.mxu0 0.0
    %6492 = vmatprep.subr.mxu0 0.0
    %6493 = vmatpush1.msra.mxu0 0.0
    %6494 = vmatprep.subr.mxu0 0.0
    %6495 = vmatpush1.msra.mxu0 0.0
    %6496 = vmatprep.subr.mxu0 0.0
    %6497 = vmatpush1.msra.mxu0 0.0
    %6498 = vmatprep.subr.mxu0 0.0
    %6499 = vmatpush1.msra.mxu0 0.0
    %6500 = vmatprep.subr.mxu0 0.0
    %6501 = vmatpush1.msra.mxu0 0.0
    %6502 = vmatprep.subr.mxu0 0.0
    %6503 = vmatpush1.msra.mxu0 0.0
    %6504 = vmatprep.subr.mxu0 0.0
    %6505 = vmatpush1.msra.mxu0 0.0
    %6506 = vmatprep.mubr.f32.mxu0 0.0
    %6507 = vmatmul.mubr.f32.gmra.mrb[0].mxu0 %v6437
    %v6508 = vpop.f32.mrb[0].mxu0
    %v6509 = vadd.f32 %v6434, %v6508
    %v6510 = vpop.f32.mrb[0].mxu0
    %6511 = vdwg.mxu0
    %v6512 = vmul.f32 %v6261, 0.5
    %v6513 = vtanh.pop %v6512
    %v6514 = vadd.f32 %v6513, 1.0
    %v6515 = vmul.f32 %v6514, 0.5
    %v6516 = vmul.f32 %v6515, 3.9
    %v6517 = vadd.f32 %v6516, 0.1
    %v6518 = vmul.f32 %v6509, 0.5
    %v6519 = vtanh.pop %v6518
    %v6520 = vadd.f32 %v6519, 1.0
    %v6521 = vmul.f32 %v6520, 0.5
    %v6522 = vmul.f32 %v6521, 1.5
    %v6523 = vadd.f32 %v6522, 0.5
    %vm6524 = vcmask 1024
    %6525 = vst.msk [vmem:[%s59] sm:$0x3] %vm6524, %v6517
    %6526 = vst.msk [vmem:[%s61] sm:$0x3] %vm6524, %v6523
    %v6527 = vrcp.pop %v6517
    %v6528 = vmul.f32 1.0, %v6527
    %v6529 = vld [vmem:[%s9] sm:$0x3]
    %v6530 = vsub.f32 0.0, %v6529
    %v6531 = vmul.f32 %v6530, %v6528
    %v6532 = vmul.f32 %v6531, 1.442695
    %v6533 = vpow.pop %v6532
    %v6534 = vsub.f32 1.0, %v6533
    %v6535 = vld [vmem:[%s5] sm:$0x3]
    %6537 = vset.pattern.permute.xlu0 0
    %6538 = vperm.xlu0 %6537, %v6534
    %v6539 = vpop.permute.xlu0 %6538
    %v6541 = vmul.f32 %v6539, %v6535
    %v6542 = vld [vmem:[%s7] sm:$0x3]
    %6544 = vset.pattern.permute.xlu0 0
    %6545 = vperm.xlu0 %6544, %v6533
    %v6546 = vpop.permute.xlu0 %6545
    %v6548 = vmul.f32 %v6542, %v6546
    %v6549 = vsub.f32 1.0, %v6548
    %v6550 = vrcp.pop %v6549
    %v6551 = vmul.f32 %v6541, %v6550
    %6553 = vset.pattern.permute.xlu0 0
    %6554 = vperm.xlu0 %6553, %v6523
    %v6555 = vpop.permute.xlu0 %6554
    %v6557 = vmul.f32 %v6551, %v6555
    %vm6558 = vcmask 58368
    %6559 = vst.msk [vmem:[#allocation9] sm:$0x3] %vm6558, %v6557
    %v6560 = vld [vmem:[%s11] sm:$0x3]
    %v6561 = vld [vmem:[%s13] sm:$0x3]
    %6563 = vset.pattern.permute.xlu0 0
    %6564 = vperm.xlu0 %6563, %v6561
    %v6565 = vpop.permute.xlu0 %6564
    %v6567 = vrcp.pop %v6565
    %v6568 = vmul.f32 %v6560, %v6567
    %v6569 = vsub.f32 0.0, %v6528
    %v6570 = vmul.f32 %v6569, 0.005
    %v6571 = vmul.f32 %v6570, 1.442695
    %v6572 = vpow.pop %v6571
    %v6573 = vsub.f32 1.0, %v6568
    %6575 = vset.pattern.permute.xlu0 0
    %6576 = vperm.xlu0 %6575, %v6572
    %v6577 = vpop.permute.xlu0 %6576
    %v6579 = vmul.f32 %v6568, %v6577
    %v6580 = vadd.f32 %v6573, %v6579
    %v6581 = vmul.f32 %v6572, 0.9659258
    %6583 = vset.pattern.permute.xlu0 0
    %6584 = vperm.xlu0 %6583, %v6581
    %v6585 = vpop.permute.xlu0 %6584
    %v6587 = vsub.f32 %v6580, %v6585
    %v6588 = vmul.f32 %v6568, 0.9659258
    %v6589 = vsub.f32 1.0, %v6588
    %v6590 = vmul.f32 %v6579, 0.9659258
    %v6591 = vadd.f32 %v6589, %v6590
    %v6592 = vsub.f32 %v6591, %v6585
    %v6593 = vrcp.pop %v6592
    %v6594 = vmul.f32 %v6587, %v6593
    %v6595 = vlog2.pop %v6594
    %v6596 = vmul.f32 %v6595, 0.6931472
    %v6597 = vmul.f32 %v6596, -200.0
    %6599 = vset.pattern.permute.xlu0 0
    %6600 = vperm.xlu0 %6599, %v6528
    %v6601 = vpop.permute.xlu0 %6600
    %v6603 = vsub.f32 %v6597, %v6601
    %v6604 = vrcp.pop 4.5
    %v6605 = vmul.f32 %v6603, %v6604
    %vm6606 = vcmp.ne.f32.partialorder %v6605, %v6605
    %v6607 = vsel %vm6606, 0.0, %v6605
    %vm6608 = vcmask 123904
    %6609 = vst.msk [vmem:[#allocation10] sm:$0x3] %vm6608, %v6607
    // Predicated region
    $region114: #{t10_forward.1} parent=1 // pred_check
      _
    $region115: #{t10_forward.1} parent=1 // pred_check_branch
      %6611 = sbr.rel (0) target = $region117
    $region116: #{t10_forward.1} parent=1 // pred_region
      %s6613 = ssub.s32 32, 32
      %6614 = vsyncadd [#allocation8], %s6613
      %s6616 = sshll.u32 [#allocation9], 4
      %s6617 = int_to_ptr.vmem [resolvable:$true] %s6616
      %6619 = dma.vmem_to_hbm [thread:$0]  %s6617, 32, %s55, [#allocation8]
    $region117: #{t10_forward.1} parent=1 // pred_fallthru
      _
    // Predicated region
    $region118: #{t10_forward.1} parent=1 // pred_check
      _
    $region119: #{t10_forward.1} parent=1 // pred_check_branch
      %6621 = sbr.rel (0) target = $region121
    $region120: #{t10_forward.1} parent=1 // pred_region
      %s6623 = ssub.s32 32, 32
      %6624 = vsyncadd [#allocation11], %s6623
      %s6626 = sshll.u32 [#allocation10], 4
      %s6627 = int_to_ptr.vmem [resolvable:$true] %s6626
      %6629 = dma.vmem_to_hbm [thread:$0]  %s6627, 32, %s57, [#allocation11]
    $region121: #{t10_forward.1} parent=1 // pred_fallthru
      _
    // Predicated region
    $region122: #{t10_forward.1} parent=1 // pred_check
      _
    $region123: #{t10_forward.1} parent=1 // pred_check_branch
      %6631 = sbr.rel (0) target = $region125
    $region124: #{t10_forward.1} parent=1 // pred_region
      _
    $region125: #{t10_forward.1} parent=1 // pred_fallthru
      _
    // Predicated region
    $region126: #{t10_forward.1} parent=1 // pred_check
      _
    $region127: #{t10_forward.1} parent=1 // pred_check_branch
      %6633 = sbr.rel (0) target = $region129
    $region128: #{t10_forward.1} parent=1 // pred_region
      _
    $region129: #{t10_forward.1} parent=1 // pred_fallthru
      _
    // Predicated region
    $region130: #{t10_forward.1} parent=1 // pred_check
      _
    $region131: #{t10_forward.1} parent=1 // pred_check_branch
      %6635 = sbr.rel (0) target = $region133
    $region132: #{t10_forward.1} parent=1 // pred_region
      %6636 = dma.done [#allocation8], 32
    $region133: #{t10_forward.1} parent=1 // pred_fallthru
      _
    // Predicated region
    $region134: #{t10_forward.1} parent=1 // pred_check
      _
    $region135: #{t10_forward.1} parent=1 // pred_check_branch
      %6638 = sbr.rel (0) target = $region137
    $region136: #{t10_forward.1} parent=1 // pred_region
      %6639 = dma.done [#allocation11], 32
    $region137: #{t10_forward.1} parent=1 // pred_fallthru
      _
    // Predicated region
    $region138: #{t10_forward.1} parent=1 // pred_check
      _
    $region139: #{t10_forward.1} parent=1 // pred_check_branch
      %6641 = sbr.rel (0) target = $region141
    $region140: #{t10_forward.1} parent=1 // pred_region
      _
    $region141: #{t10_forward.1} parent=1 // pred_fallthru
      _
    // Predicated region
    $region142: #{t10_forward.1} parent=1 // pred_check
      _
    $region143: #{t10_forward.1} parent=1 // pred_check_branch
      %6643 = sbr.rel (0) target = $region145
    $region144: #{t10_forward.1} parent=1 // pred_region
      _
    $region145: #{t10_forward.1} parent=1 // pred_fallthru
      _
    %6644 = vsyncpa [#allocation7], 1
    %6645 = vsyncpa [#allocation8], 1
    %6646 = vsyncpa [#allocation11], 1

</llo_original>
